<compile_context>
chip_gen: v6e
topology: v6e:2x2x1
jax: 0.10.0
libtpu: 0.0.40
codegen_flags: <defaults>
</compile_context>

<pallas_src>
import jax
import jax.numpy as jnp
from jax.experimental import pallas as pl
from jax.experimental.pallas import tpu as pltpu

CIN = 3            # encoder input channels
HIDDEN_UNITS = 4   # encoder output channels (== hidden_units)
H = W = 56         # spatial size the classifier hard-codes
OUT_SHAPE = 10     # output_shape (number of classes)
BATCH = 2
F = HIDDEN_UNITS * H * W   # 12544 = 98 * 128
TK = 6272                  # reduction tile for the first Linear: 12544 = 2*6272, 6272 = 49*128


# --------------------------- encoder: 3x3 conv + ReLU ------------------------
def _conv3x3_relu_kernel(w_ref, b_ref, xp_ref, o_ref):
    # w_ref : SMEM (COUT*CIN*9,)  flattened conv weights, PyTorch OIHW order
    # b_ref : SMEM (COUT,)
    # xp_ref: VMEM (1, CIN, H+2, W+2) zero-padded input (one batch element)
    # o_ref : VMEM (1, COUT, H, W)
    accs = [jnp.zeros((H, W), jnp.float32) for _ in range(HIDDEN_UNITS)]
    for ci in range(CIN):
        xch = xp_ref[0, ci]                      # (H+2, W+2) one channel
        for kh in range(3):
            rows = xch[kh:kh + H, :]             # sublane shift, once per (ci,kh)
            for kw in range(3):
                win = rows[:, kw:kw + W]         # lane shift, once per (ci,kh,kw)
                for co in range(HIDDEN_UNITS):
                    wv = w_ref[((co * CIN + ci) * 3 + kh) * 3 + kw]
                    accs[co] = accs[co] + win * wv
    for co in range(HIDDEN_UNITS):
        o_ref[0, co] = jnp.maximum(accs[co] + b_ref[co], 0.0)


def conv3x3_relu(x, w, b):
    """x: (B, CIN, H, W) f32; w: (COUT, CIN, 3, 3) f32; b: (COUT,) f32."""
    B = x.shape[0]
    xp = jnp.pad(x, ((0, 0), (0, 0), (1, 1), (1, 1)))
    flops = 2 * B * HIDDEN_UNITS * CIN * 9 * H * W
    bytes_accessed = 4 * (int(xp.size) + int(w.size) + int(b.size)
                          + B * HIDDEN_UNITS * H * W)
    return pl.pallas_call(
        _conv3x3_relu_kernel,
        out_shape=jax.ShapeDtypeStruct((B, HIDDEN_UNITS, H, W), jnp.float32),
        grid=(B,),
        in_specs=[
            pl.BlockSpec(memory_space=pltpu.MemorySpace.SMEM),   # conv weights
            pl.BlockSpec(memory_space=pltpu.MemorySpace.SMEM),   # conv bias
            pl.BlockSpec((1, CIN, H + 2, W + 2), lambda bb: (bb, 0, 0, 0)),
        ],
        out_specs=pl.BlockSpec((1, HIDDEN_UNITS, H, W), lambda bb: (bb, 0, 0, 0)),
        compiler_params=pltpu.CompilerParams(dimension_semantics=("parallel",)),
        cost_estimate=pl.CostEstimate(flops=flops, transcendentals=0,
                                      bytes_accessed=bytes_accessed),
    )(w.reshape(-1), b, xp)


# --------------------------- classifier: fused 5-layer MLP -------------------
def _mlp_kernel(x_ref, w1_ref, b1_ref, w2_ref, b2_ref, w3_ref, b3_ref,
                w4_ref, b4_ref, w5_ref, b5_ref, o_ref, acc_ref):
    k = pl.program_id(0)

    @pl.when(k == 0)
    def _():
        acc_ref[...] = jnp.zeros_like(acc_ref)

    # big first Linear, reduced over the flattened-feature axis (tiled by TK)
    acc_ref[...] += jnp.dot(x_ref[...], w1_ref[...],
                            preferred_element_type=jnp.float32)

    @pl.when(k == pl.num_programs(0) - 1)
    def _():
        h = jnp.maximum(acc_ref[...] + b1_ref[...], 0.0)
        h = jnp.maximum(jnp.dot(h, w2_ref[...],
                                preferred_element_type=jnp.float32) + b2_ref[...], 0.0)
        h = jnp.maximum(jnp.dot(h, w3_ref[...],
                                preferred_element_type=jnp.float32) + b3_ref[...], 0.0)
        h = jnp.maximum(jnp.dot(h, w4_ref[...],
                                preferred_element_type=jnp.float32) + b4_ref[...], 0.0)
        o_ref[...] = jnp.dot(h, w5_ref[...],
                             preferred_element_type=jnp.float32) + b5_ref[...]


def classifier_mlp(x_flat, params):
    """x_flat: (B, F) f32 with F % TK == 0; params: (w1,b1,...,w5,b5)."""
    B, Fdim = x_flat.shape
    assert Fdim % TK == 0 and TK % 128 == 0
    w1, b1, w2, b2, w3, b3, w4, b4, w5, b5 = params

    def const_spec(arr):
        nd = arr.ndim
        return pl.BlockSpec(arr.shape, lambda k, _nd=nd: (0,) * _nd)

    flops = 2 * B * (Fdim * 128 + 128 * 256 + 256 * 128 + 128 * 64 + 64 * OUT_SHAPE)
    bytes_accessed = 4 * (B * Fdim + B * OUT_SHAPE
                          + sum(int(p.size) for p in params))

    return pl.pallas_call(
        _mlp_kernel,
        out_shape=jax.ShapeDtypeStruct((B, OUT_SHAPE), jnp.float32),
        grid=(Fdim // TK,),
        in_specs=[
            pl.BlockSpec((B, TK), lambda k: (0, k)),      # x tile (lane-aligned)
            pl.BlockSpec((TK, 128), lambda k: (k, 0)),    # W1 tile (3.2 MB/step)
            const_spec(b1), const_spec(w2), const_spec(b2),
            const_spec(w3), const_spec(b3), const_spec(w4), const_spec(b4),
            const_spec(w5), const_spec(b5),
        ],
        out_specs=pl.BlockSpec((B, OUT_SHAPE), lambda k: (0, 0)),
        scratch_shapes=[pltpu.VMEM((B, 128), jnp.float32)],
        compiler_params=pltpu.CompilerParams(dimension_semantics=("arbitrary",)),
        cost_estimate=pl.CostEstimate(flops=flops, transcendentals=0,
                                      bytes_accessed=bytes_accessed),
    )(x_flat, w1, b1, w2, b2, w3, b3, w4, b4, w5, b5)


# --------------------------- full forward ------------------------------------
def ca_encoder_classifier_forward(x, conv_w, conv_b, mlp_params):
    compressed = conv3x3_relu(x, conv_w, conv_b)          # (B, hidden, 56, 56)
    # torch.nn.Flatten over NCHW -> (B, C*H*W); single small XLA relayout.
    flat = compressed.reshape(compressed.shape[0], -1)
    return classifier_mlp(flat, mlp_params)               # (B, output_shape)


# --------------------------- pure-JAX reference (for checking) ---------------
def reference_forward(x, conv_w, conv_b, mlp_params):
    y = jax.lax.conv_general_dilated(
        x, conv_w, window_strides=(1, 1), padding="SAME",
        dimension_numbers=("NCHW", "OIHW", "NCHW"))
    y = jnp.maximum(y + conv_b[None, :, None, None], 0.0)
    h = y.reshape(y.shape[0], -1)
    w1, b1, w2, b2, w3, b3, w4, b4, w5, b5 = mlp_params
    h = jnp.maximum(h @ w1 + b1, 0.0)
    h = jnp.maximum(h @ w2 + b2, 0.0)
    h = jnp.maximum(h @ w3 + b3, 0.0)
    h = jnp.maximum(h @ w4 + b4, 0.0)
    return h @ w5 + b5


# --------------------------- deterministic params + run ----------------------
def make_params(key):
    ks = jax.random.split(key, 12)
    conv_w = 0.1 * jax.random.normal(ks[0], (HIDDEN_UNITS, CIN, 3, 3), jnp.float32)
    conv_b = 0.1 * jax.random.normal(ks[1], (HIDDEN_UNITS,), jnp.float32)
    # Linear weights stored as (in, out) = PyTorch weight.T ; biases as (1, out)
    w1 = 0.02 * jax.random.normal(ks[2], (F, 128), jnp.float32)
    b1 = 0.02 * jax.random.normal(ks[3], (1, 128), jnp.float32)
    w2 = 0.05 * jax.random.normal(ks[4], (128, 256), jnp.float32)
    b2 = 0.05 * jax.random.normal(ks[5], (1, 256), jnp.float32)
    w3 = 0.05 * jax.random.normal(ks[6], (256, 128), jnp.float32)
    b3 = 0.05 * jax.random.normal(ks[7], (1, 128), jnp.float32)
    w4 = 0.05 * jax.random.normal(ks[8], (128, 64), jnp.float32)
    b4 = 0.05 * jax.random.normal(ks[9], (1, 64), jnp.float32)
    w5 = 0.05 * jax.random.normal(ks[10], (64, OUT_SHAPE), jnp.float32)
    b5 = 0.05 * jax.random.normal(ks[11], (1, OUT_SHAPE), jnp.float32)
    return conv_w, conv_b, (w1, b1, w2, b2, w3, b3, w4, b4, w5, b5)


if __name__ == "__main__":
    key = jax.random.PRNGKey(0)
    kx, kp = jax.random.split(key)
    x = jax.random.normal(kx, (BATCH, CIN, H, W), jnp.float32)
    conv_w, conv_b, mlp_params = make_params(kp)

    logits = jax.jit(ca_encoder_classifier_forward)(x, conv_w, conv_b, mlp_params)
    logits = jax.block_until_ready(logits)

    ref = reference_forward(x, conv_w, conv_b, mlp_params)
    assert logits.shape == (BATCH, OUT_SHAPE)
    assert jnp.allclose(logits, ref, rtol=1e-3, atol=1e-3), (logits, ref)

    print("KERNEL_OK")
</pallas_src>

<mosaic_0001>
module attributes {stable_mosaic.version = 11 : i64} {
  func.func @_conv3x3_relu_kernel(%arg0: i32, %arg1: memref<108xf32, #tpu.memory_space<smem>>, %arg2: memref<4xf32, #tpu.memory_space<smem>>, %arg3: memref<1x3x58x58xf32, #tpu.memory_space<vmem>>, %arg4: memref<1x4x56x56xf32, #tpu.memory_space<vmem>>) attributes {dimension_semantics = [#tpu.dimension_semantics<parallel>], iteration_bounds = array<i64: 2>, scalar_prefetch = 0 : i64, scratch_operands = 0 : i64, tpu.core_type = #tpu.core_type<tc>, window_params = [{transform_indices = @transform_0, window_bounds = array<i64: 108>}, {transform_indices = @transform_1, window_bounds = array<i64: 4>}, {transform_indices = @transform_2, window_bounds = array<i64: 1, 3, 58, 58>}, {transform_indices = @transform_3, window_bounds = array<i64: 1, 4, 56, 56>}]} {
    %cst = arith.constant 0.000000e+00 : f32
    %0 = vector.broadcast %cst : f32 to vector<56x56xf32>
    %cst_0 = arith.constant 0.000000e+00 : f32
    %1 = vector.broadcast %cst_0 : f32 to vector<56x56xf32>
    %cst_1 = arith.constant 0.000000e+00 : f32
    %2 = vector.broadcast %cst_1 : f32 to vector<56x56xf32>
    %cst_2 = arith.constant 0.000000e+00 : f32
    %3 = vector.broadcast %cst_2 : f32 to vector<56x56xf32>
    %c0 = arith.constant 0 : index
    %c0_3 = arith.constant 0 : index
    %c0_4 = arith.constant 0 : index
    %c0_5 = arith.constant 0 : index
    %4 = vector.load %arg3[%c0, %c0_3, %c0_4, %c0_5] : memref<1x3x58x58xf32, #tpu.memory_space<vmem>>, vector<1x1x58x58xf32>
    %5 = vector.shape_cast %4 : vector<1x1x58x58xf32> to vector<58x58xf32>
    %6 = vector.extract_strided_slice %5 {offsets = [0, 0], sizes = [56, 58], strides = [1, 1]} : vector<58x58xf32> to vector<56x58xf32>
    %7 = vector.extract_strided_slice %6 {offsets = [0, 0], sizes = [56, 56], strides = [1, 1]} : vector<56x58xf32> to vector<56x56xf32>
    %c0_6 = arith.constant 0 : index
    %8 = memref.load %arg1[%c0_6] : memref<108xf32, #tpu.memory_space<smem>>
    %9 = vector.broadcast %8 : f32 to vector<56x56xf32>
    %10 = arith.mulf %7, %9 : vector<56x56xf32>
    %11 = arith.addf %0, %10 : vector<56x56xf32>
    %c27 = arith.constant 27 : index
    %12 = memref.load %arg1[%c27] : memref<108xf32, #tpu.memory_space<smem>>
    %13 = vector.broadcast %12 : f32 to vector<56x56xf32>
    %14 = arith.mulf %7, %13 : vector<56x56xf32>
    %15 = arith.addf %1, %14 : vector<56x56xf32>
    %c54 = arith.constant 54 : index
    %16 = memref.load %arg1[%c54] : memref<108xf32, #tpu.memory_space<smem>>
    %17 = vector.broadcast %16 : f32 to vector<56x56xf32>
    %18 = arith.mulf %7, %17 : vector<56x56xf32>
    %19 = arith.addf %2, %18 : vector<56x56xf32>
    %c81 = arith.constant 81 : index
    %20 = memref.load %arg1[%c81] : memref<108xf32, #tpu.memory_space<smem>>
    %21 = vector.broadcast %20 : f32 to vector<56x56xf32>
    %22 = arith.mulf %7, %21 : vector<56x56xf32>
    %23 = arith.addf %3, %22 : vector<56x56xf32>
    %24 = vector.extract_strided_slice %6 {offsets = [0, 1], sizes = [56, 56], strides = [1, 1]} : vector<56x58xf32> to vector<56x56xf32>
    %c1 = arith.constant 1 : index
    %25 = memref.load %arg1[%c1] : memref<108xf32, #tpu.memory_space<smem>>
    %26 = vector.broadcast %25 : f32 to vector<56x56xf32>
    %27 = arith.mulf %24, %26 : vector<56x56xf32>
    %28 = arith.addf %11, %27 : vector<56x56xf32>
    %c28 = arith.constant 28 : index
    %29 = memref.load %arg1[%c28] : memref<108xf32, #tpu.memory_space<smem>>
    %30 = vector.broadcast %29 : f32 to vector<56x56xf32>
    %31 = arith.mulf %24, %30 : vector<56x56xf32>
    %32 = arith.addf %15, %31 : vector<56x56xf32>
    %c55 = arith.constant 55 : index
    %33 = memref.load %arg1[%c55] : memref<108xf32, #tpu.memory_space<smem>>
    %34 = vector.broadcast %33 : f32 to vector<56x56xf32>
    %35 = arith.mulf %24, %34 : vector<56x56xf32>
    %36 = arith.addf %19, %35 : vector<56x56xf32>
    %c82 = arith.constant 82 : index
    %37 = memref.load %arg1[%c82] : memref<108xf32, #tpu.memory_space<smem>>
    %38 = vector.broadcast %37 : f32 to vector<56x56xf32>
    %39 = arith.mulf %24, %38 : vector<56x56xf32>
    %40 = arith.addf %23, %39 : vector<56x56xf32>
    %41 = vector.extract_strided_slice %6 {offsets = [0, 2], sizes = [56, 56], strides = [1, 1]} : vector<56x58xf32> to vector<56x56xf32>
    %c2 = arith.constant 2 : index
    %42 = memref.load %arg1[%c2] : memref<108xf32, #tpu.memory_space<smem>>
    %43 = vector.broadcast %42 : f32 to vector<56x56xf32>
    %44 = arith.mulf %41, %43 : vector<56x56xf32>
    %45 = arith.addf %28, %44 : vector<56x56xf32>
    %c29 = arith.constant 29 : index
    %46 = memref.load %arg1[%c29] : memref<108xf32, #tpu.memory_space<smem>>
    %47 = vector.broadcast %46 : f32 to vector<56x56xf32>
    %48 = arith.mulf %41, %47 : vector<56x56xf32>
    %49 = arith.addf %32, %48 : vector<56x56xf32>
    %c56 = arith.constant 56 : index
    %50 = memref.load %arg1[%c56] : memref<108xf32, #tpu.memory_space<smem>>
    %51 = vector.broadcast %50 : f32 to vector<56x56xf32>
    %52 = arith.mulf %41, %51 : vector<56x56xf32>
    %53 = arith.addf %36, %52 : vector<56x56xf32>
    %c83 = arith.constant 83 : index
    %54 = memref.load %arg1[%c83] : memref<108xf32, #tpu.memory_space<smem>>
    %55 = vector.broadcast %54 : f32 to vector<56x56xf32>
    %56 = arith.mulf %41, %55 : vector<56x56xf32>
    %57 = arith.addf %40, %56 : vector<56x56xf32>
    %58 = vector.extract_strided_slice %5 {offsets = [1, 0], sizes = [56, 58], strides = [1, 1]} : vector<58x58xf32> to vector<56x58xf32>
    %59 = vector.extract_strided_slice %58 {offsets = [0, 0], sizes = [56, 56], strides = [1, 1]} : vector<56x58xf32> to vector<56x56xf32>
    %c3 = arith.constant 3 : index
    %60 = memref.load %arg1[%c3] : memref<108xf32, #tpu.memory_space<smem>>
    %61 = vector.broadcast %60 : f32 to vector<56x56xf32>
    %62 = arith.mulf %59, %61 : vector<56x56xf32>
    %63 = arith.addf %45, %62 : vector<56x56xf32>
    %c30 = arith.constant 30 : index
    %64 = memref.load %arg1[%c30] : memref<108xf32, #tpu.memory_space<smem>>
    %65 = vector.broadcast %64 : f32 to vector<56x56xf32>
    %66 = arith.mulf %59, %65 : vector<56x56xf32>
    %67 = arith.addf %49, %66 : vector<56x56xf32>
    %c57 = arith.constant 57 : index
    %68 = memref.load %arg1[%c57] : memref<108xf32, #tpu.memory_space<smem>>
    %69 = vector.broadcast %68 : f32 to vector<56x56xf32>
    %70 = arith.mulf %59, %69 : vector<56x56xf32>
    %71 = arith.addf %53, %70 : vector<56x56xf32>
    %c84 = arith.constant 84 : index
    %72 = memref.load %arg1[%c84] : memref<108xf32, #tpu.memory_space<smem>>
    %73 = vector.broadcast %72 : f32 to vector<56x56xf32>
    %74 = arith.mulf %59, %73 : vector<56x56xf32>
    %75 = arith.addf %57, %74 : vector<56x56xf32>
    %76 = vector.extract_strided_slice %58 {offsets = [0, 1], sizes = [56, 56], strides = [1, 1]} : vector<56x58xf32> to vector<56x56xf32>
    %c4 = arith.constant 4 : index
    %77 = memref.load %arg1[%c4] : memref<108xf32, #tpu.memory_space<smem>>
    %78 = vector.broadcast %77 : f32 to vector<56x56xf32>
    %79 = arith.mulf %76, %78 : vector<56x56xf32>
    %80 = arith.addf %63, %79 : vector<56x56xf32>
    %c31 = arith.constant 31 : index
    %81 = memref.load %arg1[%c31] : memref<108xf32, #tpu.memory_space<smem>>
    %82 = vector.broadcast %81 : f32 to vector<56x56xf32>
    %83 = arith.mulf %76, %82 : vector<56x56xf32>
    %84 = arith.addf %67, %83 : vector<56x56xf32>
    %c58 = arith.constant 58 : index
    %85 = memref.load %arg1[%c58] : memref<108xf32, #tpu.memory_space<smem>>
    %86 = vector.broadcast %85 : f32 to vector<56x56xf32>
    %87 = arith.mulf %76, %86 : vector<56x56xf32>
    %88 = arith.addf %71, %87 : vector<56x56xf32>
    %c85 = arith.constant 85 : index
    %89 = memref.load %arg1[%c85] : memref<108xf32, #tpu.memory_space<smem>>
    %90 = vector.broadcast %89 : f32 to vector<56x56xf32>
    %91 = arith.mulf %76, %90 : vector<56x56xf32>
    %92 = arith.addf %75, %91 : vector<56x56xf32>
    %93 = vector.extract_strided_slice %58 {offsets = [0, 2], sizes = [56, 56], strides = [1, 1]} : vector<56x58xf32> to vector<56x56xf32>
    %c5 = arith.constant 5 : index
    %94 = memref.load %arg1[%c5] : memref<108xf32, #tpu.memory_space<smem>>
    %95 = vector.broadcast %94 : f32 to vector<56x56xf32>
    %96 = arith.mulf %93, %95 : vector<56x56xf32>
    %97 = arith.addf %80, %96 : vector<56x56xf32>
    %c32 = arith.constant 32 : index
    %98 = memref.load %arg1[%c32] : memref<108xf32, #tpu.memory_space<smem>>
    %99 = vector.broadcast %98 : f32 to vector<56x56xf32>
    %100 = arith.mulf %93, %99 : vector<56x56xf32>
    %101 = arith.addf %84, %100 : vector<56x56xf32>
    %c59 = arith.constant 59 : index
    %102 = memref.load %arg1[%c59] : memref<108xf32, #tpu.memory_space<smem>>
    %103 = vector.broadcast %102 : f32 to vector<56x56xf32>
    %104 = arith.mulf %93, %103 : vector<56x56xf32>
    %105 = arith.addf %88, %104 : vector<56x56xf32>
    %c86 = arith.constant 86 : index
    %106 = memref.load %arg1[%c86] : memref<108xf32, #tpu.memory_space<smem>>
    %107 = vector.broadcast %106 : f32 to vector<56x56xf32>
    %108 = arith.mulf %93, %107 : vector<56x56xf32>
    %109 = arith.addf %92, %108 : vector<56x56xf32>
    %110 = vector.extract_strided_slice %5 {offsets = [2, 0], sizes = [56, 58], strides = [1, 1]} : vector<58x58xf32> to vector<56x58xf32>
    %111 = vector.extract_strided_slice %110 {offsets = [0, 0], sizes = [56, 56], strides = [1, 1]} : vector<56x58xf32> to vector<56x56xf32>
    %c6 = arith.constant 6 : index
    %112 = memref.load %arg1[%c6] : memref<108xf32, #tpu.memory_space<smem>>
    %113 = vector.broadcast %112 : f32 to vector<56x56xf32>
    %114 = arith.mulf %111, %113 : vector<56x56xf32>
    %115 = arith.addf %97, %114 : vector<56x56xf32>
    %c33 = arith.constant 33 : index
    %116 = memref.load %arg1[%c33] : memref<108xf32, #tpu.memory_space<smem>>
    %117 = vector.broadcast %116 : f32 to vector<56x56xf32>
    %118 = arith.mulf %111, %117 : vector<56x56xf32>
    %119 = arith.addf %101, %118 : vector<56x56xf32>
    %c60 = arith.constant 60 : index
    %120 = memref.load %arg1[%c60] : memref<108xf32, #tpu.memory_space<smem>>
    %121 = vector.broadcast %120 : f32 to vector<56x56xf32>
    %122 = arith.mulf %111, %121 : vector<56x56xf32>
    %123 = arith.addf %105, %122 : vector<56x56xf32>
    %c87 = arith.constant 87 : index
    %124 = memref.load %arg1[%c87] : memref<108xf32, #tpu.memory_space<smem>>
    %125 = vector.broadcast %124 : f32 to vector<56x56xf32>
    %126 = arith.mulf %111, %125 : vector<56x56xf32>
    %127 = arith.addf %109, %126 : vector<56x56xf32>
    %128 = vector.extract_strided_slice %110 {offsets = [0, 1], sizes = [56, 56], strides = [1, 1]} : vector<56x58xf32> to vector<56x56xf32>
    %c7 = arith.constant 7 : index
    %129 = memref.load %arg1[%c7] : memref<108xf32, #tpu.memory_space<smem>>
    %130 = vector.broadcast %129 : f32 to vector<56x56xf32>
    %131 = arith.mulf %128, %130 : vector<56x56xf32>
    %132 = arith.addf %115, %131 : vector<56x56xf32>
    %c34 = arith.constant 34 : index
    %133 = memref.load %arg1[%c34] : memref<108xf32, #tpu.memory_space<smem>>
    %134 = vector.broadcast %133 : f32 to vector<56x56xf32>
    %135 = arith.mulf %128, %134 : vector<56x56xf32>
    %136 = arith.addf %119, %135 : vector<56x56xf32>
    %c61 = arith.constant 61 : index
    %137 = memref.load %arg1[%c61] : memref<108xf32, #tpu.memory_space<smem>>
    %138 = vector.broadcast %137 : f32 to vector<56x56xf32>
    %139 = arith.mulf %128, %138 : vector<56x56xf32>
    %140 = arith.addf %123, %139 : vector<56x56xf32>
    %c88 = arith.constant 88 : index
    %141 = memref.load %arg1[%c88] : memref<108xf32, #tpu.memory_space<smem>>
    %142 = vector.broadcast %141 : f32 to vector<56x56xf32>
    %143 = arith.mulf %128, %142 : vector<56x56xf32>
    %144 = arith.addf %127, %143 : vector<56x56xf32>
    %145 = vector.extract_strided_slice %110 {offsets = [0, 2], sizes = [56, 56], strides = [1, 1]} : vector<56x58xf32> to vector<56x56xf32>
    %c8 = arith.constant 8 : index
    %146 = memref.load %arg1[%c8] : memref<108xf32, #tpu.memory_space<smem>>
    %147 = vector.broadcast %146 : f32 to vector<56x56xf32>
    %148 = arith.mulf %145, %147 : vector<56x56xf32>
    %149 = arith.addf %132, %148 : vector<56x56xf32>
    %c35 = arith.constant 35 : index
    %150 = memref.load %arg1[%c35] : memref<108xf32, #tpu.memory_space<smem>>
    %151 = vector.broadcast %150 : f32 to vector<56x56xf32>
    %152 = arith.mulf %145, %151 : vector<56x56xf32>
    %153 = arith.addf %136, %152 : vector<56x56xf32>
    %c62 = arith.constant 62 : index
    %154 = memref.load %arg1[%c62] : memref<108xf32, #tpu.memory_space<smem>>
    %155 = vector.broadcast %154 : f32 to vector<56x56xf32>
    %156 = arith.mulf %145, %155 : vector<56x56xf32>
    %157 = arith.addf %140, %156 : vector<56x56xf32>
    %c89 = arith.constant 89 : index
    %158 = memref.load %arg1[%c89] : memref<108xf32, #tpu.memory_space<smem>>
    %159 = vector.broadcast %158 : f32 to vector<56x56xf32>
    %160 = arith.mulf %145, %159 : vector<56x56xf32>
    %161 = arith.addf %144, %160 : vector<56x56xf32>
    %c0_7 = arith.constant 0 : index
    %c1_8 = arith.constant 1 : index
    %c0_9 = arith.constant 0 : index
    %c0_10 = arith.constant 0 : index
    %162 = vector.load %arg3[%c0_7, %c1_8, %c0_9, %c0_10] : memref<1x3x58x58xf32, #tpu.memory_space<vmem>>, vector<1x1x58x58xf32>
    %163 = vector.shape_cast %162 : vector<1x1x58x58xf32> to vector<58x58xf32>
    %164 = vector.extract_strided_slice %163 {offsets = [0, 0], sizes = [56, 58], strides = [1, 1]} : vector<58x58xf32> to vector<56x58xf32>
    %165 = vector.extract_strided_slice %164 {offsets = [0, 0], sizes = [56, 56], strides = [1, 1]} : vector<56x58xf32> to vector<56x56xf32>
    %c9 = arith.constant 9 : index
    %166 = memref.load %arg1[%c9] : memref<108xf32, #tpu.memory_space<smem>>
    %167 = vector.broadcast %166 : f32 to vector<56x56xf32>
    %168 = arith.mulf %165, %167 : vector<56x56xf32>
    %169 = arith.addf %149, %168 : vector<56x56xf32>
    %c36 = arith.constant 36 : index
    %170 = memref.load %arg1[%c36] : memref<108xf32, #tpu.memory_space<smem>>
    %171 = vector.broadcast %170 : f32 to vector<56x56xf32>
    %172 = arith.mulf %165, %171 : vector<56x56xf32>
    %173 = arith.addf %153, %172 : vector<56x56xf32>
    %c63 = arith.constant 63 : index
    %174 = memref.load %arg1[%c63] : memref<108xf32, #tpu.memory_space<smem>>
    %175 = vector.broadcast %174 : f32 to vector<56x56xf32>
    %176 = arith.mulf %165, %175 : vector<56x56xf32>
    %177 = arith.addf %157, %176 : vector<56x56xf32>
    %c90 = arith.constant 90 : index
    %178 = memref.load %arg1[%c90] : memref<108xf32, #tpu.memory_space<smem>>
    %179 = vector.broadcast %178 : f32 to vector<56x56xf32>
    %180 = arith.mulf %165, %179 : vector<56x56xf32>
    %181 = arith.addf %161, %180 : vector<56x56xf32>
    %182 = vector.extract_strided_slice %164 {offsets = [0, 1], sizes = [56, 56], strides = [1, 1]} : vector<56x58xf32> to vector<56x56xf32>
    %c10 = arith.constant 10 : index
    %183 = memref.load %arg1[%c10] : memref<108xf32, #tpu.memory_space<smem>>
    %184 = vector.broadcast %183 : f32 to vector<56x56xf32>
    %185 = arith.mulf %182, %184 : vector<56x56xf32>
    %186 = arith.addf %169, %185 : vector<56x56xf32>
    %c37 = arith.constant 37 : index
    %187 = memref.load %arg1[%c37] : memref<108xf32, #tpu.memory_space<smem>>
    %188 = vector.broadcast %187 : f32 to vector<56x56xf32>
    %189 = arith.mulf %182, %188 : vector<56x56xf32>
    %190 = arith.addf %173, %189 : vector<56x56xf32>
    %c64 = arith.constant 64 : index
    %191 = memref.load %arg1[%c64] : memref<108xf32, #tpu.memory_space<smem>>
    %192 = vector.broadcast %191 : f32 to vector<56x56xf32>
    %193 = arith.mulf %182, %192 : vector<56x56xf32>
    %194 = arith.addf %177, %193 : vector<56x56xf32>
    %c91 = arith.constant 91 : index
    %195 = memref.load %arg1[%c91] : memref<108xf32, #tpu.memory_space<smem>>
    %196 = vector.broadcast %195 : f32 to vector<56x56xf32>
    %197 = arith.mulf %182, %196 : vector<56x56xf32>
    %198 = arith.addf %181, %197 : vector<56x56xf32>
    %199 = vector.extract_strided_slice %164 {offsets = [0, 2], sizes = [56, 56], strides = [1, 1]} : vector<56x58xf32> to vector<56x56xf32>
    %c11 = arith.constant 11 : index
    %200 = memref.load %arg1[%c11] : memref<108xf32, #tpu.memory_space<smem>>
    %201 = vector.broadcast %200 : f32 to vector<56x56xf32>
    %202 = arith.mulf %199, %201 : vector<56x56xf32>
    %203 = arith.addf %186, %202 : vector<56x56xf32>
    %c38 = arith.constant 38 : index
    %204 = memref.load %arg1[%c38] : memref<108xf32, #tpu.memory_space<smem>>
    %205 = vector.broadcast %204 : f32 to vector<56x56xf32>
    %206 = arith.mulf %199, %205 : vector<56x56xf32>
    %207 = arith.addf %190, %206 : vector<56x56xf32>
    %c65 = arith.constant 65 : index
    %208 = memref.load %arg1[%c65] : memref<108xf32, #tpu.memory_space<smem>>
    %209 = vector.broadcast %208 : f32 to vector<56x56xf32>
    %210 = arith.mulf %199, %209 : vector<56x56xf32>
    %211 = arith.addf %194, %210 : vector<56x56xf32>
    %c92 = arith.constant 92 : index
    %212 = memref.load %arg1[%c92] : memref<108xf32, #tpu.memory_space<smem>>
    %213 = vector.broadcast %212 : f32 to vector<56x56xf32>
    %214 = arith.mulf %199, %213 : vector<56x56xf32>
    %215 = arith.addf %198, %214 : vector<56x56xf32>
    %216 = vector.extract_strided_slice %163 {offsets = [1, 0], sizes = [56, 58], strides = [1, 1]} : vector<58x58xf32> to vector<56x58xf32>
    %217 = vector.extract_strided_slice %216 {offsets = [0, 0], sizes = [56, 56], strides = [1, 1]} : vector<56x58xf32> to vector<56x56xf32>
    %c12 = arith.constant 12 : index
    %218 = memref.load %arg1[%c12] : memref<108xf32, #tpu.memory_space<smem>>
    %219 = vector.broadcast %218 : f32 to vector<56x56xf32>
    %220 = arith.mulf %217, %219 : vector<56x56xf32>
    %221 = arith.addf %203, %220 : vector<56x56xf32>
    %c39 = arith.constant 39 : index
    %222 = memref.load %arg1[%c39] : memref<108xf32, #tpu.memory_space<smem>>
    %223 = vector.broadcast %222 : f32 to vector<56x56xf32>
    %224 = arith.mulf %217, %223 : vector<56x56xf32>
    %225 = arith.addf %207, %224 : vector<56x56xf32>
    %c66 = arith.constant 66 : index
    %226 = memref.load %arg1[%c66] : memref<108xf32, #tpu.memory_space<smem>>
    %227 = vector.broadcast %226 : f32 to vector<56x56xf32>
    %228 = arith.mulf %217, %227 : vector<56x56xf32>
    %229 = arith.addf %211, %228 : vector<56x56xf32>
    %c93 = arith.constant 93 : index
    %230 = memref.load %arg1[%c93] : memref<108xf32, #tpu.memory_space<smem>>
    %231 = vector.broadcast %230 : f32 to vector<56x56xf32>
    %232 = arith.mulf %217, %231 : vector<56x56xf32>
    %233 = arith.addf %215, %232 : vector<56x56xf32>
    %234 = vector.extract_strided_slice %216 {offsets = [0, 1], sizes = [56, 56], strides = [1, 1]} : vector<56x58xf32> to vector<56x56xf32>
    %c13 = arith.constant 13 : index
    %235 = memref.load %arg1[%c13] : memref<108xf32, #tpu.memory_space<smem>>
    %236 = vector.broadcast %235 : f32 to vector<56x56xf32>
    %237 = arith.mulf %234, %236 : vector<56x56xf32>
    %238 = arith.addf %221, %237 : vector<56x56xf32>
    %c40 = arith.constant 40 : index
    %239 = memref.load %arg1[%c40] : memref<108xf32, #tpu.memory_space<smem>>
    %240 = vector.broadcast %239 : f32 to vector<56x56xf32>
    %241 = arith.mulf %234, %240 : vector<56x56xf32>
    %242 = arith.addf %225, %241 : vector<56x56xf32>
    %c67 = arith.constant 67 : index
    %243 = memref.load %arg1[%c67] : memref<108xf32, #tpu.memory_space<smem>>
    %244 = vector.broadcast %243 : f32 to vector<56x56xf32>
    %245 = arith.mulf %234, %244 : vector<56x56xf32>
    %246 = arith.addf %229, %245 : vector<56x56xf32>
    %c94 = arith.constant 94 : index
    %247 = memref.load %arg1[%c94] : memref<108xf32, #tpu.memory_space<smem>>
    %248 = vector.broadcast %247 : f32 to vector<56x56xf32>
    %249 = arith.mulf %234, %248 : vector<56x56xf32>
    %250 = arith.addf %233, %249 : vector<56x56xf32>
    %251 = vector.extract_strided_slice %216 {offsets = [0, 2], sizes = [56, 56], strides = [1, 1]} : vector<56x58xf32> to vector<56x56xf32>
    %c14 = arith.constant 14 : index
    %252 = memref.load %arg1[%c14] : memref<108xf32, #tpu.memory_space<smem>>
    %253 = vector.broadcast %252 : f32 to vector<56x56xf32>
    %254 = arith.mulf %251, %253 : vector<56x56xf32>
    %255 = arith.addf %238, %254 : vector<56x56xf32>
    %c41 = arith.constant 41 : index
    %256 = memref.load %arg1[%c41] : memref<108xf32, #tpu.memory_space<smem>>
    %257 = vector.broadcast %256 : f32 to vector<56x56xf32>
    %258 = arith.mulf %251, %257 : vector<56x56xf32>
    %259 = arith.addf %242, %258 : vector<56x56xf32>
    %c68 = arith.constant 68 : index
    %260 = memref.load %arg1[%c68] : memref<108xf32, #tpu.memory_space<smem>>
    %261 = vector.broadcast %260 : f32 to vector<56x56xf32>
    %262 = arith.mulf %251, %261 : vector<56x56xf32>
    %263 = arith.addf %246, %262 : vector<56x56xf32>
    %c95 = arith.constant 95 : index
    %264 = memref.load %arg1[%c95] : memref<108xf32, #tpu.memory_space<smem>>
    %265 = vector.broadcast %264 : f32 to vector<56x56xf32>
    %266 = arith.mulf %251, %265 : vector<56x56xf32>
    %267 = arith.addf %250, %266 : vector<56x56xf32>
    %268 = vector.extract_strided_slice %163 {offsets = [2, 0], sizes = [56, 58], strides = [1, 1]} : vector<58x58xf32> to vector<56x58xf32>
    %269 = vector.extract_strided_slice %268 {offsets = [0, 0], sizes = [56, 56], strides = [1, 1]} : vector<56x58xf32> to vector<56x56xf32>
    %c15 = arith.constant 15 : index
    %270 = memref.load %arg1[%c15] : memref<108xf32, #tpu.memory_space<smem>>
    %271 = vector.broadcast %270 : f32 to vector<56x56xf32>
    %272 = arith.mulf %269, %271 : vector<56x56xf32>
    %273 = arith.addf %255, %272 : vector<56x56xf32>
    %c42 = arith.constant 42 : index
    %274 = memref.load %arg1[%c42] : memref<108xf32, #tpu.memory_space<smem>>
    %275 = vector.broadcast %274 : f32 to vector<56x56xf32>
    %276 = arith.mulf %269, %275 : vector<56x56xf32>
    %277 = arith.addf %259, %276 : vector<56x56xf32>
    %c69 = arith.constant 69 : index
    %278 = memref.load %arg1[%c69] : memref<108xf32, #tpu.memory_space<smem>>
    %279 = vector.broadcast %278 : f32 to vector<56x56xf32>
    %280 = arith.mulf %269, %279 : vector<56x56xf32>
    %281 = arith.addf %263, %280 : vector<56x56xf32>
    %c96 = arith.constant 96 : index
    %282 = memref.load %arg1[%c96] : memref<108xf32, #tpu.memory_space<smem>>
    %283 = vector.broadcast %282 : f32 to vector<56x56xf32>
    %284 = arith.mulf %269, %283 : vector<56x56xf32>
    %285 = arith.addf %267, %284 : vector<56x56xf32>
    %286 = vector.extract_strided_slice %268 {offsets = [0, 1], sizes = [56, 56], strides = [1, 1]} : vector<56x58xf32> to vector<56x56xf32>
    %c16 = arith.constant 16 : index
    %287 = memref.load %arg1[%c16] : memref<108xf32, #tpu.memory_space<smem>>
    %288 = vector.broadcast %287 : f32 to vector<56x56xf32>
    %289 = arith.mulf %286, %288 : vector<56x56xf32>
    %290 = arith.addf %273, %289 : vector<56x56xf32>
    %c43 = arith.constant 43 : index
    %291 = memref.load %arg1[%c43] : memref<108xf32, #tpu.memory_space<smem>>
    %292 = vector.broadcast %291 : f32 to vector<56x56xf32>
    %293 = arith.mulf %286, %292 : vector<56x56xf32>
    %294 = arith.addf %277, %293 : vector<56x56xf32>
    %c70 = arith.constant 70 : index
    %295 = memref.load %arg1[%c70] : memref<108xf32, #tpu.memory_space<smem>>
    %296 = vector.broadcast %295 : f32 to vector<56x56xf32>
    %297 = arith.mulf %286, %296 : vector<56x56xf32>
    %298 = arith.addf %281, %297 : vector<56x56xf32>
    %c97 = arith.constant 97 : index
    %299 = memref.load %arg1[%c97] : memref<108xf32, #tpu.memory_space<smem>>
    %300 = vector.broadcast %299 : f32 to vector<56x56xf32>
    %301 = arith.mulf %286, %300 : vector<56x56xf32>
    %302 = arith.addf %285, %301 : vector<56x56xf32>
    %303 = vector.extract_strided_slice %268 {offsets = [0, 2], sizes = [56, 56], strides = [1, 1]} : vector<56x58xf32> to vector<56x56xf32>
    %c17 = arith.constant 17 : index
    %304 = memref.load %arg1[%c17] : memref<108xf32, #tpu.memory_space<smem>>
    %305 = vector.broadcast %304 : f32 to vector<56x56xf32>
    %306 = arith.mulf %303, %305 : vector<56x56xf32>
    %307 = arith.addf %290, %306 : vector<56x56xf32>
    %c44 = arith.constant 44 : index
    %308 = memref.load %arg1[%c44] : memref<108xf32, #tpu.memory_space<smem>>
    %309 = vector.broadcast %308 : f32 to vector<56x56xf32>
    %310 = arith.mulf %303, %309 : vector<56x56xf32>
    %311 = arith.addf %294, %310 : vector<56x56xf32>
    %c71 = arith.constant 71 : index
    %312 = memref.load %arg1[%c71] : memref<108xf32, #tpu.memory_space<smem>>
    %313 = vector.broadcast %312 : f32 to vector<56x56xf32>
    %314 = arith.mulf %303, %313 : vector<56x56xf32>
    %315 = arith.addf %298, %314 : vector<56x56xf32>
    %c98 = arith.constant 98 : index
    %316 = memref.load %arg1[%c98] : memref<108xf32, #tpu.memory_space<smem>>
    %317 = vector.broadcast %316 : f32 to vector<56x56xf32>
    %318 = arith.mulf %303, %317 : vector<56x56xf32>
    %319 = arith.addf %302, %318 : vector<56x56xf32>
    %c0_11 = arith.constant 0 : index
    %c2_12 = arith.constant 2 : index
    %c0_13 = arith.constant 0 : index
    %c0_14 = arith.constant 0 : index
    %320 = vector.load %arg3[%c0_11, %c2_12, %c0_13, %c0_14] : memref<1x3x58x58xf32, #tpu.memory_space<vmem>>, vector<1x1x58x58xf32>
    %321 = vector.shape_cast %320 : vector<1x1x58x58xf32> to vector<58x58xf32>
    %322 = vector.extract_strided_slice %321 {offsets = [0, 0], sizes = [56, 58], strides = [1, 1]} : vector<58x58xf32> to vector<56x58xf32>
    %323 = vector.extract_strided_slice %322 {offsets = [0, 0], sizes = [56, 56], strides = [1, 1]} : vector<56x58xf32> to vector<56x56xf32>
    %c18 = arith.constant 18 : index
    %324 = memref.load %arg1[%c18] : memref<108xf32, #tpu.memory_space<smem>>
    %325 = vector.broadcast %324 : f32 to vector<56x56xf32>
    %326 = arith.mulf %323, %325 : vector<56x56xf32>
    %327 = arith.addf %307, %326 : vector<56x56xf32>
    %c45 = arith.constant 45 : index
    %328 = memref.load %arg1[%c45] : memref<108xf32, #tpu.memory_space<smem>>
    %329 = vector.broadcast %328 : f32 to vector<56x56xf32>
    %330 = arith.mulf %323, %329 : vector<56x56xf32>
    %331 = arith.addf %311, %330 : vector<56x56xf32>
    %c72 = arith.constant 72 : index
    %332 = memref.load %arg1[%c72] : memref<108xf32, #tpu.memory_space<smem>>
    %333 = vector.broadcast %332 : f32 to vector<56x56xf32>
    %334 = arith.mulf %323, %333 : vector<56x56xf32>
    %335 = arith.addf %315, %334 : vector<56x56xf32>
    %c99 = arith.constant 99 : index
    %336 = memref.load %arg1[%c99] : memref<108xf32, #tpu.memory_space<smem>>
    %337 = vector.broadcast %336 : f32 to vector<56x56xf32>
    %338 = arith.mulf %323, %337 : vector<56x56xf32>
    %339 = arith.addf %319, %338 : vector<56x56xf32>
    %340 = vector.extract_strided_slice %322 {offsets = [0, 1], sizes = [56, 56], strides = [1, 1]} : vector<56x58xf32> to vector<56x56xf32>
    %c19 = arith.constant 19 : index
    %341 = memref.load %arg1[%c19] : memref<108xf32, #tpu.memory_space<smem>>
    %342 = vector.broadcast %341 : f32 to vector<56x56xf32>
    %343 = arith.mulf %340, %342 : vector<56x56xf32>
    %344 = arith.addf %327, %343 : vector<56x56xf32>
    %c46 = arith.constant 46 : index
    %345 = memref.load %arg1[%c46] : memref<108xf32, #tpu.memory_space<smem>>
    %346 = vector.broadcast %345 : f32 to vector<56x56xf32>
    %347 = arith.mulf %340, %346 : vector<56x56xf32>
    %348 = arith.addf %331, %347 : vector<56x56xf32>
    %c73 = arith.constant 73 : index
    %349 = memref.load %arg1[%c73] : memref<108xf32, #tpu.memory_space<smem>>
    %350 = vector.broadcast %349 : f32 to vector<56x56xf32>
    %351 = arith.mulf %340, %350 : vector<56x56xf32>
    %352 = arith.addf %335, %351 : vector<56x56xf32>
    %c100 = arith.constant 100 : index
    %353 = memref.load %arg1[%c100] : memref<108xf32, #tpu.memory_space<smem>>
    %354 = vector.broadcast %353 : f32 to vector<56x56xf32>
    %355 = arith.mulf %340, %354 : vector<56x56xf32>
    %356 = arith.addf %339, %355 : vector<56x56xf32>
    %357 = vector.extract_strided_slice %322 {offsets = [0, 2], sizes = [56, 56], strides = [1, 1]} : vector<56x58xf32> to vector<56x56xf32>
    %c20 = arith.constant 20 : index
    %358 = memref.load %arg1[%c20] : memref<108xf32, #tpu.memory_space<smem>>
    %359 = vector.broadcast %358 : f32 to vector<56x56xf32>
    %360 = arith.mulf %357, %359 : vector<56x56xf32>
    %361 = arith.addf %344, %360 : vector<56x56xf32>
    %c47 = arith.constant 47 : index
    %362 = memref.load %arg1[%c47] : memref<108xf32, #tpu.memory_space<smem>>
    %363 = vector.broadcast %362 : f32 to vector<56x56xf32>
    %364 = arith.mulf %357, %363 : vector<56x56xf32>
    %365 = arith.addf %348, %364 : vector<56x56xf32>
    %c74 = arith.constant 74 : index
    %366 = memref.load %arg1[%c74] : memref<108xf32, #tpu.memory_space<smem>>
    %367 = vector.broadcast %366 : f32 to vector<56x56xf32>
    %368 = arith.mulf %357, %367 : vector<56x56xf32>
    %369 = arith.addf %352, %368 : vector<56x56xf32>
    %c101 = arith.constant 101 : index
    %370 = memref.load %arg1[%c101] : memref<108xf32, #tpu.memory_space<smem>>
    %371 = vector.broadcast %370 : f32 to vector<56x56xf32>
    %372 = arith.mulf %357, %371 : vector<56x56xf32>
    %373 = arith.addf %356, %372 : vector<56x56xf32>
    %374 = vector.extract_strided_slice %321 {offsets = [1, 0], sizes = [56, 58], strides = [1, 1]} : vector<58x58xf32> to vector<56x58xf32>
    %375 = vector.extract_strided_slice %374 {offsets = [0, 0], sizes = [56, 56], strides = [1, 1]} : vector<56x58xf32> to vector<56x56xf32>
    %c21 = arith.constant 21 : index
    %376 = memref.load %arg1[%c21] : memref<108xf32, #tpu.memory_space<smem>>
    %377 = vector.broadcast %376 : f32 to vector<56x56xf32>
    %378 = arith.mulf %375, %377 : vector<56x56xf32>
    %379 = arith.addf %361, %378 : vector<56x56xf32>
    %c48 = arith.constant 48 : index
    %380 = memref.load %arg1[%c48] : memref<108xf32, #tpu.memory_space<smem>>
    %381 = vector.broadcast %380 : f32 to vector<56x56xf32>
    %382 = arith.mulf %375, %381 : vector<56x56xf32>
    %383 = arith.addf %365, %382 : vector<56x56xf32>
    %c75 = arith.constant 75 : index
    %384 = memref.load %arg1[%c75] : memref<108xf32, #tpu.memory_space<smem>>
    %385 = vector.broadcast %384 : f32 to vector<56x56xf32>
    %386 = arith.mulf %375, %385 : vector<56x56xf32>
    %387 = arith.addf %369, %386 : vector<56x56xf32>
    %c102 = arith.constant 102 : index
    %388 = memref.load %arg1[%c102] : memref<108xf32, #tpu.memory_space<smem>>
    %389 = vector.broadcast %388 : f32 to vector<56x56xf32>
    %390 = arith.mulf %375, %389 : vector<56x56xf32>
    %391 = arith.addf %373, %390 : vector<56x56xf32>
    %392 = vector.extract_strided_slice %374 {offsets = [0, 1], sizes = [56, 56], strides = [1, 1]} : vector<56x58xf32> to vector<56x56xf32>
    %c22 = arith.constant 22 : index
    %393 = memref.load %arg1[%c22] : memref<108xf32, #tpu.memory_space<smem>>
    %394 = vector.broadcast %393 : f32 to vector<56x56xf32>
    %395 = arith.mulf %392, %394 : vector<56x56xf32>
    %396 = arith.addf %379, %395 : vector<56x56xf32>
    %c49 = arith.constant 49 : index
    %397 = memref.load %arg1[%c49] : memref<108xf32, #tpu.memory_space<smem>>
    %398 = vector.broadcast %397 : f32 to vector<56x56xf32>
    %399 = arith.mulf %392, %398 : vector<56x56xf32>
    %400 = arith.addf %383, %399 : vector<56x56xf32>
    %c76 = arith.constant 76 : index
    %401 = memref.load %arg1[%c76] : memref<108xf32, #tpu.memory_space<smem>>
    %402 = vector.broadcast %401 : f32 to vector<56x56xf32>
    %403 = arith.mulf %392, %402 : vector<56x56xf32>
    %404 = arith.addf %387, %403 : vector<56x56xf32>
    %c103 = arith.constant 103 : index
    %405 = memref.load %arg1[%c103] : memref<108xf32, #tpu.memory_space<smem>>
    %406 = vector.broadcast %405 : f32 to vector<56x56xf32>
    %407 = arith.mulf %392, %406 : vector<56x56xf32>
    %408 = arith.addf %391, %407 : vector<56x56xf32>
    %409 = vector.extract_strided_slice %374 {offsets = [0, 2], sizes = [56, 56], strides = [1, 1]} : vector<56x58xf32> to vector<56x56xf32>
    %c23 = arith.constant 23 : index
    %410 = memref.load %arg1[%c23] : memref<108xf32, #tpu.memory_space<smem>>
    %411 = vector.broadcast %410 : f32 to vector<56x56xf32>
    %412 = arith.mulf %409, %411 : vector<56x56xf32>
    %413 = arith.addf %396, %412 : vector<56x56xf32>
    %c50 = arith.constant 50 : index
    %414 = memref.load %arg1[%c50] : memref<108xf32, #tpu.memory_space<smem>>
    %415 = vector.broadcast %414 : f32 to vector<56x56xf32>
    %416 = arith.mulf %409, %415 : vector<56x56xf32>
    %417 = arith.addf %400, %416 : vector<56x56xf32>
    %c77 = arith.constant 77 : index
    %418 = memref.load %arg1[%c77] : memref<108xf32, #tpu.memory_space<smem>>
    %419 = vector.broadcast %418 : f32 to vector<56x56xf32>
    %420 = arith.mulf %409, %419 : vector<56x56xf32>
    %421 = arith.addf %404, %420 : vector<56x56xf32>
    %c104 = arith.constant 104 : index
    %422 = memref.load %arg1[%c104] : memref<108xf32, #tpu.memory_space<smem>>
    %423 = vector.broadcast %422 : f32 to vector<56x56xf32>
    %424 = arith.mulf %409, %423 : vector<56x56xf32>
    %425 = arith.addf %408, %424 : vector<56x56xf32>
    %426 = vector.extract_strided_slice %321 {offsets = [2, 0], sizes = [56, 58], strides = [1, 1]} : vector<58x58xf32> to vector<56x58xf32>
    %427 = vector.extract_strided_slice %426 {offsets = [0, 0], sizes = [56, 56], strides = [1, 1]} : vector<56x58xf32> to vector<56x56xf32>
    %c24 = arith.constant 24 : index
    %428 = memref.load %arg1[%c24] : memref<108xf32, #tpu.memory_space<smem>>
    %429 = vector.broadcast %428 : f32 to vector<56x56xf32>
    %430 = arith.mulf %427, %429 : vector<56x56xf32>
    %431 = arith.addf %413, %430 : vector<56x56xf32>
    %c51 = arith.constant 51 : index
    %432 = memref.load %arg1[%c51] : memref<108xf32, #tpu.memory_space<smem>>
    %433 = vector.broadcast %432 : f32 to vector<56x56xf32>
    %434 = arith.mulf %427, %433 : vector<56x56xf32>
    %435 = arith.addf %417, %434 : vector<56x56xf32>
    %c78 = arith.constant 78 : index
    %436 = memref.load %arg1[%c78] : memref<108xf32, #tpu.memory_space<smem>>
    %437 = vector.broadcast %436 : f32 to vector<56x56xf32>
    %438 = arith.mulf %427, %437 : vector<56x56xf32>
    %439 = arith.addf %421, %438 : vector<56x56xf32>
    %c105 = arith.constant 105 : index
    %440 = memref.load %arg1[%c105] : memref<108xf32, #tpu.memory_space<smem>>
    %441 = vector.broadcast %440 : f32 to vector<56x56xf32>
    %442 = arith.mulf %427, %441 : vector<56x56xf32>
    %443 = arith.addf %425, %442 : vector<56x56xf32>
    %444 = vector.extract_strided_slice %426 {offsets = [0, 1], sizes = [56, 56], strides = [1, 1]} : vector<56x58xf32> to vector<56x56xf32>
    %c25 = arith.constant 25 : index
    %445 = memref.load %arg1[%c25] : memref<108xf32, #tpu.memory_space<smem>>
    %446 = vector.broadcast %445 : f32 to vector<56x56xf32>
    %447 = arith.mulf %444, %446 : vector<56x56xf32>
    %448 = arith.addf %431, %447 : vector<56x56xf32>
    %c52 = arith.constant 52 : index
    %449 = memref.load %arg1[%c52] : memref<108xf32, #tpu.memory_space<smem>>
    %450 = vector.broadcast %449 : f32 to vector<56x56xf32>
    %451 = arith.mulf %444, %450 : vector<56x56xf32>
    %452 = arith.addf %435, %451 : vector<56x56xf32>
    %c79 = arith.constant 79 : index
    %453 = memref.load %arg1[%c79] : memref<108xf32, #tpu.memory_space<smem>>
    %454 = vector.broadcast %453 : f32 to vector<56x56xf32>
    %455 = arith.mulf %444, %454 : vector<56x56xf32>
    %456 = arith.addf %439, %455 : vector<56x56xf32>
    %c106 = arith.constant 106 : index
    %457 = memref.load %arg1[%c106] : memref<108xf32, #tpu.memory_space<smem>>
    %458 = vector.broadcast %457 : f32 to vector<56x56xf32>
    %459 = arith.mulf %444, %458 : vector<56x56xf32>
    %460 = arith.addf %443, %459 : vector<56x56xf32>
    %461 = vector.extract_strided_slice %426 {offsets = [0, 2], sizes = [56, 56], strides = [1, 1]} : vector<56x58xf32> to vector<56x56xf32>
    %c26 = arith.constant 26 : index
    %462 = memref.load %arg1[%c26] : memref<108xf32, #tpu.memory_space<smem>>
    %463 = vector.broadcast %462 : f32 to vector<56x56xf32>
    %464 = arith.mulf %461, %463 : vector<56x56xf32>
    %465 = arith.addf %448, %464 : vector<56x56xf32>
    %c53 = arith.constant 53 : index
    %466 = memref.load %arg1[%c53] : memref<108xf32, #tpu.memory_space<smem>>
    %467 = vector.broadcast %466 : f32 to vector<56x56xf32>
    %468 = arith.mulf %461, %467 : vector<56x56xf32>
    %469 = arith.addf %452, %468 : vector<56x56xf32>
    %c80 = arith.constant 80 : index
    %470 = memref.load %arg1[%c80] : memref<108xf32, #tpu.memory_space<smem>>
    %471 = vector.broadcast %470 : f32 to vector<56x56xf32>
    %472 = arith.mulf %461, %471 : vector<56x56xf32>
    %473 = arith.addf %456, %472 : vector<56x56xf32>
    %c107 = arith.constant 107 : index
    %474 = memref.load %arg1[%c107] : memref<108xf32, #tpu.memory_space<smem>>
    %475 = vector.broadcast %474 : f32 to vector<56x56xf32>
    %476 = arith.mulf %461, %475 : vector<56x56xf32>
    %477 = arith.addf %460, %476 : vector<56x56xf32>
    %c0_15 = arith.constant 0 : index
    %478 = memref.load %arg2[%c0_15] : memref<4xf32, #tpu.memory_space<smem>>
    %479 = vector.broadcast %478 : f32 to vector<56x56xf32>
    %480 = arith.addf %465, %479 : vector<56x56xf32>
    %cst_16 = arith.constant 0.000000e+00 : f32
    %481 = vector.broadcast %cst_16 : f32 to vector<56x56xf32>
    %482 = arith.maximumf %480, %481 : vector<56x56xf32>
    %c0_17 = arith.constant 0 : index
    %c0_18 = arith.constant 0 : index
    %c0_19 = arith.constant 0 : index
    %c0_20 = arith.constant 0 : index
    %483 = vector.load %arg4[%c0_17, %c0_18, %c0_19, %c0_20] : memref<1x4x56x56xf32, #tpu.memory_space<vmem>>, vector<1x1x56x56xf32>
    %484 = vector.shape_cast %483 : vector<1x1x56x56xf32> to vector<56x56xf32>
    %485 = vector.shape_cast %482 : vector<56x56xf32> to vector<1x1x56x56xf32>
    tpu.vector_store %arg4[%c0_17, %c0_18, %c0_19, %c0_20], %485 {strides = array<i32>} : memref<1x4x56x56xf32, #tpu.memory_space<vmem>>, vector<1x1x56x56xf32>,
    %c1_21 = arith.constant 1 : index
    %486 = memref.load %arg2[%c1_21] : memref<4xf32, #tpu.memory_space<smem>>
    %487 = vector.broadcast %486 : f32 to vector<56x56xf32>
    %488 = arith.addf %469, %487 : vector<56x56xf32>
    %cst_22 = arith.constant 0.000000e+00 : f32
    %489 = vector.broadcast %cst_22 : f32 to vector<56x56xf32>
    %490 = arith.maximumf %488, %489 : vector<56x56xf32>
    %c0_23 = arith.constant 0 : index
    %c1_24 = arith.constant 1 : index
    %c0_25 = arith.constant 0 : index
    %c0_26 = arith.constant 0 : index
    %491 = vector.load %arg4[%c0_23, %c1_24, %c0_25, %c0_26] : memref<1x4x56x56xf32, #tpu.memory_space<vmem>>, vector<1x1x56x56xf32>
    %492 = vector.shape_cast %491 : vector<1x1x56x56xf32> to vector<56x56xf32>
    %493 = vector.shape_cast %490 : vector<56x56xf32> to vector<1x1x56x56xf32>
    tpu.vector_store %arg4[%c0_23, %c1_24, %c0_25, %c0_26], %493 {strides = array<i32>} : memref<1x4x56x56xf32, #tpu.memory_space<vmem>>, vector<1x1x56x56xf32>,
    %c2_27 = arith.constant 2 : index
    %494 = memref.load %arg2[%c2_27] : memref<4xf32, #tpu.memory_space<smem>>
    %495 = vector.broadcast %494 : f32 to vector<56x56xf32>
    %496 = arith.addf %473, %495 : vector<56x56xf32>
    %cst_28 = arith.constant 0.000000e+00 : f32
    %497 = vector.broadcast %cst_28 : f32 to vector<56x56xf32>
    %498 = arith.maximumf %496, %497 : vector<56x56xf32>
    %c0_29 = arith.constant 0 : index
    %c2_30 = arith.constant 2 : index
    %c0_31 = arith.constant 0 : index
    %c0_32 = arith.constant 0 : index
    %499 = vector.load %arg4[%c0_29, %c2_30, %c0_31, %c0_32] : memref<1x4x56x56xf32, #tpu.memory_space<vmem>>, vector<1x1x56x56xf32>
    %500 = vector.shape_cast %499 : vector<1x1x56x56xf32> to vector<56x56xf32>
    %501 = vector.shape_cast %498 : vector<56x56xf32> to vector<1x1x56x56xf32>
    tpu.vector_store %arg4[%c0_29, %c2_30, %c0_31, %c0_32], %501 {strides = array<i32>} : memref<1x4x56x56xf32, #tpu.memory_space<vmem>>, vector<1x1x56x56xf32>,
    %c3_33 = arith.constant 3 : index
    %502 = memref.load %arg2[%c3_33] : memref<4xf32, #tpu.memory_space<smem>>
    %503 = vector.broadcast %502 : f32 to vector<56x56xf32>
    %504 = arith.addf %477, %503 : vector<56x56xf32>
    %cst_34 = arith.constant 0.000000e+00 : f32
    %505 = vector.broadcast %cst_34 : f32 to vector<56x56xf32>
    %506 = arith.maximumf %504, %505 : vector<56x56xf32>
    %c0_35 = arith.constant 0 : index
    %c3_36 = arith.constant 3 : index
    %c0_37 = arith.constant 0 : index
    %c0_38 = arith.constant 0 : index
    %507 = vector.load %arg4[%c0_35, %c3_36, %c0_37, %c0_38] : memref<1x4x56x56xf32, #tpu.memory_space<vmem>>, vector<1x1x56x56xf32>
    %508 = vector.shape_cast %507 : vector<1x1x56x56xf32> to vector<56x56xf32>
    %509 = vector.shape_cast %506 : vector<56x56xf32> to vector<1x1x56x56xf32>
    tpu.vector_store %arg4[%c0_35, %c3_36, %c0_37, %c0_38], %509 {strides = array<i32>} : memref<1x4x56x56xf32, #tpu.memory_space<vmem>>, vector<1x1x56x56xf32>,
    return
  }
  func.func @transform_0(%arg0: i32) -> i32 {
    %c0_i32 = arith.constant 0 : i32
    %c0_i32_0 = arith.constant 0 : i32
    return %c0_i32 : i32
  }
  func.func @transform_1(%arg0: i32) -> i32 {
    %c0_i32 = arith.constant 0 : i32
    %c0_i32_0 = arith.constant 0 : i32
    return %c0_i32 : i32
  }
  func.func @transform_2(%arg0: i32) -> (i32, i32, i32, i32) {
    %c0_i32 = arith.constant 0 : i32
    %c0_i32_0 = arith.constant 0 : i32
    %c0_i32_1 = arith.constant 0 : i32
    %c0_i32_2 = arith.constant 0 : i32
    return %arg0, %c0_i32, %c0_i32_0, %c0_i32_1 : i32, i32, i32, i32
  }
  func.func @transform_3(%arg0: i32) -> (i32, i32, i32, i32) {
    %c0_i32 = arith.constant 0 : i32
    %c0_i32_0 = arith.constant 0 : i32
    %c0_i32_1 = arith.constant 0 : i32
    %c0_i32_2 = arith.constant 0 : i32
    return %arg0, %c0_i32, %c0_i32_0, %c0_i32_1 : i32, i32, i32, i32
  }
}

module attributes {stable_mosaic.version = 11 : i64} {
  func.func @_mlp_kernel(%arg0: i32, %arg1: memref<2x6272xf32, #tpu.memory_space<vmem>>, %arg2: memref<6272x128xf32, #tpu.memory_space<vmem>>, %arg3: memref<1x128xf32, #tpu.memory_space<vmem>>, %arg4: memref<128x256xf32, #tpu.memory_space<vmem>>, %arg5: memref<1x256xf32, #tpu.memory_space<vmem>>, %arg6: memref<256x128xf32, #tpu.memory_space<vmem>>, %arg7: memref<1x128xf32, #tpu.memory_space<vmem>>, %arg8: memref<128x64xf32, #tpu.memory_space<vmem>>, %arg9: memref<1x64xf32, #tpu.memory_space<vmem>>, %arg10: memref<64x10xf32, #tpu.memory_space<vmem>>, %arg11: memref<1x10xf32, #tpu.memory_space<vmem>>, %arg12: memref<2x10xf32, #tpu.memory_space<vmem>>, %arg13: memref<2x128xf32, #tpu.memory_space<vmem>>) attributes {dimension_semantics = [#tpu.dimension_semantics<arbitrary>], iteration_bounds = array<i64: 2>, scalar_prefetch = 0 : i64, scratch_operands = 1 : i64, tpu.core_type = #tpu.core_type<tc>, window_params = [{transform_indices = @transform_0, window_bounds = array<i64: 2, 6272>}, {transform_indices = @transform_1, window_bounds = array<i64: 6272, 128>}, {pipeline_mode = #tpu.pipeline_mode<synchronous>, transform_indices = @transform_2, window_bounds = array<i64: 1, 128>}, {pipeline_mode = #tpu.pipeline_mode<synchronous>, transform_indices = @transform_3, window_bounds = array<i64: 128, 256>}, {pipeline_mode = #tpu.pipeline_mode<synchronous>, transform_indices = @transform_4, window_bounds = array<i64: 1, 256>}, {pipeline_mode = #tpu.pipeline_mode<synchronous>, transform_indices = @transform_5, window_bounds = array<i64: 256, 128>}, {pipeline_mode = #tpu.pipeline_mode<synchronous>, transform_indices = @transform_6, window_bounds = array<i64: 1, 128>}, {pipeline_mode = #tpu.pipeline_mode<synchronous>, transform_indices = @transform_7, window_bounds = array<i64: 128, 64>}, {pipeline_mode = #tpu.pipeline_mode<synchronous>, transform_indices = @transform_8, window_bounds = array<i64: 1, 64>}, {pipeline_mode = #tpu.pipeline_mode<synchronous>, transform_indices = @transform_9, window_bounds = array<i64: 64, 10>}, {pipeline_mode = #tpu.pipeline_mode<synchronous>, transform_indices = @transform_10, window_bounds = array<i64: 1, 10>}, {pipeline_mode = #tpu.pipeline_mode<synchronous>, transform_indices = @transform_11, window_bounds = array<i64: 2, 10>}]} {
    %c0_i32 = arith.constant 0 : i32
    %0 = arith.cmpi eq, %arg0, %c0_i32 : i32
    %1 = arith.extui %0 : i1 to i32
    %c0_i32_0 = arith.constant 0 : i32
    %2 = arith.cmpi ne, %1, %c0_i32_0 : i32
    scf.if %2 {
      %cst_9 = arith.constant 0.000000e+00 : f32
      %12 = vector.broadcast %cst_9 : f32 to vector<2x128xf32>
      %c0_10 = arith.constant 0 : index
      %c0_11 = arith.constant 0 : index
      %13 = vector.load %arg13[%c0_10, %c0_11] : memref<2x128xf32, #tpu.memory_space<vmem>>, vector<2x128xf32>
      tpu.vector_store %arg13[%c0_10, %c0_11], %12 {strides = array<i32>} : memref<2x128xf32, #tpu.memory_space<vmem>>, vector<2x128xf32>,
    } else {
    }
    %c0 = arith.constant 0 : index
    %c0_1 = arith.constant 0 : index
    %3 = vector.load %arg13[%c0, %c0_1] : memref<2x128xf32, #tpu.memory_space<vmem>>, vector<2x128xf32>
    %c0_2 = arith.constant 0 : index
    %c0_3 = arith.constant 0 : index
    %4 = vector.load %arg1[%c0_2, %c0_3] : memref<2x6272xf32, #tpu.memory_space<vmem>>, vector<2x6272xf32>
    %c0_4 = arith.constant 0 : index
    %c0_5 = arith.constant 0 : index
    %5 = vector.load %arg2[%c0_4, %c0_5] : memref<6272x128xf32, #tpu.memory_space<vmem>>, vector<6272x128xf32>
    %cst = arith.constant dense<0.000000e+00> : vector<2x128xf32>
    %6 = tpu.matmul %4, %5, %cst {dimension_numbers = #tpu.dot_dimension_numbers<[1], [0], [0], [1], [0, 0, 1, 1], [], []>} : vector<2x6272xf32>, vector<6272x128xf32>, vector<2x128xf32> -> vector<2x128xf32>
    %7 = arith.addf %3, %6 : vector<2x128xf32>
    %c0_6 = arith.constant 0 : index
    %c0_7 = arith.constant 0 : index
    %8 = vector.load %arg13[%c0_6, %c0_7] : memref<2x128xf32, #tpu.memory_space<vmem>>, vector<2x128xf32>
    tpu.vector_store %arg13[%c0_6, %c0_7], %7 {strides = array<i32>} : memref<2x128xf32, #tpu.memory_space<vmem>>, vector<2x128xf32>,
    %c1_i32 = arith.constant 1 : i32
    %9 = arith.cmpi eq, %arg0, %c1_i32 : i32
    %10 = arith.extui %9 : i1 to i32
    %c0_i32_8 = arith.constant 0 : i32
    %11 = arith.cmpi ne, %10, %c0_i32_8 : i32
    scf.if %11 {
      %c0_9 = arith.constant 0 : index
      %c0_10 = arith.constant 0 : index
      %12 = vector.load %arg13[%c0_9, %c0_10] : memref<2x128xf32, #tpu.memory_space<vmem>>, vector<2x128xf32>
      %c0_11 = arith.constant 0 : index
      %c0_12 = arith.constant 0 : index
      %13 = vector.load %arg3[%c0_11, %c0_12] : memref<1x128xf32, #tpu.memory_space<vmem>>, vector<1x128xf32>
      %14 = vector.broadcast %13 : vector<1x128xf32> to vector<2x128xf32>
      %15 = arith.addf %12, %14 : vector<2x128xf32>
      %cst_13 = arith.constant 0.000000e+00 : f32
      %16 = vector.broadcast %cst_13 : f32 to vector<2x128xf32>
      %17 = arith.maximumf %15, %16 : vector<2x128xf32>
      %c0_14 = arith.constant 0 : index
      %c0_15 = arith.constant 0 : index
      %18 = vector.load %arg4[%c0_14, %c0_15] : memref<128x256xf32, #tpu.memory_space<vmem>>, vector<128x256xf32>
      %cst_16 = arith.constant dense<0.000000e+00> : vector<2x256xf32>
      %19 = tpu.matmul %17, %18, %cst_16 {dimension_numbers = #tpu.dot_dimension_numbers<[1], [0], [0], [1], [0, 0, 1, 1], [], []>} : vector<2x128xf32>, vector<128x256xf32>, vector<2x256xf32> -> vector<2x256xf32>
      %c0_17 = arith.constant 0 : index
      %c0_18 = arith.constant 0 : index
      %20 = vector.load %arg5[%c0_17, %c0_18] : memref<1x256xf32, #tpu.memory_space<vmem>>, vector<1x256xf32>
      %21 = vector.broadcast %20 : vector<1x256xf32> to vector<2x256xf32>
      %22 = arith.addf %19, %21 : vector<2x256xf32>
      %cst_19 = arith.constant 0.000000e+00 : f32
      %23 = vector.broadcast %cst_19 : f32 to vector<2x256xf32>
      %24 = arith.maximumf %22, %23 : vector<2x256xf32>
      %c0_20 = arith.constant 0 : index
      %c0_21 = arith.constant 0 : index
      %25 = vector.load %arg6[%c0_20, %c0_21] : memref<256x128xf32, #tpu.memory_space<vmem>>, vector<256x128xf32>
      %cst_22 = arith.constant dense<0.000000e+00> : vector<2x128xf32>
      %26 = tpu.matmul %24, %25, %cst_22 {dimension_numbers = #tpu.dot_dimension_numbers<[1], [0], [0], [1], [0, 0, 1, 1], [], []>} : vector<2x256xf32>, vector<256x128xf32>, vector<2x128xf32> -> vector<2x128xf32>
      %c0_23 = arith.constant 0 : index
      %c0_24 = arith.constant 0 : index
      %27 = vector.load %arg7[%c0_23, %c0_24] : memref<1x128xf32, #tpu.memory_space<vmem>>, vector<1x128xf32>
      %28 = vector.broadcast %27 : vector<1x128xf32> to vector<2x128xf32>
      %29 = arith.addf %26, %28 : vector<2x128xf32>
      %cst_25 = arith.constant 0.000000e+00 : f32
      %30 = vector.broadcast %cst_25 : f32 to vector<2x128xf32>
      %31 = arith.maximumf %29, %30 : vector<2x128xf32>
      %c0_26 = arith.constant 0 : index
      %c0_27 = arith.constant 0 : index
      %32 = vector.load %arg8[%c0_26, %c0_27] : memref<128x64xf32, #tpu.memory_space<vmem>>, vector<128x64xf32>
      %cst_28 = arith.constant dense<0.000000e+00> : vector<2x64xf32>
      %33 = tpu.matmul %31, %32, %cst_28 {dimension_numbers = #tpu.dot_dimension_numbers<[1], [0], [0], [1], [0, 0, 1, 1], [], []>} : vector<2x128xf32>, vector<128x64xf32>, vector<2x64xf32> -> vector<2x64xf32>
      %c0_29 = arith.constant 0 : index
      %c0_30 = arith.constant 0 : index
      %34 = vector.load %arg9[%c0_29, %c0_30] : memref<1x64xf32, #tpu.memory_space<vmem>>, vector<1x64xf32>
      %35 = vector.broadcast %34 : vector<1x64xf32> to vector<2x64xf32>
      %36 = arith.addf %33, %35 : vector<2x64xf32>
      %cst_31 = arith.constant 0.000000e+00 : f32
      %37 = vector.broadcast %cst_31 : f32 to vector<2x64xf32>
      %38 = arith.maximumf %36, %37 : vector<2x64xf32>
      %c0_32 = arith.constant 0 : index
      %c0_33 = arith.constant 0 : index
      %39 = vector.load %arg10[%c0_32, %c0_33] : memref<64x10xf32, #tpu.memory_space<vmem>>, vector<64x10xf32>
      %cst_34 = arith.constant dense<0.000000e+00> : vector<2x10xf32>
      %40 = tpu.matmul %38, %39, %cst_34 {dimension_numbers = #tpu.dot_dimension_numbers<[1], [0], [0], [1], [0, 0, 1, 1], [], []>} : vector<2x64xf32>, vector<64x10xf32>, vector<2x10xf32> -> vector<2x10xf32>
      %c0_35 = arith.constant 0 : index
      %c0_36 = arith.constant 0 : index
      %41 = vector.load %arg11[%c0_35, %c0_36] : memref<1x10xf32, #tpu.memory_space<vmem>>, vector<1x10xf32>
      %42 = vector.broadcast %41 : vector<1x10xf32> to vector<2x10xf32>
      %43 = arith.addf %40, %42 : vector<2x10xf32>
      %c0_37 = arith.constant 0 : index
      %c0_38 = arith.constant 0 : index
      %44 = vector.load %arg12[%c0_37, %c0_38] : memref<2x10xf32, #tpu.memory_space<vmem>>, vector<2x10xf32>
      tpu.vector_store %arg12[%c0_37, %c0_38], %43 {strides = array<i32>} : memref<2x10xf32, #tpu.memory_space<vmem>>, vector<2x10xf32>,
    } else {
    }
    return
  }
  func.func @transform_0(%arg0: i32) -> (i32, i32) {
    %c0_i32 = arith.constant 0 : i32
    %c0_i32_0 = arith.constant 0 : i32
    return %c0_i32, %arg0 : i32, i32
  }
  func.func @transform_1(%arg0: i32) -> (i32, i32) {
    %c0_i32 = arith.constant 0 : i32
    %c0_i32_0 = arith.constant 0 : i32
    return %arg0, %c0_i32 : i32, i32
  }
  func.func @transform_2(%arg0: i32) -> (i32, i32) {
    %c0_i32 = arith.constant 0 : i32
    %c0_i32_0 = arith.constant 0 : i32
    %c0_i32_1 = arith.constant 0 : i32
    return %c0_i32, %c0_i32_0 : i32, i32
  }
  func.func @transform_3(%arg0: i32) -> (i32, i32) {
    %c0_i32 = arith.constant 0 : i32
    %c0_i32_0 = arith.constant 0 : i32
    %c0_i32_1 = arith.constant 0 : i32
    return %c0_i32, %c0_i32_0 : i32, i32
  }
  func.func @transform_4(%arg0: i32) -> (i32, i32) {
    %c0_i32 = arith.constant 0 : i32
    %c0_i32_0 = arith.constant 0 : i32
    %c0_i32_1 = arith.constant 0 : i32
    return %c0_i32, %c0_i32_0 : i32, i32
  }
  func.func @transform_5(%arg0: i32) -> (i32, i32) {
    %c0_i32 = arith.constant 0 : i32
    %c0_i32_0 = arith.constant 0 : i32
    %c0_i32_1 = arith.constant 0 : i32
    return %c0_i32, %c0_i32_0 : i32, i32
  }
  func.func @transform_6(%arg0: i32) -> (i32, i32) {
    %c0_i32 = arith.constant 0 : i32
    %c0_i32_0 = arith.constant 0 : i32
    %c0_i32_1 = arith.constant 0 : i32
    return %c0_i32, %c0_i32_0 : i32, i32
  }
  func.func @transform_7(%arg0: i32) -> (i32, i32) {
    %c0_i32 = arith.constant 0 : i32
    %c0_i32_0 = arith.constant 0 : i32
    %c0_i32_1 = arith.constant 0 : i32
    return %c0_i32, %c0_i32_0 : i32, i32
  }
  func.func @transform_8(%arg0: i32) -> (i32, i32) {
    %c0_i32 = arith.constant 0 : i32
    %c0_i32_0 = arith.constant 0 : i32
    %c0_i32_1 = arith.constant 0 : i32
    return %c0_i32, %c0_i32_0 : i32, i32
  }
  func.func @transform_9(%arg0: i32) -> (i32, i32) {
    %c0_i32 = arith.constant 0 : i32
    %c0_i32_0 = arith.constant 0 : i32
    %c0_i32_1 = arith.constant 0 : i32
    return %c0_i32, %c0_i32_0 : i32, i32
  }
  func.func @transform_10(%arg0: i32) -> (i32, i32) {
    %c0_i32 = arith.constant 0 : i32
    %c0_i32_0 = arith.constant 0 : i32
    %c0_i32_1 = arith.constant 0 : i32
    return %c0_i32, %c0_i32_0 : i32, i32
  }
  func.func @transform_11(%arg0: i32) -> (i32, i32) {
    %c0_i32 = arith.constant 0 : i32
    %c0_i32_0 = arith.constant 0 : i32
    %c0_i32_1 = arith.constant 0 : i32
    return %c0_i32, %c0_i32_0 : i32, i32
  }
}

</mosaic_0001>

<llo_original>
// kernel: ca_encoder_classifier_forward.3
$region0: #{ca_encoder_classifier_forward.3}
  #allocation0 [shape = 'u32[]', space=smem, size = 0x4, offset = 0x4, fixed_abs, tag = 'smem constant byte address 0x4 - core index']
  #allocation1 [shape = 'u32[144,128]{1,0:T(1,128)}', space=vmem, size = 0x12000, scoped, tag = 'internal scratch']
  #allocation2 [shape = 'f32[2,128]{1,0:T(2,128)}', space=vmem, size = 0x400, scoped, tag = 'scratch operand']
  %s0 = inlined_call_operand.vmem [shape: f32[2,12544], index: 0, kind: input, shape index: {}]
  %s1 = inlined_call_operand.hbm [shape: f32[12544,128], index: 1, kind: input, shape index: {}]
  %s2 = inlined_call_operand.hbm [shape: f32[1,128], index: 2, kind: input, shape index: {}]
  %s3 = inlined_call_operand.hbm [shape: f32[128,256], index: 3, kind: input, shape index: {}]
  %s4 = inlined_call_operand.hbm [shape: f32[1,256], index: 4, kind: input, shape index: {}]
  %s5 = inlined_call_operand.hbm [shape: f32[256,128], index: 5, kind: input, shape index: {}]
  %s6 = inlined_call_operand.hbm [shape: f32[1,128], index: 6, kind: input, shape index: {}]
  %s7 = inlined_call_operand.vmem [shape: f32[128,64], index: 7, kind: input, shape index: {}]
  %s8 = inlined_call_operand.hbm [shape: f32[1,64], index: 8, kind: input, shape index: {}]
  %s9 = inlined_call_operand.vmem [shape: f32[64,10], index: 9, kind: input, shape index: {}]
  %s10 = inlined_call_operand.hbm [shape: f32[1,10], index: 10, kind: input, shape index: {}]
  %s11 = inlined_call_operand.hbm [shape: f32[2,10], index: 11, kind: output, shape index: {}]
  %s12 = sld [smem:[#allocation0]]
  $region117: #{ca_encoder_classifier_forward.3} parent=0
    _
  %s14 = ssub.s32 1, %s12
  %s15 = scalar_select 0, %s14, %s12
  $region1: #{ca_encoder_classifier_forward.3} parent=0
    #allocation3 [shape = 'u8[6422528]{0}', space=vmem, size = 0x620000, scoped, tag = 'input window, operand 1']
    #allocation4 [shape = 's32[2]{0}', space=sflag, size = 0x8, scoped, tag = 'scoped memory for ca_encoder_classifier_forward.3']
    #allocation5 [shape = 's32[2]{0}', space=sflag, size = 0x8, scoped, tag = 'scoped memory for ca_encoder_classifier_forward.3']
    #allocation6 [shape = 'u8[512]{0}', space=vmem, size = 0x400, scoped, tag = 'input window, operand 2, single buffered']
    #allocation7 [shape = 's32[1]{0}', space=sflag, size = 0x4, scoped, tag = 'scoped memory for ca_encoder_classifier_forward.3']
    #allocation8 [shape = 'u8[131072]{0}', space=vmem, size = 0x20000, scoped, tag = 'input window, operand 3, single buffered']
    #allocation9 [shape = 'u8[1024]{0}', space=vmem, size = 0x400, scoped, tag = 'input window, operand 4, single buffered']
    #allocation10 [shape = 's32[1]{0}', space=sflag, size = 0x4, scoped, tag = 'scoped memory for ca_encoder_classifier_forward.3']
    #allocation11 [shape = 'u8[131072]{0}', space=vmem, size = 0x20000, scoped, tag = 'input window, operand 5, single buffered']
    #allocation12 [shape = 'u8[512]{0}', space=vmem, size = 0x400, scoped, tag = 'input window, operand 6, single buffered']
    #allocation13 [shape = 's32[1]{0}', space=sflag, size = 0x4, scoped, tag = 'scoped memory for ca_encoder_classifier_forward.3']
    #allocation14 [shape = 'u8[512]{0}', space=vmem, size = 0x400, scoped, tag = 'input window, operand 8, single buffered']
    #allocation15 [shape = 'u8[512]{0}', space=vmem, size = 0x400, scoped, tag = 'input window, operand 10, single buffered']
    #allocation16 [shape = 's32[1]{0}', space=sflag, size = 0x4, scoped, tag = 'scoped memory for ca_encoder_classifier_forward.3']
    #allocation17 [shape = 'u8[1024]{0}', space=vmem, size = 0x400, scoped, tag = 'output window, operand 0, single buffered']
    %16 = vsyncpa [#allocation4], 0
    %s17 = scalar_lea.sflag [#allocation4], 1
    %18 = vsyncpa %s17, 0
    %19 = vsyncpa [#allocation7], 0
    %20 = vsyncpa [#allocation10], 0
    %21 = vsyncpa [#allocation13], 0
    %22 = vsyncpa [#allocation16], 0
    %23 = vsyncpa [#allocation5], 0
    loop: start=0, step=1, limit=4
    $region2: #{ca_encoder_classifier_forward.3} parent=1 // loop_pre_header
      _
    $region3: #{ca_encoder_classifier_forward.3} parent=1 // loop_header
      %s25 = sphi 0, %s29
      %p26 = scmp.ge.s32.totalorder %s25, 4
      %s35 = sphi 0, %s37
      %s38 = sphi 0, %s35
      %s39 = sphi 0, %s38
      %s55 = sphi 0, %s39
      %s61 = sphi 0, %s63
      %s64 = sphi 0, %s61
      %s65 = sphi 0, %s64
      %s81 = sphi 0, %s65
      %s85 = sphi 0, %s85
      %s87 = sphi 0, %s85
      %s88 = sphi 0, %s87
      %s102 = sphi 0, %s88
      %s106 = sphi 0, %s106
      %s108 = sphi 0, %s106
      %s109 = sphi 0, %s108
      %s123 = sphi 0, %s109
      %s127 = sphi 0, %s127
      %s129 = sphi 0, %s127
      %s130 = sphi 0, %s129
      %s144 = sphi 0, %s130
      %s148 = sphi 0, %s148
      %s150 = sphi 0, %s148
      %s151 = sphi 0, %s150
      %s165 = sphi 0, %s151
      %s169 = sphi 0, %s169
      %s171 = sphi 0, %s169
      %s172 = sphi 0, %s171
      %s186 = sphi 0, %s172
      %s190 = sphi 0, %s190
      %s192 = sphi 0, %s190
      %s193 = sphi 0, %s192
      %s207 = sphi 0, %s193
      %s211 = sphi 0, %s211
      %s213 = sphi 0, %s211
      %s214 = sphi 0, %s213
      %s228 = sphi 0, %s214
      %s232 = sphi 0, %s232
      %s234 = sphi 0, %s232
      %s235 = sphi 0, %s234
      %s249 = sphi 0, %s235
      %s253 = sphi 0, %s253
      %s255 = sphi 0, %s253
      %s256 = sphi 0, %s255
      %s270 = sphi 0, %s256
      %s274 = sphi 0, %s274
      %s276 = sphi 0, %s274
      %s277 = sphi 0, %s276
      %s291 = sphi 0, %s277
    $region4: #{ca_encoder_classifier_forward.3} parent=1 // loop_header_branch
      %28 = sbr.rel (%p26) target = $region8
    $region5: #{ca_encoder_classifier_forward.3} parent=1 // loop_body
      %s30 = ssub.s32 %s25, 1
      %s31 = ssub.s32 %s25, 2
      %s32 = sadd.s32 %s25, 1
      %s33 = ssub.s32 %s25, %s32
      %p34 = scmp.eq.s32.totalorder %s33, 0
      %s36 = sadd.s32 %s35, 1
      %s37 = scalar_select %p34, %s35, %s36
      %p40 = pneg %p34
      %p41 = scmp.eq.s32.totalorder %s25, 1
      %p42 = por %p40, %p41
      %p43 = scmp.ne.s32.totalorder %s35, %s38
      %p44 = scmp.eq.s32.totalorder %s25, 0
      %p45 = por %p43, %p44
      %p46 = scmp.ne.s32.totalorder %s35, %s38
      %p47 = scmp.eq.s32.totalorder %s30, 1
      %p48 = por %p46, %p47
      %p49 = scmp.ne.s32.totalorder %s38, %s39
      %p50 = scmp.eq.s32.totalorder %s30, 0
      %p51 = por %p49, %p50
      %p52 = scmp.ne.s32.totalorder %s38, %s39
      %p53 = scmp.eq.s32.totalorder %s31, 1
      %p54 = por %p52, %p53
      %p56 = scmp.ne.s32.totalorder %s39, %s55
      %p57 = scmp.eq.s32.totalorder %s31, 0
      %p58 = por %p56, %p57
      %s59 = ssub.s32 %s25, %s32
      %p60 = scmp.eq.s32.totalorder %s59, 0
      %s62 = sadd.s32 %s61, 1
      %s63 = scalar_select %p60, %s61, %s62
      %p66 = pneg %p60
      %p67 = scmp.eq.s32.totalorder %s25, 1
      %p68 = por %p66, %p67
      %p69 = scmp.ne.s32.totalorder %s61, %s64
      %p70 = scmp.eq.s32.totalorder %s25, 0
      %p71 = por %p69, %p70
      %p72 = scmp.ne.s32.totalorder %s61, %s64
      %p73 = scmp.eq.s32.totalorder %s30, 1
      %p74 = por %p72, %p73
      %p75 = scmp.ne.s32.totalorder %s64, %s65
      %p76 = scmp.eq.s32.totalorder %s30, 0
      %p77 = por %p75, %p76
      %p78 = scmp.ne.s32.totalorder %s64, %s65
      %p79 = scmp.eq.s32.totalorder %s31, 1
      %p80 = por %p78, %p79
      %p82 = scmp.ne.s32.totalorder %s65, %s81
      %p83 = scmp.eq.s32.totalorder %s31, 0
      %p84 = por %p82, %p83
      %s86 = sadd.s32 %s85, 1
      %p89 = scmp.eq.s32.totalorder %s25, 1
      %p90 = scmp.ne.s32.totalorder %s85, %s87
      %p91 = scmp.eq.s32.totalorder %s25, 0
      %p92 = por %p90, %p91
      %p93 = scmp.ne.s32.totalorder %s85, %s87
      %p94 = scmp.eq.s32.totalorder %s30, 1
      %p95 = por %p93, %p94
      %p96 = scmp.ne.s32.totalorder %s87, %s88
      %p97 = scmp.eq.s32.totalorder %s30, 0
      %p98 = por %p96, %p97
      %p99 = scmp.ne.s32.totalorder %s87, %s88
      %p100 = scmp.eq.s32.totalorder %s31, 1
      %p101 = por %p99, %p100
      %p103 = scmp.ne.s32.totalorder %s88, %s102
      %p104 = scmp.eq.s32.totalorder %s31, 0
      %p105 = por %p103, %p104
      %s107 = sadd.s32 %s106, 1
      %p110 = scmp.eq.s32.totalorder %s25, 1
      %p111 = scmp.ne.s32.totalorder %s106, %s108
      %p112 = scmp.eq.s32.totalorder %s25, 0
      %p113 = por %p111, %p112
      %p114 = scmp.ne.s32.totalorder %s106, %s108
      %p115 = scmp.eq.s32.totalorder %s30, 1
      %p116 = por %p114, %p115
      %p117 = scmp.ne.s32.totalorder %s108, %s109
      %p118 = scmp.eq.s32.totalorder %s30, 0
      %p119 = por %p117, %p118
      %p120 = scmp.ne.s32.totalorder %s108, %s109
      %p121 = scmp.eq.s32.totalorder %s31, 1
      %p122 = por %p120, %p121
      %p124 = scmp.ne.s32.totalorder %s109, %s123
      %p125 = scmp.eq.s32.totalorder %s31, 0
      %p126 = por %p124, %p125
      %s128 = sadd.s32 %s127, 1
      %p131 = scmp.eq.s32.totalorder %s25, 1
      %p132 = scmp.ne.s32.totalorder %s127, %s129
      %p133 = scmp.eq.s32.totalorder %s25, 0
      %p134 = por %p132, %p133
      %p135 = scmp.ne.s32.totalorder %s127, %s129
      %p136 = scmp.eq.s32.totalorder %s30, 1
      %p137 = por %p135, %p136
      %p138 = scmp.ne.s32.totalorder %s129, %s130
      %p139 = scmp.eq.s32.totalorder %s30, 0
      %p140 = por %p138, %p139
      %p141 = scmp.ne.s32.totalorder %s129, %s130
      %p142 = scmp.eq.s32.totalorder %s31, 1
      %p143 = por %p141, %p142
      %p145 = scmp.ne.s32.totalorder %s130, %s144
      %p146 = scmp.eq.s32.totalorder %s31, 0
      %p147 = por %p145, %p146
      %s149 = sadd.s32 %s148, 1
      %p152 = scmp.eq.s32.totalorder %s25, 1
      %p153 = scmp.ne.s32.totalorder %s148, %s150
      %p154 = scmp.eq.s32.totalorder %s25, 0
      %p155 = por %p153, %p154
      %p156 = scmp.ne.s32.totalorder %s148, %s150
      %p157 = scmp.eq.s32.totalorder %s30, 1
      %p158 = por %p156, %p157
      %p159 = scmp.ne.s32.totalorder %s150, %s151
      %p160 = scmp.eq.s32.totalorder %s30, 0
      %p161 = por %p159, %p160
      %p162 = scmp.ne.s32.totalorder %s150, %s151
      %p163 = scmp.eq.s32.totalorder %s31, 1
      %p164 = por %p162, %p163
      %p166 = scmp.ne.s32.totalorder %s151, %s165
      %p167 = scmp.eq.s32.totalorder %s31, 0
      %p168 = por %p166, %p167
      %s170 = sadd.s32 %s169, 1
      %p173 = scmp.eq.s32.totalorder %s25, 1
      %p174 = scmp.ne.s32.totalorder %s169, %s171
      %p175 = scmp.eq.s32.totalorder %s25, 0
      %p176 = por %p174, %p175
      %p177 = scmp.ne.s32.totalorder %s169, %s171
      %p178 = scmp.eq.s32.totalorder %s30, 1
      %p179 = por %p177, %p178
      %p180 = scmp.ne.s32.totalorder %s171, %s172
      %p181 = scmp.eq.s32.totalorder %s30, 0
      %p182 = por %p180, %p181
      %p183 = scmp.ne.s32.totalorder %s171, %s172
      %p184 = scmp.eq.s32.totalorder %s31, 1
      %p185 = por %p183, %p184
      %p187 = scmp.ne.s32.totalorder %s172, %s186
      %p188 = scmp.eq.s32.totalorder %s31, 0
      %p189 = por %p187, %p188
      %s191 = sadd.s32 %s190, 1
      %p194 = scmp.eq.s32.totalorder %s25, 1
      %p195 = scmp.ne.s32.totalorder %s190, %s192
      %p196 = scmp.eq.s32.totalorder %s25, 0
      %p197 = por %p195, %p196
      %p198 = scmp.ne.s32.totalorder %s190, %s192
      %p199 = scmp.eq.s32.totalorder %s30, 1
      %p200 = por %p198, %p199
      %p201 = scmp.ne.s32.totalorder %s192, %s193
      %p202 = scmp.eq.s32.totalorder %s30, 0
      %p203 = por %p201, %p202
      %p204 = scmp.ne.s32.totalorder %s192, %s193
      %p205 = scmp.eq.s32.totalorder %s31, 1
      %p206 = por %p204, %p205
      %p208 = scmp.ne.s32.totalorder %s193, %s207
      %p209 = scmp.eq.s32.totalorder %s31, 0
      %p210 = por %p208, %p209
      %s212 = sadd.s32 %s211, 1
      %p215 = scmp.eq.s32.totalorder %s25, 1
      %p216 = scmp.ne.s32.totalorder %s211, %s213
      %p217 = scmp.eq.s32.totalorder %s25, 0
      %p218 = por %p216, %p217
      %p219 = scmp.ne.s32.totalorder %s211, %s213
      %p220 = scmp.eq.s32.totalorder %s30, 1
      %p221 = por %p219, %p220
      %p222 = scmp.ne.s32.totalorder %s213, %s214
      %p223 = scmp.eq.s32.totalorder %s30, 0
      %p224 = por %p222, %p223
      %p225 = scmp.ne.s32.totalorder %s213, %s214
      %p226 = scmp.eq.s32.totalorder %s31, 1
      %p227 = por %p225, %p226
      %p229 = scmp.ne.s32.totalorder %s214, %s228
      %p230 = scmp.eq.s32.totalorder %s31, 0
      %p231 = por %p229, %p230
      %s233 = sadd.s32 %s232, 1
      %p236 = scmp.eq.s32.totalorder %s25, 1
      %p237 = scmp.ne.s32.totalorder %s232, %s234
      %p238 = scmp.eq.s32.totalorder %s25, 0
      %p239 = por %p237, %p238
      %p240 = scmp.ne.s32.totalorder %s232, %s234
      %p241 = scmp.eq.s32.totalorder %s30, 1
      %p242 = por %p240, %p241
      %p243 = scmp.ne.s32.totalorder %s234, %s235
      %p244 = scmp.eq.s32.totalorder %s30, 0
      %p245 = por %p243, %p244
      %p246 = scmp.ne.s32.totalorder %s234, %s235
      %p247 = scmp.eq.s32.totalorder %s31, 1
      %p248 = por %p246, %p247
      %p250 = scmp.ne.s32.totalorder %s235, %s249
      %p251 = scmp.eq.s32.totalorder %s31, 0
      %p252 = por %p250, %p251
      %s254 = sadd.s32 %s253, 1
      %p257 = scmp.eq.s32.totalorder %s25, 1
      %p258 = scmp.ne.s32.totalorder %s253, %s255
      %p259 = scmp.eq.s32.totalorder %s25, 0
      %p260 = por %p258, %p259
      %p261 = scmp.ne.s32.totalorder %s253, %s255
      %p262 = scmp.eq.s32.totalorder %s30, 1
      %p263 = por %p261, %p262
      %p264 = scmp.ne.s32.totalorder %s255, %s256
      %p265 = scmp.eq.s32.totalorder %s30, 0
      %p266 = por %p264, %p265
      %p267 = scmp.ne.s32.totalorder %s255, %s256
      %p268 = scmp.eq.s32.totalorder %s31, 1
      %p269 = por %p267, %p268
      %p271 = scmp.ne.s32.totalorder %s256, %s270
      %p272 = scmp.eq.s32.totalorder %s31, 0
      %p273 = por %p271, %p272
      %s275 = sadd.s32 %s274, 1
      %p278 = scmp.eq.s32.totalorder %s25, 1
      %p279 = scmp.ne.s32.totalorder %s274, %s276
      %p280 = scmp.eq.s32.totalorder %s25, 0
      %p281 = por %p279, %p280
      %p282 = scmp.ne.s32.totalorder %s274, %s276
      %p283 = scmp.eq.s32.totalorder %s30, 1
      %p284 = por %p282, %p283
      %p285 = scmp.ne.s32.totalorder %s276, %s277
      %p286 = scmp.eq.s32.totalorder %s30, 0
      %p287 = por %p285, %p286
      %p288 = scmp.ne.s32.totalorder %s276, %s277
      %p289 = scmp.eq.s32.totalorder %s31, 1
      %p290 = por %p288, %p289
      %p292 = scmp.ne.s32.totalorder %s277, %s291
      %p293 = scmp.eq.s32.totalorder %s31, 0
      %p294 = por %p292, %p293
      %p295 = scmp.le.s32.totalorder 1, %s25
      %p296 = scmp.lt.s32.totalorder %s25, 3
      %p297 = pnand %p295, %p296
      %p298 = pneg %p297
      // Predicated region
      $region9: #{ca_encoder_classifier_forward.3} parent=5 // pred_check
        _
      $region10: #{ca_encoder_classifier_forward.3} parent=5 // pred_check_branch
        %300 = sbr.rel (%p297) target = $region12
      $region11: #{ca_encoder_classifier_forward.3} parent=5 // pred_region
        %s301 = ssub.s32 %s25, 1
        // Predicated region
        $region13: #{ca_encoder_classifier_forward.3} parent=11 // pred_check
          %p302 = pneg %p98
        $region14: #{ca_encoder_classifier_forward.3} parent=11 // pred_check_branch
          %304 = sbr.rel (%p302) target = $region16
        $region15: #{ca_encoder_classifier_forward.3} parent=11 // pred_region
          %s306 = ssub.s32 16, 16
          %307 = vsyncadd [#allocation7], %s306
          %s309 = sshll.u32 [#allocation6], 4
          %s310 = int_to_ptr.vmem [resolvable:$true] %s309
          %312 = dma.hbm_to_vmem [thread:$0]  %s2, 16, %s310, [#allocation7]
        $region16: #{ca_encoder_classifier_forward.3} parent=11 // pred_fallthru
          _
        // Predicated region
        $region17: #{ca_encoder_classifier_forward.3} parent=11 // pred_check
          %p313 = pneg %p119
        $region18: #{ca_encoder_classifier_forward.3} parent=11 // pred_check_branch
          %315 = sbr.rel (%p313) target = $region20
        $region19: #{ca_encoder_classifier_forward.3} parent=11 // pred_region
          %s317 = ssub.s32 4096, 4096
          %318 = vsyncadd [#allocation7], %s317
          %s319 = sshll.u32 [#allocation8], 4
          %s320 = int_to_ptr.vmem [resolvable:$true] %s319
          %325 = dma.hbm_to_vmem [thread:$0]  %s3, 4096, %s320, [#allocation7], 256, 256, 16
        $region20: #{ca_encoder_classifier_forward.3} parent=11 // pred_fallthru
          _
        // Predicated region
        $region21: #{ca_encoder_classifier_forward.3} parent=11 // pred_check
          %p326 = pneg %p140
        $region22: #{ca_encoder_classifier_forward.3} parent=11 // pred_check_branch
          %328 = sbr.rel (%p326) target = $region24
        $region23: #{ca_encoder_classifier_forward.3} parent=11 // pred_region
          %s330 = ssub.s32 32, 32
          %331 = vsyncadd [#allocation10], %s330
          %s333 = sshll.u32 [#allocation9], 4
          %s334 = int_to_ptr.vmem [resolvable:$true] %s333
          %336 = dma.hbm_to_vmem [thread:$0]  %s4, 32, %s334, [#allocation10]
        $region24: #{ca_encoder_classifier_forward.3} parent=11 // pred_fallthru
          _
        // Predicated region
        $region25: #{ca_encoder_classifier_forward.3} parent=11 // pred_check
          %p337 = pneg %p161
        $region26: #{ca_encoder_classifier_forward.3} parent=11 // pred_check_branch
          %339 = sbr.rel (%p337) target = $region28
        $region27: #{ca_encoder_classifier_forward.3} parent=11 // pred_region
          %s341 = ssub.s32 4096, 4096
          %342 = vsyncadd [#allocation10], %s341
          %s343 = sshll.u32 [#allocation11], 4
          %s344 = int_to_ptr.vmem [resolvable:$true] %s343
          %349 = dma.hbm_to_vmem [thread:$0]  %s5, 4096, %s344, [#allocation10], 128, 128, 8
        $region28: #{ca_encoder_classifier_forward.3} parent=11 // pred_fallthru
          _
        // Predicated region
        $region29: #{ca_encoder_classifier_forward.3} parent=11 // pred_check
          %p350 = pneg %p182
        $region30: #{ca_encoder_classifier_forward.3} parent=11 // pred_check_branch
          %352 = sbr.rel (%p350) target = $region32
        $region31: #{ca_encoder_classifier_forward.3} parent=11 // pred_region
          %s354 = ssub.s32 16, 16
          %355 = vsyncadd [#allocation13], %s354
          %s357 = sshll.u32 [#allocation12], 4
          %s358 = int_to_ptr.vmem [resolvable:$true] %s357
          %360 = dma.hbm_to_vmem [thread:$0]  %s6, 16, %s358, [#allocation13]
        $region32: #{ca_encoder_classifier_forward.3} parent=11 // pred_fallthru
          _
        // Predicated region
        $region33: #{ca_encoder_classifier_forward.3} parent=11 // pred_check
          %p361 = pneg %p203
        $region34: #{ca_encoder_classifier_forward.3} parent=11 // pred_check_branch
          %363 = sbr.rel (%p361) target = $region36
        $region35: #{ca_encoder_classifier_forward.3} parent=11 // pred_region
          _
        $region36: #{ca_encoder_classifier_forward.3} parent=11 // pred_fallthru
          _
        // Predicated region
        $region37: #{ca_encoder_classifier_forward.3} parent=11 // pred_check
          %p364 = pneg %p224
        $region38: #{ca_encoder_classifier_forward.3} parent=11 // pred_check_branch
          %366 = sbr.rel (%p364) target = $region40
        $region39: #{ca_encoder_classifier_forward.3} parent=11 // pred_region
          %s368 = ssub.s32 16, 16
          %369 = vsyncadd [#allocation13], %s368
          %s371 = sshll.u32 [#allocation14], 4
          %s372 = int_to_ptr.vmem [resolvable:$true] %s371
          %374 = dma.hbm_to_vmem [thread:$0]  %s8, 16, %s372, [#allocation13]
        $region40: #{ca_encoder_classifier_forward.3} parent=11 // pred_fallthru
          _
        // Predicated region
        $region41: #{ca_encoder_classifier_forward.3} parent=11 // pred_check
          %p375 = pneg %p245
        $region42: #{ca_encoder_classifier_forward.3} parent=11 // pred_check_branch
          %377 = sbr.rel (%p375) target = $region44
        $region43: #{ca_encoder_classifier_forward.3} parent=11 // pred_region
          _
        $region44: #{ca_encoder_classifier_forward.3} parent=11 // pred_fallthru
          _
        // Predicated region
        $region45: #{ca_encoder_classifier_forward.3} parent=11 // pred_check
          %p378 = pneg %p266
        $region46: #{ca_encoder_classifier_forward.3} parent=11 // pred_check_branch
          %380 = sbr.rel (%p378) target = $region48
        $region47: #{ca_encoder_classifier_forward.3} parent=11 // pred_region
          %s382 = ssub.s32 16, 16
          %383 = vsyncadd [#allocation16], %s382
          %s385 = sshll.u32 [#allocation15], 4
          %s386 = int_to_ptr.vmem [resolvable:$true] %s385
          %388 = dma.hbm_to_vmem [thread:$0]  %s10, 16, %s386, [#allocation16]
        $region48: #{ca_encoder_classifier_forward.3} parent=11 // pred_fallthru
          _
      $region12: #{ca_encoder_classifier_forward.3} parent=5 // pred_fallthru
        _
      %p389 = scmp.lt.s32.totalorder %s25, 2
      // Predicated region
      $region49: #{ca_encoder_classifier_forward.3} parent=5 // pred_check
        %p390 = pneg %p389
      $region50: #{ca_encoder_classifier_forward.3} parent=5 // pred_check_branch
        %392 = sbr.rel (%p390) target = $region52
      $region51: #{ca_encoder_classifier_forward.3} parent=5 // pred_region
        // Predicated region
        $region53: #{ca_encoder_classifier_forward.3} parent=51 // pred_check
          %p393 = pneg %p45
        $region54: #{ca_encoder_classifier_forward.3} parent=51 // pred_check_branch
          %395 = sbr.rel (%p393) target = $region56
        $region55: #{ca_encoder_classifier_forward.3} parent=51 // pred_region
          %s396 = smul.u32 49, %s25
          %p397 = scmp.lt.s32.totalorder %s396, 97
          %s398 = scalar_select %p397, %s396, 97
          %s399 = smul.addr %s398, 2
          %s400 = scalar_lea.vmem %s0, %s399
          %s401 = smul.u32 49, %s25
        $region56: #{ca_encoder_classifier_forward.3} parent=51 // pred_fallthru
          _
        // Predicated region
        $region57: #{ca_encoder_classifier_forward.3} parent=51 // pred_check
          %p402 = pneg %p71
        $region58: #{ca_encoder_classifier_forward.3} parent=51 // pred_check_branch
          %404 = sbr.rel (%p402) target = $region60
        $region59: #{ca_encoder_classifier_forward.3} parent=51 // pred_region
          %s405 = sand.u32 %s61, 1
          %s406 = scalar_lea.sflag [#allocation4], %s405
          %s407 = sand.u32 %s61, 1
          %s408 = smul.addr %s407, 6272
          %s409 = scalar_lea.vmem [#allocation3], %s408
          %s410 = smul.u32 784, %s25
          %s412 = ssub.s32 100352, 100352
          %413 = vsyncadd %s406, %s412
          %s414 = smul.addr %s410, 128
          %s415 = scalar_lea.hbm %s1, %s414
          %s416 = sshll.u32 %s409, 4
          %s417 = int_to_ptr.vmem [resolvable:$true] %s416
          %422 = dma.hbm_to_vmem [thread:$0]  %s415, 100352, %s417, %s406, 128, 128, 8
        $region60: #{ca_encoder_classifier_forward.3} parent=51 // pred_fallthru
          _
      $region52: #{ca_encoder_classifier_forward.3} parent=5 // pred_fallthru
        _
      %p423 = scmp.le.s32.totalorder 1, %s25
      %p424 = scmp.lt.s32.totalorder %s25, 3
      %p425 = pnand %p423, %p424
      %p426 = pneg %p425
      // Predicated region
      $region61: #{ca_encoder_classifier_forward.3} parent=5 // pred_check
        _
      $region62: #{ca_encoder_classifier_forward.3} parent=5 // pred_check_branch
        %428 = sbr.rel (%p425) target = $region64
      $region63: #{ca_encoder_classifier_forward.3} parent=5 // pred_region
        %s429 = ssub.s32 %s25, 1
        %s430 = sand.u32 %s64, 1
        %s431 = scalar_lea.sflag [#allocation4], %s430
        %s432 = sand.u32 %s64, 1
        %s433 = smul.addr %s432, 6272
        %s434 = scalar_lea.vmem [#allocation3], %s433
        // Predicated region
        $region65: #{ca_encoder_classifier_forward.3} parent=63 // pred_check
          %p435 = pneg %p77
        $region66: #{ca_encoder_classifier_forward.3} parent=63 // pred_check_branch
          %437 = sbr.rel (%p435) target = $region68
        $region67: #{ca_encoder_classifier_forward.3} parent=63 // pred_region
          %438 = dma.done %s431, 100352
        $region68: #{ca_encoder_classifier_forward.3} parent=63 // pred_fallthru
          _
        // Predicated region
        $region69: #{ca_encoder_classifier_forward.3} parent=63 // pred_check
          %p439 = pneg %p98
        $region70: #{ca_encoder_classifier_forward.3} parent=63 // pred_check_branch
          %441 = sbr.rel (%p439) target = $region72
        $region71: #{ca_encoder_classifier_forward.3} parent=63 // pred_region
          %442 = dma.done [#allocation7], 16
        $region72: #{ca_encoder_classifier_forward.3} parent=63 // pred_fallthru
          _
        // Predicated region
        $region73: #{ca_encoder_classifier_forward.3} parent=63 // pred_check
          %p443 = pneg %p119
        $region74: #{ca_encoder_classifier_forward.3} parent=63 // pred_check_branch
          %445 = sbr.rel (%p443) target = $region76
        $region75: #{ca_encoder_classifier_forward.3} parent=63 // pred_region
          %446 = dma.done [#allocation7], 4096
        $region76: #{ca_encoder_classifier_forward.3} parent=63 // pred_fallthru
          _
        // Predicated region
        $region77: #{ca_encoder_classifier_forward.3} parent=63 // pred_check
          %p447 = pneg %p140
        $region78: #{ca_encoder_classifier_forward.3} parent=63 // pred_check_branch
          %449 = sbr.rel (%p447) target = $region80
        $region79: #{ca_encoder_classifier_forward.3} parent=63 // pred_region
          %450 = dma.done [#allocation10], 32
        $region80: #{ca_encoder_classifier_forward.3} parent=63 // pred_fallthru
          _
        // Predicated region
        $region81: #{ca_encoder_classifier_forward.3} parent=63 // pred_check
          %p451 = pneg %p161
        $region82: #{ca_encoder_classifier_forward.3} parent=63 // pred_check_branch
          %453 = sbr.rel (%p451) target = $region84
        $region83: #{ca_encoder_classifier_forward.3} parent=63 // pred_region
          %454 = dma.done [#allocation10], 4096
        $region84: #{ca_encoder_classifier_forward.3} parent=63 // pred_fallthru
          _
        // Predicated region
        $region85: #{ca_encoder_classifier_forward.3} parent=63 // pred_check
          %p455 = pneg %p182
        $region86: #{ca_encoder_classifier_forward.3} parent=63 // pred_check_branch
          %457 = sbr.rel (%p455) target = $region88
        $region87: #{ca_encoder_classifier_forward.3} parent=63 // pred_region
          %458 = dma.done [#allocation13], 16
        $region88: #{ca_encoder_classifier_forward.3} parent=63 // pred_fallthru
          _
        // Predicated region
        $region89: #{ca_encoder_classifier_forward.3} parent=63 // pred_check
          %p459 = pneg %p224
        $region90: #{ca_encoder_classifier_forward.3} parent=63 // pred_check_branch
          %461 = sbr.rel (%p459) target = $region92
        $region91: #{ca_encoder_classifier_forward.3} parent=63 // pred_region
          %462 = dma.done [#allocation13], 16
        $region92: #{ca_encoder_classifier_forward.3} parent=63 // pred_fallthru
          _
        // Predicated region
        $region93: #{ca_encoder_classifier_forward.3} parent=63 // pred_check
          %p463 = pneg %p266
        $region94: #{ca_encoder_classifier_forward.3} parent=63 // pred_check_branch
          %465 = sbr.rel (%p463) target = $region96
        $region95: #{ca_encoder_classifier_forward.3} parent=63 // pred_region
          %466 = dma.done [#allocation16], 16
        $region96: #{ca_encoder_classifier_forward.3} parent=63 // pred_fallthru
          _
        %s467 = smul.u32 49, %s30
        %p468 = scmp.lt.s32.totalorder %s467, 97
        %s469 = scalar_select %p468, %s467, 97
        %s470 = smul.addr %s469, 2
        %s471 = scalar_lea.vmem %s0, %s470
        %p472 = pneg %p51
        %p473 = pneg %p48
        %s474 = sand.u32 %s64, 1
        %s475 = scalar_lea.sflag [#allocation4], %s474
        %s476 = sand.u32 %s64, 1
        %s477 = smul.addr %s476, 6272
        %s478 = scalar_lea.vmem [#allocation3], %s477
        %p479 = pneg %p77
        %p480 = pneg %p74
        %p481 = pneg %p98
        %p482 = pneg %p95
        %p483 = pneg %p119
        %p484 = pneg %p116
        %p485 = pneg %p140
        %p486 = pneg %p137
        %p487 = pneg %p161
        %p488 = pneg %p158
        %p489 = pneg %p182
        %p490 = pneg %p179
        %p491 = pneg %p203
        %p492 = pneg %p200
        %p493 = pneg %p224
        %p494 = pneg %p221
        %p495 = pneg %p245
        %p496 = pneg %p242
        %p497 = pneg %p266
        %p498 = pneg %p263
        %p499 = pneg %p287
        %p500 = pneg %p284
        %s501 = smul.u32 49, %s30
        %p502 = scmp.lt.s32.totalorder %s501, 97
        %s503 = scalar_select %p502, %s501, 97
        %s504 = smul.addr %s503, 2
        %s505 = scalar_lea.vmem %s0, %s504
        %s506 = smul.u32 49, %s30
        %s507 = smul.u32 784, %s30
        %p508 = scmp.eq.s32.totalorder %s30, 0
        // Predicated region
        $region97: #{ca_encoder_classifier_forward.3} parent=63 // pred_check
          %p509 = pneg %p508
        $region98: #{ca_encoder_classifier_forward.3} parent=63 // pred_check_branch
          %511 = sbr.rel (%p509) target = $region100
        $region99: #{ca_encoder_classifier_forward.3} parent=63 // pred_region
          %512 = vst [vmem:[#allocation2] sm:$0x3] 0.0
        $region100: #{ca_encoder_classifier_forward.3} parent=63 // pred_fallthru
          _
        %v513 = vld [vmem:[#allocation2] sm:$0x3]
        %v514 = vld [vmem:[%s505] sm:$0xff]
        %v515 = vld [vmem:[%s505 + $0x8] sm:$0xff]
        %v516 = vld [vmem:[%s505 + $0x10] sm:$0xff]
        %v517 = vld [vmem:[%s505 + $0x18] sm:$0xff]
        %v518 = vld [vmem:[%s505 + $0x20] sm:$0xff]
        %v519 = vld [vmem:[%s505 + $0x28] sm:$0xff]
        %v520 = vld [vmem:[%s505 + $0x30] sm:$0xff]
        %v521 = vld [vmem:[%s505 + $0x38] sm:$0xff]
        %v522 = vld [vmem:[%s505 + $0x40] sm:$0xff]
        %v523 = vld [vmem:[%s505 + $0x48] sm:$0xff]
        %v524 = vld [vmem:[%s505 + $0x50] sm:$0xff]
        %v525 = vld [vmem:[%s505 + $0x58] sm:$0xff]
        %v526 = vld [vmem:[%s505 + $0x60] sm:$0x3]
        %v527 = vld [vmem:[%s434] sm:$0xff]
        %v528 = vld [vmem:[%s434 + $0x8] sm:$0xff]
        %v529 = vld [vmem:[%s434 + $0x10] sm:$0xff]
        %v530 = vld [vmem:[%s434 + $0x18] sm:$0xff]
        %v531 = vld [vmem:[%s434 + $0x20] sm:$0xff]
        %v532 = vld [vmem:[%s434 + $0x28] sm:$0xff]
        %v533 = vld [vmem:[%s434 + $0x30] sm:$0xff]
        %v534 = vld [vmem:[%s434 + $0x38] sm:$0xff]
        %v535 = vld [vmem:[%s434 + $0x40] sm:$0xff]
        %v536 = vld [vmem:[%s434 + $0x48] sm:$0xff]
        %v537 = vld [vmem:[%s434 + $0x50] sm:$0xff]
        %v538 = vld [vmem:[%s434 + $0x58] sm:$0xff]
        %v539 = vld [vmem:[%s434 + $0x60] sm:$0xff]
        %v540 = vld [vmem:[%s434 + $0x68] sm:$0xff]
        %v541 = vld [vmem:[%s434 + $0x70] sm:$0xff]
        %v542 = vld [vmem:[%s434 + $0x78] sm:$0xff]
        %v543 = vld [vmem:[%s434 + $0x80] sm:$0xff]
        %v544 = vld [vmem:[%s434 + $0x88] sm:$0xff]
        %v545 = vld [vmem:[%s434 + $0x90] sm:$0xff]
        %v546 = vld [vmem:[%s434 + $0x98] sm:$0xff]
        %v547 = vld [vmem:[%s434 + $0xa0] sm:$0xff]
        %v548 = vld [vmem:[%s434 + $0xa8] sm:$0xff]
        %v549 = vld [vmem:[%s434 + $0xb0] sm:$0xff]
        %v550 = vld [vmem:[%s434 + $0xb8] sm:$0xff]
        %v551 = vld [vmem:[%s434 + $0xc0] sm:$0xff]
        %v552 = vld [vmem:[%s434 + $0xc8] sm:$0xff]
        %v553 = vld [vmem:[%s434 + $0xd0] sm:$0xff]
        %v554 = vld [vmem:[%s434 + $0xd8] sm:$0xff]
        %v555 = vld [vmem:[%s434 + $0xe0] sm:$0xff]
        %v556 = vld [vmem:[%s434 + $0xe8] sm:$0xff]
        %v557 = vld [vmem:[%s434 + $0xf0] sm:$0xff]
        %v558 = vld [vmem:[%s434 + $0xf8] sm:$0xff]
        %v559 = vld [vmem:[%s434 + $0x100] sm:$0xff]
        %v560 = vld [vmem:[%s434 + $0x108] sm:$0xff]
        %v561 = vld [vmem:[%s434 + $0x110] sm:$0xff]
        %v562 = vld [vmem:[%s434 + $0x118] sm:$0xff]
        %v563 = vld [vmem:[%s434 + $0x120] sm:$0xff]
        %v564 = vld [vmem:[%s434 + $0x128] sm:$0xff]
        %v565 = vld [vmem:[%s434 + $0x130] sm:$0xff]
        %v566 = vld [vmem:[%s434 + $0x138] sm:$0xff]
        %v567 = vld [vmem:[%s434 + $0x140] sm:$0xff]
        %v568 = vld [vmem:[%s434 + $0x148] sm:$0xff]
        %v569 = vld [vmem:[%s434 + $0x150] sm:$0xff]
        %v570 = vld [vmem:[%s434 + $0x158] sm:$0xff]
        %v571 = vld [vmem:[%s434 + $0x160] sm:$0xff]
        %v572 = vld [vmem:[%s434 + $0x168] sm:$0xff]
        %v573 = vld [vmem:[%s434 + $0x170] sm:$0xff]
        %v574 = vld [vmem:[%s434 + $0x178] sm:$0xff]
        %v575 = vld [vmem:[%s434 + $0x180] sm:$0xff]
        %v576 = vld [vmem:[%s434 + $0x188] sm:$0xff]
        %v577 = vld [vmem:[%s434 + $0x190] sm:$0xff]
        %v578 = vld [vmem:[%s434 + $0x198] sm:$0xff]
        %v579 = vld [vmem:[%s434 + $0x1a0] sm:$0xff]
        %v580 = vld [vmem:[%s434 + $0x1a8] sm:$0xff]
        %v581 = vld [vmem:[%s434 + $0x1b0] sm:$0xff]
        %v582 = vld [vmem:[%s434 + $0x1b8] sm:$0xff]
        %v583 = vld [vmem:[%s434 + $0x1c0] sm:$0xff]
        %v584 = vld [vmem:[%s434 + $0x1c8] sm:$0xff]
        %v585 = vld [vmem:[%s434 + $0x1d0] sm:$0xff]
        %v586 = vld [vmem:[%s434 + $0x1d8] sm:$0xff]
        %v587 = vld [vmem:[%s434 + $0x1e0] sm:$0xff]
        %v588 = vld [vmem:[%s434 + $0x1e8] sm:$0xff]
        %v589 = vld [vmem:[%s434 + $0x1f0] sm:$0xff]
        %v590 = vld [vmem:[%s434 + $0x1f8] sm:$0xff]
        %v591 = vld [vmem:[%s434 + $0x200] sm:$0xff]
        %v592 = vld [vmem:[%s434 + $0x208] sm:$0xff]
        %v593 = vld [vmem:[%s434 + $0x210] sm:$0xff]
        %v594 = vld [vmem:[%s434 + $0x218] sm:$0xff]
        %v595 = vld [vmem:[%s434 + $0x220] sm:$0xff]
        %v596 = vld [vmem:[%s434 + $0x228] sm:$0xff]
        %v597 = vld [vmem:[%s434 + $0x230] sm:$0xff]
        %v598 = vld [vmem:[%s434 + $0x238] sm:$0xff]
        %v599 = vld [vmem:[%s434 + $0x240] sm:$0xff]
        %v600 = vld [vmem:[%s434 + $0x248] sm:$0xff]
        %v601 = vld [vmem:[%s434 + $0x250] sm:$0xff]
        %v602 = vld [vmem:[%s434 + $0x258] sm:$0xff]
        %v603 = vld [vmem:[%s434 + $0x260] sm:$0xff]
        %v604 = vld [vmem:[%s434 + $0x268] sm:$0xff]
        %v605 = vld [vmem:[%s434 + $0x270] sm:$0xff]
        %v606 = vld [vmem:[%s434 + $0x278] sm:$0xff]
        %v607 = vld [vmem:[%s434 + $0x280] sm:$0xff]
        %v608 = vld [vmem:[%s434 + $0x288] sm:$0xff]
        %v609 = vld [vmem:[%s434 + $0x290] sm:$0xff]
        %v610 = vld [vmem:[%s434 + $0x298] sm:$0xff]
        %v611 = vld [vmem:[%s434 + $0x2a0] sm:$0xff]
        %v612 = vld [vmem:[%s434 + $0x2a8] sm:$0xff]
        %v613 = vld [vmem:[%s434 + $0x2b0] sm:$0xff]
        %v614 = vld [vmem:[%s434 + $0x2b8] sm:$0xff]
        %v615 = vld [vmem:[%s434 + $0x2c0] sm:$0xff]
        %v616 = vld [vmem:[%s434 + $0x2c8] sm:$0xff]
        %v617 = vld [vmem:[%s434 + $0x2d0] sm:$0xff]
        %v618 = vld [vmem:[%s434 + $0x2d8] sm:$0xff]
        %v619 = vld [vmem:[%s434 + $0x2e0] sm:$0xff]
        %v620 = vld [vmem:[%s434 + $0x2e8] sm:$0xff]
        %v621 = vld [vmem:[%s434 + $0x2f0] sm:$0xff]
        %v622 = vld [vmem:[%s434 + $0x2f8] sm:$0xff]
        %v623 = vld [vmem:[%s434 + $0x300] sm:$0xff]
        %v624 = vld [vmem:[%s434 + $0x308] sm:$0xff]
        %v625 = vld [vmem:[%s434 + $0x310] sm:$0xff]
        %v626 = vld [vmem:[%s434 + $0x318] sm:$0xff]
        %v627 = vld [vmem:[%s434 + $0x320] sm:$0xff]
        %v628 = vld [vmem:[%s434 + $0x328] sm:$0xff]
        %v629 = vld [vmem:[%s434 + $0x330] sm:$0xff]
        %v630 = vld [vmem:[%s434 + $0x338] sm:$0xff]
        %v631 = vld [vmem:[%s434 + $0x340] sm:$0xff]
        %v632 = vld [vmem:[%s434 + $0x348] sm:$0xff]
        %v633 = vld [vmem:[%s434 + $0x350] sm:$0xff]
        %v634 = vld [vmem:[%s434 + $0x358] sm:$0xff]
        %v635 = vld [vmem:[%s434 + $0x360] sm:$0xff]
        %v636 = vld [vmem:[%s434 + $0x368] sm:$0xff]
        %v637 = vld [vmem:[%s434 + $0x370] sm:$0xff]
        %v638 = vld [vmem:[%s434 + $0x378] sm:$0xff]
        %v639 = vld [vmem:[%s434 + $0x380] sm:$0xff]
        %v640 = vld [vmem:[%s434 + $0x388] sm:$0xff]
        %v641 = vld [vmem:[%s434 + $0x390] sm:$0xff]
        %v642 = vld [vmem:[%s434 + $0x398] sm:$0xff]
        %v643 = vld [vmem:[%s434 + $0x3a0] sm:$0xff]
        %v644 = vld [vmem:[%s434 + $0x3a8] sm:$0xff]
        %v645 = vld [vmem:[%s434 + $0x3b0] sm:$0xff]
        %v646 = vld [vmem:[%s434 + $0x3b8] sm:$0xff]
        %v647 = vld [vmem:[%s434 + $0x3c0] sm:$0xff]
        %v648 = vld [vmem:[%s434 + $0x3c8] sm:$0xff]
        %v649 = vld [vmem:[%s434 + $0x3d0] sm:$0xff]
        %v650 = vld [vmem:[%s434 + $0x3d8] sm:$0xff]
        %v651 = vld [vmem:[%s434 + $0x3e0] sm:$0xff]
        %v652 = vld [vmem:[%s434 + $0x3e8] sm:$0xff]
        %v653 = vld [vmem:[%s434 + $0x3f0] sm:$0xff]
        %v654 = vld [vmem:[%s434 + $0x3f8] sm:$0xff]
        %v655 = vld [vmem:[%s434 + $0x400] sm:$0xff]
        %v656 = vld [vmem:[%s434 + $0x408] sm:$0xff]
        %v657 = vld [vmem:[%s434 + $0x410] sm:$0xff]
        %v658 = vld [vmem:[%s434 + $0x418] sm:$0xff]
        %v659 = vld [vmem:[%s434 + $0x420] sm:$0xff]
        %v660 = vld [vmem:[%s434 + $0x428] sm:$0xff]
        %v661 = vld [vmem:[%s434 + $0x430] sm:$0xff]
        %v662 = vld [vmem:[%s434 + $0x438] sm:$0xff]
        %v663 = vld [vmem:[%s434 + $0x440] sm:$0xff]
        %v664 = vld [vmem:[%s434 + $0x448] sm:$0xff]
        %v665 = vld [vmem:[%s434 + $0x450] sm:$0xff]
        %v666 = vld [vmem:[%s434 + $0x458] sm:$0xff]
        %v667 = vld [vmem:[%s434 + $0x460] sm:$0xff]
        %v668 = vld [vmem:[%s434 + $0x468] sm:$0xff]
        %v669 = vld [vmem:[%s434 + $0x470] sm:$0xff]
        %v670 = vld [vmem:[%s434 + $0x478] sm:$0xff]
        %v671 = vld [vmem:[%s434 + $0x480] sm:$0xff]
        %v672 = vld [vmem:[%s434 + $0x488] sm:$0xff]
        %v673 = vld [vmem:[%s434 + $0x490] sm:$0xff]
        %v674 = vld [vmem:[%s434 + $0x498] sm:$0xff]
        %v675 = vld [vmem:[%s434 + $0x4a0] sm:$0xff]
        %v676 = vld [vmem:[%s434 + $0x4a8] sm:$0xff]
        %v677 = vld [vmem:[%s434 + $0x4b0] sm:$0xff]
        %v678 = vld [vmem:[%s434 + $0x4b8] sm:$0xff]
        %v679 = vld [vmem:[%s434 + $0x4c0] sm:$0xff]
        %v680 = vld [vmem:[%s434 + $0x4c8] sm:$0xff]
        %v681 = vld [vmem:[%s434 + $0x4d0] sm:$0xff]
        %v682 = vld [vmem:[%s434 + $0x4d8] sm:$0xff]
        %v683 = vld [vmem:[%s434 + $0x4e0] sm:$0xff]
        %v684 = vld [vmem:[%s434 + $0x4e8] sm:$0xff]
        %v685 = vld [vmem:[%s434 + $0x4f0] sm:$0xff]
        %v686 = vld [vmem:[%s434 + $0x4f8] sm:$0xff]
        %v687 = vld [vmem:[%s434 + $0x500] sm:$0xff]
        %v688 = vld [vmem:[%s434 + $0x508] sm:$0xff]
        %v689 = vld [vmem:[%s434 + $0x510] sm:$0xff]
        %v690 = vld [vmem:[%s434 + $0x518] sm:$0xff]
        %v691 = vld [vmem:[%s434 + $0x520] sm:$0xff]
        %v692 = vld [vmem:[%s434 + $0x528] sm:$0xff]
        %v693 = vld [vmem:[%s434 + $0x530] sm:$0xff]
        %v694 = vld [vmem:[%s434 + $0x538] sm:$0xff]
        %v695 = vld [vmem:[%s434 + $0x540] sm:$0xff]
        %v696 = vld [vmem:[%s434 + $0x548] sm:$0xff]
        %v697 = vld [vmem:[%s434 + $0x550] sm:$0xff]
        %v698 = vld [vmem:[%s434 + $0x558] sm:$0xff]
        %v699 = vld [vmem:[%s434 + $0x560] sm:$0xff]
        %v700 = vld [vmem:[%s434 + $0x568] sm:$0xff]
        %v701 = vld [vmem:[%s434 + $0x570] sm:$0xff]
        %v702 = vld [vmem:[%s434 + $0x578] sm:$0xff]
        %v703 = vld [vmem:[%s434 + $0x580] sm:$0xff]
        %v704 = vld [vmem:[%s434 + $0x588] sm:$0xff]
        %v705 = vld [vmem:[%s434 + $0x590] sm:$0xff]
        %v706 = vld [vmem:[%s434 + $0x598] sm:$0xff]
        %v707 = vld [vmem:[%s434 + $0x5a0] sm:$0xff]
        %v708 = vld [vmem:[%s434 + $0x5a8] sm:$0xff]
        %v709 = vld [vmem:[%s434 + $0x5b0] sm:$0xff]
        %v710 = vld [vmem:[%s434 + $0x5b8] sm:$0xff]
        %v711 = vld [vmem:[%s434 + $0x5c0] sm:$0xff]
        %v712 = vld [vmem:[%s434 + $0x5c8] sm:$0xff]
        %v713 = vld [vmem:[%s434 + $0x5d0] sm:$0xff]
        %v714 = vld [vmem:[%s434 + $0x5d8] sm:$0xff]
        %v715 = vld [vmem:[%s434 + $0x5e0] sm:$0xff]
        %v716 = vld [vmem:[%s434 + $0x5e8] sm:$0xff]
        %v717 = vld [vmem:[%s434 + $0x5f0] sm:$0xff]
        %v718 = vld [vmem:[%s434 + $0x5f8] sm:$0xff]
        %v719 = vld [vmem:[%s434 + $0x600] sm:$0xff]
        %v720 = vld [vmem:[%s434 + $0x608] sm:$0xff]
        %v721 = vld [vmem:[%s434 + $0x610] sm:$0xff]
        %v722 = vld [vmem:[%s434 + $0x618] sm:$0xff]
        %v723 = vld [vmem:[%s434 + $0x620] sm:$0xff]
        %v724 = vld [vmem:[%s434 + $0x628] sm:$0xff]
        %v725 = vld [vmem:[%s434 + $0x630] sm:$0xff]
        %v726 = vld [vmem:[%s434 + $0x638] sm:$0xff]
        %v727 = vld [vmem:[%s434 + $0x640] sm:$0xff]
        %v728 = vld [vmem:[%s434 + $0x648] sm:$0xff]
        %v729 = vld [vmem:[%s434 + $0x650] sm:$0xff]
        %v730 = vld [vmem:[%s434 + $0x658] sm:$0xff]
        %v731 = vld [vmem:[%s434 + $0x660] sm:$0xff]
        %v732 = vld [vmem:[%s434 + $0x668] sm:$0xff]
        %v733 = vld [vmem:[%s434 + $0x670] sm:$0xff]
        %v734 = vld [vmem:[%s434 + $0x678] sm:$0xff]
        %v735 = vld [vmem:[%s434 + $0x680] sm:$0xff]
        %v736 = vld [vmem:[%s434 + $0x688] sm:$0xff]
        %v737 = vld [vmem:[%s434 + $0x690] sm:$0xff]
        %v738 = vld [vmem:[%s434 + $0x698] sm:$0xff]
        %v739 = vld [vmem:[%s434 + $0x6a0] sm:$0xff]
        %v740 = vld [vmem:[%s434 + $0x6a8] sm:$0xff]
        %v741 = vld [vmem:[%s434 + $0x6b0] sm:$0xff]
        %v742 = vld [vmem:[%s434 + $0x6b8] sm:$0xff]
        %v743 = vld [vmem:[%s434 + $0x6c0] sm:$0xff]
        %v744 = vld [vmem:[%s434 + $0x6c8] sm:$0xff]
        %v745 = vld [vmem:[%s434 + $0x6d0] sm:$0xff]
        %v746 = vld [vmem:[%s434 + $0x6d8] sm:$0xff]
        %v747 = vld [vmem:[%s434 + $0x6e0] sm:$0xff]
        %v748 = vld [vmem:[%s434 + $0x6e8] sm:$0xff]
        %v749 = vld [vmem:[%s434 + $0x6f0] sm:$0xff]
        %v750 = vld [vmem:[%s434 + $0x6f8] sm:$0xff]
        %v751 = vld [vmem:[%s434 + $0x700] sm:$0xff]
        %v752 = vld [vmem:[%s434 + $0x708] sm:$0xff]
        %v753 = vld [vmem:[%s434 + $0x710] sm:$0xff]
        %v754 = vld [vmem:[%s434 + $0x718] sm:$0xff]
        %v755 = vld [vmem:[%s434 + $0x720] sm:$0xff]
        %v756 = vld [vmem:[%s434 + $0x728] sm:$0xff]
        %v757 = vld [vmem:[%s434 + $0x730] sm:$0xff]
        %v758 = vld [vmem:[%s434 + $0x738] sm:$0xff]
        %v759 = vld [vmem:[%s434 + $0x740] sm:$0xff]
        %v760 = vld [vmem:[%s434 + $0x748] sm:$0xff]
        %v761 = vld [vmem:[%s434 + $0x750] sm:$0xff]
        %v762 = vld [vmem:[%s434 + $0x758] sm:$0xff]
        %v763 = vld [vmem:[%s434 + $0x760] sm:$0xff]
        %v764 = vld [vmem:[%s434 + $0x768] sm:$0xff]
        %v765 = vld [vmem:[%s434 + $0x770] sm:$0xff]
        %v766 = vld [vmem:[%s434 + $0x778] sm:$0xff]
        %v767 = vld [vmem:[%s434 + $0x780] sm:$0xff]
        %v768 = vld [vmem:[%s434 + $0x788] sm:$0xff]
        %v769 = vld [vmem:[%s434 + $0x790] sm:$0xff]
        %v770 = vld [vmem:[%s434 + $0x798] sm:$0xff]
        %v771 = vld [vmem:[%s434 + $0x7a0] sm:$0xff]
        %v772 = vld [vmem:[%s434 + $0x7a8] sm:$0xff]
        %v773 = vld [vmem:[%s434 + $0x7b0] sm:$0xff]
        %v774 = vld [vmem:[%s434 + $0x7b8] sm:$0xff]
        %v775 = vld [vmem:[%s434 + $0x7c0] sm:$0xff]
        %v776 = vld [vmem:[%s434 + $0x7c8] sm:$0xff]
        %v777 = vld [vmem:[%s434 + $0x7d0] sm:$0xff]
        %v778 = vld [vmem:[%s434 + $0x7d8] sm:$0xff]
        %v779 = vld [vmem:[%s434 + $0x7e0] sm:$0xff]
        %v780 = vld [vmem:[%s434 + $0x7e8] sm:$0xff]
        %v781 = vld [vmem:[%s434 + $0x7f0] sm:$0xff]
        %v782 = vld [vmem:[%s434 + $0x7f8] sm:$0xff]
        %v783 = vld [vmem:[%s434 + $0x800] sm:$0xff]
        %v784 = vld [vmem:[%s434 + $0x808] sm:$0xff]
        %v785 = vld [vmem:[%s434 + $0x810] sm:$0xff]
        %v786 = vld [vmem:[%s434 + $0x818] sm:$0xff]
        %v787 = vld [vmem:[%s434 + $0x820] sm:$0xff]
        %v788 = vld [vmem:[%s434 + $0x828] sm:$0xff]
        %v789 = vld [vmem:[%s434 + $0x830] sm:$0xff]
        %v790 = vld [vmem:[%s434 + $0x838] sm:$0xff]
        %v791 = vld [vmem:[%s434 + $0x840] sm:$0xff]
        %v792 = vld [vmem:[%s434 + $0x848] sm:$0xff]
        %v793 = vld [vmem:[%s434 + $0x850] sm:$0xff]
        %v794 = vld [vmem:[%s434 + $0x858] sm:$0xff]
        %v795 = vld [vmem:[%s434 + $0x860] sm:$0xff]
        %v796 = vld [vmem:[%s434 + $0x868] sm:$0xff]
        %v797 = vld [vmem:[%s434 + $0x870] sm:$0xff]
        %v798 = vld [vmem:[%s434 + $0x878] sm:$0xff]
        %v799 = vld [vmem:[%s434 + $0x880] sm:$0xff]
        %v800 = vld [vmem:[%s434 + $0x888] sm:$0xff]
        %v801 = vld [vmem:[%s434 + $0x890] sm:$0xff]
        %v802 = vld [vmem:[%s434 + $0x898] sm:$0xff]
        %v803 = vld [vmem:[%s434 + $0x8a0] sm:$0xff]
        %v804 = vld [vmem:[%s434 + $0x8a8] sm:$0xff]
        %v805 = vld [vmem:[%s434 + $0x8b0] sm:$0xff]
        %v806 = vld [vmem:[%s434 + $0x8b8] sm:$0xff]
        %v807 = vld [vmem:[%s434 + $0x8c0] sm:$0xff]
        %v808 = vld [vmem:[%s434 + $0x8c8] sm:$0xff]
        %v809 = vld [vmem:[%s434 + $0x8d0] sm:$0xff]
        %v810 = vld [vmem:[%s434 + $0x8d8] sm:$0xff]
        %v811 = vld [vmem:[%s434 + $0x8e0] sm:$0xff]
        %v812 = vld [vmem:[%s434 + $0x8e8] sm:$0xff]
        %v813 = vld [vmem:[%s434 + $0x8f0] sm:$0xff]
        %v814 = vld [vmem:[%s434 + $0x8f8] sm:$0xff]
        %v815 = vld [vmem:[%s434 + $0x900] sm:$0xff]
        %v816 = vld [vmem:[%s434 + $0x908] sm:$0xff]
        %v817 = vld [vmem:[%s434 + $0x910] sm:$0xff]
        %v818 = vld [vmem:[%s434 + $0x918] sm:$0xff]
        %v819 = vld [vmem:[%s434 + $0x920] sm:$0xff]
        %v820 = vld [vmem:[%s434 + $0x928] sm:$0xff]
        %v821 = vld [vmem:[%s434 + $0x930] sm:$0xff]
        %v822 = vld [vmem:[%s434 + $0x938] sm:$0xff]
        %v823 = vld [vmem:[%s434 + $0x940] sm:$0xff]
        %v824 = vld [vmem:[%s434 + $0x948] sm:$0xff]
        %v825 = vld [vmem:[%s434 + $0x950] sm:$0xff]
        %v826 = vld [vmem:[%s434 + $0x958] sm:$0xff]
        %v827 = vld [vmem:[%s434 + $0x960] sm:$0xff]
        %v828 = vld [vmem:[%s434 + $0x968] sm:$0xff]
        %v829 = vld [vmem:[%s434 + $0x970] sm:$0xff]
        %v830 = vld [vmem:[%s434 + $0x978] sm:$0xff]
        %v831 = vld [vmem:[%s434 + $0x980] sm:$0xff]
        %v832 = vld [vmem:[%s434 + $0x988] sm:$0xff]
        %v833 = vld [vmem:[%s434 + $0x990] sm:$0xff]
        %v834 = vld [vmem:[%s434 + $0x998] sm:$0xff]
        %v835 = vld [vmem:[%s434 + $0x9a0] sm:$0xff]
        %v836 = vld [vmem:[%s434 + $0x9a8] sm:$0xff]
        %v837 = vld [vmem:[%s434 + $0x9b0] sm:$0xff]
        %v838 = vld [vmem:[%s434 + $0x9b8] sm:$0xff]
        %v839 = vld [vmem:[%s434 + $0x9c0] sm:$0xff]
        %v840 = vld [vmem:[%s434 + $0x9c8] sm:$0xff]
        %v841 = vld [vmem:[%s434 + $0x9d0] sm:$0xff]
        %v842 = vld [vmem:[%s434 + $0x9d8] sm:$0xff]
        %v843 = vld [vmem:[%s434 + $0x9e0] sm:$0xff]
        %v844 = vld [vmem:[%s434 + $0x9e8] sm:$0xff]
        %v845 = vld [vmem:[%s434 + $0x9f0] sm:$0xff]
        %v846 = vld [vmem:[%s434 + $0x9f8] sm:$0xff]
        %v847 = vld [vmem:[%s434 + $0xa00] sm:$0xff]
        %v848 = vld [vmem:[%s434 + $0xa08] sm:$0xff]
        %v849 = vld [vmem:[%s434 + $0xa10] sm:$0xff]
        %v850 = vld [vmem:[%s434 + $0xa18] sm:$0xff]
        %v851 = vld [vmem:[%s434 + $0xa20] sm:$0xff]
        %v852 = vld [vmem:[%s434 + $0xa28] sm:$0xff]
        %v853 = vld [vmem:[%s434 + $0xa30] sm:$0xff]
        %v854 = vld [vmem:[%s434 + $0xa38] sm:$0xff]
        %v855 = vld [vmem:[%s434 + $0xa40] sm:$0xff]
        %v856 = vld [vmem:[%s434 + $0xa48] sm:$0xff]
        %v857 = vld [vmem:[%s434 + $0xa50] sm:$0xff]
        %v858 = vld [vmem:[%s434 + $0xa58] sm:$0xff]
        %v859 = vld [vmem:[%s434 + $0xa60] sm:$0xff]
        %v860 = vld [vmem:[%s434 + $0xa68] sm:$0xff]
        %v861 = vld [vmem:[%s434 + $0xa70] sm:$0xff]
        %v862 = vld [vmem:[%s434 + $0xa78] sm:$0xff]
        %v863 = vld [vmem:[%s434 + $0xa80] sm:$0xff]
        %v864 = vld [vmem:[%s434 + $0xa88] sm:$0xff]
        %v865 = vld [vmem:[%s434 + $0xa90] sm:$0xff]
        %v866 = vld [vmem:[%s434 + $0xa98] sm:$0xff]
        %v867 = vld [vmem:[%s434 + $0xaa0] sm:$0xff]
        %v868 = vld [vmem:[%s434 + $0xaa8] sm:$0xff]
        %v869 = vld [vmem:[%s434 + $0xab0] sm:$0xff]
        %v870 = vld [vmem:[%s434 + $0xab8] sm:$0xff]
        %v871 = vld [vmem:[%s434 + $0xac0] sm:$0xff]
        %v872 = vld [vmem:[%s434 + $0xac8] sm:$0xff]
        %v873 = vld [vmem:[%s434 + $0xad0] sm:$0xff]
        %v874 = vld [vmem:[%s434 + $0xad8] sm:$0xff]
        %v875 = vld [vmem:[%s434 + $0xae0] sm:$0xff]
        %v876 = vld [vmem:[%s434 + $0xae8] sm:$0xff]
        %v877 = vld [vmem:[%s434 + $0xaf0] sm:$0xff]
        %v878 = vld [vmem:[%s434 + $0xaf8] sm:$0xff]
        %v879 = vld [vmem:[%s434 + $0xb00] sm:$0xff]
        %v880 = vld [vmem:[%s434 + $0xb08] sm:$0xff]
        %v881 = vld [vmem:[%s434 + $0xb10] sm:$0xff]
        %v882 = vld [vmem:[%s434 + $0xb18] sm:$0xff]
        %v883 = vld [vmem:[%s434 + $0xb20] sm:$0xff]
        %v884 = vld [vmem:[%s434 + $0xb28] sm:$0xff]
        %v885 = vld [vmem:[%s434 + $0xb30] sm:$0xff]
        %v886 = vld [vmem:[%s434 + $0xb38] sm:$0xff]
        %v887 = vld [vmem:[%s434 + $0xb40] sm:$0xff]
        %v888 = vld [vmem:[%s434 + $0xb48] sm:$0xff]
        %v889 = vld [vmem:[%s434 + $0xb50] sm:$0xff]
        %v890 = vld [vmem:[%s434 + $0xb58] sm:$0xff]
        %v891 = vld [vmem:[%s434 + $0xb60] sm:$0xff]
        %v892 = vld [vmem:[%s434 + $0xb68] sm:$0xff]
        %v893 = vld [vmem:[%s434 + $0xb70] sm:$0xff]
        %v894 = vld [vmem:[%s434 + $0xb78] sm:$0xff]
        %v895 = vld [vmem:[%s434 + $0xb80] sm:$0xff]
        %v896 = vld [vmem:[%s434 + $0xb88] sm:$0xff]
        %v897 = vld [vmem:[%s434 + $0xb90] sm:$0xff]
        %v898 = vld [vmem:[%s434 + $0xb98] sm:$0xff]
        %v899 = vld [vmem:[%s434 + $0xba0] sm:$0xff]
        %v900 = vld [vmem:[%s434 + $0xba8] sm:$0xff]
        %v901 = vld [vmem:[%s434 + $0xbb0] sm:$0xff]
        %v902 = vld [vmem:[%s434 + $0xbb8] sm:$0xff]
        %v903 = vld [vmem:[%s434 + $0xbc0] sm:$0xff]
        %v904 = vld [vmem:[%s434 + $0xbc8] sm:$0xff]
        %v905 = vld [vmem:[%s434 + $0xbd0] sm:$0xff]
        %v906 = vld [vmem:[%s434 + $0xbd8] sm:$0xff]
        %v907 = vld [vmem:[%s434 + $0xbe0] sm:$0xff]
        %v908 = vld [vmem:[%s434 + $0xbe8] sm:$0xff]
        %v909 = vld [vmem:[%s434 + $0xbf0] sm:$0xff]
        %v910 = vld [vmem:[%s434 + $0xbf8] sm:$0xff]
        %v911 = vld [vmem:[%s434 + $0xc00] sm:$0xff]
        %v912 = vld [vmem:[%s434 + $0xc08] sm:$0xff]
        %v913 = vld [vmem:[%s434 + $0xc10] sm:$0xff]
        %v914 = vld [vmem:[%s434 + $0xc18] sm:$0xff]
        %v915 = vld [vmem:[%s434 + $0xc20] sm:$0xff]
        %v916 = vld [vmem:[%s434 + $0xc28] sm:$0xff]
        %v917 = vld [vmem:[%s434 + $0xc30] sm:$0xff]
        %v918 = vld [vmem:[%s434 + $0xc38] sm:$0xff]
        %v919 = vld [vmem:[%s434 + $0xc40] sm:$0xff]
        %v920 = vld [vmem:[%s434 + $0xc48] sm:$0xff]
        %v921 = vld [vmem:[%s434 + $0xc50] sm:$0xff]
        %v922 = vld [vmem:[%s434 + $0xc58] sm:$0xff]
        %v923 = vld [vmem:[%s434 + $0xc60] sm:$0xff]
        %v924 = vld [vmem:[%s434 + $0xc68] sm:$0xff]
        %v925 = vld [vmem:[%s434 + $0xc70] sm:$0xff]
        %v926 = vld [vmem:[%s434 + $0xc78] sm:$0xff]
        %v927 = vld [vmem:[%s434 + $0xc80] sm:$0xff]
        %v928 = vld [vmem:[%s434 + $0xc88] sm:$0xff]
        %v929 = vld [vmem:[%s434 + $0xc90] sm:$0xff]
        %v930 = vld [vmem:[%s434 + $0xc98] sm:$0xff]
        %v931 = vld [vmem:[%s434 + $0xca0] sm:$0xff]
        %v932 = vld [vmem:[%s434 + $0xca8] sm:$0xff]
        %v933 = vld [vmem:[%s434 + $0xcb0] sm:$0xff]
        %v934 = vld [vmem:[%s434 + $0xcb8] sm:$0xff]
        %v935 = vld [vmem:[%s434 + $0xcc0] sm:$0xff]
        %v936 = vld [vmem:[%s434 + $0xcc8] sm:$0xff]
        %v937 = vld [vmem:[%s434 + $0xcd0] sm:$0xff]
        %v938 = vld [vmem:[%s434 + $0xcd8] sm:$0xff]
        %v939 = vld [vmem:[%s434 + $0xce0] sm:$0xff]
        %v940 = vld [vmem:[%s434 + $0xce8] sm:$0xff]
        %v941 = vld [vmem:[%s434 + $0xcf0] sm:$0xff]
        %v942 = vld [vmem:[%s434 + $0xcf8] sm:$0xff]
        %v943 = vld [vmem:[%s434 + $0xd00] sm:$0xff]
        %v944 = vld [vmem:[%s434 + $0xd08] sm:$0xff]
        %v945 = vld [vmem:[%s434 + $0xd10] sm:$0xff]
        %v946 = vld [vmem:[%s434 + $0xd18] sm:$0xff]
        %v947 = vld [vmem:[%s434 + $0xd20] sm:$0xff]
        %v948 = vld [vmem:[%s434 + $0xd28] sm:$0xff]
        %v949 = vld [vmem:[%s434 + $0xd30] sm:$0xff]
        %v950 = vld [vmem:[%s434 + $0xd38] sm:$0xff]
        %v951 = vld [vmem:[%s434 + $0xd40] sm:$0xff]
        %v952 = vld [vmem:[%s434 + $0xd48] sm:$0xff]
        %v953 = vld [vmem:[%s434 + $0xd50] sm:$0xff]
        %v954 = vld [vmem:[%s434 + $0xd58] sm:$0xff]
        %v955 = vld [vmem:[%s434 + $0xd60] sm:$0xff]
        %v956 = vld [vmem:[%s434 + $0xd68] sm:$0xff]
        %v957 = vld [vmem:[%s434 + $0xd70] sm:$0xff]
        %v958 = vld [vmem:[%s434 + $0xd78] sm:$0xff]
        %v959 = vld [vmem:[%s434 + $0xd80] sm:$0xff]
        %v960 = vld [vmem:[%s434 + $0xd88] sm:$0xff]
        %v961 = vld [vmem:[%s434 + $0xd90] sm:$0xff]
        %v962 = vld [vmem:[%s434 + $0xd98] sm:$0xff]
        %v963 = vld [vmem:[%s434 + $0xda0] sm:$0xff]
        %v964 = vld [vmem:[%s434 + $0xda8] sm:$0xff]
        %v965 = vld [vmem:[%s434 + $0xdb0] sm:$0xff]
        %v966 = vld [vmem:[%s434 + $0xdb8] sm:$0xff]
        %v967 = vld [vmem:[%s434 + $0xdc0] sm:$0xff]
        %v968 = vld [vmem:[%s434 + $0xdc8] sm:$0xff]
        %v969 = vld [vmem:[%s434 + $0xdd0] sm:$0xff]
        %v970 = vld [vmem:[%s434 + $0xdd8] sm:$0xff]
        %v971 = vld [vmem:[%s434 + $0xde0] sm:$0xff]
        %v972 = vld [vmem:[%s434 + $0xde8] sm:$0xff]
        %v973 = vld [vmem:[%s434 + $0xdf0] sm:$0xff]
        %v974 = vld [vmem:[%s434 + $0xdf8] sm:$0xff]
        %v975 = vld [vmem:[%s434 + $0xe00] sm:$0xff]
        %v976 = vld [vmem:[%s434 + $0xe08] sm:$0xff]
        %v977 = vld [vmem:[%s434 + $0xe10] sm:$0xff]
        %v978 = vld [vmem:[%s434 + $0xe18] sm:$0xff]
        %v979 = vld [vmem:[%s434 + $0xe20] sm:$0xff]
        %v980 = vld [vmem:[%s434 + $0xe28] sm:$0xff]
        %v981 = vld [vmem:[%s434 + $0xe30] sm:$0xff]
        %v982 = vld [vmem:[%s434 + $0xe38] sm:$0xff]
        %v983 = vld [vmem:[%s434 + $0xe40] sm:$0xff]
        %v984 = vld [vmem:[%s434 + $0xe48] sm:$0xff]
        %v985 = vld [vmem:[%s434 + $0xe50] sm:$0xff]
        %v986 = vld [vmem:[%s434 + $0xe58] sm:$0xff]
        %v987 = vld [vmem:[%s434 + $0xe60] sm:$0xff]
        %v988 = vld [vmem:[%s434 + $0xe68] sm:$0xff]
        %v989 = vld [vmem:[%s434 + $0xe70] sm:$0xff]
        %v990 = vld [vmem:[%s434 + $0xe78] sm:$0xff]
        %v991 = vld [vmem:[%s434 + $0xe80] sm:$0xff]
        %v992 = vld [vmem:[%s434 + $0xe88] sm:$0xff]
        %v993 = vld [vmem:[%s434 + $0xe90] sm:$0xff]
        %v994 = vld [vmem:[%s434 + $0xe98] sm:$0xff]
        %v995 = vld [vmem:[%s434 + $0xea0] sm:$0xff]
        %v996 = vld [vmem:[%s434 + $0xea8] sm:$0xff]
        %v997 = vld [vmem:[%s434 + $0xeb0] sm:$0xff]
        %v998 = vld [vmem:[%s434 + $0xeb8] sm:$0xff]
        %v999 = vld [vmem:[%s434 + $0xec0] sm:$0xff]
        %v1000 = vld [vmem:[%s434 + $0xec8] sm:$0xff]
        %v1001 = vld [vmem:[%s434 + $0xed0] sm:$0xff]
        %v1002 = vld [vmem:[%s434 + $0xed8] sm:$0xff]
        %v1003 = vld [vmem:[%s434 + $0xee0] sm:$0xff]
        %v1004 = vld [vmem:[%s434 + $0xee8] sm:$0xff]
        %v1005 = vld [vmem:[%s434 + $0xef0] sm:$0xff]
        %v1006 = vld [vmem:[%s434 + $0xef8] sm:$0xff]
        %v1007 = vld [vmem:[%s434 + $0xf00] sm:$0xff]
        %v1008 = vld [vmem:[%s434 + $0xf08] sm:$0xff]
        %v1009 = vld [vmem:[%s434 + $0xf10] sm:$0xff]
        %v1010 = vld [vmem:[%s434 + $0xf18] sm:$0xff]
        %v1011 = vld [vmem:[%s434 + $0xf20] sm:$0xff]
        %v1012 = vld [vmem:[%s434 + $0xf28] sm:$0xff]
        %v1013 = vld [vmem:[%s434 + $0xf30] sm:$0xff]
        %v1014 = vld [vmem:[%s434 + $0xf38] sm:$0xff]
        %v1015 = vld [vmem:[%s434 + $0xf40] sm:$0xff]
        %v1016 = vld [vmem:[%s434 + $0xf48] sm:$0xff]
        %v1017 = vld [vmem:[%s434 + $0xf50] sm:$0xff]
        %v1018 = vld [vmem:[%s434 + $0xf58] sm:$0xff]
        %v1019 = vld [vmem:[%s434 + $0xf60] sm:$0xff]
        %v1020 = vld [vmem:[%s434 + $0xf68] sm:$0xff]
        %v1021 = vld [vmem:[%s434 + $0xf70] sm:$0xff]
        %v1022 = vld [vmem:[%s434 + $0xf78] sm:$0xff]
        %v1023 = vld [vmem:[%s434 + $0xf80] sm:$0xff]
        %v1024 = vld [vmem:[%s434 + $0xf88] sm:$0xff]
        %v1025 = vld [vmem:[%s434 + $0xf90] sm:$0xff]
        %v1026 = vld [vmem:[%s434 + $0xf98] sm:$0xff]
        %v1027 = vld [vmem:[%s434 + $0xfa0] sm:$0xff]
        %v1028 = vld [vmem:[%s434 + $0xfa8] sm:$0xff]
        %v1029 = vld [vmem:[%s434 + $0xfb0] sm:$0xff]
        %v1030 = vld [vmem:[%s434 + $0xfb8] sm:$0xff]
        %v1031 = vld [vmem:[%s434 + $0xfc0] sm:$0xff]
        %v1032 = vld [vmem:[%s434 + $0xfc8] sm:$0xff]
        %v1033 = vld [vmem:[%s434 + $0xfd0] sm:$0xff]
        %v1034 = vld [vmem:[%s434 + $0xfd8] sm:$0xff]
        %v1035 = vld [vmem:[%s434 + $0xfe0] sm:$0xff]
        %v1036 = vld [vmem:[%s434 + $0xfe8] sm:$0xff]
        %v1037 = vld [vmem:[%s434 + $0xff0] sm:$0xff]
        %v1038 = vld [vmem:[%s434 + $0xff8] sm:$0xff]
        %v1039 = vld [vmem:[%s434 + $0x1000] sm:$0xff]
        %v1040 = vld [vmem:[%s434 + $0x1008] sm:$0xff]
        %v1041 = vld [vmem:[%s434 + $0x1010] sm:$0xff]
        %v1042 = vld [vmem:[%s434 + $0x1018] sm:$0xff]
        %v1043 = vld [vmem:[%s434 + $0x1020] sm:$0xff]
        %v1044 = vld [vmem:[%s434 + $0x1028] sm:$0xff]
        %v1045 = vld [vmem:[%s434 + $0x1030] sm:$0xff]
        %v1046 = vld [vmem:[%s434 + $0x1038] sm:$0xff]
        %v1047 = vld [vmem:[%s434 + $0x1040] sm:$0xff]
        %v1048 = vld [vmem:[%s434 + $0x1048] sm:$0xff]
        %v1049 = vld [vmem:[%s434 + $0x1050] sm:$0xff]
        %v1050 = vld [vmem:[%s434 + $0x1058] sm:$0xff]
        %v1051 = vld [vmem:[%s434 + $0x1060] sm:$0xff]
        %v1052 = vld [vmem:[%s434 + $0x1068] sm:$0xff]
        %v1053 = vld [vmem:[%s434 + $0x1070] sm:$0xff]
        %v1054 = vld [vmem:[%s434 + $0x1078] sm:$0xff]
        %v1055 = vld [vmem:[%s434 + $0x1080] sm:$0xff]
        %v1056 = vld [vmem:[%s434 + $0x1088] sm:$0xff]
        %v1057 = vld [vmem:[%s434 + $0x1090] sm:$0xff]
        %v1058 = vld [vmem:[%s434 + $0x1098] sm:$0xff]
        %v1059 = vld [vmem:[%s434 + $0x10a0] sm:$0xff]
        %v1060 = vld [vmem:[%s434 + $0x10a8] sm:$0xff]
        %v1061 = vld [vmem:[%s434 + $0x10b0] sm:$0xff]
        %v1062 = vld [vmem:[%s434 + $0x10b8] sm:$0xff]
        %v1063 = vld [vmem:[%s434 + $0x10c0] sm:$0xff]
        %v1064 = vld [vmem:[%s434 + $0x10c8] sm:$0xff]
        %v1065 = vld [vmem:[%s434 + $0x10d0] sm:$0xff]
        %v1066 = vld [vmem:[%s434 + $0x10d8] sm:$0xff]
        %v1067 = vld [vmem:[%s434 + $0x10e0] sm:$0xff]
        %v1068 = vld [vmem:[%s434 + $0x10e8] sm:$0xff]
        %v1069 = vld [vmem:[%s434 + $0x10f0] sm:$0xff]
        %v1070 = vld [vmem:[%s434 + $0x10f8] sm:$0xff]
        %v1071 = vld [vmem:[%s434 + $0x1100] sm:$0xff]
        %v1072 = vld [vmem:[%s434 + $0x1108] sm:$0xff]
        %v1073 = vld [vmem:[%s434 + $0x1110] sm:$0xff]
        %v1074 = vld [vmem:[%s434 + $0x1118] sm:$0xff]
        %v1075 = vld [vmem:[%s434 + $0x1120] sm:$0xff]
        %v1076 = vld [vmem:[%s434 + $0x1128] sm:$0xff]
        %v1077 = vld [vmem:[%s434 + $0x1130] sm:$0xff]
        %v1078 = vld [vmem:[%s434 + $0x1138] sm:$0xff]
        %v1079 = vld [vmem:[%s434 + $0x1140] sm:$0xff]
        %v1080 = vld [vmem:[%s434 + $0x1148] sm:$0xff]
        %v1081 = vld [vmem:[%s434 + $0x1150] sm:$0xff]
        %v1082 = vld [vmem:[%s434 + $0x1158] sm:$0xff]
        %v1083 = vld [vmem:[%s434 + $0x1160] sm:$0xff]
        %v1084 = vld [vmem:[%s434 + $0x1168] sm:$0xff]
        %v1085 = vld [vmem:[%s434 + $0x1170] sm:$0xff]
        %v1086 = vld [vmem:[%s434 + $0x1178] sm:$0xff]
        %v1087 = vld [vmem:[%s434 + $0x1180] sm:$0xff]
        %v1088 = vld [vmem:[%s434 + $0x1188] sm:$0xff]
        %v1089 = vld [vmem:[%s434 + $0x1190] sm:$0xff]
        %v1090 = vld [vmem:[%s434 + $0x1198] sm:$0xff]
        %v1091 = vld [vmem:[%s434 + $0x11a0] sm:$0xff]
        %v1092 = vld [vmem:[%s434 + $0x11a8] sm:$0xff]
        %v1093 = vld [vmem:[%s434 + $0x11b0] sm:$0xff]
        %v1094 = vld [vmem:[%s434 + $0x11b8] sm:$0xff]
        %v1095 = vld [vmem:[%s434 + $0x11c0] sm:$0xff]
        %v1096 = vld [vmem:[%s434 + $0x11c8] sm:$0xff]
        %v1097 = vld [vmem:[%s434 + $0x11d0] sm:$0xff]
        %v1098 = vld [vmem:[%s434 + $0x11d8] sm:$0xff]
        %v1099 = vld [vmem:[%s434 + $0x11e0] sm:$0xff]
        %v1100 = vld [vmem:[%s434 + $0x11e8] sm:$0xff]
        %v1101 = vld [vmem:[%s434 + $0x11f0] sm:$0xff]
        %v1102 = vld [vmem:[%s434 + $0x11f8] sm:$0xff]
        %v1103 = vld [vmem:[%s434 + $0x1200] sm:$0xff]
        %v1104 = vld [vmem:[%s434 + $0x1208] sm:$0xff]
        %v1105 = vld [vmem:[%s434 + $0x1210] sm:$0xff]
        %v1106 = vld [vmem:[%s434 + $0x1218] sm:$0xff]
        %v1107 = vld [vmem:[%s434 + $0x1220] sm:$0xff]
        %v1108 = vld [vmem:[%s434 + $0x1228] sm:$0xff]
        %v1109 = vld [vmem:[%s434 + $0x1230] sm:$0xff]
        %v1110 = vld [vmem:[%s434 + $0x1238] sm:$0xff]
        %v1111 = vld [vmem:[%s434 + $0x1240] sm:$0xff]
        %v1112 = vld [vmem:[%s434 + $0x1248] sm:$0xff]
        %v1113 = vld [vmem:[%s434 + $0x1250] sm:$0xff]
        %v1114 = vld [vmem:[%s434 + $0x1258] sm:$0xff]
        %v1115 = vld [vmem:[%s434 + $0x1260] sm:$0xff]
        %v1116 = vld [vmem:[%s434 + $0x1268] sm:$0xff]
        %v1117 = vld [vmem:[%s434 + $0x1270] sm:$0xff]
        %v1118 = vld [vmem:[%s434 + $0x1278] sm:$0xff]
        %v1119 = vld [vmem:[%s434 + $0x1280] sm:$0xff]
        %v1120 = vld [vmem:[%s434 + $0x1288] sm:$0xff]
        %v1121 = vld [vmem:[%s434 + $0x1290] sm:$0xff]
        %v1122 = vld [vmem:[%s434 + $0x1298] sm:$0xff]
        %v1123 = vld [vmem:[%s434 + $0x12a0] sm:$0xff]
        %v1124 = vld [vmem:[%s434 + $0x12a8] sm:$0xff]
        %v1125 = vld [vmem:[%s434 + $0x12b0] sm:$0xff]
        %v1126 = vld [vmem:[%s434 + $0x12b8] sm:$0xff]
        %v1127 = vld [vmem:[%s434 + $0x12c0] sm:$0xff]
        %v1128 = vld [vmem:[%s434 + $0x12c8] sm:$0xff]
        %v1129 = vld [vmem:[%s434 + $0x12d0] sm:$0xff]
        %v1130 = vld [vmem:[%s434 + $0x12d8] sm:$0xff]
        %v1131 = vld [vmem:[%s434 + $0x12e0] sm:$0xff]
        %v1132 = vld [vmem:[%s434 + $0x12e8] sm:$0xff]
        %v1133 = vld [vmem:[%s434 + $0x12f0] sm:$0xff]
        %v1134 = vld [vmem:[%s434 + $0x12f8] sm:$0xff]
        %v1135 = vld [vmem:[%s434 + $0x1300] sm:$0xff]
        %v1136 = vld [vmem:[%s434 + $0x1308] sm:$0xff]
        %v1137 = vld [vmem:[%s434 + $0x1310] sm:$0xff]
        %v1138 = vld [vmem:[%s434 + $0x1318] sm:$0xff]
        %v1139 = vld [vmem:[%s434 + $0x1320] sm:$0xff]
        %v1140 = vld [vmem:[%s434 + $0x1328] sm:$0xff]
        %v1141 = vld [vmem:[%s434 + $0x1330] sm:$0xff]
        %v1142 = vld [vmem:[%s434 + $0x1338] sm:$0xff]
        %v1143 = vld [vmem:[%s434 + $0x1340] sm:$0xff]
        %v1144 = vld [vmem:[%s434 + $0x1348] sm:$0xff]
        %v1145 = vld [vmem:[%s434 + $0x1350] sm:$0xff]
        %v1146 = vld [vmem:[%s434 + $0x1358] sm:$0xff]
        %v1147 = vld [vmem:[%s434 + $0x1360] sm:$0xff]
        %v1148 = vld [vmem:[%s434 + $0x1368] sm:$0xff]
        %v1149 = vld [vmem:[%s434 + $0x1370] sm:$0xff]
        %v1150 = vld [vmem:[%s434 + $0x1378] sm:$0xff]
        %v1151 = vld [vmem:[%s434 + $0x1380] sm:$0xff]
        %v1152 = vld [vmem:[%s434 + $0x1388] sm:$0xff]
        %v1153 = vld [vmem:[%s434 + $0x1390] sm:$0xff]
        %v1154 = vld [vmem:[%s434 + $0x1398] sm:$0xff]
        %v1155 = vld [vmem:[%s434 + $0x13a0] sm:$0xff]
        %v1156 = vld [vmem:[%s434 + $0x13a8] sm:$0xff]
        %v1157 = vld [vmem:[%s434 + $0x13b0] sm:$0xff]
        %v1158 = vld [vmem:[%s434 + $0x13b8] sm:$0xff]
        %v1159 = vld [vmem:[%s434 + $0x13c0] sm:$0xff]
        %v1160 = vld [vmem:[%s434 + $0x13c8] sm:$0xff]
        %v1161 = vld [vmem:[%s434 + $0x13d0] sm:$0xff]
        %v1162 = vld [vmem:[%s434 + $0x13d8] sm:$0xff]
        %v1163 = vld [vmem:[%s434 + $0x13e0] sm:$0xff]
        %v1164 = vld [vmem:[%s434 + $0x13e8] sm:$0xff]
        %v1165 = vld [vmem:[%s434 + $0x13f0] sm:$0xff]
        %v1166 = vld [vmem:[%s434 + $0x13f8] sm:$0xff]
        %v1167 = vld [vmem:[%s434 + $0x1400] sm:$0xff]
        %v1168 = vld [vmem:[%s434 + $0x1408] sm:$0xff]
        %v1169 = vld [vmem:[%s434 + $0x1410] sm:$0xff]
        %v1170 = vld [vmem:[%s434 + $0x1418] sm:$0xff]
        %v1171 = vld [vmem:[%s434 + $0x1420] sm:$0xff]
        %v1172 = vld [vmem:[%s434 + $0x1428] sm:$0xff]
        %v1173 = vld [vmem:[%s434 + $0x1430] sm:$0xff]
        %v1174 = vld [vmem:[%s434 + $0x1438] sm:$0xff]
        %v1175 = vld [vmem:[%s434 + $0x1440] sm:$0xff]
        %v1176 = vld [vmem:[%s434 + $0x1448] sm:$0xff]
        %v1177 = vld [vmem:[%s434 + $0x1450] sm:$0xff]
        %v1178 = vld [vmem:[%s434 + $0x1458] sm:$0xff]
        %v1179 = vld [vmem:[%s434 + $0x1460] sm:$0xff]
        %v1180 = vld [vmem:[%s434 + $0x1468] sm:$0xff]
        %v1181 = vld [vmem:[%s434 + $0x1470] sm:$0xff]
        %v1182 = vld [vmem:[%s434 + $0x1478] sm:$0xff]
        %v1183 = vld [vmem:[%s434 + $0x1480] sm:$0xff]
        %v1184 = vld [vmem:[%s434 + $0x1488] sm:$0xff]
        %v1185 = vld [vmem:[%s434 + $0x1490] sm:$0xff]
        %v1186 = vld [vmem:[%s434 + $0x1498] sm:$0xff]
        %v1187 = vld [vmem:[%s434 + $0x14a0] sm:$0xff]
        %v1188 = vld [vmem:[%s434 + $0x14a8] sm:$0xff]
        %v1189 = vld [vmem:[%s434 + $0x14b0] sm:$0xff]
        %v1190 = vld [vmem:[%s434 + $0x14b8] sm:$0xff]
        %v1191 = vld [vmem:[%s434 + $0x14c0] sm:$0xff]
        %v1192 = vld [vmem:[%s434 + $0x14c8] sm:$0xff]
        %v1193 = vld [vmem:[%s434 + $0x14d0] sm:$0xff]
        %v1194 = vld [vmem:[%s434 + $0x14d8] sm:$0xff]
        %v1195 = vld [vmem:[%s434 + $0x14e0] sm:$0xff]
        %v1196 = vld [vmem:[%s434 + $0x14e8] sm:$0xff]
        %v1197 = vld [vmem:[%s434 + $0x14f0] sm:$0xff]
        %v1198 = vld [vmem:[%s434 + $0x14f8] sm:$0xff]
        %v1199 = vld [vmem:[%s434 + $0x1500] sm:$0xff]
        %v1200 = vld [vmem:[%s434 + $0x1508] sm:$0xff]
        %v1201 = vld [vmem:[%s434 + $0x1510] sm:$0xff]
        %v1202 = vld [vmem:[%s434 + $0x1518] sm:$0xff]
        %v1203 = vld [vmem:[%s434 + $0x1520] sm:$0xff]
        %v1204 = vld [vmem:[%s434 + $0x1528] sm:$0xff]
        %v1205 = vld [vmem:[%s434 + $0x1530] sm:$0xff]
        %v1206 = vld [vmem:[%s434 + $0x1538] sm:$0xff]
        %v1207 = vld [vmem:[%s434 + $0x1540] sm:$0xff]
        %v1208 = vld [vmem:[%s434 + $0x1548] sm:$0xff]
        %v1209 = vld [vmem:[%s434 + $0x1550] sm:$0xff]
        %v1210 = vld [vmem:[%s434 + $0x1558] sm:$0xff]
        %v1211 = vld [vmem:[%s434 + $0x1560] sm:$0xff]
        %v1212 = vld [vmem:[%s434 + $0x1568] sm:$0xff]
        %v1213 = vld [vmem:[%s434 + $0x1570] sm:$0xff]
        %v1214 = vld [vmem:[%s434 + $0x1578] sm:$0xff]
        %v1215 = vld [vmem:[%s434 + $0x1580] sm:$0xff]
        %v1216 = vld [vmem:[%s434 + $0x1588] sm:$0xff]
        %v1217 = vld [vmem:[%s434 + $0x1590] sm:$0xff]
        %v1218 = vld [vmem:[%s434 + $0x1598] sm:$0xff]
        %v1219 = vld [vmem:[%s434 + $0x15a0] sm:$0xff]
        %v1220 = vld [vmem:[%s434 + $0x15a8] sm:$0xff]
        %v1221 = vld [vmem:[%s434 + $0x15b0] sm:$0xff]
        %v1222 = vld [vmem:[%s434 + $0x15b8] sm:$0xff]
        %v1223 = vld [vmem:[%s434 + $0x15c0] sm:$0xff]
        %v1224 = vld [vmem:[%s434 + $0x15c8] sm:$0xff]
        %v1225 = vld [vmem:[%s434 + $0x15d0] sm:$0xff]
        %v1226 = vld [vmem:[%s434 + $0x15d8] sm:$0xff]
        %v1227 = vld [vmem:[%s434 + $0x15e0] sm:$0xff]
        %v1228 = vld [vmem:[%s434 + $0x15e8] sm:$0xff]
        %v1229 = vld [vmem:[%s434 + $0x15f0] sm:$0xff]
        %v1230 = vld [vmem:[%s434 + $0x15f8] sm:$0xff]
        %v1231 = vld [vmem:[%s434 + $0x1600] sm:$0xff]
        %v1232 = vld [vmem:[%s434 + $0x1608] sm:$0xff]
        %v1233 = vld [vmem:[%s434 + $0x1610] sm:$0xff]
        %v1234 = vld [vmem:[%s434 + $0x1618] sm:$0xff]
        %v1235 = vld [vmem:[%s434 + $0x1620] sm:$0xff]
        %v1236 = vld [vmem:[%s434 + $0x1628] sm:$0xff]
        %v1237 = vld [vmem:[%s434 + $0x1630] sm:$0xff]
        %v1238 = vld [vmem:[%s434 + $0x1638] sm:$0xff]
        %v1239 = vld [vmem:[%s434 + $0x1640] sm:$0xff]
        %v1240 = vld [vmem:[%s434 + $0x1648] sm:$0xff]
        %v1241 = vld [vmem:[%s434 + $0x1650] sm:$0xff]
        %v1242 = vld [vmem:[%s434 + $0x1658] sm:$0xff]
        %v1243 = vld [vmem:[%s434 + $0x1660] sm:$0xff]
        %v1244 = vld [vmem:[%s434 + $0x1668] sm:$0xff]
        %v1245 = vld [vmem:[%s434 + $0x1670] sm:$0xff]
        %v1246 = vld [vmem:[%s434 + $0x1678] sm:$0xff]
        %v1247 = vld [vmem:[%s434 + $0x1680] sm:$0xff]
        %v1248 = vld [vmem:[%s434 + $0x1688] sm:$0xff]
        %v1249 = vld [vmem:[%s434 + $0x1690] sm:$0xff]
        %v1250 = vld [vmem:[%s434 + $0x1698] sm:$0xff]
        %v1251 = vld [vmem:[%s434 + $0x16a0] sm:$0xff]
        %v1252 = vld [vmem:[%s434 + $0x16a8] sm:$0xff]
        %v1253 = vld [vmem:[%s434 + $0x16b0] sm:$0xff]
        %v1254 = vld [vmem:[%s434 + $0x16b8] sm:$0xff]
        %v1255 = vld [vmem:[%s434 + $0x16c0] sm:$0xff]
        %v1256 = vld [vmem:[%s434 + $0x16c8] sm:$0xff]
        %v1257 = vld [vmem:[%s434 + $0x16d0] sm:$0xff]
        %v1258 = vld [vmem:[%s434 + $0x16d8] sm:$0xff]
        %v1259 = vld [vmem:[%s434 + $0x16e0] sm:$0xff]
        %v1260 = vld [vmem:[%s434 + $0x16e8] sm:$0xff]
        %v1261 = vld [vmem:[%s434 + $0x16f0] sm:$0xff]
        %v1262 = vld [vmem:[%s434 + $0x16f8] sm:$0xff]
        %v1263 = vld [vmem:[%s434 + $0x1700] sm:$0xff]
        %v1264 = vld [vmem:[%s434 + $0x1708] sm:$0xff]
        %v1265 = vld [vmem:[%s434 + $0x1710] sm:$0xff]
        %v1266 = vld [vmem:[%s434 + $0x1718] sm:$0xff]
        %v1267 = vld [vmem:[%s434 + $0x1720] sm:$0xff]
        %v1268 = vld [vmem:[%s434 + $0x1728] sm:$0xff]
        %v1269 = vld [vmem:[%s434 + $0x1730] sm:$0xff]
        %v1270 = vld [vmem:[%s434 + $0x1738] sm:$0xff]
        %v1271 = vld [vmem:[%s434 + $0x1740] sm:$0xff]
        %v1272 = vld [vmem:[%s434 + $0x1748] sm:$0xff]
        %v1273 = vld [vmem:[%s434 + $0x1750] sm:$0xff]
        %v1274 = vld [vmem:[%s434 + $0x1758] sm:$0xff]
        %v1275 = vld [vmem:[%s434 + $0x1760] sm:$0xff]
        %v1276 = vld [vmem:[%s434 + $0x1768] sm:$0xff]
        %v1277 = vld [vmem:[%s434 + $0x1770] sm:$0xff]
        %v1278 = vld [vmem:[%s434 + $0x1778] sm:$0xff]
        %v1279 = vld [vmem:[%s434 + $0x1780] sm:$0xff]
        %v1280 = vld [vmem:[%s434 + $0x1788] sm:$0xff]
        %v1281 = vld [vmem:[%s434 + $0x1790] sm:$0xff]
        %v1282 = vld [vmem:[%s434 + $0x1798] sm:$0xff]
        %v1283 = vld [vmem:[%s434 + $0x17a0] sm:$0xff]
        %v1284 = vld [vmem:[%s434 + $0x17a8] sm:$0xff]
        %v1285 = vld [vmem:[%s434 + $0x17b0] sm:$0xff]
        %v1286 = vld [vmem:[%s434 + $0x17b8] sm:$0xff]
        %v1287 = vld [vmem:[%s434 + $0x17c0] sm:$0xff]
        %v1288 = vld [vmem:[%s434 + $0x17c8] sm:$0xff]
        %v1289 = vld [vmem:[%s434 + $0x17d0] sm:$0xff]
        %v1290 = vld [vmem:[%s434 + $0x17d8] sm:$0xff]
        %v1291 = vld [vmem:[%s434 + $0x17e0] sm:$0xff]
        %v1292 = vld [vmem:[%s434 + $0x17e8] sm:$0xff]
        %v1293 = vld [vmem:[%s434 + $0x17f0] sm:$0xff]
        %v1294 = vld [vmem:[%s434 + $0x17f8] sm:$0xff]
        %v1295 = vld [vmem:[%s434 + $0x1800] sm:$0xff]
        %v1296 = vld [vmem:[%s434 + $0x1808] sm:$0xff]
        %v1297 = vld [vmem:[%s434 + $0x1810] sm:$0xff]
        %v1298 = vld [vmem:[%s434 + $0x1818] sm:$0xff]
        %v1299 = vld [vmem:[%s434 + $0x1820] sm:$0xff]
        %v1300 = vld [vmem:[%s434 + $0x1828] sm:$0xff]
        %v1301 = vld [vmem:[%s434 + $0x1830] sm:$0xff]
        %v1302 = vld [vmem:[%s434 + $0x1838] sm:$0xff]
        %v1303 = vld [vmem:[%s434 + $0x1840] sm:$0xff]
        %v1304 = vld [vmem:[%s434 + $0x1848] sm:$0xff]
        %v1305 = vld [vmem:[%s434 + $0x1850] sm:$0xff]
        %v1306 = vld [vmem:[%s434 + $0x1858] sm:$0xff]
        %v1307 = vld [vmem:[%s434 + $0x1860] sm:$0xff]
        %v1308 = vld [vmem:[%s434 + $0x1868] sm:$0xff]
        %v1309 = vld [vmem:[%s434 + $0x1870] sm:$0xff]
        %v1310 = vld [vmem:[%s434 + $0x1878] sm:$0xff]
        %v1324 = vcombine.high %v514, %v514
        %v1326 = vunpack.c.l.s4 1983009808
        %v1327 = vunpack.c.0.s8 %v1326
        %v1328 = vlaneseq
        %v1329 = vshrl.u32 %v1328, 7
        %v1330 = vsub.s32 %v1327, %v1329
        %v1331 = vrot.slane %v514, %v1330
        %v1333 = vunpack.c.l.s4 1983009808
        %v1334 = vunpack.c.0.s8 %v1333
        %v1335 = vlaneseq
        %v1336 = vshrl.u32 %v1335, 7
        %v1337 = vsub.s32 %v1334, %v1336
        %v1338 = vrot.slane %v1324, %v1337
        %v1339 = vcombine.high %v1331, %v1331
        %v1340 = vcombine.high %v1338, %v1338
        %v1341 = vcombine.high %v515, %v515
        %v1343 = vunpack.c.l.s4 1983009808
        %v1344 = vunpack.c.0.s8 %v1343
        %v1345 = vlaneseq
        %v1346 = vshrl.u32 %v1345, 7
        %v1347 = vsub.s32 %v1344, %v1346
        %v1348 = vrot.slane %v515, %v1347
        %v1350 = vunpack.c.l.s4 1983009808
        %v1351 = vunpack.c.0.s8 %v1350
        %v1352 = vlaneseq
        %v1353 = vshrl.u32 %v1352, 7
        %v1354 = vsub.s32 %v1351, %v1353
        %v1355 = vrot.slane %v1341, %v1354
        %v1356 = vcombine.high %v1348, %v1348
        %v1357 = vcombine.high %v1355, %v1355
        %v1358 = vcombine.high %v516, %v516
        %v1360 = vunpack.c.l.s4 1983009808
        %v1361 = vunpack.c.0.s8 %v1360
        %v1362 = vlaneseq
        %v1363 = vshrl.u32 %v1362, 7
        %v1364 = vsub.s32 %v1361, %v1363
        %v1365 = vrot.slane %v516, %v1364
        %v1367 = vunpack.c.l.s4 1983009808
        %v1368 = vunpack.c.0.s8 %v1367
        %v1369 = vlaneseq
        %v1370 = vshrl.u32 %v1369, 7
        %v1371 = vsub.s32 %v1368, %v1370
        %v1372 = vrot.slane %v1358, %v1371
        %v1373 = vcombine.high %v1365, %v1365
        %v1374 = vcombine.high %v1372, %v1372
        %v1375 = vcombine.high %v517, %v517
        %v1377 = vunpack.c.l.s4 1983009808
        %v1378 = vunpack.c.0.s8 %v1377
        %v1379 = vlaneseq
        %v1380 = vshrl.u32 %v1379, 7
        %v1381 = vsub.s32 %v1378, %v1380
        %v1382 = vrot.slane %v517, %v1381
        %v1384 = vunpack.c.l.s4 1983009808
        %v1385 = vunpack.c.0.s8 %v1384
        %v1386 = vlaneseq
        %v1387 = vshrl.u32 %v1386, 7
        %v1388 = vsub.s32 %v1385, %v1387
        %v1389 = vrot.slane %v1375, %v1388
        %v1390 = vcombine.high %v1382, %v1382
        %v1391 = vcombine.high %v1389, %v1389
        %v1392 = vcombine.high %v518, %v518
        %v1394 = vunpack.c.l.s4 1983009808
        %v1395 = vunpack.c.0.s8 %v1394
        %v1396 = vlaneseq
        %v1397 = vshrl.u32 %v1396, 7
        %v1398 = vsub.s32 %v1395, %v1397
        %v1399 = vrot.slane %v518, %v1398
        %v1401 = vunpack.c.l.s4 1983009808
        %v1402 = vunpack.c.0.s8 %v1401
        %v1403 = vlaneseq
        %v1404 = vshrl.u32 %v1403, 7
        %v1405 = vsub.s32 %v1402, %v1404
        %v1406 = vrot.slane %v1392, %v1405
        %v1407 = vcombine.high %v1399, %v1399
        %v1408 = vcombine.high %v1406, %v1406
        %v1409 = vcombine.high %v519, %v519
        %v1411 = vunpack.c.l.s4 1983009808
        %v1412 = vunpack.c.0.s8 %v1411
        %v1413 = vlaneseq
        %v1414 = vshrl.u32 %v1413, 7
        %v1415 = vsub.s32 %v1412, %v1414
        %v1416 = vrot.slane %v519, %v1415
        %v1418 = vunpack.c.l.s4 1983009808
        %v1419 = vunpack.c.0.s8 %v1418
        %v1420 = vlaneseq
        %v1421 = vshrl.u32 %v1420, 7
        %v1422 = vsub.s32 %v1419, %v1421
        %v1423 = vrot.slane %v1409, %v1422
        %v1424 = vcombine.high %v1416, %v1416
        %v1425 = vcombine.high %v1423, %v1423
        %v1426 = vcombine.high %v520, %v520
        %v1428 = vunpack.c.l.s4 1983009808
        %v1429 = vunpack.c.0.s8 %v1428
        %v1430 = vlaneseq
        %v1431 = vshrl.u32 %v1430, 7
        %v1432 = vsub.s32 %v1429, %v1431
        %v1433 = vrot.slane %v520, %v1432
        %v1435 = vunpack.c.l.s4 1983009808
        %v1436 = vunpack.c.0.s8 %v1435
        %v1437 = vlaneseq
        %v1438 = vshrl.u32 %v1437, 7
        %v1439 = vsub.s32 %v1436, %v1438
        %v1440 = vrot.slane %v1426, %v1439
        %v1441 = vcombine.high %v1433, %v1433
        %v1442 = vcombine.high %v1440, %v1440
        %v1443 = vcombine.high %v521, %v521
        %v1445 = vunpack.c.l.s4 1983009808
        %v1446 = vunpack.c.0.s8 %v1445
        %v1447 = vlaneseq
        %v1448 = vshrl.u32 %v1447, 7
        %v1449 = vsub.s32 %v1446, %v1448
        %v1450 = vrot.slane %v521, %v1449
        %v1452 = vunpack.c.l.s4 1983009808
        %v1453 = vunpack.c.0.s8 %v1452
        %v1454 = vlaneseq
        %v1455 = vshrl.u32 %v1454, 7
        %v1456 = vsub.s32 %v1453, %v1455
        %v1457 = vrot.slane %v1443, %v1456
        %v1458 = vcombine.high %v1450, %v1450
        %v1459 = vcombine.high %v1457, %v1457
        %v1460 = vcombine.high %v522, %v522
        %v1462 = vunpack.c.l.s4 1983009808
        %v1463 = vunpack.c.0.s8 %v1462
        %v1464 = vlaneseq
        %v1465 = vshrl.u32 %v1464, 7
        %v1466 = vsub.s32 %v1463, %v1465
        %v1467 = vrot.slane %v522, %v1466
        %v1469 = vunpack.c.l.s4 1983009808
        %v1470 = vunpack.c.0.s8 %v1469
        %v1471 = vlaneseq
        %v1472 = vshrl.u32 %v1471, 7
        %v1473 = vsub.s32 %v1470, %v1472
        %v1474 = vrot.slane %v1460, %v1473
        %v1475 = vcombine.high %v1467, %v1467
        %v1476 = vcombine.high %v1474, %v1474
        %v1477 = vcombine.high %v523, %v523
        %v1479 = vunpack.c.l.s4 1983009808
        %v1480 = vunpack.c.0.s8 %v1479
        %v1481 = vlaneseq
        %v1482 = vshrl.u32 %v1481, 7
        %v1483 = vsub.s32 %v1480, %v1482
        %v1484 = vrot.slane %v523, %v1483
        %v1486 = vunpack.c.l.s4 1983009808
        %v1487 = vunpack.c.0.s8 %v1486
        %v1488 = vlaneseq
        %v1489 = vshrl.u32 %v1488, 7
        %v1490 = vsub.s32 %v1487, %v1489
        %v1491 = vrot.slane %v1477, %v1490
        %v1492 = vcombine.high %v1484, %v1484
        %v1493 = vcombine.high %v1491, %v1491
        %v1494 = vcombine.high %v524, %v524
        %v1496 = vunpack.c.l.s4 1983009808
        %v1497 = vunpack.c.0.s8 %v1496
        %v1498 = vlaneseq
        %v1499 = vshrl.u32 %v1498, 7
        %v1500 = vsub.s32 %v1497, %v1499
        %v1501 = vrot.slane %v524, %v1500
        %v1503 = vunpack.c.l.s4 1983009808
        %v1504 = vunpack.c.0.s8 %v1503
        %v1505 = vlaneseq
        %v1506 = vshrl.u32 %v1505, 7
        %v1507 = vsub.s32 %v1504, %v1506
        %v1508 = vrot.slane %v1494, %v1507
        %v1509 = vcombine.high %v1501, %v1501
        %v1510 = vcombine.high %v1508, %v1508
        %v1511 = vcombine.high %v525, %v525
        %v1513 = vunpack.c.l.s4 1983009808
        %v1514 = vunpack.c.0.s8 %v1513
        %v1515 = vlaneseq
        %v1516 = vshrl.u32 %v1515, 7
        %v1517 = vsub.s32 %v1514, %v1516
        %v1518 = vrot.slane %v525, %v1517
        %v1520 = vunpack.c.l.s4 1983009808
        %v1521 = vunpack.c.0.s8 %v1520
        %v1522 = vlaneseq
        %v1523 = vshrl.u32 %v1522, 7
        %v1524 = vsub.s32 %v1521, %v1523
        %v1525 = vrot.slane %v1511, %v1524
        %v1526 = vcombine.high %v1518, %v1518
        %v1527 = vcombine.high %v1525, %v1525
        %v1529 = vunpack.c.l.s4 1983009808
        %v1530 = vunpack.c.0.s8 %v1529
        %v1531 = vlaneseq
        %v1532 = vshrl.u32 %v1531, 7
        %v1533 = vsub.s32 %v1530, %v1532
        %v1534 = vrot.slane %v526, %v1533
        %1584 = vmatprep.subr.mxu0 0.0
        %1585 = vmatpush1.msra.mxu0 %v542
        %1586 = vmatprep.subr.mxu0 0.0
        %1587 = vmatpush1.msra.mxu0 %v541
        %1588 = vmatprep.subr.mxu0 0.0
        %1589 = vmatpush1.msra.mxu0 %v540
        %1590 = vmatprep.subr.mxu0 0.0
        %1591 = vmatpush1.msra.mxu0 %v539
        %1592 = vmatprep.subr.mxu0 0.0
        %1593 = vmatpush1.msra.mxu0 %v538
        %1594 = vmatprep.subr.mxu0 0.0
        %1595 = vmatpush1.msra.mxu0 %v537
        %1596 = vmatprep.subr.mxu0 0.0
        %1597 = vmatpush1.msra.mxu0 %v536
        %1598 = vmatprep.subr.mxu0 0.0
        %1599 = vmatpush1.msra.mxu0 %v535
        %1600 = vmatprep.subr.mxu0 0.0
        %1601 = vmatpush1.msra.mxu0 %v534
        %1602 = vmatprep.subr.mxu0 0.0
        %1603 = vmatpush1.msra.mxu0 %v533
        %1604 = vmatprep.subr.mxu0 0.0
        %1605 = vmatpush1.msra.mxu0 %v532
        %1606 = vmatprep.subr.mxu0 0.0
        %1607 = vmatpush1.msra.mxu0 %v531
        %1608 = vmatprep.subr.mxu0 0.0
        %1609 = vmatpush1.msra.mxu0 %v530
        %1610 = vmatprep.subr.mxu0 0.0
        %1611 = vmatpush1.msra.mxu0 %v529
        %1612 = vmatprep.subr.mxu0 0.0
        %1613 = vmatpush1.msra.mxu0 %v528
        %1614 = vmatprep.subr.mxu0 0.0
        %1615 = vmatpush1.msra.mxu0 %v527
        %1616 = vmatprep.subr.mxu0 0.0
        %1617 = vmatpush2.msra.mxu0 %v558
        %1618 = vmatprep.subr.mxu0 0.0
        %1619 = vmatpush2.msra.mxu0 %v557
        %1620 = vmatprep.subr.mxu0 0.0
        %1621 = vmatpush2.msra.mxu0 %v556
        %1622 = vmatprep.subr.mxu0 0.0
        %1623 = vmatpush2.msra.mxu0 %v555
        %1624 = vmatprep.subr.mxu0 0.0
        %1625 = vmatpush2.msra.mxu0 %v554
        %1626 = vmatprep.subr.mxu0 0.0
        %1627 = vmatpush2.msra.mxu0 %v553
        %1628 = vmatprep.subr.mxu0 0.0
        %1629 = vmatpush2.msra.mxu0 %v552
        %1630 = vmatprep.subr.mxu0 0.0
        %1631 = vmatpush2.msra.mxu0 %v551
        %1632 = vmatprep.subr.mxu0 0.0
        %1633 = vmatpush2.msra.mxu0 %v550
        %1634 = vmatprep.subr.mxu0 0.0
        %1635 = vmatpush2.msra.mxu0 %v549
        %1636 = vmatprep.subr.mxu0 0.0
        %1637 = vmatpush2.msra.mxu0 %v548
        %1638 = vmatprep.subr.mxu0 0.0
        %1639 = vmatpush2.msra.mxu0 %v547
        %1640 = vmatprep.subr.mxu0 0.0
        %1641 = vmatpush2.msra.mxu0 %v546
        %1642 = vmatprep.subr.mxu0 0.0
        %1643 = vmatpush2.msra.mxu0 %v545
        %1644 = vmatprep.subr.mxu0 0.0
        %1645 = vmatpush2.msra.mxu0 %v544
        %1646 = vmatprep.subr.mxu0 0.0
        %1647 = vmatpush2.msra.mxu0 %v543
        %1648 = vmatprep.mubr.f32.mxu0 %v1339
        %1649 = vmatmul.mubr.f32.gmra.mxu0 %v1331
        %v1650 = vpop.f32.mrf.mxu0
        %v1651 = vadd.f32 0.0, %v1650
        %v1652 = vpop.f32.mrf.mxu0
        %1653 = vdwg.mxu0
        %1654 = vmatprep.subr.mxu0 0.0
        %1655 = vmatpush1.msra.mxu0 %v574
        %1656 = vmatprep.subr.mxu0 0.0
        %1657 = vmatpush1.msra.mxu0 %v573
        %1658 = vmatprep.subr.mxu0 0.0
        %1659 = vmatpush1.msra.mxu0 %v572
        %1660 = vmatprep.subr.mxu0 0.0
        %1661 = vmatpush1.msra.mxu0 %v571
        %1662 = vmatprep.subr.mxu0 0.0
        %1663 = vmatpush1.msra.mxu0 %v570
        %1664 = vmatprep.subr.mxu0 0.0
        %1665 = vmatpush1.msra.mxu0 %v569
        %1666 = vmatprep.subr.mxu0 0.0
        %1667 = vmatpush1.msra.mxu0 %v568
        %1668 = vmatprep.subr.mxu0 0.0
        %1669 = vmatpush1.msra.mxu0 %v567
        %1670 = vmatprep.subr.mxu0 0.0
        %1671 = vmatpush1.msra.mxu0 %v566
        %1672 = vmatprep.subr.mxu0 0.0
        %1673 = vmatpush1.msra.mxu0 %v565
        %1674 = vmatprep.subr.mxu0 0.0
        %1675 = vmatpush1.msra.mxu0 %v564
        %1676 = vmatprep.subr.mxu0 0.0
        %1677 = vmatpush1.msra.mxu0 %v563
        %1678 = vmatprep.subr.mxu0 0.0
        %1679 = vmatpush1.msra.mxu0 %v562
        %1680 = vmatprep.subr.mxu0 0.0
        %1681 = vmatpush1.msra.mxu0 %v561
        %1682 = vmatprep.subr.mxu0 0.0
        %1683 = vmatpush1.msra.mxu0 %v560
        %1684 = vmatprep.subr.mxu0 0.0
        %1685 = vmatpush1.msra.mxu0 %v559
        %1686 = vmatprep.subr.mxu0 0.0
        %1687 = vmatpush2.msra.mxu0 %v590
        %1688 = vmatprep.subr.mxu0 0.0
        %1689 = vmatpush2.msra.mxu0 %v589
        %1690 = vmatprep.subr.mxu0 0.0
        %1691 = vmatpush2.msra.mxu0 %v588
        %1692 = vmatprep.subr.mxu0 0.0
        %1693 = vmatpush2.msra.mxu0 %v587
        %1694 = vmatprep.subr.mxu0 0.0
        %1695 = vmatpush2.msra.mxu0 %v586
        %1696 = vmatprep.subr.mxu0 0.0
        %1697 = vmatpush2.msra.mxu0 %v585
        %1698 = vmatprep.subr.mxu0 0.0
        %1699 = vmatpush2.msra.mxu0 %v584
        %1700 = vmatprep.subr.mxu0 0.0
        %1701 = vmatpush2.msra.mxu0 %v583
        %1702 = vmatprep.subr.mxu0 0.0
        %1703 = vmatpush2.msra.mxu0 %v582
        %1704 = vmatprep.subr.mxu0 0.0
        %1705 = vmatpush2.msra.mxu0 %v581
        %1706 = vmatprep.subr.mxu0 0.0
        %1707 = vmatpush2.msra.mxu0 %v580
        %1708 = vmatprep.subr.mxu0 0.0
        %1709 = vmatpush2.msra.mxu0 %v579
        %1710 = vmatprep.subr.mxu0 0.0
        %1711 = vmatpush2.msra.mxu0 %v578
        %1712 = vmatprep.subr.mxu0 0.0
        %1713 = vmatpush2.msra.mxu0 %v577
        %1714 = vmatprep.subr.mxu0 0.0
        %1715 = vmatpush2.msra.mxu0 %v576
        %1716 = vmatprep.subr.mxu0 0.0
        %1717 = vmatpush2.msra.mxu0 %v575
        %1718 = vmatprep.mubr.f32.mxu0 %v1340
        %1719 = vmatmul.mubr.f32.gmra.mxu0 %v1338
        %v1720 = vpop.f32.mrf.mxu0
        %v1721 = vadd.f32 %v1651, %v1720
        %v1722 = vpop.f32.mrf.mxu0
        %1723 = vdwg.mxu0
        %1724 = vmatprep.subr.mxu0 0.0
        %1725 = vmatpush1.msra.mxu0 %v606
        %1726 = vmatprep.subr.mxu0 0.0
        %1727 = vmatpush1.msra.mxu0 %v605
        %1728 = vmatprep.subr.mxu0 0.0
        %1729 = vmatpush1.msra.mxu0 %v604
        %1730 = vmatprep.subr.mxu0 0.0
        %1731 = vmatpush1.msra.mxu0 %v603
        %1732 = vmatprep.subr.mxu0 0.0
        %1733 = vmatpush1.msra.mxu0 %v602
        %1734 = vmatprep.subr.mxu0 0.0
        %1735 = vmatpush1.msra.mxu0 %v601
        %1736 = vmatprep.subr.mxu0 0.0
        %1737 = vmatpush1.msra.mxu0 %v600
        %1738 = vmatprep.subr.mxu0 0.0
        %1739 = vmatpush1.msra.mxu0 %v599
        %1740 = vmatprep.subr.mxu0 0.0
        %1741 = vmatpush1.msra.mxu0 %v598
        %1742 = vmatprep.subr.mxu0 0.0
        %1743 = vmatpush1.msra.mxu0 %v597
        %1744 = vmatprep.subr.mxu0 0.0
        %1745 = vmatpush1.msra.mxu0 %v596
        %1746 = vmatprep.subr.mxu0 0.0
        %1747 = vmatpush1.msra.mxu0 %v595
        %1748 = vmatprep.subr.mxu0 0.0
        %1749 = vmatpush1.msra.mxu0 %v594
        %1750 = vmatprep.subr.mxu0 0.0
        %1751 = vmatpush1.msra.mxu0 %v593
        %1752 = vmatprep.subr.mxu0 0.0
        %1753 = vmatpush1.msra.mxu0 %v592
        %1754 = vmatprep.subr.mxu0 0.0
        %1755 = vmatpush1.msra.mxu0 %v591
        %1756 = vmatprep.subr.mxu0 0.0
        %1757 = vmatpush2.msra.mxu0 %v622
        %1758 = vmatprep.subr.mxu0 0.0
        %1759 = vmatpush2.msra.mxu0 %v621
        %1760 = vmatprep.subr.mxu0 0.0
        %1761 = vmatpush2.msra.mxu0 %v620
        %1762 = vmatprep.subr.mxu0 0.0
        %1763 = vmatpush2.msra.mxu0 %v619
        %1764 = vmatprep.subr.mxu0 0.0
        %1765 = vmatpush2.msra.mxu0 %v618
        %1766 = vmatprep.subr.mxu0 0.0
        %1767 = vmatpush2.msra.mxu0 %v617
        %1768 = vmatprep.subr.mxu0 0.0
        %1769 = vmatpush2.msra.mxu0 %v616
        %1770 = vmatprep.subr.mxu0 0.0
        %1771 = vmatpush2.msra.mxu0 %v615
        %1772 = vmatprep.subr.mxu0 0.0
        %1773 = vmatpush2.msra.mxu0 %v614
        %1774 = vmatprep.subr.mxu0 0.0
        %1775 = vmatpush2.msra.mxu0 %v613
        %1776 = vmatprep.subr.mxu0 0.0
        %1777 = vmatpush2.msra.mxu0 %v612
        %1778 = vmatprep.subr.mxu0 0.0
        %1779 = vmatpush2.msra.mxu0 %v611
        %1780 = vmatprep.subr.mxu0 0.0
        %1781 = vmatpush2.msra.mxu0 %v610
        %1782 = vmatprep.subr.mxu0 0.0
        %1783 = vmatpush2.msra.mxu0 %v609
        %1784 = vmatprep.subr.mxu0 0.0
        %1785 = vmatpush2.msra.mxu0 %v608
        %1786 = vmatprep.subr.mxu0 0.0
        %1787 = vmatpush2.msra.mxu0 %v607
        %1788 = vmatprep.mubr.f32.mxu0 %v1356
        %1789 = vmatmul.mubr.f32.gmra.mxu0 %v1348
        %v1790 = vpop.f32.mrf.mxu0
        %v1791 = vadd.f32 %v1721, %v1790
        %v1792 = vpop.f32.mrf.mxu0
        %1793 = vdwg.mxu0
        %1794 = vmatprep.subr.mxu0 0.0
        %1795 = vmatpush1.msra.mxu0 %v638
        %1796 = vmatprep.subr.mxu0 0.0
        %1797 = vmatpush1.msra.mxu0 %v637
        %1798 = vmatprep.subr.mxu0 0.0
        %1799 = vmatpush1.msra.mxu0 %v636
        %1800 = vmatprep.subr.mxu0 0.0
        %1801 = vmatpush1.msra.mxu0 %v635
        %1802 = vmatprep.subr.mxu0 0.0
        %1803 = vmatpush1.msra.mxu0 %v634
        %1804 = vmatprep.subr.mxu0 0.0
        %1805 = vmatpush1.msra.mxu0 %v633
        %1806 = vmatprep.subr.mxu0 0.0
        %1807 = vmatpush1.msra.mxu0 %v632
        %1808 = vmatprep.subr.mxu0 0.0
        %1809 = vmatpush1.msra.mxu0 %v631
        %1810 = vmatprep.subr.mxu0 0.0
        %1811 = vmatpush1.msra.mxu0 %v630
        %1812 = vmatprep.subr.mxu0 0.0
        %1813 = vmatpush1.msra.mxu0 %v629
        %1814 = vmatprep.subr.mxu0 0.0
        %1815 = vmatpush1.msra.mxu0 %v628
        %1816 = vmatprep.subr.mxu0 0.0
        %1817 = vmatpush1.msra.mxu0 %v627
        %1818 = vmatprep.subr.mxu0 0.0
        %1819 = vmatpush1.msra.mxu0 %v626
        %1820 = vmatprep.subr.mxu0 0.0
        %1821 = vmatpush1.msra.mxu0 %v625
        %1822 = vmatprep.subr.mxu0 0.0
        %1823 = vmatpush1.msra.mxu0 %v624
        %1824 = vmatprep.subr.mxu0 0.0
        %1825 = vmatpush1.msra.mxu0 %v623
        %1826 = vmatprep.subr.mxu0 0.0
        %1827 = vmatpush2.msra.mxu0 %v654
        %1828 = vmatprep.subr.mxu0 0.0
        %1829 = vmatpush2.msra.mxu0 %v653
        %1830 = vmatprep.subr.mxu0 0.0
        %1831 = vmatpush2.msra.mxu0 %v652
        %1832 = vmatprep.subr.mxu0 0.0
        %1833 = vmatpush2.msra.mxu0 %v651
        %1834 = vmatprep.subr.mxu0 0.0
        %1835 = vmatpush2.msra.mxu0 %v650
        %1836 = vmatprep.subr.mxu0 0.0
        %1837 = vmatpush2.msra.mxu0 %v649
        %1838 = vmatprep.subr.mxu0 0.0
        %1839 = vmatpush2.msra.mxu0 %v648
        %1840 = vmatprep.subr.mxu0 0.0
        %1841 = vmatpush2.msra.mxu0 %v647
        %1842 = vmatprep.subr.mxu0 0.0
        %1843 = vmatpush2.msra.mxu0 %v646
        %1844 = vmatprep.subr.mxu0 0.0
        %1845 = vmatpush2.msra.mxu0 %v645
        %1846 = vmatprep.subr.mxu0 0.0
        %1847 = vmatpush2.msra.mxu0 %v644
        %1848 = vmatprep.subr.mxu0 0.0
        %1849 = vmatpush2.msra.mxu0 %v643
        %1850 = vmatprep.subr.mxu0 0.0
        %1851 = vmatpush2.msra.mxu0 %v642
        %1852 = vmatprep.subr.mxu0 0.0
        %1853 = vmatpush2.msra.mxu0 %v641
        %1854 = vmatprep.subr.mxu0 0.0
        %1855 = vmatpush2.msra.mxu0 %v640
        %1856 = vmatprep.subr.mxu0 0.0
        %1857 = vmatpush2.msra.mxu0 %v639
        %1858 = vmatprep.mubr.f32.mxu0 %v1357
        %1859 = vmatmul.mubr.f32.gmra.mxu0 %v1355
        %v1860 = vpop.f32.mrf.mxu0
        %v1861 = vadd.f32 %v1791, %v1860
        %v1862 = vpop.f32.mrf.mxu0
        %1863 = vdwg.mxu0
        %1864 = vmatprep.subr.mxu0 0.0
        %1865 = vmatpush1.msra.mxu0 %v670
        %1866 = vmatprep.subr.mxu0 0.0
        %1867 = vmatpush1.msra.mxu0 %v669
        %1868 = vmatprep.subr.mxu0 0.0
        %1869 = vmatpush1.msra.mxu0 %v668
        %1870 = vmatprep.subr.mxu0 0.0
        %1871 = vmatpush1.msra.mxu0 %v667
        %1872 = vmatprep.subr.mxu0 0.0
        %1873 = vmatpush1.msra.mxu0 %v666
        %1874 = vmatprep.subr.mxu0 0.0
        %1875 = vmatpush1.msra.mxu0 %v665
        %1876 = vmatprep.subr.mxu0 0.0
        %1877 = vmatpush1.msra.mxu0 %v664
        %1878 = vmatprep.subr.mxu0 0.0
        %1879 = vmatpush1.msra.mxu0 %v663
        %1880 = vmatprep.subr.mxu0 0.0
        %1881 = vmatpush1.msra.mxu0 %v662
        %1882 = vmatprep.subr.mxu0 0.0
        %1883 = vmatpush1.msra.mxu0 %v661
        %1884 = vmatprep.subr.mxu0 0.0
        %1885 = vmatpush1.msra.mxu0 %v660
        %1886 = vmatprep.subr.mxu0 0.0
        %1887 = vmatpush1.msra.mxu0 %v659
        %1888 = vmatprep.subr.mxu0 0.0
        %1889 = vmatpush1.msra.mxu0 %v658
        %1890 = vmatprep.subr.mxu0 0.0
        %1891 = vmatpush1.msra.mxu0 %v657
        %1892 = vmatprep.subr.mxu0 0.0
        %1893 = vmatpush1.msra.mxu0 %v656
        %1894 = vmatprep.subr.mxu0 0.0
        %1895 = vmatpush1.msra.mxu0 %v655
        %1896 = vmatprep.subr.mxu0 0.0
        %1897 = vmatpush2.msra.mxu0 %v686
        %1898 = vmatprep.subr.mxu0 0.0
        %1899 = vmatpush2.msra.mxu0 %v685
        %1900 = vmatprep.subr.mxu0 0.0
        %1901 = vmatpush2.msra.mxu0 %v684
        %1902 = vmatprep.subr.mxu0 0.0
        %1903 = vmatpush2.msra.mxu0 %v683
        %1904 = vmatprep.subr.mxu0 0.0
        %1905 = vmatpush2.msra.mxu0 %v682
        %1906 = vmatprep.subr.mxu0 0.0
        %1907 = vmatpush2.msra.mxu0 %v681
        %1908 = vmatprep.subr.mxu0 0.0
        %1909 = vmatpush2.msra.mxu0 %v680
        %1910 = vmatprep.subr.mxu0 0.0
        %1911 = vmatpush2.msra.mxu0 %v679
        %1912 = vmatprep.subr.mxu0 0.0
        %1913 = vmatpush2.msra.mxu0 %v678
        %1914 = vmatprep.subr.mxu0 0.0
        %1915 = vmatpush2.msra.mxu0 %v677
        %1916 = vmatprep.subr.mxu0 0.0
        %1917 = vmatpush2.msra.mxu0 %v676
        %1918 = vmatprep.subr.mxu0 0.0
        %1919 = vmatpush2.msra.mxu0 %v675
        %1920 = vmatprep.subr.mxu0 0.0
        %1921 = vmatpush2.msra.mxu0 %v674
        %1922 = vmatprep.subr.mxu0 0.0
        %1923 = vmatpush2.msra.mxu0 %v673
        %1924 = vmatprep.subr.mxu0 0.0
        %1925 = vmatpush2.msra.mxu0 %v672
        %1926 = vmatprep.subr.mxu0 0.0
        %1927 = vmatpush2.msra.mxu0 %v671
        %1928 = vmatprep.mubr.f32.mxu0 %v1373
        %1929 = vmatmul.mubr.f32.gmra.mxu0 %v1365
        %v1930 = vpop.f32.mrf.mxu0
        %v1931 = vadd.f32 %v1861, %v1930
        %v1932 = vpop.f32.mrf.mxu0
        %1933 = vdwg.mxu0
        %1934 = vmatprep.subr.mxu0 0.0
        %1935 = vmatpush1.msra.mxu0 %v702
        %1936 = vmatprep.subr.mxu0 0.0
        %1937 = vmatpush1.msra.mxu0 %v701
        %1938 = vmatprep.subr.mxu0 0.0
        %1939 = vmatpush1.msra.mxu0 %v700
        %1940 = vmatprep.subr.mxu0 0.0
        %1941 = vmatpush1.msra.mxu0 %v699
        %1942 = vmatprep.subr.mxu0 0.0
        %1943 = vmatpush1.msra.mxu0 %v698
        %1944 = vmatprep.subr.mxu0 0.0
        %1945 = vmatpush1.msra.mxu0 %v697
        %1946 = vmatprep.subr.mxu0 0.0
        %1947 = vmatpush1.msra.mxu0 %v696
        %1948 = vmatprep.subr.mxu0 0.0
        %1949 = vmatpush1.msra.mxu0 %v695
        %1950 = vmatprep.subr.mxu0 0.0
        %1951 = vmatpush1.msra.mxu0 %v694
        %1952 = vmatprep.subr.mxu0 0.0
        %1953 = vmatpush1.msra.mxu0 %v693
        %1954 = vmatprep.subr.mxu0 0.0
        %1955 = vmatpush1.msra.mxu0 %v692
        %1956 = vmatprep.subr.mxu0 0.0
        %1957 = vmatpush1.msra.mxu0 %v691
        %1958 = vmatprep.subr.mxu0 0.0
        %1959 = vmatpush1.msra.mxu0 %v690
        %1960 = vmatprep.subr.mxu0 0.0
        %1961 = vmatpush1.msra.mxu0 %v689
        %1962 = vmatprep.subr.mxu0 0.0
        %1963 = vmatpush1.msra.mxu0 %v688
        %1964 = vmatprep.subr.mxu0 0.0
        %1965 = vmatpush1.msra.mxu0 %v687
        %1966 = vmatprep.subr.mxu0 0.0
        %1967 = vmatpush2.msra.mxu0 %v718
        %1968 = vmatprep.subr.mxu0 0.0
        %1969 = vmatpush2.msra.mxu0 %v717
        %1970 = vmatprep.subr.mxu0 0.0
        %1971 = vmatpush2.msra.mxu0 %v716
        %1972 = vmatprep.subr.mxu0 0.0
        %1973 = vmatpush2.msra.mxu0 %v715
        %1974 = vmatprep.subr.mxu0 0.0
        %1975 = vmatpush2.msra.mxu0 %v714
        %1976 = vmatprep.subr.mxu0 0.0
        %1977 = vmatpush2.msra.mxu0 %v713
        %1978 = vmatprep.subr.mxu0 0.0
        %1979 = vmatpush2.msra.mxu0 %v712
        %1980 = vmatprep.subr.mxu0 0.0
        %1981 = vmatpush2.msra.mxu0 %v711
        %1982 = vmatprep.subr.mxu0 0.0
        %1983 = vmatpush2.msra.mxu0 %v710
        %1984 = vmatprep.subr.mxu0 0.0
        %1985 = vmatpush2.msra.mxu0 %v709
        %1986 = vmatprep.subr.mxu0 0.0
        %1987 = vmatpush2.msra.mxu0 %v708
        %1988 = vmatprep.subr.mxu0 0.0
        %1989 = vmatpush2.msra.mxu0 %v707
        %1990 = vmatprep.subr.mxu0 0.0
        %1991 = vmatpush2.msra.mxu0 %v706
        %1992 = vmatprep.subr.mxu0 0.0
        %1993 = vmatpush2.msra.mxu0 %v705
        %1994 = vmatprep.subr.mxu0 0.0
        %1995 = vmatpush2.msra.mxu0 %v704
        %1996 = vmatprep.subr.mxu0 0.0
        %1997 = vmatpush2.msra.mxu0 %v703
        %1998 = vmatprep.mubr.f32.mxu0 %v1374
        %1999 = vmatmul.mubr.f32.gmra.mxu0 %v1372
        %v2000 = vpop.f32.mrf.mxu0
        %v2001 = vadd.f32 %v1931, %v2000
        %v2002 = vpop.f32.mrf.mxu0
        %2003 = vdwg.mxu0
        %2004 = vmatprep.subr.mxu0 0.0
        %2005 = vmatpush1.msra.mxu0 %v734
        %2006 = vmatprep.subr.mxu0 0.0
        %2007 = vmatpush1.msra.mxu0 %v733
        %2008 = vmatprep.subr.mxu0 0.0
        %2009 = vmatpush1.msra.mxu0 %v732
        %2010 = vmatprep.subr.mxu0 0.0
        %2011 = vmatpush1.msra.mxu0 %v731
        %2012 = vmatprep.subr.mxu0 0.0
        %2013 = vmatpush1.msra.mxu0 %v730
        %2014 = vmatprep.subr.mxu0 0.0
        %2015 = vmatpush1.msra.mxu0 %v729
        %2016 = vmatprep.subr.mxu0 0.0
        %2017 = vmatpush1.msra.mxu0 %v728
        %2018 = vmatprep.subr.mxu0 0.0
        %2019 = vmatpush1.msra.mxu0 %v727
        %2020 = vmatprep.subr.mxu0 0.0
        %2021 = vmatpush1.msra.mxu0 %v726
        %2022 = vmatprep.subr.mxu0 0.0
        %2023 = vmatpush1.msra.mxu0 %v725
        %2024 = vmatprep.subr.mxu0 0.0
        %2025 = vmatpush1.msra.mxu0 %v724
        %2026 = vmatprep.subr.mxu0 0.0
        %2027 = vmatpush1.msra.mxu0 %v723
        %2028 = vmatprep.subr.mxu0 0.0
        %2029 = vmatpush1.msra.mxu0 %v722
        %2030 = vmatprep.subr.mxu0 0.0
        %2031 = vmatpush1.msra.mxu0 %v721
        %2032 = vmatprep.subr.mxu0 0.0
        %2033 = vmatpush1.msra.mxu0 %v720
        %2034 = vmatprep.subr.mxu0 0.0
        %2035 = vmatpush1.msra.mxu0 %v719
        %2036 = vmatprep.subr.mxu0 0.0
        %2037 = vmatpush2.msra.mxu0 %v750
        %2038 = vmatprep.subr.mxu0 0.0
        %2039 = vmatpush2.msra.mxu0 %v749
        %2040 = vmatprep.subr.mxu0 0.0
        %2041 = vmatpush2.msra.mxu0 %v748
        %2042 = vmatprep.subr.mxu0 0.0
        %2043 = vmatpush2.msra.mxu0 %v747
        %2044 = vmatprep.subr.mxu0 0.0
        %2045 = vmatpush2.msra.mxu0 %v746
        %2046 = vmatprep.subr.mxu0 0.0
        %2047 = vmatpush2.msra.mxu0 %v745
        %2048 = vmatprep.subr.mxu0 0.0
        %2049 = vmatpush2.msra.mxu0 %v744
        %2050 = vmatprep.subr.mxu0 0.0
        %2051 = vmatpush2.msra.mxu0 %v743
        %2052 = vmatprep.subr.mxu0 0.0
        %2053 = vmatpush2.msra.mxu0 %v742
        %2054 = vmatprep.subr.mxu0 0.0
        %2055 = vmatpush2.msra.mxu0 %v741
        %2056 = vmatprep.subr.mxu0 0.0
        %2057 = vmatpush2.msra.mxu0 %v740
        %2058 = vmatprep.subr.mxu0 0.0
        %2059 = vmatpush2.msra.mxu0 %v739
        %2060 = vmatprep.subr.mxu0 0.0
        %2061 = vmatpush2.msra.mxu0 %v738
        %2062 = vmatprep.subr.mxu0 0.0
        %2063 = vmatpush2.msra.mxu0 %v737
        %2064 = vmatprep.subr.mxu0 0.0
        %2065 = vmatpush2.msra.mxu0 %v736
        %2066 = vmatprep.subr.mxu0 0.0
        %2067 = vmatpush2.msra.mxu0 %v735
        %2068 = vmatprep.mubr.f32.mxu0 %v1390
        %2069 = vmatmul.mubr.f32.gmra.mxu0 %v1382
        %v2070 = vpop.f32.mrf.mxu0
        %v2071 = vadd.f32 %v2001, %v2070
        %v2072 = vpop.f32.mrf.mxu0
        %2073 = vdwg.mxu0
        %2074 = vmatprep.subr.mxu0 0.0
        %2075 = vmatpush1.msra.mxu0 %v766
        %2076 = vmatprep.subr.mxu0 0.0
        %2077 = vmatpush1.msra.mxu0 %v765
        %2078 = vmatprep.subr.mxu0 0.0
        %2079 = vmatpush1.msra.mxu0 %v764
        %2080 = vmatprep.subr.mxu0 0.0
        %2081 = vmatpush1.msra.mxu0 %v763
        %2082 = vmatprep.subr.mxu0 0.0
        %2083 = vmatpush1.msra.mxu0 %v762
        %2084 = vmatprep.subr.mxu0 0.0
        %2085 = vmatpush1.msra.mxu0 %v761
        %2086 = vmatprep.subr.mxu0 0.0
        %2087 = vmatpush1.msra.mxu0 %v760
        %2088 = vmatprep.subr.mxu0 0.0
        %2089 = vmatpush1.msra.mxu0 %v759
        %2090 = vmatprep.subr.mxu0 0.0
        %2091 = vmatpush1.msra.mxu0 %v758
        %2092 = vmatprep.subr.mxu0 0.0
        %2093 = vmatpush1.msra.mxu0 %v757
        %2094 = vmatprep.subr.mxu0 0.0
        %2095 = vmatpush1.msra.mxu0 %v756
        %2096 = vmatprep.subr.mxu0 0.0
        %2097 = vmatpush1.msra.mxu0 %v755
        %2098 = vmatprep.subr.mxu0 0.0
        %2099 = vmatpush1.msra.mxu0 %v754
        %2100 = vmatprep.subr.mxu0 0.0
        %2101 = vmatpush1.msra.mxu0 %v753
        %2102 = vmatprep.subr.mxu0 0.0
        %2103 = vmatpush1.msra.mxu0 %v752
        %2104 = vmatprep.subr.mxu0 0.0
        %2105 = vmatpush1.msra.mxu0 %v751
        %2106 = vmatprep.subr.mxu0 0.0
        %2107 = vmatpush2.msra.mxu0 %v782
        %2108 = vmatprep.subr.mxu0 0.0
        %2109 = vmatpush2.msra.mxu0 %v781
        %2110 = vmatprep.subr.mxu0 0.0
        %2111 = vmatpush2.msra.mxu0 %v780
        %2112 = vmatprep.subr.mxu0 0.0
        %2113 = vmatpush2.msra.mxu0 %v779
        %2114 = vmatprep.subr.mxu0 0.0
        %2115 = vmatpush2.msra.mxu0 %v778
        %2116 = vmatprep.subr.mxu0 0.0
        %2117 = vmatpush2.msra.mxu0 %v777
        %2118 = vmatprep.subr.mxu0 0.0
        %2119 = vmatpush2.msra.mxu0 %v776
        %2120 = vmatprep.subr.mxu0 0.0
        %2121 = vmatpush2.msra.mxu0 %v775
        %2122 = vmatprep.subr.mxu0 0.0
        %2123 = vmatpush2.msra.mxu0 %v774
        %2124 = vmatprep.subr.mxu0 0.0
        %2125 = vmatpush2.msra.mxu0 %v773
        %2126 = vmatprep.subr.mxu0 0.0
        %2127 = vmatpush2.msra.mxu0 %v772
        %2128 = vmatprep.subr.mxu0 0.0
        %2129 = vmatpush2.msra.mxu0 %v771
        %2130 = vmatprep.subr.mxu0 0.0
        %2131 = vmatpush2.msra.mxu0 %v770
        %2132 = vmatprep.subr.mxu0 0.0
        %2133 = vmatpush2.msra.mxu0 %v769
        %2134 = vmatprep.subr.mxu0 0.0
        %2135 = vmatpush2.msra.mxu0 %v768
        %2136 = vmatprep.subr.mxu0 0.0
        %2137 = vmatpush2.msra.mxu0 %v767
        %2138 = vmatprep.mubr.f32.mxu0 %v1391
        %2139 = vmatmul.mubr.f32.gmra.mxu0 %v1389
        %v2140 = vpop.f32.mrf.mxu0
        %v2141 = vadd.f32 %v2071, %v2140
        %v2142 = vpop.f32.mrf.mxu0
        %2143 = vdwg.mxu0
        %2144 = vmatprep.subr.mxu0 0.0
        %2145 = vmatpush1.msra.mxu0 %v798
        %2146 = vmatprep.subr.mxu0 0.0
        %2147 = vmatpush1.msra.mxu0 %v797
        %2148 = vmatprep.subr.mxu0 0.0
        %2149 = vmatpush1.msra.mxu0 %v796
        %2150 = vmatprep.subr.mxu0 0.0
        %2151 = vmatpush1.msra.mxu0 %v795
        %2152 = vmatprep.subr.mxu0 0.0
        %2153 = vmatpush1.msra.mxu0 %v794
        %2154 = vmatprep.subr.mxu0 0.0
        %2155 = vmatpush1.msra.mxu0 %v793
        %2156 = vmatprep.subr.mxu0 0.0
        %2157 = vmatpush1.msra.mxu0 %v792
        %2158 = vmatprep.subr.mxu0 0.0
        %2159 = vmatpush1.msra.mxu0 %v791
        %2160 = vmatprep.subr.mxu0 0.0
        %2161 = vmatpush1.msra.mxu0 %v790
        %2162 = vmatprep.subr.mxu0 0.0
        %2163 = vmatpush1.msra.mxu0 %v789
        %2164 = vmatprep.subr.mxu0 0.0
        %2165 = vmatpush1.msra.mxu0 %v788
        %2166 = vmatprep.subr.mxu0 0.0
        %2167 = vmatpush1.msra.mxu0 %v787
        %2168 = vmatprep.subr.mxu0 0.0
        %2169 = vmatpush1.msra.mxu0 %v786
        %2170 = vmatprep.subr.mxu0 0.0
        %2171 = vmatpush1.msra.mxu0 %v785
        %2172 = vmatprep.subr.mxu0 0.0
        %2173 = vmatpush1.msra.mxu0 %v784
        %2174 = vmatprep.subr.mxu0 0.0
        %2175 = vmatpush1.msra.mxu0 %v783
        %2176 = vmatprep.subr.mxu0 0.0
        %2177 = vmatpush2.msra.mxu0 %v814
        %2178 = vmatprep.subr.mxu0 0.0
        %2179 = vmatpush2.msra.mxu0 %v813
        %2180 = vmatprep.subr.mxu0 0.0
        %2181 = vmatpush2.msra.mxu0 %v812
        %2182 = vmatprep.subr.mxu0 0.0
        %2183 = vmatpush2.msra.mxu0 %v811
        %2184 = vmatprep.subr.mxu0 0.0
        %2185 = vmatpush2.msra.mxu0 %v810
        %2186 = vmatprep.subr.mxu0 0.0
        %2187 = vmatpush2.msra.mxu0 %v809
        %2188 = vmatprep.subr.mxu0 0.0
        %2189 = vmatpush2.msra.mxu0 %v808
        %2190 = vmatprep.subr.mxu0 0.0
        %2191 = vmatpush2.msra.mxu0 %v807
        %2192 = vmatprep.subr.mxu0 0.0
        %2193 = vmatpush2.msra.mxu0 %v806
        %2194 = vmatprep.subr.mxu0 0.0
        %2195 = vmatpush2.msra.mxu0 %v805
        %2196 = vmatprep.subr.mxu0 0.0
        %2197 = vmatpush2.msra.mxu0 %v804
        %2198 = vmatprep.subr.mxu0 0.0
        %2199 = vmatpush2.msra.mxu0 %v803
        %2200 = vmatprep.subr.mxu0 0.0
        %2201 = vmatpush2.msra.mxu0 %v802
        %2202 = vmatprep.subr.mxu0 0.0
        %2203 = vmatpush2.msra.mxu0 %v801
        %2204 = vmatprep.subr.mxu0 0.0
        %2205 = vmatpush2.msra.mxu0 %v800
        %2206 = vmatprep.subr.mxu0 0.0
        %2207 = vmatpush2.msra.mxu0 %v799
        %2208 = vmatprep.mubr.f32.mxu0 %v1407
        %2209 = vmatmul.mubr.f32.gmra.mxu0 %v1399
        %v2210 = vpop.f32.mrf.mxu0
        %v2211 = vadd.f32 %v2141, %v2210
        %v2212 = vpop.f32.mrf.mxu0
        %2213 = vdwg.mxu0
        %2214 = vmatprep.subr.mxu0 0.0
        %2215 = vmatpush1.msra.mxu0 %v830
        %2216 = vmatprep.subr.mxu0 0.0
        %2217 = vmatpush1.msra.mxu0 %v829
        %2218 = vmatprep.subr.mxu0 0.0
        %2219 = vmatpush1.msra.mxu0 %v828
        %2220 = vmatprep.subr.mxu0 0.0
        %2221 = vmatpush1.msra.mxu0 %v827
        %2222 = vmatprep.subr.mxu0 0.0
        %2223 = vmatpush1.msra.mxu0 %v826
        %2224 = vmatprep.subr.mxu0 0.0
        %2225 = vmatpush1.msra.mxu0 %v825
        %2226 = vmatprep.subr.mxu0 0.0
        %2227 = vmatpush1.msra.mxu0 %v824
        %2228 = vmatprep.subr.mxu0 0.0
        %2229 = vmatpush1.msra.mxu0 %v823
        %2230 = vmatprep.subr.mxu0 0.0
        %2231 = vmatpush1.msra.mxu0 %v822
        %2232 = vmatprep.subr.mxu0 0.0
        %2233 = vmatpush1.msra.mxu0 %v821
        %2234 = vmatprep.subr.mxu0 0.0
        %2235 = vmatpush1.msra.mxu0 %v820
        %2236 = vmatprep.subr.mxu0 0.0
        %2237 = vmatpush1.msra.mxu0 %v819
        %2238 = vmatprep.subr.mxu0 0.0
        %2239 = vmatpush1.msra.mxu0 %v818
        %2240 = vmatprep.subr.mxu0 0.0
        %2241 = vmatpush1.msra.mxu0 %v817
        %2242 = vmatprep.subr.mxu0 0.0
        %2243 = vmatpush1.msra.mxu0 %v816
        %2244 = vmatprep.subr.mxu0 0.0
        %2245 = vmatpush1.msra.mxu0 %v815
        %2246 = vmatprep.subr.mxu0 0.0
        %2247 = vmatpush2.msra.mxu0 %v846
        %2248 = vmatprep.subr.mxu0 0.0
        %2249 = vmatpush2.msra.mxu0 %v845
        %2250 = vmatprep.subr.mxu0 0.0
        %2251 = vmatpush2.msra.mxu0 %v844
        %2252 = vmatprep.subr.mxu0 0.0
        %2253 = vmatpush2.msra.mxu0 %v843
        %2254 = vmatprep.subr.mxu0 0.0
        %2255 = vmatpush2.msra.mxu0 %v842
        %2256 = vmatprep.subr.mxu0 0.0
        %2257 = vmatpush2.msra.mxu0 %v841
        %2258 = vmatprep.subr.mxu0 0.0
        %2259 = vmatpush2.msra.mxu0 %v840
        %2260 = vmatprep.subr.mxu0 0.0
        %2261 = vmatpush2.msra.mxu0 %v839
        %2262 = vmatprep.subr.mxu0 0.0
        %2263 = vmatpush2.msra.mxu0 %v838
        %2264 = vmatprep.subr.mxu0 0.0
        %2265 = vmatpush2.msra.mxu0 %v837
        %2266 = vmatprep.subr.mxu0 0.0
        %2267 = vmatpush2.msra.mxu0 %v836
        %2268 = vmatprep.subr.mxu0 0.0
        %2269 = vmatpush2.msra.mxu0 %v835
        %2270 = vmatprep.subr.mxu0 0.0
        %2271 = vmatpush2.msra.mxu0 %v834
        %2272 = vmatprep.subr.mxu0 0.0
        %2273 = vmatpush2.msra.mxu0 %v833
        %2274 = vmatprep.subr.mxu0 0.0
        %2275 = vmatpush2.msra.mxu0 %v832
        %2276 = vmatprep.subr.mxu0 0.0
        %2277 = vmatpush2.msra.mxu0 %v831
        %2278 = vmatprep.mubr.f32.mxu0 %v1408
        %2279 = vmatmul.mubr.f32.gmra.mxu0 %v1406
        %v2280 = vpop.f32.mrf.mxu0
        %v2281 = vadd.f32 %v2211, %v2280
        %v2282 = vpop.f32.mrf.mxu0
        %2283 = vdwg.mxu0
        %2284 = vmatprep.subr.mxu0 0.0
        %2285 = vmatpush1.msra.mxu0 %v862
        %2286 = vmatprep.subr.mxu0 0.0
        %2287 = vmatpush1.msra.mxu0 %v861
        %2288 = vmatprep.subr.mxu0 0.0
        %2289 = vmatpush1.msra.mxu0 %v860
        %2290 = vmatprep.subr.mxu0 0.0
        %2291 = vmatpush1.msra.mxu0 %v859
        %2292 = vmatprep.subr.mxu0 0.0
        %2293 = vmatpush1.msra.mxu0 %v858
        %2294 = vmatprep.subr.mxu0 0.0
        %2295 = vmatpush1.msra.mxu0 %v857
        %2296 = vmatprep.subr.mxu0 0.0
        %2297 = vmatpush1.msra.mxu0 %v856
        %2298 = vmatprep.subr.mxu0 0.0
        %2299 = vmatpush1.msra.mxu0 %v855
        %2300 = vmatprep.subr.mxu0 0.0
        %2301 = vmatpush1.msra.mxu0 %v854
        %2302 = vmatprep.subr.mxu0 0.0
        %2303 = vmatpush1.msra.mxu0 %v853
        %2304 = vmatprep.subr.mxu0 0.0
        %2305 = vmatpush1.msra.mxu0 %v852
        %2306 = vmatprep.subr.mxu0 0.0
        %2307 = vmatpush1.msra.mxu0 %v851
        %2308 = vmatprep.subr.mxu0 0.0
        %2309 = vmatpush1.msra.mxu0 %v850
        %2310 = vmatprep.subr.mxu0 0.0
        %2311 = vmatpush1.msra.mxu0 %v849
        %2312 = vmatprep.subr.mxu0 0.0
        %2313 = vmatpush1.msra.mxu0 %v848
        %2314 = vmatprep.subr.mxu0 0.0
        %2315 = vmatpush1.msra.mxu0 %v847
        %2316 = vmatprep.subr.mxu0 0.0
        %2317 = vmatpush2.msra.mxu0 %v878
        %2318 = vmatprep.subr.mxu0 0.0
        %2319 = vmatpush2.msra.mxu0 %v877
        %2320 = vmatprep.subr.mxu0 0.0
        %2321 = vmatpush2.msra.mxu0 %v876
        %2322 = vmatprep.subr.mxu0 0.0
        %2323 = vmatpush2.msra.mxu0 %v875
        %2324 = vmatprep.subr.mxu0 0.0
        %2325 = vmatpush2.msra.mxu0 %v874
        %2326 = vmatprep.subr.mxu0 0.0
        %2327 = vmatpush2.msra.mxu0 %v873
        %2328 = vmatprep.subr.mxu0 0.0
        %2329 = vmatpush2.msra.mxu0 %v872
        %2330 = vmatprep.subr.mxu0 0.0
        %2331 = vmatpush2.msra.mxu0 %v871
        %2332 = vmatprep.subr.mxu0 0.0
        %2333 = vmatpush2.msra.mxu0 %v870
        %2334 = vmatprep.subr.mxu0 0.0
        %2335 = vmatpush2.msra.mxu0 %v869
        %2336 = vmatprep.subr.mxu0 0.0
        %2337 = vmatpush2.msra.mxu0 %v868
        %2338 = vmatprep.subr.mxu0 0.0
        %2339 = vmatpush2.msra.mxu0 %v867
        %2340 = vmatprep.subr.mxu0 0.0
        %2341 = vmatpush2.msra.mxu0 %v866
        %2342 = vmatprep.subr.mxu0 0.0
        %2343 = vmatpush2.msra.mxu0 %v865
        %2344 = vmatprep.subr.mxu0 0.0
        %2345 = vmatpush2.msra.mxu0 %v864
        %2346 = vmatprep.subr.mxu0 0.0
        %2347 = vmatpush2.msra.mxu0 %v863
        %2348 = vmatprep.mubr.f32.mxu0 %v1424
        %2349 = vmatmul.mubr.f32.gmra.mxu0 %v1416
        %v2350 = vpop.f32.mrf.mxu0
        %v2351 = vadd.f32 %v2281, %v2350
        %v2352 = vpop.f32.mrf.mxu0
        %2353 = vdwg.mxu0
        %2354 = vmatprep.subr.mxu0 0.0
        %2355 = vmatpush1.msra.mxu0 %v894
        %2356 = vmatprep.subr.mxu0 0.0
        %2357 = vmatpush1.msra.mxu0 %v893
        %2358 = vmatprep.subr.mxu0 0.0
        %2359 = vmatpush1.msra.mxu0 %v892
        %2360 = vmatprep.subr.mxu0 0.0
        %2361 = vmatpush1.msra.mxu0 %v891
        %2362 = vmatprep.subr.mxu0 0.0
        %2363 = vmatpush1.msra.mxu0 %v890
        %2364 = vmatprep.subr.mxu0 0.0
        %2365 = vmatpush1.msra.mxu0 %v889
        %2366 = vmatprep.subr.mxu0 0.0
        %2367 = vmatpush1.msra.mxu0 %v888
        %2368 = vmatprep.subr.mxu0 0.0
        %2369 = vmatpush1.msra.mxu0 %v887
        %2370 = vmatprep.subr.mxu0 0.0
        %2371 = vmatpush1.msra.mxu0 %v886
        %2372 = vmatprep.subr.mxu0 0.0
        %2373 = vmatpush1.msra.mxu0 %v885
        %2374 = vmatprep.subr.mxu0 0.0
        %2375 = vmatpush1.msra.mxu0 %v884
        %2376 = vmatprep.subr.mxu0 0.0
        %2377 = vmatpush1.msra.mxu0 %v883
        %2378 = vmatprep.subr.mxu0 0.0
        %2379 = vmatpush1.msra.mxu0 %v882
        %2380 = vmatprep.subr.mxu0 0.0
        %2381 = vmatpush1.msra.mxu0 %v881
        %2382 = vmatprep.subr.mxu0 0.0
        %2383 = vmatpush1.msra.mxu0 %v880
        %2384 = vmatprep.subr.mxu0 0.0
        %2385 = vmatpush1.msra.mxu0 %v879
        %2386 = vmatprep.subr.mxu0 0.0
        %2387 = vmatpush2.msra.mxu0 %v910
        %2388 = vmatprep.subr.mxu0 0.0
        %2389 = vmatpush2.msra.mxu0 %v909
        %2390 = vmatprep.subr.mxu0 0.0
        %2391 = vmatpush2.msra.mxu0 %v908
        %2392 = vmatprep.subr.mxu0 0.0
        %2393 = vmatpush2.msra.mxu0 %v907
        %2394 = vmatprep.subr.mxu0 0.0
        %2395 = vmatpush2.msra.mxu0 %v906
        %2396 = vmatprep.subr.mxu0 0.0
        %2397 = vmatpush2.msra.mxu0 %v905
        %2398 = vmatprep.subr.mxu0 0.0
        %2399 = vmatpush2.msra.mxu0 %v904
        %2400 = vmatprep.subr.mxu0 0.0
        %2401 = vmatpush2.msra.mxu0 %v903
        %2402 = vmatprep.subr.mxu0 0.0
        %2403 = vmatpush2.msra.mxu0 %v902
        %2404 = vmatprep.subr.mxu0 0.0
        %2405 = vmatpush2.msra.mxu0 %v901
        %2406 = vmatprep.subr.mxu0 0.0
        %2407 = vmatpush2.msra.mxu0 %v900
        %2408 = vmatprep.subr.mxu0 0.0
        %2409 = vmatpush2.msra.mxu0 %v899
        %2410 = vmatprep.subr.mxu0 0.0
        %2411 = vmatpush2.msra.mxu0 %v898
        %2412 = vmatprep.subr.mxu0 0.0
        %2413 = vmatpush2.msra.mxu0 %v897
        %2414 = vmatprep.subr.mxu0 0.0
        %2415 = vmatpush2.msra.mxu0 %v896
        %2416 = vmatprep.subr.mxu0 0.0
        %2417 = vmatpush2.msra.mxu0 %v895
        %2418 = vmatprep.mubr.f32.mxu0 %v1425
        %2419 = vmatmul.mubr.f32.gmra.mxu0 %v1423
        %v2420 = vpop.f32.mrf.mxu0
        %v2421 = vadd.f32 %v2351, %v2420
        %v2422 = vpop.f32.mrf.mxu0
        %2423 = vdwg.mxu0
        %2424 = vmatprep.subr.mxu0 0.0
        %2425 = vmatpush1.msra.mxu0 %v926
        %2426 = vmatprep.subr.mxu0 0.0
        %2427 = vmatpush1.msra.mxu0 %v925
        %2428 = vmatprep.subr.mxu0 0.0
        %2429 = vmatpush1.msra.mxu0 %v924
        %2430 = vmatprep.subr.mxu0 0.0
        %2431 = vmatpush1.msra.mxu0 %v923
        %2432 = vmatprep.subr.mxu0 0.0
        %2433 = vmatpush1.msra.mxu0 %v922
        %2434 = vmatprep.subr.mxu0 0.0
        %2435 = vmatpush1.msra.mxu0 %v921
        %2436 = vmatprep.subr.mxu0 0.0
        %2437 = vmatpush1.msra.mxu0 %v920
        %2438 = vmatprep.subr.mxu0 0.0
        %2439 = vmatpush1.msra.mxu0 %v919
        %2440 = vmatprep.subr.mxu0 0.0
        %2441 = vmatpush1.msra.mxu0 %v918
        %2442 = vmatprep.subr.mxu0 0.0
        %2443 = vmatpush1.msra.mxu0 %v917
        %2444 = vmatprep.subr.mxu0 0.0
        %2445 = vmatpush1.msra.mxu0 %v916
        %2446 = vmatprep.subr.mxu0 0.0
        %2447 = vmatpush1.msra.mxu0 %v915
        %2448 = vmatprep.subr.mxu0 0.0
        %2449 = vmatpush1.msra.mxu0 %v914
        %2450 = vmatprep.subr.mxu0 0.0
        %2451 = vmatpush1.msra.mxu0 %v913
        %2452 = vmatprep.subr.mxu0 0.0
        %2453 = vmatpush1.msra.mxu0 %v912
        %2454 = vmatprep.subr.mxu0 0.0
        %2455 = vmatpush1.msra.mxu0 %v911
        %2456 = vmatprep.subr.mxu0 0.0
        %2457 = vmatpush2.msra.mxu0 %v942
        %2458 = vmatprep.subr.mxu0 0.0
        %2459 = vmatpush2.msra.mxu0 %v941
        %2460 = vmatprep.subr.mxu0 0.0
        %2461 = vmatpush2.msra.mxu0 %v940
        %2462 = vmatprep.subr.mxu0 0.0
        %2463 = vmatpush2.msra.mxu0 %v939
        %2464 = vmatprep.subr.mxu0 0.0
        %2465 = vmatpush2.msra.mxu0 %v938
        %2466 = vmatprep.subr.mxu0 0.0
        %2467 = vmatpush2.msra.mxu0 %v937
        %2468 = vmatprep.subr.mxu0 0.0
        %2469 = vmatpush2.msra.mxu0 %v936
        %2470 = vmatprep.subr.mxu0 0.0
        %2471 = vmatpush2.msra.mxu0 %v935
        %2472 = vmatprep.subr.mxu0 0.0
        %2473 = vmatpush2.msra.mxu0 %v934
        %2474 = vmatprep.subr.mxu0 0.0
        %2475 = vmatpush2.msra.mxu0 %v933
        %2476 = vmatprep.subr.mxu0 0.0
        %2477 = vmatpush2.msra.mxu0 %v932
        %2478 = vmatprep.subr.mxu0 0.0
        %2479 = vmatpush2.msra.mxu0 %v931
        %2480 = vmatprep.subr.mxu0 0.0
        %2481 = vmatpush2.msra.mxu0 %v930
        %2482 = vmatprep.subr.mxu0 0.0
        %2483 = vmatpush2.msra.mxu0 %v929
        %2484 = vmatprep.subr.mxu0 0.0
        %2485 = vmatpush2.msra.mxu0 %v928
        %2486 = vmatprep.subr.mxu0 0.0
        %2487 = vmatpush2.msra.mxu0 %v927
        %2488 = vmatprep.mubr.f32.mxu0 %v1441
        %2489 = vmatmul.mubr.f32.gmra.mxu0 %v1433
        %v2490 = vpop.f32.mrf.mxu0
        %v2491 = vadd.f32 %v2421, %v2490
        %v2492 = vpop.f32.mrf.mxu0
        %2493 = vdwg.mxu0
        %2494 = vmatprep.subr.mxu0 0.0
        %2495 = vmatpush1.msra.mxu0 %v958
        %2496 = vmatprep.subr.mxu0 0.0
        %2497 = vmatpush1.msra.mxu0 %v957
        %2498 = vmatprep.subr.mxu0 0.0
        %2499 = vmatpush1.msra.mxu0 %v956
        %2500 = vmatprep.subr.mxu0 0.0
        %2501 = vmatpush1.msra.mxu0 %v955
        %2502 = vmatprep.subr.mxu0 0.0
        %2503 = vmatpush1.msra.mxu0 %v954
        %2504 = vmatprep.subr.mxu0 0.0
        %2505 = vmatpush1.msra.mxu0 %v953
        %2506 = vmatprep.subr.mxu0 0.0
        %2507 = vmatpush1.msra.mxu0 %v952
        %2508 = vmatprep.subr.mxu0 0.0
        %2509 = vmatpush1.msra.mxu0 %v951
        %2510 = vmatprep.subr.mxu0 0.0
        %2511 = vmatpush1.msra.mxu0 %v950
        %2512 = vmatprep.subr.mxu0 0.0
        %2513 = vmatpush1.msra.mxu0 %v949
        %2514 = vmatprep.subr.mxu0 0.0
        %2515 = vmatpush1.msra.mxu0 %v948
        %2516 = vmatprep.subr.mxu0 0.0
        %2517 = vmatpush1.msra.mxu0 %v947
        %2518 = vmatprep.subr.mxu0 0.0
        %2519 = vmatpush1.msra.mxu0 %v946
        %2520 = vmatprep.subr.mxu0 0.0
        %2521 = vmatpush1.msra.mxu0 %v945
        %2522 = vmatprep.subr.mxu0 0.0
        %2523 = vmatpush1.msra.mxu0 %v944
        %2524 = vmatprep.subr.mxu0 0.0
        %2525 = vmatpush1.msra.mxu0 %v943
        %2526 = vmatprep.subr.mxu0 0.0
        %2527 = vmatpush2.msra.mxu0 %v974
        %2528 = vmatprep.subr.mxu0 0.0
        %2529 = vmatpush2.msra.mxu0 %v973
        %2530 = vmatprep.subr.mxu0 0.0
        %2531 = vmatpush2.msra.mxu0 %v972
        %2532 = vmatprep.subr.mxu0 0.0
        %2533 = vmatpush2.msra.mxu0 %v971
        %2534 = vmatprep.subr.mxu0 0.0
        %2535 = vmatpush2.msra.mxu0 %v970
        %2536 = vmatprep.subr.mxu0 0.0
        %2537 = vmatpush2.msra.mxu0 %v969
        %2538 = vmatprep.subr.mxu0 0.0
        %2539 = vmatpush2.msra.mxu0 %v968
        %2540 = vmatprep.subr.mxu0 0.0
        %2541 = vmatpush2.msra.mxu0 %v967
        %2542 = vmatprep.subr.mxu0 0.0
        %2543 = vmatpush2.msra.mxu0 %v966
        %2544 = vmatprep.subr.mxu0 0.0
        %2545 = vmatpush2.msra.mxu0 %v965
        %2546 = vmatprep.subr.mxu0 0.0
        %2547 = vmatpush2.msra.mxu0 %v964
        %2548 = vmatprep.subr.mxu0 0.0
        %2549 = vmatpush2.msra.mxu0 %v963
        %2550 = vmatprep.subr.mxu0 0.0
        %2551 = vmatpush2.msra.mxu0 %v962
        %2552 = vmatprep.subr.mxu0 0.0
        %2553 = vmatpush2.msra.mxu0 %v961
        %2554 = vmatprep.subr.mxu0 0.0
        %2555 = vmatpush2.msra.mxu0 %v960
        %2556 = vmatprep.subr.mxu0 0.0
        %2557 = vmatpush2.msra.mxu0 %v959
        %2558 = vmatprep.mubr.f32.mxu0 %v1442
        %2559 = vmatmul.mubr.f32.gmra.mxu0 %v1440
        %v2560 = vpop.f32.mrf.mxu0
        %v2561 = vadd.f32 %v2491, %v2560
        %v2562 = vpop.f32.mrf.mxu0
        %2563 = vdwg.mxu0
        %2564 = vmatprep.subr.mxu0 0.0
        %2565 = vmatpush1.msra.mxu0 %v990
        %2566 = vmatprep.subr.mxu0 0.0
        %2567 = vmatpush1.msra.mxu0 %v989
        %2568 = vmatprep.subr.mxu0 0.0
        %2569 = vmatpush1.msra.mxu0 %v988
        %2570 = vmatprep.subr.mxu0 0.0
        %2571 = vmatpush1.msra.mxu0 %v987
        %2572 = vmatprep.subr.mxu0 0.0
        %2573 = vmatpush1.msra.mxu0 %v986
        %2574 = vmatprep.subr.mxu0 0.0
        %2575 = vmatpush1.msra.mxu0 %v985
        %2576 = vmatprep.subr.mxu0 0.0
        %2577 = vmatpush1.msra.mxu0 %v984
        %2578 = vmatprep.subr.mxu0 0.0
        %2579 = vmatpush1.msra.mxu0 %v983
        %2580 = vmatprep.subr.mxu0 0.0
        %2581 = vmatpush1.msra.mxu0 %v982
        %2582 = vmatprep.subr.mxu0 0.0
        %2583 = vmatpush1.msra.mxu0 %v981
        %2584 = vmatprep.subr.mxu0 0.0
        %2585 = vmatpush1.msra.mxu0 %v980
        %2586 = vmatprep.subr.mxu0 0.0
        %2587 = vmatpush1.msra.mxu0 %v979
        %2588 = vmatprep.subr.mxu0 0.0
        %2589 = vmatpush1.msra.mxu0 %v978
        %2590 = vmatprep.subr.mxu0 0.0
        %2591 = vmatpush1.msra.mxu0 %v977
        %2592 = vmatprep.subr.mxu0 0.0
        %2593 = vmatpush1.msra.mxu0 %v976
        %2594 = vmatprep.subr.mxu0 0.0
        %2595 = vmatpush1.msra.mxu0 %v975
        %2596 = vmatprep.subr.mxu0 0.0
        %2597 = vmatpush2.msra.mxu0 %v1006
        %2598 = vmatprep.subr.mxu0 0.0
        %2599 = vmatpush2.msra.mxu0 %v1005
        %2600 = vmatprep.subr.mxu0 0.0
        %2601 = vmatpush2.msra.mxu0 %v1004
        %2602 = vmatprep.subr.mxu0 0.0
        %2603 = vmatpush2.msra.mxu0 %v1003
        %2604 = vmatprep.subr.mxu0 0.0
        %2605 = vmatpush2.msra.mxu0 %v1002
        %2606 = vmatprep.subr.mxu0 0.0
        %2607 = vmatpush2.msra.mxu0 %v1001
        %2608 = vmatprep.subr.mxu0 0.0
        %2609 = vmatpush2.msra.mxu0 %v1000
        %2610 = vmatprep.subr.mxu0 0.0
        %2611 = vmatpush2.msra.mxu0 %v999
        %2612 = vmatprep.subr.mxu0 0.0
        %2613 = vmatpush2.msra.mxu0 %v998
        %2614 = vmatprep.subr.mxu0 0.0
        %2615 = vmatpush2.msra.mxu0 %v997
        %2616 = vmatprep.subr.mxu0 0.0
        %2617 = vmatpush2.msra.mxu0 %v996
        %2618 = vmatprep.subr.mxu0 0.0
        %2619 = vmatpush2.msra.mxu0 %v995
        %2620 = vmatprep.subr.mxu0 0.0
        %2621 = vmatpush2.msra.mxu0 %v994
        %2622 = vmatprep.subr.mxu0 0.0
        %2623 = vmatpush2.msra.mxu0 %v993
        %2624 = vmatprep.subr.mxu0 0.0
        %2625 = vmatpush2.msra.mxu0 %v992
        %2626 = vmatprep.subr.mxu0 0.0
        %2627 = vmatpush2.msra.mxu0 %v991
        %2628 = vmatprep.mubr.f32.mxu0 %v1458
        %2629 = vmatmul.mubr.f32.gmra.mxu0 %v1450
        %v2630 = vpop.f32.mrf.mxu0
        %v2631 = vadd.f32 %v2561, %v2630
        %v2632 = vpop.f32.mrf.mxu0
        %2633 = vdwg.mxu0
        %2634 = vmatprep.subr.mxu0 0.0
        %2635 = vmatpush1.msra.mxu0 %v1022
        %2636 = vmatprep.subr.mxu0 0.0
        %2637 = vmatpush1.msra.mxu0 %v1021
        %2638 = vmatprep.subr.mxu0 0.0
        %2639 = vmatpush1.msra.mxu0 %v1020
        %2640 = vmatprep.subr.mxu0 0.0
        %2641 = vmatpush1.msra.mxu0 %v1019
        %2642 = vmatprep.subr.mxu0 0.0
        %2643 = vmatpush1.msra.mxu0 %v1018
        %2644 = vmatprep.subr.mxu0 0.0
        %2645 = vmatpush1.msra.mxu0 %v1017
        %2646 = vmatprep.subr.mxu0 0.0
        %2647 = vmatpush1.msra.mxu0 %v1016
        %2648 = vmatprep.subr.mxu0 0.0
        %2649 = vmatpush1.msra.mxu0 %v1015
        %2650 = vmatprep.subr.mxu0 0.0
        %2651 = vmatpush1.msra.mxu0 %v1014
        %2652 = vmatprep.subr.mxu0 0.0
        %2653 = vmatpush1.msra.mxu0 %v1013
        %2654 = vmatprep.subr.mxu0 0.0
        %2655 = vmatpush1.msra.mxu0 %v1012
        %2656 = vmatprep.subr.mxu0 0.0
        %2657 = vmatpush1.msra.mxu0 %v1011
        %2658 = vmatprep.subr.mxu0 0.0
        %2659 = vmatpush1.msra.mxu0 %v1010
        %2660 = vmatprep.subr.mxu0 0.0
        %2661 = vmatpush1.msra.mxu0 %v1009
        %2662 = vmatprep.subr.mxu0 0.0
        %2663 = vmatpush1.msra.mxu0 %v1008
        %2664 = vmatprep.subr.mxu0 0.0
        %2665 = vmatpush1.msra.mxu0 %v1007
        %2666 = vmatprep.subr.mxu0 0.0
        %2667 = vmatpush2.msra.mxu0 %v1038
        %2668 = vmatprep.subr.mxu0 0.0
        %2669 = vmatpush2.msra.mxu0 %v1037
        %2670 = vmatprep.subr.mxu0 0.0
        %2671 = vmatpush2.msra.mxu0 %v1036
        %2672 = vmatprep.subr.mxu0 0.0
        %2673 = vmatpush2.msra.mxu0 %v1035
        %2674 = vmatprep.subr.mxu0 0.0
        %2675 = vmatpush2.msra.mxu0 %v1034
        %2676 = vmatprep.subr.mxu0 0.0
        %2677 = vmatpush2.msra.mxu0 %v1033
        %2678 = vmatprep.subr.mxu0 0.0
        %2679 = vmatpush2.msra.mxu0 %v1032
        %2680 = vmatprep.subr.mxu0 0.0
        %2681 = vmatpush2.msra.mxu0 %v1031
        %2682 = vmatprep.subr.mxu0 0.0
        %2683 = vmatpush2.msra.mxu0 %v1030
        %2684 = vmatprep.subr.mxu0 0.0
        %2685 = vmatpush2.msra.mxu0 %v1029
        %2686 = vmatprep.subr.mxu0 0.0
        %2687 = vmatpush2.msra.mxu0 %v1028
        %2688 = vmatprep.subr.mxu0 0.0
        %2689 = vmatpush2.msra.mxu0 %v1027
        %2690 = vmatprep.subr.mxu0 0.0
        %2691 = vmatpush2.msra.mxu0 %v1026
        %2692 = vmatprep.subr.mxu0 0.0
        %2693 = vmatpush2.msra.mxu0 %v1025
        %2694 = vmatprep.subr.mxu0 0.0
        %2695 = vmatpush2.msra.mxu0 %v1024
        %2696 = vmatprep.subr.mxu0 0.0
        %2697 = vmatpush2.msra.mxu0 %v1023
        %2698 = vmatprep.mubr.f32.mxu0 %v1459
        %2699 = vmatmul.mubr.f32.gmra.mxu0 %v1457
        %v2700 = vpop.f32.mrf.mxu0
        %v2701 = vadd.f32 %v2631, %v2700
        %v2702 = vpop.f32.mrf.mxu0
        %2703 = vdwg.mxu0
        %2704 = vmatprep.subr.mxu0 0.0
        %2705 = vmatpush1.msra.mxu0 %v1054
        %2706 = vmatprep.subr.mxu0 0.0
        %2707 = vmatpush1.msra.mxu0 %v1053
        %2708 = vmatprep.subr.mxu0 0.0
        %2709 = vmatpush1.msra.mxu0 %v1052
        %2710 = vmatprep.subr.mxu0 0.0
        %2711 = vmatpush1.msra.mxu0 %v1051
        %2712 = vmatprep.subr.mxu0 0.0
        %2713 = vmatpush1.msra.mxu0 %v1050
        %2714 = vmatprep.subr.mxu0 0.0
        %2715 = vmatpush1.msra.mxu0 %v1049
        %2716 = vmatprep.subr.mxu0 0.0
        %2717 = vmatpush1.msra.mxu0 %v1048
        %2718 = vmatprep.subr.mxu0 0.0
        %2719 = vmatpush1.msra.mxu0 %v1047
        %2720 = vmatprep.subr.mxu0 0.0
        %2721 = vmatpush1.msra.mxu0 %v1046
        %2722 = vmatprep.subr.mxu0 0.0
        %2723 = vmatpush1.msra.mxu0 %v1045
        %2724 = vmatprep.subr.mxu0 0.0
        %2725 = vmatpush1.msra.mxu0 %v1044
        %2726 = vmatprep.subr.mxu0 0.0
        %2727 = vmatpush1.msra.mxu0 %v1043
        %2728 = vmatprep.subr.mxu0 0.0
        %2729 = vmatpush1.msra.mxu0 %v1042
        %2730 = vmatprep.subr.mxu0 0.0
        %2731 = vmatpush1.msra.mxu0 %v1041
        %2732 = vmatprep.subr.mxu0 0.0
        %2733 = vmatpush1.msra.mxu0 %v1040
        %2734 = vmatprep.subr.mxu0 0.0
        %2735 = vmatpush1.msra.mxu0 %v1039
        %2736 = vmatprep.subr.mxu0 0.0
        %2737 = vmatpush2.msra.mxu0 %v1070
        %2738 = vmatprep.subr.mxu0 0.0
        %2739 = vmatpush2.msra.mxu0 %v1069
        %2740 = vmatprep.subr.mxu0 0.0
        %2741 = vmatpush2.msra.mxu0 %v1068
        %2742 = vmatprep.subr.mxu0 0.0
        %2743 = vmatpush2.msra.mxu0 %v1067
        %2744 = vmatprep.subr.mxu0 0.0
        %2745 = vmatpush2.msra.mxu0 %v1066
        %2746 = vmatprep.subr.mxu0 0.0
        %2747 = vmatpush2.msra.mxu0 %v1065
        %2748 = vmatprep.subr.mxu0 0.0
        %2749 = vmatpush2.msra.mxu0 %v1064
        %2750 = vmatprep.subr.mxu0 0.0
        %2751 = vmatpush2.msra.mxu0 %v1063
        %2752 = vmatprep.subr.mxu0 0.0
        %2753 = vmatpush2.msra.mxu0 %v1062
        %2754 = vmatprep.subr.mxu0 0.0
        %2755 = vmatpush2.msra.mxu0 %v1061
        %2756 = vmatprep.subr.mxu0 0.0
        %2757 = vmatpush2.msra.mxu0 %v1060
        %2758 = vmatprep.subr.mxu0 0.0
        %2759 = vmatpush2.msra.mxu0 %v1059
        %2760 = vmatprep.subr.mxu0 0.0
        %2761 = vmatpush2.msra.mxu0 %v1058
        %2762 = vmatprep.subr.mxu0 0.0
        %2763 = vmatpush2.msra.mxu0 %v1057
        %2764 = vmatprep.subr.mxu0 0.0
        %2765 = vmatpush2.msra.mxu0 %v1056
        %2766 = vmatprep.subr.mxu0 0.0
        %2767 = vmatpush2.msra.mxu0 %v1055
        %2768 = vmatprep.mubr.f32.mxu0 %v1475
        %2769 = vmatmul.mubr.f32.gmra.mxu0 %v1467
        %v2770 = vpop.f32.mrf.mxu0
        %v2771 = vadd.f32 %v2701, %v2770
        %v2772 = vpop.f32.mrf.mxu0
        %2773 = vdwg.mxu0
        %2774 = vmatprep.subr.mxu0 0.0
        %2775 = vmatpush1.msra.mxu0 %v1086
        %2776 = vmatprep.subr.mxu0 0.0
        %2777 = vmatpush1.msra.mxu0 %v1085
        %2778 = vmatprep.subr.mxu0 0.0
        %2779 = vmatpush1.msra.mxu0 %v1084
        %2780 = vmatprep.subr.mxu0 0.0
        %2781 = vmatpush1.msra.mxu0 %v1083
        %2782 = vmatprep.subr.mxu0 0.0
        %2783 = vmatpush1.msra.mxu0 %v1082
        %2784 = vmatprep.subr.mxu0 0.0
        %2785 = vmatpush1.msra.mxu0 %v1081
        %2786 = vmatprep.subr.mxu0 0.0
        %2787 = vmatpush1.msra.mxu0 %v1080
        %2788 = vmatprep.subr.mxu0 0.0
        %2789 = vmatpush1.msra.mxu0 %v1079
        %2790 = vmatprep.subr.mxu0 0.0
        %2791 = vmatpush1.msra.mxu0 %v1078
        %2792 = vmatprep.subr.mxu0 0.0
        %2793 = vmatpush1.msra.mxu0 %v1077
        %2794 = vmatprep.subr.mxu0 0.0
        %2795 = vmatpush1.msra.mxu0 %v1076
        %2796 = vmatprep.subr.mxu0 0.0
        %2797 = vmatpush1.msra.mxu0 %v1075
        %2798 = vmatprep.subr.mxu0 0.0
        %2799 = vmatpush1.msra.mxu0 %v1074
        %2800 = vmatprep.subr.mxu0 0.0
        %2801 = vmatpush1.msra.mxu0 %v1073
        %2802 = vmatprep.subr.mxu0 0.0
        %2803 = vmatpush1.msra.mxu0 %v1072
        %2804 = vmatprep.subr.mxu0 0.0
        %2805 = vmatpush1.msra.mxu0 %v1071
        %2806 = vmatprep.subr.mxu0 0.0
        %2807 = vmatpush2.msra.mxu0 %v1102
        %2808 = vmatprep.subr.mxu0 0.0
        %2809 = vmatpush2.msra.mxu0 %v1101
        %2810 = vmatprep.subr.mxu0 0.0
        %2811 = vmatpush2.msra.mxu0 %v1100
        %2812 = vmatprep.subr.mxu0 0.0
        %2813 = vmatpush2.msra.mxu0 %v1099
        %2814 = vmatprep.subr.mxu0 0.0
        %2815 = vmatpush2.msra.mxu0 %v1098
        %2816 = vmatprep.subr.mxu0 0.0
        %2817 = vmatpush2.msra.mxu0 %v1097
        %2818 = vmatprep.subr.mxu0 0.0
        %2819 = vmatpush2.msra.mxu0 %v1096
        %2820 = vmatprep.subr.mxu0 0.0
        %2821 = vmatpush2.msra.mxu0 %v1095
        %2822 = vmatprep.subr.mxu0 0.0
        %2823 = vmatpush2.msra.mxu0 %v1094
        %2824 = vmatprep.subr.mxu0 0.0
        %2825 = vmatpush2.msra.mxu0 %v1093
        %2826 = vmatprep.subr.mxu0 0.0
        %2827 = vmatpush2.msra.mxu0 %v1092
        %2828 = vmatprep.subr.mxu0 0.0
        %2829 = vmatpush2.msra.mxu0 %v1091
        %2830 = vmatprep.subr.mxu0 0.0
        %2831 = vmatpush2.msra.mxu0 %v1090
        %2832 = vmatprep.subr.mxu0 0.0
        %2833 = vmatpush2.msra.mxu0 %v1089
        %2834 = vmatprep.subr.mxu0 0.0
        %2835 = vmatpush2.msra.mxu0 %v1088
        %2836 = vmatprep.subr.mxu0 0.0
        %2837 = vmatpush2.msra.mxu0 %v1087
        %2838 = vmatprep.mubr.f32.mxu0 %v1476
        %2839 = vmatmul.mubr.f32.gmra.mxu0 %v1474
        %v2840 = vpop.f32.mrf.mxu0
        %v2841 = vadd.f32 %v2771, %v2840
        %v2842 = vpop.f32.mrf.mxu0
        %2843 = vdwg.mxu0
        %2844 = vmatprep.subr.mxu0 0.0
        %2845 = vmatpush1.msra.mxu0 %v1118
        %2846 = vmatprep.subr.mxu0 0.0
        %2847 = vmatpush1.msra.mxu0 %v1117
        %2848 = vmatprep.subr.mxu0 0.0
        %2849 = vmatpush1.msra.mxu0 %v1116
        %2850 = vmatprep.subr.mxu0 0.0
        %2851 = vmatpush1.msra.mxu0 %v1115
        %2852 = vmatprep.subr.mxu0 0.0
        %2853 = vmatpush1.msra.mxu0 %v1114
        %2854 = vmatprep.subr.mxu0 0.0
        %2855 = vmatpush1.msra.mxu0 %v1113
        %2856 = vmatprep.subr.mxu0 0.0
        %2857 = vmatpush1.msra.mxu0 %v1112
        %2858 = vmatprep.subr.mxu0 0.0
        %2859 = vmatpush1.msra.mxu0 %v1111
        %2860 = vmatprep.subr.mxu0 0.0
        %2861 = vmatpush1.msra.mxu0 %v1110
        %2862 = vmatprep.subr.mxu0 0.0
        %2863 = vmatpush1.msra.mxu0 %v1109
        %2864 = vmatprep.subr.mxu0 0.0
        %2865 = vmatpush1.msra.mxu0 %v1108
        %2866 = vmatprep.subr.mxu0 0.0
        %2867 = vmatpush1.msra.mxu0 %v1107
        %2868 = vmatprep.subr.mxu0 0.0
        %2869 = vmatpush1.msra.mxu0 %v1106
        %2870 = vmatprep.subr.mxu0 0.0
        %2871 = vmatpush1.msra.mxu0 %v1105
        %2872 = vmatprep.subr.mxu0 0.0
        %2873 = vmatpush1.msra.mxu0 %v1104
        %2874 = vmatprep.subr.mxu0 0.0
        %2875 = vmatpush1.msra.mxu0 %v1103
        %2876 = vmatprep.subr.mxu0 0.0
        %2877 = vmatpush2.msra.mxu0 %v1134
        %2878 = vmatprep.subr.mxu0 0.0
        %2879 = vmatpush2.msra.mxu0 %v1133
        %2880 = vmatprep.subr.mxu0 0.0
        %2881 = vmatpush2.msra.mxu0 %v1132
        %2882 = vmatprep.subr.mxu0 0.0
        %2883 = vmatpush2.msra.mxu0 %v1131
        %2884 = vmatprep.subr.mxu0 0.0
        %2885 = vmatpush2.msra.mxu0 %v1130
        %2886 = vmatprep.subr.mxu0 0.0
        %2887 = vmatpush2.msra.mxu0 %v1129
        %2888 = vmatprep.subr.mxu0 0.0
        %2889 = vmatpush2.msra.mxu0 %v1128
        %2890 = vmatprep.subr.mxu0 0.0
        %2891 = vmatpush2.msra.mxu0 %v1127
        %2892 = vmatprep.subr.mxu0 0.0
        %2893 = vmatpush2.msra.mxu0 %v1126
        %2894 = vmatprep.subr.mxu0 0.0
        %2895 = vmatpush2.msra.mxu0 %v1125
        %2896 = vmatprep.subr.mxu0 0.0
        %2897 = vmatpush2.msra.mxu0 %v1124
        %2898 = vmatprep.subr.mxu0 0.0
        %2899 = vmatpush2.msra.mxu0 %v1123
        %2900 = vmatprep.subr.mxu0 0.0
        %2901 = vmatpush2.msra.mxu0 %v1122
        %2902 = vmatprep.subr.mxu0 0.0
        %2903 = vmatpush2.msra.mxu0 %v1121
        %2904 = vmatprep.subr.mxu0 0.0
        %2905 = vmatpush2.msra.mxu0 %v1120
        %2906 = vmatprep.subr.mxu0 0.0
        %2907 = vmatpush2.msra.mxu0 %v1119
        %2908 = vmatprep.mubr.f32.mxu0 %v1492
        %2909 = vmatmul.mubr.f32.gmra.mxu0 %v1484
        %v2910 = vpop.f32.mrf.mxu0
        %v2911 = vadd.f32 %v2841, %v2910
        %v2912 = vpop.f32.mrf.mxu0
        %2913 = vdwg.mxu0
        %2914 = vmatprep.subr.mxu0 0.0
        %2915 = vmatpush1.msra.mxu0 %v1150
        %2916 = vmatprep.subr.mxu0 0.0
        %2917 = vmatpush1.msra.mxu0 %v1149
        %2918 = vmatprep.subr.mxu0 0.0
        %2919 = vmatpush1.msra.mxu0 %v1148
        %2920 = vmatprep.subr.mxu0 0.0
        %2921 = vmatpush1.msra.mxu0 %v1147
        %2922 = vmatprep.subr.mxu0 0.0
        %2923 = vmatpush1.msra.mxu0 %v1146
        %2924 = vmatprep.subr.mxu0 0.0
        %2925 = vmatpush1.msra.mxu0 %v1145
        %2926 = vmatprep.subr.mxu0 0.0
        %2927 = vmatpush1.msra.mxu0 %v1144
        %2928 = vmatprep.subr.mxu0 0.0
        %2929 = vmatpush1.msra.mxu0 %v1143
        %2930 = vmatprep.subr.mxu0 0.0
        %2931 = vmatpush1.msra.mxu0 %v1142
        %2932 = vmatprep.subr.mxu0 0.0
        %2933 = vmatpush1.msra.mxu0 %v1141
        %2934 = vmatprep.subr.mxu0 0.0
        %2935 = vmatpush1.msra.mxu0 %v1140
        %2936 = vmatprep.subr.mxu0 0.0
        %2937 = vmatpush1.msra.mxu0 %v1139
        %2938 = vmatprep.subr.mxu0 0.0
        %2939 = vmatpush1.msra.mxu0 %v1138
        %2940 = vmatprep.subr.mxu0 0.0
        %2941 = vmatpush1.msra.mxu0 %v1137
        %2942 = vmatprep.subr.mxu0 0.0
        %2943 = vmatpush1.msra.mxu0 %v1136
        %2944 = vmatprep.subr.mxu0 0.0
        %2945 = vmatpush1.msra.mxu0 %v1135
        %2946 = vmatprep.subr.mxu0 0.0
        %2947 = vmatpush2.msra.mxu0 %v1166
        %2948 = vmatprep.subr.mxu0 0.0
        %2949 = vmatpush2.msra.mxu0 %v1165
        %2950 = vmatprep.subr.mxu0 0.0
        %2951 = vmatpush2.msra.mxu0 %v1164
        %2952 = vmatprep.subr.mxu0 0.0
        %2953 = vmatpush2.msra.mxu0 %v1163
        %2954 = vmatprep.subr.mxu0 0.0
        %2955 = vmatpush2.msra.mxu0 %v1162
        %2956 = vmatprep.subr.mxu0 0.0
        %2957 = vmatpush2.msra.mxu0 %v1161
        %2958 = vmatprep.subr.mxu0 0.0
        %2959 = vmatpush2.msra.mxu0 %v1160
        %2960 = vmatprep.subr.mxu0 0.0
        %2961 = vmatpush2.msra.mxu0 %v1159
        %2962 = vmatprep.subr.mxu0 0.0
        %2963 = vmatpush2.msra.mxu0 %v1158
        %2964 = vmatprep.subr.mxu0 0.0
        %2965 = vmatpush2.msra.mxu0 %v1157
        %2966 = vmatprep.subr.mxu0 0.0
        %2967 = vmatpush2.msra.mxu0 %v1156
        %2968 = vmatprep.subr.mxu0 0.0
        %2969 = vmatpush2.msra.mxu0 %v1155
        %2970 = vmatprep.subr.mxu0 0.0
        %2971 = vmatpush2.msra.mxu0 %v1154
        %2972 = vmatprep.subr.mxu0 0.0
        %2973 = vmatpush2.msra.mxu0 %v1153
        %2974 = vmatprep.subr.mxu0 0.0
        %2975 = vmatpush2.msra.mxu0 %v1152
        %2976 = vmatprep.subr.mxu0 0.0
        %2977 = vmatpush2.msra.mxu0 %v1151
        %2978 = vmatprep.mubr.f32.mxu0 %v1493
        %2979 = vmatmul.mubr.f32.gmra.mxu0 %v1491
        %v2980 = vpop.f32.mrf.mxu0
        %v2981 = vadd.f32 %v2911, %v2980
        %v2982 = vpop.f32.mrf.mxu0
        %2983 = vdwg.mxu0
        %2984 = vmatprep.subr.mxu0 0.0
        %2985 = vmatpush1.msra.mxu0 %v1182
        %2986 = vmatprep.subr.mxu0 0.0
        %2987 = vmatpush1.msra.mxu0 %v1181
        %2988 = vmatprep.subr.mxu0 0.0
        %2989 = vmatpush1.msra.mxu0 %v1180
        %2990 = vmatprep.subr.mxu0 0.0
        %2991 = vmatpush1.msra.mxu0 %v1179
        %2992 = vmatprep.subr.mxu0 0.0
        %2993 = vmatpush1.msra.mxu0 %v1178
        %2994 = vmatprep.subr.mxu0 0.0
        %2995 = vmatpush1.msra.mxu0 %v1177
        %2996 = vmatprep.subr.mxu0 0.0
        %2997 = vmatpush1.msra.mxu0 %v1176
        %2998 = vmatprep.subr.mxu0 0.0
        %2999 = vmatpush1.msra.mxu0 %v1175
        %3000 = vmatprep.subr.mxu0 0.0
        %3001 = vmatpush1.msra.mxu0 %v1174
        %3002 = vmatprep.subr.mxu0 0.0
        %3003 = vmatpush1.msra.mxu0 %v1173
        %3004 = vmatprep.subr.mxu0 0.0
        %3005 = vmatpush1.msra.mxu0 %v1172
        %3006 = vmatprep.subr.mxu0 0.0
        %3007 = vmatpush1.msra.mxu0 %v1171
        %3008 = vmatprep.subr.mxu0 0.0
        %3009 = vmatpush1.msra.mxu0 %v1170
        %3010 = vmatprep.subr.mxu0 0.0
        %3011 = vmatpush1.msra.mxu0 %v1169
        %3012 = vmatprep.subr.mxu0 0.0
        %3013 = vmatpush1.msra.mxu0 %v1168
        %3014 = vmatprep.subr.mxu0 0.0
        %3015 = vmatpush1.msra.mxu0 %v1167
        %3016 = vmatprep.subr.mxu0 0.0
        %3017 = vmatpush2.msra.mxu0 %v1198
        %3018 = vmatprep.subr.mxu0 0.0
        %3019 = vmatpush2.msra.mxu0 %v1197
        %3020 = vmatprep.subr.mxu0 0.0
        %3021 = vmatpush2.msra.mxu0 %v1196
        %3022 = vmatprep.subr.mxu0 0.0
        %3023 = vmatpush2.msra.mxu0 %v1195
        %3024 = vmatprep.subr.mxu0 0.0
        %3025 = vmatpush2.msra.mxu0 %v1194
        %3026 = vmatprep.subr.mxu0 0.0
        %3027 = vmatpush2.msra.mxu0 %v1193
        %3028 = vmatprep.subr.mxu0 0.0
        %3029 = vmatpush2.msra.mxu0 %v1192
        %3030 = vmatprep.subr.mxu0 0.0
        %3031 = vmatpush2.msra.mxu0 %v1191
        %3032 = vmatprep.subr.mxu0 0.0
        %3033 = vmatpush2.msra.mxu0 %v1190
        %3034 = vmatprep.subr.mxu0 0.0
        %3035 = vmatpush2.msra.mxu0 %v1189
        %3036 = vmatprep.subr.mxu0 0.0
        %3037 = vmatpush2.msra.mxu0 %v1188
        %3038 = vmatprep.subr.mxu0 0.0
        %3039 = vmatpush2.msra.mxu0 %v1187
        %3040 = vmatprep.subr.mxu0 0.0
        %3041 = vmatpush2.msra.mxu0 %v1186
        %3042 = vmatprep.subr.mxu0 0.0
        %3043 = vmatpush2.msra.mxu0 %v1185
        %3044 = vmatprep.subr.mxu0 0.0
        %3045 = vmatpush2.msra.mxu0 %v1184
        %3046 = vmatprep.subr.mxu0 0.0
        %3047 = vmatpush2.msra.mxu0 %v1183
        %3048 = vmatprep.mubr.f32.mxu0 %v1509
        %3049 = vmatmul.mubr.f32.gmra.mxu0 %v1501
        %v3050 = vpop.f32.mrf.mxu0
        %v3051 = vadd.f32 %v2981, %v3050
        %v3052 = vpop.f32.mrf.mxu0
        %3053 = vdwg.mxu0
        %3054 = vmatprep.subr.mxu0 0.0
        %3055 = vmatpush1.msra.mxu0 %v1214
        %3056 = vmatprep.subr.mxu0 0.0
        %3057 = vmatpush1.msra.mxu0 %v1213
        %3058 = vmatprep.subr.mxu0 0.0
        %3059 = vmatpush1.msra.mxu0 %v1212
        %3060 = vmatprep.subr.mxu0 0.0
        %3061 = vmatpush1.msra.mxu0 %v1211
        %3062 = vmatprep.subr.mxu0 0.0
        %3063 = vmatpush1.msra.mxu0 %v1210
        %3064 = vmatprep.subr.mxu0 0.0
        %3065 = vmatpush1.msra.mxu0 %v1209
        %3066 = vmatprep.subr.mxu0 0.0
        %3067 = vmatpush1.msra.mxu0 %v1208
        %3068 = vmatprep.subr.mxu0 0.0
        %3069 = vmatpush1.msra.mxu0 %v1207
        %3070 = vmatprep.subr.mxu0 0.0
        %3071 = vmatpush1.msra.mxu0 %v1206
        %3072 = vmatprep.subr.mxu0 0.0
        %3073 = vmatpush1.msra.mxu0 %v1205
        %3074 = vmatprep.subr.mxu0 0.0
        %3075 = vmatpush1.msra.mxu0 %v1204
        %3076 = vmatprep.subr.mxu0 0.0
        %3077 = vmatpush1.msra.mxu0 %v1203
        %3078 = vmatprep.subr.mxu0 0.0
        %3079 = vmatpush1.msra.mxu0 %v1202
        %3080 = vmatprep.subr.mxu0 0.0
        %3081 = vmatpush1.msra.mxu0 %v1201
        %3082 = vmatprep.subr.mxu0 0.0
        %3083 = vmatpush1.msra.mxu0 %v1200
        %3084 = vmatprep.subr.mxu0 0.0
        %3085 = vmatpush1.msra.mxu0 %v1199
        %3086 = vmatprep.subr.mxu0 0.0
        %3087 = vmatpush2.msra.mxu0 %v1230
        %3088 = vmatprep.subr.mxu0 0.0
        %3089 = vmatpush2.msra.mxu0 %v1229
        %3090 = vmatprep.subr.mxu0 0.0
        %3091 = vmatpush2.msra.mxu0 %v1228
        %3092 = vmatprep.subr.mxu0 0.0
        %3093 = vmatpush2.msra.mxu0 %v1227
        %3094 = vmatprep.subr.mxu0 0.0
        %3095 = vmatpush2.msra.mxu0 %v1226
        %3096 = vmatprep.subr.mxu0 0.0
        %3097 = vmatpush2.msra.mxu0 %v1225
        %3098 = vmatprep.subr.mxu0 0.0
        %3099 = vmatpush2.msra.mxu0 %v1224
        %3100 = vmatprep.subr.mxu0 0.0
        %3101 = vmatpush2.msra.mxu0 %v1223
        %3102 = vmatprep.subr.mxu0 0.0
        %3103 = vmatpush2.msra.mxu0 %v1222
        %3104 = vmatprep.subr.mxu0 0.0
        %3105 = vmatpush2.msra.mxu0 %v1221
        %3106 = vmatprep.subr.mxu0 0.0
        %3107 = vmatpush2.msra.mxu0 %v1220
        %3108 = vmatprep.subr.mxu0 0.0
        %3109 = vmatpush2.msra.mxu0 %v1219
        %3110 = vmatprep.subr.mxu0 0.0
        %3111 = vmatpush2.msra.mxu0 %v1218
        %3112 = vmatprep.subr.mxu0 0.0
        %3113 = vmatpush2.msra.mxu0 %v1217
        %3114 = vmatprep.subr.mxu0 0.0
        %3115 = vmatpush2.msra.mxu0 %v1216
        %3116 = vmatprep.subr.mxu0 0.0
        %3117 = vmatpush2.msra.mxu0 %v1215
        %3118 = vmatprep.mubr.f32.mxu0 %v1510
        %3119 = vmatmul.mubr.f32.gmra.mxu0 %v1508
        %v3120 = vpop.f32.mrf.mxu0
        %v3121 = vadd.f32 %v3051, %v3120
        %v3122 = vpop.f32.mrf.mxu0
        %3123 = vdwg.mxu0
        %3124 = vmatprep.subr.mxu0 0.0
        %3125 = vmatpush1.msra.mxu0 %v1246
        %3126 = vmatprep.subr.mxu0 0.0
        %3127 = vmatpush1.msra.mxu0 %v1245
        %3128 = vmatprep.subr.mxu0 0.0
        %3129 = vmatpush1.msra.mxu0 %v1244
        %3130 = vmatprep.subr.mxu0 0.0
        %3131 = vmatpush1.msra.mxu0 %v1243
        %3132 = vmatprep.subr.mxu0 0.0
        %3133 = vmatpush1.msra.mxu0 %v1242
        %3134 = vmatprep.subr.mxu0 0.0
        %3135 = vmatpush1.msra.mxu0 %v1241
        %3136 = vmatprep.subr.mxu0 0.0
        %3137 = vmatpush1.msra.mxu0 %v1240
        %3138 = vmatprep.subr.mxu0 0.0
        %3139 = vmatpush1.msra.mxu0 %v1239
        %3140 = vmatprep.subr.mxu0 0.0
        %3141 = vmatpush1.msra.mxu0 %v1238
        %3142 = vmatprep.subr.mxu0 0.0
        %3143 = vmatpush1.msra.mxu0 %v1237
        %3144 = vmatprep.subr.mxu0 0.0
        %3145 = vmatpush1.msra.mxu0 %v1236
        %3146 = vmatprep.subr.mxu0 0.0
        %3147 = vmatpush1.msra.mxu0 %v1235
        %3148 = vmatprep.subr.mxu0 0.0
        %3149 = vmatpush1.msra.mxu0 %v1234
        %3150 = vmatprep.subr.mxu0 0.0
        %3151 = vmatpush1.msra.mxu0 %v1233
        %3152 = vmatprep.subr.mxu0 0.0
        %3153 = vmatpush1.msra.mxu0 %v1232
        %3154 = vmatprep.subr.mxu0 0.0
        %3155 = vmatpush1.msra.mxu0 %v1231
        %3156 = vmatprep.subr.mxu0 0.0
        %3157 = vmatpush2.msra.mxu0 %v1262
        %3158 = vmatprep.subr.mxu0 0.0
        %3159 = vmatpush2.msra.mxu0 %v1261
        %3160 = vmatprep.subr.mxu0 0.0
        %3161 = vmatpush2.msra.mxu0 %v1260
        %3162 = vmatprep.subr.mxu0 0.0
        %3163 = vmatpush2.msra.mxu0 %v1259
        %3164 = vmatprep.subr.mxu0 0.0
        %3165 = vmatpush2.msra.mxu0 %v1258
        %3166 = vmatprep.subr.mxu0 0.0
        %3167 = vmatpush2.msra.mxu0 %v1257
        %3168 = vmatprep.subr.mxu0 0.0
        %3169 = vmatpush2.msra.mxu0 %v1256
        %3170 = vmatprep.subr.mxu0 0.0
        %3171 = vmatpush2.msra.mxu0 %v1255
        %3172 = vmatprep.subr.mxu0 0.0
        %3173 = vmatpush2.msra.mxu0 %v1254
        %3174 = vmatprep.subr.mxu0 0.0
        %3175 = vmatpush2.msra.mxu0 %v1253
        %3176 = vmatprep.subr.mxu0 0.0
        %3177 = vmatpush2.msra.mxu0 %v1252
        %3178 = vmatprep.subr.mxu0 0.0
        %3179 = vmatpush2.msra.mxu0 %v1251
        %3180 = vmatprep.subr.mxu0 0.0
        %3181 = vmatpush2.msra.mxu0 %v1250
        %3182 = vmatprep.subr.mxu0 0.0
        %3183 = vmatpush2.msra.mxu0 %v1249
        %3184 = vmatprep.subr.mxu0 0.0
        %3185 = vmatpush2.msra.mxu0 %v1248
        %3186 = vmatprep.subr.mxu0 0.0
        %3187 = vmatpush2.msra.mxu0 %v1247
        %3188 = vmatprep.mubr.f32.mxu0 %v1526
        %3189 = vmatmul.mubr.f32.gmra.mxu0 %v1518
        %v3190 = vpop.f32.mrf.mxu0
        %v3191 = vadd.f32 %v3121, %v3190
        %v3192 = vpop.f32.mrf.mxu0
        %3193 = vdwg.mxu0
        %3194 = vmatprep.subr.mxu0 0.0
        %3195 = vmatpush1.msra.mxu0 %v1278
        %3196 = vmatprep.subr.mxu0 0.0
        %3197 = vmatpush1.msra.mxu0 %v1277
        %3198 = vmatprep.subr.mxu0 0.0
        %3199 = vmatpush1.msra.mxu0 %v1276
        %3200 = vmatprep.subr.mxu0 0.0
        %3201 = vmatpush1.msra.mxu0 %v1275
        %3202 = vmatprep.subr.mxu0 0.0
        %3203 = vmatpush1.msra.mxu0 %v1274
        %3204 = vmatprep.subr.mxu0 0.0
        %3205 = vmatpush1.msra.mxu0 %v1273
        %3206 = vmatprep.subr.mxu0 0.0
        %3207 = vmatpush1.msra.mxu0 %v1272
        %3208 = vmatprep.subr.mxu0 0.0
        %3209 = vmatpush1.msra.mxu0 %v1271
        %3210 = vmatprep.subr.mxu0 0.0
        %3211 = vmatpush1.msra.mxu0 %v1270
        %3212 = vmatprep.subr.mxu0 0.0
        %3213 = vmatpush1.msra.mxu0 %v1269
        %3214 = vmatprep.subr.mxu0 0.0
        %3215 = vmatpush1.msra.mxu0 %v1268
        %3216 = vmatprep.subr.mxu0 0.0
        %3217 = vmatpush1.msra.mxu0 %v1267
        %3218 = vmatprep.subr.mxu0 0.0
        %3219 = vmatpush1.msra.mxu0 %v1266
        %3220 = vmatprep.subr.mxu0 0.0
        %3221 = vmatpush1.msra.mxu0 %v1265
        %3222 = vmatprep.subr.mxu0 0.0
        %3223 = vmatpush1.msra.mxu0 %v1264
        %3224 = vmatprep.subr.mxu0 0.0
        %3225 = vmatpush1.msra.mxu0 %v1263
        %3226 = vmatprep.subr.mxu0 0.0
        %3227 = vmatpush2.msra.mxu0 %v1294
        %3228 = vmatprep.subr.mxu0 0.0
        %3229 = vmatpush2.msra.mxu0 %v1293
        %3230 = vmatprep.subr.mxu0 0.0
        %3231 = vmatpush2.msra.mxu0 %v1292
        %3232 = vmatprep.subr.mxu0 0.0
        %3233 = vmatpush2.msra.mxu0 %v1291
        %3234 = vmatprep.subr.mxu0 0.0
        %3235 = vmatpush2.msra.mxu0 %v1290
        %3236 = vmatprep.subr.mxu0 0.0
        %3237 = vmatpush2.msra.mxu0 %v1289
        %3238 = vmatprep.subr.mxu0 0.0
        %3239 = vmatpush2.msra.mxu0 %v1288
        %3240 = vmatprep.subr.mxu0 0.0
        %3241 = vmatpush2.msra.mxu0 %v1287
        %3242 = vmatprep.subr.mxu0 0.0
        %3243 = vmatpush2.msra.mxu0 %v1286
        %3244 = vmatprep.subr.mxu0 0.0
        %3245 = vmatpush2.msra.mxu0 %v1285
        %3246 = vmatprep.subr.mxu0 0.0
        %3247 = vmatpush2.msra.mxu0 %v1284
        %3248 = vmatprep.subr.mxu0 0.0
        %3249 = vmatpush2.msra.mxu0 %v1283
        %3250 = vmatprep.subr.mxu0 0.0
        %3251 = vmatpush2.msra.mxu0 %v1282
        %3252 = vmatprep.subr.mxu0 0.0
        %3253 = vmatpush2.msra.mxu0 %v1281
        %3254 = vmatprep.subr.mxu0 0.0
        %3255 = vmatpush2.msra.mxu0 %v1280
        %3256 = vmatprep.subr.mxu0 0.0
        %3257 = vmatpush2.msra.mxu0 %v1279
        %3258 = vmatprep.mubr.f32.mxu0 %v1527
        %3259 = vmatmul.mubr.f32.gmra.mxu0 %v1525
        %v3260 = vpop.f32.mrf.mxu0
        %v3261 = vadd.f32 %v3191, %v3260
        %v3262 = vpop.f32.mrf.mxu0
        %3263 = vdwg.mxu0
        %3264 = vmatprep.subr.mxu0 0.0
        %3265 = vmatpush1.msra.mxu0 %v1310
        %3266 = vmatprep.subr.mxu0 0.0
        %3267 = vmatpush1.msra.mxu0 %v1309
        %3268 = vmatprep.subr.mxu0 0.0
        %3269 = vmatpush1.msra.mxu0 %v1308
        %3270 = vmatprep.subr.mxu0 0.0
        %3271 = vmatpush1.msra.mxu0 %v1307
        %3272 = vmatprep.subr.mxu0 0.0
        %3273 = vmatpush1.msra.mxu0 %v1306
        %3274 = vmatprep.subr.mxu0 0.0
        %3275 = vmatpush1.msra.mxu0 %v1305
        %3276 = vmatprep.subr.mxu0 0.0
        %3277 = vmatpush1.msra.mxu0 %v1304
        %3278 = vmatprep.subr.mxu0 0.0
        %3279 = vmatpush1.msra.mxu0 %v1303
        %3280 = vmatprep.subr.mxu0 0.0
        %3281 = vmatpush1.msra.mxu0 %v1302
        %3282 = vmatprep.subr.mxu0 0.0
        %3283 = vmatpush1.msra.mxu0 %v1301
        %3284 = vmatprep.subr.mxu0 0.0
        %3285 = vmatpush1.msra.mxu0 %v1300
        %3286 = vmatprep.subr.mxu0 0.0
        %3287 = vmatpush1.msra.mxu0 %v1299
        %3288 = vmatprep.subr.mxu0 0.0
        %3289 = vmatpush1.msra.mxu0 %v1298
        %3290 = vmatprep.subr.mxu0 0.0
        %3291 = vmatpush1.msra.mxu0 %v1297
        %3292 = vmatprep.subr.mxu0 0.0
        %3293 = vmatpush1.msra.mxu0 %v1296
        %3294 = vmatprep.subr.mxu0 0.0
        %3295 = vmatpush1.msra.mxu0 %v1295
        %3296 = vmatprep.subr.mxu0 0.0
        %3297 = vmatpush2.msra.mxu0 0.0
        %3298 = vmatprep.subr.mxu0 0.0
        %3299 = vmatpush2.msra.mxu0 0.0
        %3300 = vmatprep.subr.mxu0 0.0
        %3301 = vmatpush2.msra.mxu0 0.0
        %3302 = vmatprep.subr.mxu0 0.0
        %3303 = vmatpush2.msra.mxu0 0.0
        %3304 = vmatprep.subr.mxu0 0.0
        %3305 = vmatpush2.msra.mxu0 0.0
        %3306 = vmatprep.subr.mxu0 0.0
        %3307 = vmatpush2.msra.mxu0 0.0
        %3308 = vmatprep.subr.mxu0 0.0
        %3309 = vmatpush2.msra.mxu0 0.0
        %3310 = vmatprep.subr.mxu0 0.0
        %3311 = vmatpush2.msra.mxu0 0.0
        %3312 = vmatprep.subr.mxu0 0.0
        %3313 = vmatpush2.msra.mxu0 0.0
        %3314 = vmatprep.subr.mxu0 0.0
        %3315 = vmatpush2.msra.mxu0 0.0
        %3316 = vmatprep.subr.mxu0 0.0
        %3317 = vmatpush2.msra.mxu0 0.0
        %3318 = vmatprep.subr.mxu0 0.0
        %3319 = vmatpush2.msra.mxu0 0.0
        %3320 = vmatprep.subr.mxu0 0.0
        %3321 = vmatpush2.msra.mxu0 0.0
        %3322 = vmatprep.subr.mxu0 0.0
        %3323 = vmatpush2.msra.mxu0 0.0
        %3324 = vmatprep.subr.mxu0 0.0
        %3325 = vmatpush2.msra.mxu0 0.0
        %3326 = vmatprep.subr.mxu0 0.0
        %3327 = vmatpush2.msra.mxu0 0.0
        %3328 = vmatprep.mubr.f32.mxu0 0.0
        %3329 = vmatmul.mubr.f32.gmra.mxu0 %v1534
        %v3330 = vpop.f32.mrf.mxu0
        %v3331 = vadd.f32 %v3261, %v3330
        %v3332 = vpop.f32.mrf.mxu0
        %3333 = vdwg.mxu0
        %v3334 = vadd.f32 %v513, %v3331
        %3335 = vst [vmem:[#allocation2] sm:$0x3] %v3334
        %p3336 = scmp.eq.s32.totalorder %s30, 1
        // Predicated region
        $region101: #{ca_encoder_classifier_forward.3} parent=63 // pred_check
          %p3337 = pneg %p3336
        $region102: #{ca_encoder_classifier_forward.3} parent=63 // pred_check_branch
          %3339 = sbr.rel (%p3337) target = $region104
        $region103: #{ca_encoder_classifier_forward.3} parent=63 // pred_region
          %v3340 = vld [vmem:[#allocation2] sm:$0x3]
          %v3341 = vld [vmem:[#allocation6] sm:$0x1]
          %v3343 = vlaneseq
          %v3344 = vshrl.u32 %v3343, 7
          %v3345 = vsub.s32 0, %v3344
          %v3346 = vrot.slane %v3341, %v3345
          %v3348 = vadd.f32 %v3340, %v3346
          %v3349 = vmax.f32 %v3348, 0.0
          %v3350 = vld [vmem:[#allocation8] sm:$0xff]
          %v3351 = vld [vmem:[#allocation8 + $0x8] sm:$0xff]
          %v3352 = vld [vmem:[#allocation8 + $0x10] sm:$0xff]
          %v3353 = vld [vmem:[#allocation8 + $0x18] sm:$0xff]
          %v3354 = vld [vmem:[#allocation8 + $0x20] sm:$0xff]
          %v3355 = vld [vmem:[#allocation8 + $0x28] sm:$0xff]
          %v3356 = vld [vmem:[#allocation8 + $0x30] sm:$0xff]
          %v3357 = vld [vmem:[#allocation8 + $0x38] sm:$0xff]
          %v3358 = vld [vmem:[#allocation8 + $0x40] sm:$0xff]
          %v3359 = vld [vmem:[#allocation8 + $0x48] sm:$0xff]
          %v3360 = vld [vmem:[#allocation8 + $0x50] sm:$0xff]
          %v3361 = vld [vmem:[#allocation8 + $0x58] sm:$0xff]
          %v3362 = vld [vmem:[#allocation8 + $0x60] sm:$0xff]
          %v3363 = vld [vmem:[#allocation8 + $0x68] sm:$0xff]
          %v3364 = vld [vmem:[#allocation8 + $0x70] sm:$0xff]
          %v3365 = vld [vmem:[#allocation8 + $0x78] sm:$0xff]
          %v3366 = vld [vmem:[#allocation8 + $0x80] sm:$0xff]
          %v3367 = vld [vmem:[#allocation8 + $0x88] sm:$0xff]
          %v3368 = vld [vmem:[#allocation8 + $0x90] sm:$0xff]
          %v3369 = vld [vmem:[#allocation8 + $0x98] sm:$0xff]
          %v3370 = vld [vmem:[#allocation8 + $0xa0] sm:$0xff]
          %v3371 = vld [vmem:[#allocation8 + $0xa8] sm:$0xff]
          %v3372 = vld [vmem:[#allocation8 + $0xb0] sm:$0xff]
          %v3373 = vld [vmem:[#allocation8 + $0xb8] sm:$0xff]
          %v3374 = vld [vmem:[#allocation8 + $0xc0] sm:$0xff]
          %v3375 = vld [vmem:[#allocation8 + $0xc8] sm:$0xff]
          %v3376 = vld [vmem:[#allocation8 + $0xd0] sm:$0xff]
          %v3377 = vld [vmem:[#allocation8 + $0xd8] sm:$0xff]
          %v3378 = vld [vmem:[#allocation8 + $0xe0] sm:$0xff]
          %v3379 = vld [vmem:[#allocation8 + $0xe8] sm:$0xff]
          %v3380 = vld [vmem:[#allocation8 + $0xf0] sm:$0xff]
          %v3381 = vld [vmem:[#allocation8 + $0xf8] sm:$0xff]
          %v3382 = vld [vmem:[#allocation9] sm:$0x3]
          %v3384 = vlaneseq
          %v3385 = vshrl.u32 %v3384, 7
          %v3386 = vsub.s32 0, %v3385
          %v3387 = vrot.slane %v3382, %v3386
          %v3388 = vlaneseq
          %v3389 = vshrl.u32 %v3388, 7
          %v3390 = vsub.s32 1, %v3389
          %v3391 = vrot.slane %v3382, %v3390
          %3394 = vmatprep.subr.mxu0 %v3381
          %3395 = vmatpush1.msra.mxu0 %v3380
          %3396 = vmatprep.subr.mxu0 %v3379
          %3397 = vmatpush1.msra.mxu0 %v3378
          %3398 = vmatprep.subr.mxu0 %v3377
          %3399 = vmatpush1.msra.mxu0 %v3376
          %3400 = vmatprep.subr.mxu0 %v3375
          %3401 = vmatpush1.msra.mxu0 %v3374
          %3402 = vmatprep.subr.mxu0 %v3373
          %3403 = vmatpush1.msra.mxu0 %v3372
          %3404 = vmatprep.subr.mxu0 %v3371
          %3405 = vmatpush1.msra.mxu0 %v3370
          %3406 = vmatprep.subr.mxu0 %v3369
          %3407 = vmatpush1.msra.mxu0 %v3368
          %3408 = vmatprep.subr.mxu0 %v3367
          %3409 = vmatpush1.msra.mxu0 %v3366
          %3410 = vmatprep.subr.mxu0 %v3365
          %3411 = vmatpush1.msra.mxu0 %v3364
          %3412 = vmatprep.subr.mxu0 %v3363
          %3413 = vmatpush1.msra.mxu0 %v3362
          %3414 = vmatprep.subr.mxu0 %v3361
          %3415 = vmatpush1.msra.mxu0 %v3360
          %3416 = vmatprep.subr.mxu0 %v3359
          %3417 = vmatpush1.msra.mxu0 %v3358
          %3418 = vmatprep.subr.mxu0 %v3357
          %3419 = vmatpush1.msra.mxu0 %v3356
          %3420 = vmatprep.subr.mxu0 %v3355
          %3421 = vmatpush1.msra.mxu0 %v3354
          %3422 = vmatprep.subr.mxu0 %v3353
          %3423 = vmatpush1.msra.mxu0 %v3352
          %3424 = vmatprep.subr.mxu0 %v3351
          %3425 = vmatpush1.msra.mxu0 %v3350
          %3426 = vmatprep.subr.mxu0 0.0
          %3427 = vmatpush2.msra.mxu0 0.0
          %3428 = vmatprep.subr.mxu0 0.0
          %3429 = vmatpush2.msra.mxu0 0.0
          %3430 = vmatprep.subr.mxu0 0.0
          %3431 = vmatpush2.msra.mxu0 0.0
          %3432 = vmatprep.subr.mxu0 0.0
          %3433 = vmatpush2.msra.mxu0 0.0
          %3434 = vmatprep.subr.mxu0 0.0
          %3435 = vmatpush2.msra.mxu0 0.0
          %3436 = vmatprep.subr.mxu0 0.0
          %3437 = vmatpush2.msra.mxu0 0.0
          %3438 = vmatprep.subr.mxu0 0.0
          %3439 = vmatpush2.msra.mxu0 0.0
          %3440 = vmatprep.subr.mxu0 0.0
          %3441 = vmatpush2.msra.mxu0 0.0
          %3442 = vmatprep.subr.mxu0 0.0
          %3443 = vmatpush2.msra.mxu0 0.0
          %3444 = vmatprep.subr.mxu0 0.0
          %3445 = vmatpush2.msra.mxu0 0.0
          %3446 = vmatprep.subr.mxu0 0.0
          %3447 = vmatpush2.msra.mxu0 0.0
          %3448 = vmatprep.subr.mxu0 0.0
          %3449 = vmatpush2.msra.mxu0 0.0
          %3450 = vmatprep.subr.mxu0 0.0
          %3451 = vmatpush2.msra.mxu0 0.0
          %3452 = vmatprep.subr.mxu0 0.0
          %3453 = vmatpush2.msra.mxu0 0.0
          %3454 = vmatprep.subr.mxu0 0.0
          %3455 = vmatpush2.msra.mxu0 0.0
          %3456 = vmatprep.subr.mxu0 0.0
          %3457 = vmatpush2.msra.mxu0 0.0
          %3458 = vmatprep.mubr.f32.mxu0 0.0
          %3459 = vmatmul.mubr.f32.gmra.mxu0 %v3349
          %v3460 = vpop.f32.mrf.mxu0
          %v3461 = vadd.f32 %v3387, %v3460
          %v3462 = vpop.f32.mrf.mxu0
          %v3463 = vadd.f32 %v3391, %v3462
          %3464 = vdwg.mxu0
          %v3465 = vmax.f32 %v3461, 0.0
          %v3466 = vmax.f32 %v3463, 0.0
          %v3467 = vld [vmem:[#allocation11] sm:$0xff]
          %v3468 = vld [vmem:[#allocation11 + $0x8] sm:$0xff]
          %v3469 = vld [vmem:[#allocation11 + $0x10] sm:$0xff]
          %v3470 = vld [vmem:[#allocation11 + $0x18] sm:$0xff]
          %v3471 = vld [vmem:[#allocation11 + $0x20] sm:$0xff]
          %v3472 = vld [vmem:[#allocation11 + $0x28] sm:$0xff]
          %v3473 = vld [vmem:[#allocation11 + $0x30] sm:$0xff]
          %v3474 = vld [vmem:[#allocation11 + $0x38] sm:$0xff]
          %v3475 = vld [vmem:[#allocation11 + $0x40] sm:$0xff]
          %v3476 = vld [vmem:[#allocation11 + $0x48] sm:$0xff]
          %v3477 = vld [vmem:[#allocation11 + $0x50] sm:$0xff]
          %v3478 = vld [vmem:[#allocation11 + $0x58] sm:$0xff]
          %v3479 = vld [vmem:[#allocation11 + $0x60] sm:$0xff]
          %v3480 = vld [vmem:[#allocation11 + $0x68] sm:$0xff]
          %v3481 = vld [vmem:[#allocation11 + $0x70] sm:$0xff]
          %v3482 = vld [vmem:[#allocation11 + $0x78] sm:$0xff]
          %v3483 = vld [vmem:[#allocation11 + $0x80] sm:$0xff]
          %v3484 = vld [vmem:[#allocation11 + $0x88] sm:$0xff]
          %v3485 = vld [vmem:[#allocation11 + $0x90] sm:$0xff]
          %v3486 = vld [vmem:[#allocation11 + $0x98] sm:$0xff]
          %v3487 = vld [vmem:[#allocation11 + $0xa0] sm:$0xff]
          %v3488 = vld [vmem:[#allocation11 + $0xa8] sm:$0xff]
          %v3489 = vld [vmem:[#allocation11 + $0xb0] sm:$0xff]
          %v3490 = vld [vmem:[#allocation11 + $0xb8] sm:$0xff]
          %v3491 = vld [vmem:[#allocation11 + $0xc0] sm:$0xff]
          %v3492 = vld [vmem:[#allocation11 + $0xc8] sm:$0xff]
          %v3493 = vld [vmem:[#allocation11 + $0xd0] sm:$0xff]
          %v3494 = vld [vmem:[#allocation11 + $0xd8] sm:$0xff]
          %v3495 = vld [vmem:[#allocation11 + $0xe0] sm:$0xff]
          %v3496 = vld [vmem:[#allocation11 + $0xe8] sm:$0xff]
          %v3497 = vld [vmem:[#allocation11 + $0xf0] sm:$0xff]
          %v3498 = vld [vmem:[#allocation11 + $0xf8] sm:$0xff]
          %v3499 = vld [vmem:[#allocation12] sm:$0x1]
          %v3501 = vlaneseq
          %v3502 = vshrl.u32 %v3501, 7
          %v3503 = vsub.s32 0, %v3502
          %v3504 = vrot.slane %v3499, %v3503
          %3506 = vmatprep.subr.mxu0 0.0
          %3507 = vmatpush1.msra.mxu0 %v3482
          %3508 = vmatprep.subr.mxu0 0.0
          %3509 = vmatpush1.msra.mxu0 %v3481
          %3510 = vmatprep.subr.mxu0 0.0
          %3511 = vmatpush1.msra.mxu0 %v3480
          %3512 = vmatprep.subr.mxu0 0.0
          %3513 = vmatpush1.msra.mxu0 %v3479
          %3514 = vmatprep.subr.mxu0 0.0
          %3515 = vmatpush1.msra.mxu0 %v3478
          %3516 = vmatprep.subr.mxu0 0.0
          %3517 = vmatpush1.msra.mxu0 %v3477
          %3518 = vmatprep.subr.mxu0 0.0
          %3519 = vmatpush1.msra.mxu0 %v3476
          %3520 = vmatprep.subr.mxu0 0.0
          %3521 = vmatpush1.msra.mxu0 %v3475
          %3522 = vmatprep.subr.mxu0 0.0
          %3523 = vmatpush1.msra.mxu0 %v3474
          %3524 = vmatprep.subr.mxu0 0.0
          %3525 = vmatpush1.msra.mxu0 %v3473
          %3526 = vmatprep.subr.mxu0 0.0
          %3527 = vmatpush1.msra.mxu0 %v3472
          %3528 = vmatprep.subr.mxu0 0.0
          %3529 = vmatpush1.msra.mxu0 %v3471
          %3530 = vmatprep.subr.mxu0 0.0
          %3531 = vmatpush1.msra.mxu0 %v3470
          %3532 = vmatprep.subr.mxu0 0.0
          %3533 = vmatpush1.msra.mxu0 %v3469
          %3534 = vmatprep.subr.mxu0 0.0
          %3535 = vmatpush1.msra.mxu0 %v3468
          %3536 = vmatprep.subr.mxu0 0.0
          %3537 = vmatpush1.msra.mxu0 %v3467
          %3538 = vmatprep.subr.mxu0 0.0
          %3539 = vmatpush2.msra.mxu0 %v3498
          %3540 = vmatprep.subr.mxu0 0.0
          %3541 = vmatpush2.msra.mxu0 %v3497
          %3542 = vmatprep.subr.mxu0 0.0
          %3543 = vmatpush2.msra.mxu0 %v3496
          %3544 = vmatprep.subr.mxu0 0.0
          %3545 = vmatpush2.msra.mxu0 %v3495
          %3546 = vmatprep.subr.mxu0 0.0
          %3547 = vmatpush2.msra.mxu0 %v3494
          %3548 = vmatprep.subr.mxu0 0.0
          %3549 = vmatpush2.msra.mxu0 %v3493
          %3550 = vmatprep.subr.mxu0 0.0
          %3551 = vmatpush2.msra.mxu0 %v3492
          %3552 = vmatprep.subr.mxu0 0.0
          %3553 = vmatpush2.msra.mxu0 %v3491
          %3554 = vmatprep.subr.mxu0 0.0
          %3555 = vmatpush2.msra.mxu0 %v3490
          %3556 = vmatprep.subr.mxu0 0.0
          %3557 = vmatpush2.msra.mxu0 %v3489
          %3558 = vmatprep.subr.mxu0 0.0
          %3559 = vmatpush2.msra.mxu0 %v3488
          %3560 = vmatprep.subr.mxu0 0.0
          %3561 = vmatpush2.msra.mxu0 %v3487
          %3562 = vmatprep.subr.mxu0 0.0
          %3563 = vmatpush2.msra.mxu0 %v3486
          %3564 = vmatprep.subr.mxu0 0.0
          %3565 = vmatpush2.msra.mxu0 %v3485
          %3566 = vmatprep.subr.mxu0 0.0
          %3567 = vmatpush2.msra.mxu0 %v3484
          %3568 = vmatprep.subr.mxu0 0.0
          %3569 = vmatpush2.msra.mxu0 %v3483
          %3570 = vmatprep.mubr.f32.mxu0 %v3466
          %3571 = vmatmul.mubr.f32.gmra.mxu0 %v3465
          %v3572 = vpop.f32.mrf.mxu0
          %v3573 = vadd.f32 %v3504, %v3572
          %v3574 = vpop.f32.mrf.mxu0
          %3575 = vdwg.mxu0
          %v3576 = vmax.f32 %v3573, 0.0
          %v3577 = vld [vmem:[%s7] sm:$0xff]
          %v3578 = vld [vmem:[%s7 + $0x8] sm:$0xff]
          %v3579 = vld [vmem:[%s7 + $0x10] sm:$0xff]
          %v3580 = vld [vmem:[%s7 + $0x18] sm:$0xff]
          %v3581 = vld [vmem:[%s7 + $0x20] sm:$0xff]
          %v3582 = vld [vmem:[%s7 + $0x28] sm:$0xff]
          %v3583 = vld [vmem:[%s7 + $0x30] sm:$0xff]
          %v3584 = vld [vmem:[%s7 + $0x38] sm:$0xff]
          %v3585 = vld [vmem:[%s7 + $0x40] sm:$0xff]
          %v3586 = vld [vmem:[%s7 + $0x48] sm:$0xff]
          %v3587 = vld [vmem:[%s7 + $0x50] sm:$0xff]
          %v3588 = vld [vmem:[%s7 + $0x58] sm:$0xff]
          %v3589 = vld [vmem:[%s7 + $0x60] sm:$0xff]
          %v3590 = vld [vmem:[%s7 + $0x68] sm:$0xff]
          %v3591 = vld [vmem:[%s7 + $0x70] sm:$0xff]
          %v3592 = vld [vmem:[%s7 + $0x78] sm:$0xff]
          %v3593 = vld [vmem:[#allocation14] sm:$0x1]
          %v3595 = vlaneseq
          %v3596 = vshrl.u32 %v3595, 7
          %v3597 = vsub.s32 0, %v3596
          %v3598 = vrot.slane %v3593, %v3597
          %3600 = vmatprep.subr.mxu0 0.0
          %3601 = vmatpush1.msra.mxu0 %v3592
          %3602 = vmatprep.subr.mxu0 0.0
          %3603 = vmatpush1.msra.mxu0 %v3591
          %3604 = vmatprep.subr.mxu0 0.0
          %3605 = vmatpush1.msra.mxu0 %v3590
          %3606 = vmatprep.subr.mxu0 0.0
          %3607 = vmatpush1.msra.mxu0 %v3589
          %3608 = vmatprep.subr.mxu0 0.0
          %3609 = vmatpush1.msra.mxu0 %v3588
          %3610 = vmatprep.subr.mxu0 0.0
          %3611 = vmatpush1.msra.mxu0 %v3587
          %3612 = vmatprep.subr.mxu0 0.0
          %3613 = vmatpush1.msra.mxu0 %v3586
          %3614 = vmatprep.subr.mxu0 0.0
          %3615 = vmatpush1.msra.mxu0 %v3585
          %3616 = vmatprep.subr.mxu0 0.0
          %3617 = vmatpush1.msra.mxu0 %v3584
          %3618 = vmatprep.subr.mxu0 0.0
          %3619 = vmatpush1.msra.mxu0 %v3583
          %3620 = vmatprep.subr.mxu0 0.0
          %3621 = vmatpush1.msra.mxu0 %v3582
          %3622 = vmatprep.subr.mxu0 0.0
          %3623 = vmatpush1.msra.mxu0 %v3581
          %3624 = vmatprep.subr.mxu0 0.0
          %3625 = vmatpush1.msra.mxu0 %v3580
          %3626 = vmatprep.subr.mxu0 0.0
          %3627 = vmatpush1.msra.mxu0 %v3579
          %3628 = vmatprep.subr.mxu0 0.0
          %3629 = vmatpush1.msra.mxu0 %v3578
          %3630 = vmatprep.subr.mxu0 0.0
          %3631 = vmatpush1.msra.mxu0 %v3577
          %3632 = vmatprep.subr.mxu0 0.0
          %3633 = vmatpush2.msra.mxu0 0.0
          %3634 = vmatprep.subr.mxu0 0.0
          %3635 = vmatpush2.msra.mxu0 0.0
          %3636 = vmatprep.subr.mxu0 0.0
          %3637 = vmatpush2.msra.mxu0 0.0
          %3638 = vmatprep.subr.mxu0 0.0
          %3639 = vmatpush2.msra.mxu0 0.0
          %3640 = vmatprep.subr.mxu0 0.0
          %3641 = vmatpush2.msra.mxu0 0.0
          %3642 = vmatprep.subr.mxu0 0.0
          %3643 = vmatpush2.msra.mxu0 0.0
          %3644 = vmatprep.subr.mxu0 0.0
          %3645 = vmatpush2.msra.mxu0 0.0
          %3646 = vmatprep.subr.mxu0 0.0
          %3647 = vmatpush2.msra.mxu0 0.0
          %3648 = vmatprep.subr.mxu0 0.0
          %3649 = vmatpush2.msra.mxu0 0.0
          %3650 = vmatprep.subr.mxu0 0.0
          %3651 = vmatpush2.msra.mxu0 0.0
          %3652 = vmatprep.subr.mxu0 0.0
          %3653 = vmatpush2.msra.mxu0 0.0
          %3654 = vmatprep.subr.mxu0 0.0
          %3655 = vmatpush2.msra.mxu0 0.0
          %3656 = vmatprep.subr.mxu0 0.0
          %3657 = vmatpush2.msra.mxu0 0.0
          %3658 = vmatprep.subr.mxu0 0.0
          %3659 = vmatpush2.msra.mxu0 0.0
          %3660 = vmatprep.subr.mxu0 0.0
          %3661 = vmatpush2.msra.mxu0 0.0
          %3662 = vmatprep.subr.mxu0 0.0
          %3663 = vmatpush2.msra.mxu0 0.0
          %3664 = vmatprep.mubr.f32.mxu0 0.0
          %3665 = vmatmul.mubr.f32.gmra.mxu0 %v3576
          %v3666 = vpop.f32.mrf.mxu0
          %v3667 = vadd.f32 %v3598, %v3666
          %v3668 = vpop.f32.mrf.mxu0
          %3669 = vdwg.mxu0
          %v3670 = vmax.f32 %v3667, 0.0
          %v3671 = vld [vmem:[%s9] sm:$0xff]
          %v3672 = vld [vmem:[%s9 + $0x8] sm:$0xff]
          %v3673 = vld [vmem:[%s9 + $0x10] sm:$0xff]
          %v3674 = vld [vmem:[%s9 + $0x18] sm:$0xff]
          %v3675 = vld [vmem:[%s9 + $0x20] sm:$0xff]
          %v3676 = vld [vmem:[%s9 + $0x28] sm:$0xff]
          %v3677 = vld [vmem:[%s9 + $0x30] sm:$0xff]
          %v3678 = vld [vmem:[%s9 + $0x38] sm:$0xff]
          %v3679 = vld [vmem:[#allocation15] sm:$0x1]
          %v3681 = vlaneseq
          %v3682 = vshrl.u32 %v3681, 7
          %v3683 = vsub.s32 0, %v3682
          %v3684 = vrot.slane %v3679, %v3683
          %vm3686 = vcmask 523264
          %v3688 = vsel %vm3686, %v3670, 0
          %3690 = vmatprep.subr.mxu0 0.0
          %3691 = vmatpush1.msra.mxu0 0.0
          %3692 = vmatprep.subr.mxu0 0.0
          %3693 = vmatpush1.msra.mxu0 0.0
          %3694 = vmatprep.subr.mxu0 0.0
          %3695 = vmatpush1.msra.mxu0 0.0
          %3696 = vmatprep.subr.mxu0 0.0
          %3697 = vmatpush1.msra.mxu0 0.0
          %3698 = vmatprep.subr.mxu0 0.0
          %3699 = vmatpush1.msra.mxu0 0.0
          %3700 = vmatprep.subr.mxu0 0.0
          %3701 = vmatpush1.msra.mxu0 0.0
          %3702 = vmatprep.subr.mxu0 0.0
          %3703 = vmatpush1.msra.mxu0 0.0
          %3704 = vmatprep.subr.mxu0 0.0
          %3705 = vmatpush1.msra.mxu0 0.0
          %3706 = vmatprep.subr.mxu0 0.0
          %3707 = vmatpush1.msra.mxu0 %v3678
          %3708 = vmatprep.subr.mxu0 0.0
          %3709 = vmatpush1.msra.mxu0 %v3677
          %3710 = vmatprep.subr.mxu0 0.0
          %3711 = vmatpush1.msra.mxu0 %v3676
          %3712 = vmatprep.subr.mxu0 0.0
          %3713 = vmatpush1.msra.mxu0 %v3675
          %3714 = vmatprep.subr.mxu0 0.0
          %3715 = vmatpush1.msra.mxu0 %v3674
          %3716 = vmatprep.subr.mxu0 0.0
          %3717 = vmatpush1.msra.mxu0 %v3673
          %3718 = vmatprep.subr.mxu0 0.0
          %3719 = vmatpush1.msra.mxu0 %v3672
          %3720 = vmatprep.subr.mxu0 0.0
          %3721 = vmatpush1.msra.mxu0 %v3671
          %3722 = vmatprep.subr.mxu0 0.0
          %3723 = vmatpush2.msra.mxu0 0.0
          %3724 = vmatprep.subr.mxu0 0.0
          %3725 = vmatpush2.msra.mxu0 0.0
          %3726 = vmatprep.subr.mxu0 0.0
          %3727 = vmatpush2.msra.mxu0 0.0
          %3728 = vmatprep.subr.mxu0 0.0
          %3729 = vmatpush2.msra.mxu0 0.0
          %3730 = vmatprep.subr.mxu0 0.0
          %3731 = vmatpush2.msra.mxu0 0.0
          %3732 = vmatprep.subr.mxu0 0.0
          %3733 = vmatpush2.msra.mxu0 0.0
          %3734 = vmatprep.subr.mxu0 0.0
          %3735 = vmatpush2.msra.mxu0 0.0
          %3736 = vmatprep.subr.mxu0 0.0
          %3737 = vmatpush2.msra.mxu0 0.0
          %3738 = vmatprep.subr.mxu0 0.0
          %3739 = vmatpush2.msra.mxu0 0.0
          %3740 = vmatprep.subr.mxu0 0.0
          %3741 = vmatpush2.msra.mxu0 0.0
          %3742 = vmatprep.subr.mxu0 0.0
          %3743 = vmatpush2.msra.mxu0 0.0
          %3744 = vmatprep.subr.mxu0 0.0
          %3745 = vmatpush2.msra.mxu0 0.0
          %3746 = vmatprep.subr.mxu0 0.0
          %3747 = vmatpush2.msra.mxu0 0.0
          %3748 = vmatprep.subr.mxu0 0.0
          %3749 = vmatpush2.msra.mxu0 0.0
          %3750 = vmatprep.subr.mxu0 0.0
          %3751 = vmatpush2.msra.mxu0 0.0
          %3752 = vmatprep.subr.mxu0 0.0
          %3753 = vmatpush2.msra.mxu0 0.0
          %3754 = vmatprep.mubr.f32.mxu0 0.0
          %3755 = vmatmul.mubr.f32.gmra.mxu0 %v3688
          %v3756 = vpop.f32.mrf.mxu0
          %v3757 = vadd.f32 %v3684, %v3756
          %v3758 = vpop.f32.mrf.mxu0
          %3759 = vdwg.mxu0
          %vm3760 = vcmask 74752
          %3761 = vst.msk [vmem:[#allocation17] sm:$0x3] %vm3760, %v3757
        $region104: #{ca_encoder_classifier_forward.3} parent=63 // pred_fallthru
          _
        // Predicated region
        $region105: #{ca_encoder_classifier_forward.3} parent=63 // pred_check
          %p3762 = pneg %p284
        $region106: #{ca_encoder_classifier_forward.3} parent=63 // pred_check_branch
          %3764 = sbr.rel (%p3762) target = $region108
        $region107: #{ca_encoder_classifier_forward.3} parent=63 // pred_region
          %s3766 = ssub.s32 32, 32
          %3767 = vsyncadd [#allocation5], %s3766
          %s3769 = sshll.u32 [#allocation17], 4
          %s3770 = int_to_ptr.vmem [resolvable:$true] %s3769
          %3772 = dma.vmem_to_hbm [thread:$0]  %s3770, 32, %s11, [#allocation5]
        $region108: #{ca_encoder_classifier_forward.3} parent=63 // pred_fallthru
          _
        // Predicated region
        $region109: #{ca_encoder_classifier_forward.3} parent=63 // pred_check
          %p3773 = pneg %p284
        $region110: #{ca_encoder_classifier_forward.3} parent=63 // pred_check_branch
          %3775 = sbr.rel (%p3773) target = $region112
        $region111: #{ca_encoder_classifier_forward.3} parent=63 // pred_region
          %3776 = dma.done [#allocation5], 32
        $region112: #{ca_encoder_classifier_forward.3} parent=63 // pred_fallthru
          _
      $region64: #{ca_encoder_classifier_forward.3} parent=5 // pred_fallthru
        _
      %p3777 = scmp.le.s32.totalorder 2, %s25
      // Predicated region
      $region113: #{ca_encoder_classifier_forward.3} parent=5 // pred_check
        %p3778 = pneg %p3777
      $region114: #{ca_encoder_classifier_forward.3} parent=5 // pred_check_branch
        %3780 = sbr.rel (%p3778) target = $region116
      $region115: #{ca_encoder_classifier_forward.3} parent=5 // pred_region
        %s3781 = ssub.s32 %s25, 2
      $region116: #{ca_encoder_classifier_forward.3} parent=5 // pred_fallthru
        _
    $region6: #{ca_encoder_classifier_forward.3} parent=1 // loop_footer
      %s29 = sadd.s32 1, %s25
    $region7: #{ca_encoder_classifier_forward.3} parent=1 // loop_footer_branch
      %24 = sbr.rel target = $region3
    $region8: #{ca_encoder_classifier_forward.3} parent=1 // loop_exit
      _
    %3782 = vsyncpa [#allocation4], 1
    %s3783 = scalar_lea.sflag [#allocation4], 1
    %3784 = vsyncpa %s3783, 1
    %3785 = vsyncpa [#allocation7], 1
    %3786 = vsyncpa [#allocation10], 1
    %3787 = vsyncpa [#allocation13], 1
    %3788 = vsyncpa [#allocation16], 1
    %3789 = vsyncpa [#allocation5], 1
    %s3790 = scalar_lea.sflag [#allocation5], 1
    %3791 = vsyncpa %s3790, 1

// kernel: ca_encoder_classifier_forward.2
$region0: #{ca_encoder_classifier_forward.2}
  #allocation0 [shape = 'u32[]', space=smem, size = 0x4, offset = 0x4, fixed_abs, tag = 'smem constant byte address 0x4 - core index']
  #allocation1 [shape = 'u32[144,128]{1,0:T(1,128)}', space=vmem, size = 0x12000, scoped, tag = 'internal scratch']
  %s0 = inlined_call_operand.vmem [shape: f32[108], index: 0, kind: input, shape index: {}]
  %s1 = inlined_call_operand.hbm [shape: f32[4], index: 1, kind: input, shape index: {}]
  %s2 = inlined_call_operand.vmem [shape: f32[2,3,58,58], index: 2, kind: input, shape index: {}]
  %s3 = inlined_call_operand.vmem [shape: f32[2,4,56,56], index: 3, kind: output, shape index: {}]
  %s4 = sld [smem:[#allocation0]]
  $region53: #{ca_encoder_classifier_forward.2} parent=0
    _
  %s6 = ssub.s32 1, %s4
  %s7 = scalar_select 0, %s6, %s4
  $region1: #{ca_encoder_classifier_forward.2} parent=0
    #allocation2 [shape = 'u8[512]{0}', space=smem, size = 0x200, scoped, tag = 'input window, operand 0, single buffered']
    #allocation3 [shape = 's32[2]{0}', space=sflag, size = 0x8, scoped, tag = 'scoped memory for ca_encoder_classifier_forward.2']
    #allocation4 [shape = 's32[2]{0}', space=sflag, size = 0x8, scoped, tag = 'scoped memory for ca_encoder_classifier_forward.2']
    #allocation5 [shape = 'u8[512]{0}', space=smem, size = 0x200, scoped, tag = 'input window, operand 1, single buffered']
    %8 = vsyncpa [#allocation4], 0
    %9 = vsyncpa [#allocation3], 0
    loop: start=0, step=1, limit=4
    $region2: #{ca_encoder_classifier_forward.2} parent=1 // loop_pre_header
      _
    $region3: #{ca_encoder_classifier_forward.2} parent=1 // loop_header
      %s11 = sphi 0, %s15
      %p12 = scmp.ge.s32.totalorder %s11, 4
      %s19 = sphi 0, %s19
      %s21 = sphi 0, %s19
      %s22 = sphi 0, %s21
      %s36 = sphi 0, %s22
      %s40 = sphi 0, %s40
      %s42 = sphi 0, %s40
      %s43 = sphi 0, %s42
      %s57 = sphi 0, %s43
      %s63 = sphi 0, %s65
      %s66 = sphi 0, %s63
      %s67 = sphi 0, %s66
      %s83 = sphi 0, %s67
      %s89 = sphi 0, %s91
      %s92 = sphi 0, %s89
      %s93 = sphi 0, %s92
      %s109 = sphi 0, %s93
    $region4: #{ca_encoder_classifier_forward.2} parent=1 // loop_header_branch
      %14 = sbr.rel (%p12) target = $region8
    $region5: #{ca_encoder_classifier_forward.2} parent=1 // loop_body
      %s16 = ssub.s32 %s11, 1
      %s17 = ssub.s32 %s11, 2
      %s18 = sadd.s32 %s11, 1
      %s20 = sadd.s32 %s19, 1
      %p23 = scmp.eq.s32.totalorder %s11, 1
      %p24 = scmp.ne.s32.totalorder %s19, %s21
      %p25 = scmp.eq.s32.totalorder %s11, 0
      %p26 = por %p24, %p25
      %p27 = scmp.ne.s32.totalorder %s19, %s21
      %p28 = scmp.eq.s32.totalorder %s16, 1
      %p29 = por %p27, %p28
      %p30 = scmp.ne.s32.totalorder %s21, %s22
      %p31 = scmp.eq.s32.totalorder %s16, 0
      %p32 = por %p30, %p31
      %p33 = scmp.ne.s32.totalorder %s21, %s22
      %p34 = scmp.eq.s32.totalorder %s17, 1
      %p35 = por %p33, %p34
      %p37 = scmp.ne.s32.totalorder %s22, %s36
      %p38 = scmp.eq.s32.totalorder %s17, 0
      %p39 = por %p37, %p38
      %s41 = sadd.s32 %s40, 1
      %p44 = scmp.eq.s32.totalorder %s11, 1
      %p45 = scmp.ne.s32.totalorder %s40, %s42
      %p46 = scmp.eq.s32.totalorder %s11, 0
      %p47 = por %p45, %p46
      %p48 = scmp.ne.s32.totalorder %s40, %s42
      %p49 = scmp.eq.s32.totalorder %s16, 1
      %p50 = por %p48, %p49
      %p51 = scmp.ne.s32.totalorder %s42, %s43
      %p52 = scmp.eq.s32.totalorder %s16, 0
      %p53 = por %p51, %p52
      %p54 = scmp.ne.s32.totalorder %s42, %s43
      %p55 = scmp.eq.s32.totalorder %s17, 1
      %p56 = por %p54, %p55
      %p58 = scmp.ne.s32.totalorder %s43, %s57
      %p59 = scmp.eq.s32.totalorder %s17, 0
      %p60 = por %p58, %p59
      %s61 = ssub.s32 %s11, %s18
      %p62 = scmp.eq.s32.totalorder %s61, 0
      %s64 = sadd.s32 %s63, 1
      %s65 = scalar_select %p62, %s63, %s64
      %p68 = pneg %p62
      %p69 = scmp.eq.s32.totalorder %s11, 1
      %p70 = por %p68, %p69
      %p71 = scmp.ne.s32.totalorder %s63, %s66
      %p72 = scmp.eq.s32.totalorder %s11, 0
      %p73 = por %p71, %p72
      %p74 = scmp.ne.s32.totalorder %s63, %s66
      %p75 = scmp.eq.s32.totalorder %s16, 1
      %p76 = por %p74, %p75
      %p77 = scmp.ne.s32.totalorder %s66, %s67
      %p78 = scmp.eq.s32.totalorder %s16, 0
      %p79 = por %p77, %p78
      %p80 = scmp.ne.s32.totalorder %s66, %s67
      %p81 = scmp.eq.s32.totalorder %s17, 1
      %p82 = por %p80, %p81
      %p84 = scmp.ne.s32.totalorder %s67, %s83
      %p85 = scmp.eq.s32.totalorder %s17, 0
      %p86 = por %p84, %p85
      %s87 = ssub.s32 %s11, %s18
      %p88 = scmp.eq.s32.totalorder %s87, 0
      %s90 = sadd.s32 %s89, 1
      %s91 = scalar_select %p88, %s89, %s90
      %p94 = pneg %p88
      %p95 = scmp.eq.s32.totalorder %s11, 1
      %p96 = por %p94, %p95
      %p97 = scmp.ne.s32.totalorder %s89, %s92
      %p98 = scmp.eq.s32.totalorder %s11, 0
      %p99 = por %p97, %p98
      %p100 = scmp.ne.s32.totalorder %s89, %s92
      %p101 = scmp.eq.s32.totalorder %s16, 1
      %p102 = por %p100, %p101
      %p103 = scmp.ne.s32.totalorder %s92, %s93
      %p104 = scmp.eq.s32.totalorder %s16, 0
      %p105 = por %p103, %p104
      %p106 = scmp.ne.s32.totalorder %s92, %s93
      %p107 = scmp.eq.s32.totalorder %s17, 1
      %p108 = por %p106, %p107
      %p110 = scmp.ne.s32.totalorder %s93, %s109
      %p111 = scmp.eq.s32.totalorder %s17, 0
      %p112 = por %p110, %p111
      %p113 = scmp.le.s32.totalorder 1, %s11
      %p114 = scmp.lt.s32.totalorder %s11, 3
      %p115 = pnand %p113, %p114
      %p116 = pneg %p115
      // Predicated region
      $region9: #{ca_encoder_classifier_forward.2} parent=5 // pred_check
        _
      $region10: #{ca_encoder_classifier_forward.2} parent=5 // pred_check_branch
        %118 = sbr.rel (%p115) target = $region12
      $region11: #{ca_encoder_classifier_forward.2} parent=5 // pred_region
        %s119 = ssub.s32 %s11, 1
        // Predicated region
        $region13: #{ca_encoder_classifier_forward.2} parent=11 // pred_check
          %p120 = pneg %p32
        $region14: #{ca_encoder_classifier_forward.2} parent=11 // pred_check_branch
          %122 = sbr.rel (%p120) target = $region16
        $region15: #{ca_encoder_classifier_forward.2} parent=11 // pred_region
          %s124 = ssub.s32 16, 16
          %125 = vsyncadd [#allocation4], %s124
          %s127 = sshll.u32 %s0, 4
          %s128 = int_to_ptr.vmem [resolvable:$true] %s127
          %130 = dma.vmem_to_smem %s128, 16, [#allocation2], [#allocation4]
        $region16: #{ca_encoder_classifier_forward.2} parent=11 // pred_fallthru
          _
        // Predicated region
        $region17: #{ca_encoder_classifier_forward.2} parent=11 // pred_check
          %p131 = pneg %p53
        $region18: #{ca_encoder_classifier_forward.2} parent=11 // pred_check_branch
          %133 = sbr.rel (%p131) target = $region20
        $region19: #{ca_encoder_classifier_forward.2} parent=11 // pred_region
          %s135 = ssub.s32 16, 16
          %136 = vsyncadd [#allocation3], %s135
          %139 = dma.hbm_to_smem %s1, 16, [#allocation5], [#allocation3]
        $region20: #{ca_encoder_classifier_forward.2} parent=11 // pred_fallthru
          _
      $region12: #{ca_encoder_classifier_forward.2} parent=5 // pred_fallthru
        _
      %p140 = scmp.lt.s32.totalorder %s11, 2
      // Predicated region
      $region21: #{ca_encoder_classifier_forward.2} parent=5 // pred_check
        %p141 = pneg %p140
      $region22: #{ca_encoder_classifier_forward.2} parent=5 // pred_check_branch
        %143 = sbr.rel (%p141) target = $region24
      $region23: #{ca_encoder_classifier_forward.2} parent=5 // pred_region
        // Predicated region
        $region25: #{ca_encoder_classifier_forward.2} parent=23 // pred_check
          %p144 = pneg %p73
        $region26: #{ca_encoder_classifier_forward.2} parent=23 // pred_check_branch
          %146 = sbr.rel (%p144) target = $region28
        $region27: #{ca_encoder_classifier_forward.2} parent=23 // pred_region
          %p147 = scmp.lt.s32.totalorder %s11, 1
          %s148 = scalar_select %p147, %s11, 1
          %s149 = smul.addr %s148, 24
          %s150 = smul.addr %s149, 8
          %s151 = scalar_lea.vmem %s2, %s150
        $region28: #{ca_encoder_classifier_forward.2} parent=23 // pred_fallthru
          _
      $region24: #{ca_encoder_classifier_forward.2} parent=5 // pred_fallthru
        _
      %p152 = scmp.le.s32.totalorder 1, %s11
      %p153 = scmp.lt.s32.totalorder %s11, 3
      %p154 = pnand %p152, %p153
      %p155 = pneg %p154
      // Predicated region
      $region29: #{ca_encoder_classifier_forward.2} parent=5 // pred_check
        _
      $region30: #{ca_encoder_classifier_forward.2} parent=5 // pred_check_branch
        %157 = sbr.rel (%p154) target = $region32
      $region31: #{ca_encoder_classifier_forward.2} parent=5 // pred_region
        %s158 = ssub.s32 %s11, 1
        // Predicated region
        $region33: #{ca_encoder_classifier_forward.2} parent=31 // pred_check
          %p159 = pneg %p32
        $region34: #{ca_encoder_classifier_forward.2} parent=31 // pred_check_branch
          %161 = sbr.rel (%p159) target = $region36
        $region35: #{ca_encoder_classifier_forward.2} parent=31 // pred_region
          %162 = dma.done [#allocation4], 16
        $region36: #{ca_encoder_classifier_forward.2} parent=31 // pred_fallthru
          _
        // Predicated region
        $region37: #{ca_encoder_classifier_forward.2} parent=31 // pred_check
          %p163 = pneg %p53
        $region38: #{ca_encoder_classifier_forward.2} parent=31 // pred_check_branch
          %165 = sbr.rel (%p163) target = $region40
        $region39: #{ca_encoder_classifier_forward.2} parent=31 // pred_region
          %166 = dma.done [#allocation3], 16
        $region40: #{ca_encoder_classifier_forward.2} parent=31 // pred_fallthru
          _
        %167 = sfence
        %p168 = pneg %p32
        %p169 = pneg %p29
        %p170 = pneg %p53
        %p171 = pneg %p50
        %p172 = scmp.lt.s32.totalorder %s16, 1
        %s173 = scalar_select %p172, %s16, 1
        %s174 = smul.addr %s173, 24
        %s175 = smul.addr %s174, 8
        %s176 = scalar_lea.vmem %s2, %s175
        %p177 = pneg %p79
        %p178 = pneg %p76
        %p179 = pneg %p105
        %p180 = pneg %p102
        %p181 = scmp.lt.s32.totalorder %s16, 1
        %s182 = scalar_select %p181, %s16, 1
        %s183 = smul.addr %s182, 28
        %s184 = smul.addr %s183, 8
        %s185 = scalar_lea.vmem %s3, %s184
        %p186 = scmp.lt.s32.totalorder %s16, 1
        %s187 = scalar_select %p186, %s16, 1
        %s188 = smul.addr %s187, 24
        %s189 = smul.addr %s188, 8
        %s190 = scalar_lea.vmem %s2, %s189
        %p191 = scmp.lt.s32.totalorder %s16, 1
        %s192 = scalar_select %p191, %s16, 1
        %s193 = smul.addr %s192, 28
        %s194 = smul.addr %s193, 8
        %s195 = scalar_lea.vmem %s3, %s194
        %v196 = vld [vmem:[%s190] sm:$0xff]
        %v197 = vld [vmem:[%s190 + $0x8] sm:$0xff]
        %v198 = vld [vmem:[%s190 + $0x10] sm:$0xff]
        %v199 = vld [vmem:[%s190 + $0x18] sm:$0xff]
        %v200 = vld [vmem:[%s190 + $0x20] sm:$0xff]
        %v201 = vld [vmem:[%s190 + $0x28] sm:$0xff]
        %v202 = vld [vmem:[%s190 + $0x30] sm:$0xff]
        %v203 = vld [vmem:[%s190 + $0x38] sm:$0x3]
        %s204 = sld [smem:[#allocation2]]
        %v205 = vstv %s204
        %v206 = vmul.f32 %v196, %v205
        %v207 = vmul.f32 %v197, %v205
        %v208 = vmul.f32 %v198, %v205
        %v209 = vmul.f32 %v199, %v205
        %v210 = vmul.f32 %v200, %v205
        %v211 = vmul.f32 %v201, %v205
        %v212 = vmul.f32 %v202, %v205
        %v213 = vadd.f32 %v206, 0.0
        %v214 = vadd.f32 %v207, 0.0
        %v215 = vadd.f32 %v208, 0.0
        %v216 = vadd.f32 %v209, 0.0
        %v217 = vadd.f32 %v210, 0.0
        %v218 = vadd.f32 %v211, 0.0
        %v219 = vadd.f32 %v212, 0.0
        %s220 = sld [smem:[#allocation2 + $0x1b]]
        %v221 = vstv %s220
        %v222 = vmul.f32 %v196, %v221
        %v223 = vmul.f32 %v197, %v221
        %v224 = vmul.f32 %v198, %v221
        %v225 = vmul.f32 %v199, %v221
        %v226 = vmul.f32 %v200, %v221
        %v227 = vmul.f32 %v201, %v221
        %v228 = vmul.f32 %v202, %v221
        %v229 = vadd.f32 %v222, 0.0
        %v230 = vadd.f32 %v223, 0.0
        %v231 = vadd.f32 %v224, 0.0
        %v232 = vadd.f32 %v225, 0.0
        %v233 = vadd.f32 %v226, 0.0
        %v234 = vadd.f32 %v227, 0.0
        %v235 = vadd.f32 %v228, 0.0
        %s236 = sld [smem:[#allocation2 + $0x36]]
        %v237 = vstv %s236
        %v238 = vmul.f32 %v196, %v237
        %v239 = vmul.f32 %v197, %v237
        %v240 = vmul.f32 %v198, %v237
        %v241 = vmul.f32 %v199, %v237
        %v242 = vmul.f32 %v200, %v237
        %v243 = vmul.f32 %v201, %v237
        %v244 = vmul.f32 %v202, %v237
        %v245 = vadd.f32 %v238, 0.0
        %v246 = vadd.f32 %v239, 0.0
        %v247 = vadd.f32 %v240, 0.0
        %v248 = vadd.f32 %v241, 0.0
        %v249 = vadd.f32 %v242, 0.0
        %v250 = vadd.f32 %v243, 0.0
        %v251 = vadd.f32 %v244, 0.0
        %s252 = sld [smem:[#allocation2 + $0x51]]
        %v253 = vstv %s252
        %v254 = vmul.f32 %v196, %v253
        %v255 = vmul.f32 %v197, %v253
        %v256 = vmul.f32 %v198, %v253
        %v257 = vmul.f32 %v199, %v253
        %v258 = vmul.f32 %v200, %v253
        %v259 = vmul.f32 %v201, %v253
        %v260 = vmul.f32 %v202, %v253
        %v261 = vadd.f32 %v254, 0.0
        %v262 = vadd.f32 %v255, 0.0
        %v263 = vadd.f32 %v256, 0.0
        %v264 = vadd.f32 %v257, 0.0
        %v265 = vadd.f32 %v258, 0.0
        %v266 = vadd.f32 %v259, 0.0
        %v267 = vadd.f32 %v260, 0.0
        %s268 = sld [smem:[#allocation2 + $0x1]]
        %v269 = vstv %s268
        %v270 = vmul.f32 %v196, %v269
        %v271 = vmul.f32 %v197, %v269
        %v272 = vmul.f32 %v198, %v269
        %v273 = vmul.f32 %v199, %v269
        %v274 = vmul.f32 %v200, %v269
        %v275 = vmul.f32 %v201, %v269
        %v276 = vmul.f32 %v202, %v269
        %284 = vrot.lane.b32.xlu0 %v270, 127
        %v285 = vpop.permute.xlu0 %284
        %286 = vrot.lane.b32.xlu0 %v271, 127
        %v287 = vpop.permute.xlu0 %286
        %288 = vrot.lane.b32.xlu0 %v272, 127
        %v289 = vpop.permute.xlu0 %288
        %290 = vrot.lane.b32.xlu0 %v273, 127
        %v291 = vpop.permute.xlu0 %290
        %292 = vrot.lane.b32.xlu0 %v274, 127
        %v293 = vpop.permute.xlu0 %292
        %294 = vrot.lane.b32.xlu0 %v275, 127
        %v295 = vpop.permute.xlu0 %294
        %296 = vrot.lane.b32.xlu0 %v276, 127
        %v297 = vpop.permute.xlu0 %296
        %v305 = vadd.f32 %v213, %v285
        %v306 = vadd.f32 %v214, %v287
        %v307 = vadd.f32 %v215, %v289
        %v308 = vadd.f32 %v216, %v291
        %v309 = vadd.f32 %v217, %v293
        %v310 = vadd.f32 %v218, %v295
        %v311 = vadd.f32 %v219, %v297
        %s312 = sld [smem:[#allocation2 + $0x1c]]
        %v313 = vstv %s312
        %v314 = vmul.f32 %v196, %v313
        %v315 = vmul.f32 %v197, %v313
        %v316 = vmul.f32 %v198, %v313
        %v317 = vmul.f32 %v199, %v313
        %v318 = vmul.f32 %v200, %v313
        %v319 = vmul.f32 %v201, %v313
        %v320 = vmul.f32 %v202, %v313
        %328 = vrot.lane.b32.xlu0 %v314, 127
        %v329 = vpop.permute.xlu0 %328
        %330 = vrot.lane.b32.xlu0 %v315, 127
        %v331 = vpop.permute.xlu0 %330
        %332 = vrot.lane.b32.xlu0 %v316, 127
        %v333 = vpop.permute.xlu0 %332
        %334 = vrot.lane.b32.xlu0 %v317, 127
        %v335 = vpop.permute.xlu0 %334
        %336 = vrot.lane.b32.xlu0 %v318, 127
        %v337 = vpop.permute.xlu0 %336
        %338 = vrot.lane.b32.xlu0 %v319, 127
        %v339 = vpop.permute.xlu0 %338
        %340 = vrot.lane.b32.xlu0 %v320, 127
        %v341 = vpop.permute.xlu0 %340
        %v349 = vadd.f32 %v229, %v329
        %v350 = vadd.f32 %v230, %v331
        %v351 = vadd.f32 %v231, %v333
        %v352 = vadd.f32 %v232, %v335
        %v353 = vadd.f32 %v233, %v337
        %v354 = vadd.f32 %v234, %v339
        %v355 = vadd.f32 %v235, %v341
        %s356 = sld [smem:[#allocation2 + $0x37]]
        %v357 = vstv %s356
        %v358 = vmul.f32 %v196, %v357
        %v359 = vmul.f32 %v197, %v357
        %v360 = vmul.f32 %v198, %v357
        %v361 = vmul.f32 %v199, %v357
        %v362 = vmul.f32 %v200, %v357
        %v363 = vmul.f32 %v201, %v357
        %v364 = vmul.f32 %v202, %v357
        %372 = vrot.lane.b32.xlu0 %v358, 127
        %v373 = vpop.permute.xlu0 %372
        %374 = vrot.lane.b32.xlu0 %v359, 127
        %v375 = vpop.permute.xlu0 %374
        %376 = vrot.lane.b32.xlu0 %v360, 127
        %v377 = vpop.permute.xlu0 %376
        %378 = vrot.lane.b32.xlu0 %v361, 127
        %v379 = vpop.permute.xlu0 %378
        %380 = vrot.lane.b32.xlu0 %v362, 127
        %v381 = vpop.permute.xlu0 %380
        %382 = vrot.lane.b32.xlu0 %v363, 127
        %v383 = vpop.permute.xlu0 %382
        %384 = vrot.lane.b32.xlu0 %v364, 127
        %v385 = vpop.permute.xlu0 %384
        %v393 = vadd.f32 %v245, %v373
        %v394 = vadd.f32 %v246, %v375
        %v395 = vadd.f32 %v247, %v377
        %v396 = vadd.f32 %v248, %v379
        %v397 = vadd.f32 %v249, %v381
        %v398 = vadd.f32 %v250, %v383
        %v399 = vadd.f32 %v251, %v385
        %s400 = sld [smem:[#allocation2 + $0x52]]
        %v401 = vstv %s400
        %v402 = vmul.f32 %v196, %v401
        %v403 = vmul.f32 %v197, %v401
        %v404 = vmul.f32 %v198, %v401
        %v405 = vmul.f32 %v199, %v401
        %v406 = vmul.f32 %v200, %v401
        %v407 = vmul.f32 %v201, %v401
        %v408 = vmul.f32 %v202, %v401
        %416 = vrot.lane.b32.xlu0 %v402, 127
        %v417 = vpop.permute.xlu0 %416
        %418 = vrot.lane.b32.xlu0 %v403, 127
        %v419 = vpop.permute.xlu0 %418
        %420 = vrot.lane.b32.xlu0 %v404, 127
        %v421 = vpop.permute.xlu0 %420
        %422 = vrot.lane.b32.xlu0 %v405, 127
        %v423 = vpop.permute.xlu0 %422
        %424 = vrot.lane.b32.xlu0 %v406, 127
        %v425 = vpop.permute.xlu0 %424
        %426 = vrot.lane.b32.xlu0 %v407, 127
        %v427 = vpop.permute.xlu0 %426
        %428 = vrot.lane.b32.xlu0 %v408, 127
        %v429 = vpop.permute.xlu0 %428
        %v437 = vadd.f32 %v261, %v417
        %v438 = vadd.f32 %v262, %v419
        %v439 = vadd.f32 %v263, %v421
        %v440 = vadd.f32 %v264, %v423
        %v441 = vadd.f32 %v265, %v425
        %v442 = vadd.f32 %v266, %v427
        %v443 = vadd.f32 %v267, %v429
        %s444 = sld [smem:[#allocation2 + $0x2]]
        %v445 = vstv %s444
        %v446 = vmul.f32 %v196, %v445
        %v447 = vmul.f32 %v197, %v445
        %v448 = vmul.f32 %v198, %v445
        %v449 = vmul.f32 %v199, %v445
        %v450 = vmul.f32 %v200, %v445
        %v451 = vmul.f32 %v201, %v445
        %v452 = vmul.f32 %v202, %v445
        %460 = vrot.lane.b32.xlu0 %v446, 126
        %v461 = vpop.permute.xlu0 %460
        %462 = vrot.lane.b32.xlu0 %v447, 126
        %v463 = vpop.permute.xlu0 %462
        %464 = vrot.lane.b32.xlu0 %v448, 126
        %v465 = vpop.permute.xlu0 %464
        %466 = vrot.lane.b32.xlu0 %v449, 126
        %v467 = vpop.permute.xlu0 %466
        %468 = vrot.lane.b32.xlu0 %v450, 126
        %v469 = vpop.permute.xlu0 %468
        %470 = vrot.lane.b32.xlu0 %v451, 126
        %v471 = vpop.permute.xlu0 %470
        %472 = vrot.lane.b32.xlu0 %v452, 126
        %v473 = vpop.permute.xlu0 %472
        %v481 = vadd.f32 %v305, %v461
        %v482 = vadd.f32 %v306, %v463
        %v483 = vadd.f32 %v307, %v465
        %v484 = vadd.f32 %v308, %v467
        %v485 = vadd.f32 %v309, %v469
        %v486 = vadd.f32 %v310, %v471
        %v487 = vadd.f32 %v311, %v473
        %s488 = sld [smem:[#allocation2 + $0x1d]]
        %v489 = vstv %s488
        %v490 = vmul.f32 %v196, %v489
        %v491 = vmul.f32 %v197, %v489
        %v492 = vmul.f32 %v198, %v489
        %v493 = vmul.f32 %v199, %v489
        %v494 = vmul.f32 %v200, %v489
        %v495 = vmul.f32 %v201, %v489
        %v496 = vmul.f32 %v202, %v489
        %504 = vrot.lane.b32.xlu0 %v490, 126
        %v505 = vpop.permute.xlu0 %504
        %506 = vrot.lane.b32.xlu0 %v491, 126
        %v507 = vpop.permute.xlu0 %506
        %508 = vrot.lane.b32.xlu0 %v492, 126
        %v509 = vpop.permute.xlu0 %508
        %510 = vrot.lane.b32.xlu0 %v493, 126
        %v511 = vpop.permute.xlu0 %510
        %512 = vrot.lane.b32.xlu0 %v494, 126
        %v513 = vpop.permute.xlu0 %512
        %514 = vrot.lane.b32.xlu0 %v495, 126
        %v515 = vpop.permute.xlu0 %514
        %516 = vrot.lane.b32.xlu0 %v496, 126
        %v517 = vpop.permute.xlu0 %516
        %v525 = vadd.f32 %v349, %v505
        %v526 = vadd.f32 %v350, %v507
        %v527 = vadd.f32 %v351, %v509
        %v528 = vadd.f32 %v352, %v511
        %v529 = vadd.f32 %v353, %v513
        %v530 = vadd.f32 %v354, %v515
        %v531 = vadd.f32 %v355, %v517
        %s532 = sld [smem:[#allocation2 + $0x38]]
        %v533 = vstv %s532
        %v534 = vmul.f32 %v196, %v533
        %v535 = vmul.f32 %v197, %v533
        %v536 = vmul.f32 %v198, %v533
        %v537 = vmul.f32 %v199, %v533
        %v538 = vmul.f32 %v200, %v533
        %v539 = vmul.f32 %v201, %v533
        %v540 = vmul.f32 %v202, %v533
        %548 = vrot.lane.b32.xlu0 %v534, 126
        %v549 = vpop.permute.xlu0 %548
        %550 = vrot.lane.b32.xlu0 %v535, 126
        %v551 = vpop.permute.xlu0 %550
        %552 = vrot.lane.b32.xlu0 %v536, 126
        %v553 = vpop.permute.xlu0 %552
        %554 = vrot.lane.b32.xlu0 %v537, 126
        %v555 = vpop.permute.xlu0 %554
        %556 = vrot.lane.b32.xlu0 %v538, 126
        %v557 = vpop.permute.xlu0 %556
        %558 = vrot.lane.b32.xlu0 %v539, 126
        %v559 = vpop.permute.xlu0 %558
        %560 = vrot.lane.b32.xlu0 %v540, 126
        %v561 = vpop.permute.xlu0 %560
        %v569 = vadd.f32 %v393, %v549
        %v570 = vadd.f32 %v394, %v551
        %v571 = vadd.f32 %v395, %v553
        %v572 = vadd.f32 %v396, %v555
        %v573 = vadd.f32 %v397, %v557
        %v574 = vadd.f32 %v398, %v559
        %v575 = vadd.f32 %v399, %v561
        %s576 = sld [smem:[#allocation2 + $0x53]]
        %v577 = vstv %s576
        %v578 = vmul.f32 %v196, %v577
        %v579 = vmul.f32 %v197, %v577
        %v580 = vmul.f32 %v198, %v577
        %v581 = vmul.f32 %v199, %v577
        %v582 = vmul.f32 %v200, %v577
        %v583 = vmul.f32 %v201, %v577
        %v584 = vmul.f32 %v202, %v577
        %592 = vrot.lane.b32.xlu0 %v578, 126
        %v593 = vpop.permute.xlu0 %592
        %594 = vrot.lane.b32.xlu0 %v579, 126
        %v595 = vpop.permute.xlu0 %594
        %596 = vrot.lane.b32.xlu0 %v580, 126
        %v597 = vpop.permute.xlu0 %596
        %598 = vrot.lane.b32.xlu0 %v581, 126
        %v599 = vpop.permute.xlu0 %598
        %600 = vrot.lane.b32.xlu0 %v582, 126
        %v601 = vpop.permute.xlu0 %600
        %602 = vrot.lane.b32.xlu0 %v583, 126
        %v603 = vpop.permute.xlu0 %602
        %604 = vrot.lane.b32.xlu0 %v584, 126
        %v605 = vpop.permute.xlu0 %604
        %v613 = vadd.f32 %v437, %v593
        %v614 = vadd.f32 %v438, %v595
        %v615 = vadd.f32 %v439, %v597
        %v616 = vadd.f32 %v440, %v599
        %v617 = vadd.f32 %v441, %v601
        %v618 = vadd.f32 %v442, %v603
        %v619 = vadd.f32 %v443, %v605
        %s620 = sld [smem:[#allocation2 + $0x3]]
        %v621 = vstv %s620
        %v622 = vmul.f32 %v196, %v621
        %v623 = vmul.f32 %v197, %v621
        %v624 = vmul.f32 %v198, %v621
        %v625 = vmul.f32 %v199, %v621
        %v626 = vmul.f32 %v200, %v621
        %v627 = vmul.f32 %v201, %v621
        %v628 = vmul.f32 %v202, %v621
        %v629 = vmul.f32 %v203, %v621
        %vm638 = vcmask 1046528
        %v639 = vrot.slane %v622, 1
        %v640 = vrot.slane %v623, 1
        %v641 = vsel %vm638, %v639, %v640
        %v642 = vrot.slane %v624, 1
        %v643 = vsel %vm638, %v640, %v642
        %v644 = vrot.slane %v625, 1
        %v645 = vsel %vm638, %v642, %v644
        %v646 = vrot.slane %v626, 1
        %v647 = vsel %vm638, %v644, %v646
        %v648 = vrot.slane %v627, 1
        %v649 = vsel %vm638, %v646, %v648
        %v650 = vrot.slane %v628, 1
        %v651 = vsel %vm638, %v648, %v650
        %v652 = vrot.slane %v629, 1
        %v653 = vsel %vm638, %v650, %v652
        %v661 = vadd.f32 %v481, %v641
        %v662 = vadd.f32 %v482, %v643
        %v663 = vadd.f32 %v483, %v645
        %v664 = vadd.f32 %v484, %v647
        %v665 = vadd.f32 %v485, %v649
        %v666 = vadd.f32 %v486, %v651
        %v667 = vadd.f32 %v487, %v653
        %s668 = sld [smem:[#allocation2 + $0x1e]]
        %v669 = vstv %s668
        %v670 = vmul.f32 %v196, %v669
        %v671 = vmul.f32 %v197, %v669
        %v672 = vmul.f32 %v198, %v669
        %v673 = vmul.f32 %v199, %v669
        %v674 = vmul.f32 %v200, %v669
        %v675 = vmul.f32 %v201, %v669
        %v676 = vmul.f32 %v202, %v669
        %v677 = vmul.f32 %v203, %v669
        %v686 = vrot.slane %v670, 1
        %v687 = vrot.slane %v671, 1
        %v688 = vsel %vm638, %v686, %v687
        %v689 = vrot.slane %v672, 1
        %v690 = vsel %vm638, %v687, %v689
        %v691 = vrot.slane %v673, 1
        %v692 = vsel %vm638, %v689, %v691
        %v693 = vrot.slane %v674, 1
        %v694 = vsel %vm638, %v691, %v693
        %v695 = vrot.slane %v675, 1
        %v696 = vsel %vm638, %v693, %v695
        %v697 = vrot.slane %v676, 1
        %v698 = vsel %vm638, %v695, %v697
        %v699 = vrot.slane %v677, 1
        %v700 = vsel %vm638, %v697, %v699
        %v708 = vadd.f32 %v525, %v688
        %v709 = vadd.f32 %v526, %v690
        %v710 = vadd.f32 %v527, %v692
        %v711 = vadd.f32 %v528, %v694
        %v712 = vadd.f32 %v529, %v696
        %v713 = vadd.f32 %v530, %v698
        %v714 = vadd.f32 %v531, %v700
        %s715 = sld [smem:[#allocation2 + $0x39]]
        %v716 = vstv %s715
        %v717 = vmul.f32 %v196, %v716
        %v718 = vmul.f32 %v197, %v716
        %v719 = vmul.f32 %v198, %v716
        %v720 = vmul.f32 %v199, %v716
        %v721 = vmul.f32 %v200, %v716
        %v722 = vmul.f32 %v201, %v716
        %v723 = vmul.f32 %v202, %v716
        %v724 = vmul.f32 %v203, %v716
        %v733 = vrot.slane %v717, 1
        %v734 = vrot.slane %v718, 1
        %v735 = vsel %vm638, %v733, %v734
        %v736 = vrot.slane %v719, 1
        %v737 = vsel %vm638, %v734, %v736
        %v738 = vrot.slane %v720, 1
        %v739 = vsel %vm638, %v736, %v738
        %v740 = vrot.slane %v721, 1
        %v741 = vsel %vm638, %v738, %v740
        %v742 = vrot.slane %v722, 1
        %v743 = vsel %vm638, %v740, %v742
        %v744 = vrot.slane %v723, 1
        %v745 = vsel %vm638, %v742, %v744
        %v746 = vrot.slane %v724, 1
        %v747 = vsel %vm638, %v744, %v746
        %v755 = vadd.f32 %v569, %v735
        %v756 = vadd.f32 %v570, %v737
        %v757 = vadd.f32 %v571, %v739
        %v758 = vadd.f32 %v572, %v741
        %v759 = vadd.f32 %v573, %v743
        %v760 = vadd.f32 %v574, %v745
        %v761 = vadd.f32 %v575, %v747
        %s762 = sld [smem:[#allocation2 + $0x54]]
        %v763 = vstv %s762
        %v764 = vmul.f32 %v196, %v763
        %v765 = vmul.f32 %v197, %v763
        %v766 = vmul.f32 %v198, %v763
        %v767 = vmul.f32 %v199, %v763
        %v768 = vmul.f32 %v200, %v763
        %v769 = vmul.f32 %v201, %v763
        %v770 = vmul.f32 %v202, %v763
        %v771 = vmul.f32 %v203, %v763
        %v780 = vrot.slane %v764, 1
        %v781 = vrot.slane %v765, 1
        %v782 = vsel %vm638, %v780, %v781
        %v783 = vrot.slane %v766, 1
        %v784 = vsel %vm638, %v781, %v783
        %v785 = vrot.slane %v767, 1
        %v786 = vsel %vm638, %v783, %v785
        %v787 = vrot.slane %v768, 1
        %v788 = vsel %vm638, %v785, %v787
        %v789 = vrot.slane %v769, 1
        %v790 = vsel %vm638, %v787, %v789
        %v791 = vrot.slane %v770, 1
        %v792 = vsel %vm638, %v789, %v791
        %v793 = vrot.slane %v771, 1
        %v794 = vsel %vm638, %v791, %v793
        %v802 = vadd.f32 %v613, %v782
        %v803 = vadd.f32 %v614, %v784
        %v804 = vadd.f32 %v615, %v786
        %v805 = vadd.f32 %v616, %v788
        %v806 = vadd.f32 %v617, %v790
        %v807 = vadd.f32 %v618, %v792
        %v808 = vadd.f32 %v619, %v794
        %s809 = sld [smem:[#allocation2 + $0x4]]
        %v810 = vstv %s809
        %v811 = vmul.f32 %v196, %v810
        %v812 = vmul.f32 %v197, %v810
        %v813 = vmul.f32 %v198, %v810
        %v814 = vmul.f32 %v199, %v810
        %v815 = vmul.f32 %v200, %v810
        %v816 = vmul.f32 %v201, %v810
        %v817 = vmul.f32 %v202, %v810
        %v818 = vmul.f32 %v203, %v810
        %v827 = vrot.slane %v811, 1
        %v828 = vrot.slane %v812, 1
        %v829 = vsel %vm638, %v827, %v828
        %v830 = vrot.slane %v813, 1
        %v831 = vsel %vm638, %v828, %v830
        %v832 = vrot.slane %v814, 1
        %v833 = vsel %vm638, %v830, %v832
        %v834 = vrot.slane %v815, 1
        %v835 = vsel %vm638, %v832, %v834
        %v836 = vrot.slane %v816, 1
        %v837 = vsel %vm638, %v834, %v836
        %v838 = vrot.slane %v817, 1
        %v839 = vsel %vm638, %v836, %v838
        %v840 = vrot.slane %v818, 1
        %v841 = vsel %vm638, %v838, %v840
        %842 = vrot.lane.b32.xlu0 %v829, 127
        %v843 = vpop.permute.xlu0 %842
        %844 = vrot.lane.b32.xlu0 %v831, 127
        %v845 = vpop.permute.xlu0 %844
        %846 = vrot.lane.b32.xlu0 %v833, 127
        %v847 = vpop.permute.xlu0 %846
        %848 = vrot.lane.b32.xlu0 %v835, 127
        %v849 = vpop.permute.xlu0 %848
        %850 = vrot.lane.b32.xlu0 %v837, 127
        %v851 = vpop.permute.xlu0 %850
        %852 = vrot.lane.b32.xlu0 %v839, 127
        %v853 = vpop.permute.xlu0 %852
        %854 = vrot.lane.b32.xlu0 %v841, 127
        %v855 = vpop.permute.xlu0 %854
        %v863 = vadd.f32 %v661, %v843
        %v864 = vadd.f32 %v662, %v845
        %v865 = vadd.f32 %v663, %v847
        %v866 = vadd.f32 %v664, %v849
        %v867 = vadd.f32 %v665, %v851
        %v868 = vadd.f32 %v666, %v853
        %v869 = vadd.f32 %v667, %v855
        %s870 = sld [smem:[#allocation2 + $0x1f]]
        %v871 = vstv %s870
        %v872 = vmul.f32 %v196, %v871
        %v873 = vmul.f32 %v197, %v871
        %v874 = vmul.f32 %v198, %v871
        %v875 = vmul.f32 %v199, %v871
        %v876 = vmul.f32 %v200, %v871
        %v877 = vmul.f32 %v201, %v871
        %v878 = vmul.f32 %v202, %v871
        %v879 = vmul.f32 %v203, %v871
        %v888 = vrot.slane %v872, 1
        %v889 = vrot.slane %v873, 1
        %v890 = vsel %vm638, %v888, %v889
        %v891 = vrot.slane %v874, 1
        %v892 = vsel %vm638, %v889, %v891
        %v893 = vrot.slane %v875, 1
        %v894 = vsel %vm638, %v891, %v893
        %v895 = vrot.slane %v876, 1
        %v896 = vsel %vm638, %v893, %v895
        %v897 = vrot.slane %v877, 1
        %v898 = vsel %vm638, %v895, %v897
        %v899 = vrot.slane %v878, 1
        %v900 = vsel %vm638, %v897, %v899
        %v901 = vrot.slane %v879, 1
        %v902 = vsel %vm638, %v899, %v901
        %903 = vrot.lane.b32.xlu0 %v890, 127
        %v904 = vpop.permute.xlu0 %903
        %905 = vrot.lane.b32.xlu0 %v892, 127
        %v906 = vpop.permute.xlu0 %905
        %907 = vrot.lane.b32.xlu0 %v894, 127
        %v908 = vpop.permute.xlu0 %907
        %909 = vrot.lane.b32.xlu0 %v896, 127
        %v910 = vpop.permute.xlu0 %909
        %911 = vrot.lane.b32.xlu0 %v898, 127
        %v912 = vpop.permute.xlu0 %911
        %913 = vrot.lane.b32.xlu0 %v900, 127
        %v914 = vpop.permute.xlu0 %913
        %915 = vrot.lane.b32.xlu0 %v902, 127
        %v916 = vpop.permute.xlu0 %915
        %v924 = vadd.f32 %v708, %v904
        %v925 = vadd.f32 %v709, %v906
        %v926 = vadd.f32 %v710, %v908
        %v927 = vadd.f32 %v711, %v910
        %v928 = vadd.f32 %v712, %v912
        %v929 = vadd.f32 %v713, %v914
        %v930 = vadd.f32 %v714, %v916
        %s931 = sld [smem:[#allocation2 + $0x3a]]
        %v932 = vstv %s931
        %v933 = vmul.f32 %v196, %v932
        %v934 = vmul.f32 %v197, %v932
        %v935 = vmul.f32 %v198, %v932
        %v936 = vmul.f32 %v199, %v932
        %v937 = vmul.f32 %v200, %v932
        %v938 = vmul.f32 %v201, %v932
        %v939 = vmul.f32 %v202, %v932
        %v940 = vmul.f32 %v203, %v932
        %v949 = vrot.slane %v933, 1
        %v950 = vrot.slane %v934, 1
        %v951 = vsel %vm638, %v949, %v950
        %v952 = vrot.slane %v935, 1
        %v953 = vsel %vm638, %v950, %v952
        %v954 = vrot.slane %v936, 1
        %v955 = vsel %vm638, %v952, %v954
        %v956 = vrot.slane %v937, 1
        %v957 = vsel %vm638, %v954, %v956
        %v958 = vrot.slane %v938, 1
        %v959 = vsel %vm638, %v956, %v958
        %v960 = vrot.slane %v939, 1
        %v961 = vsel %vm638, %v958, %v960
        %v962 = vrot.slane %v940, 1
        %v963 = vsel %vm638, %v960, %v962
        %964 = vrot.lane.b32.xlu0 %v951, 127
        %v965 = vpop.permute.xlu0 %964
        %966 = vrot.lane.b32.xlu0 %v953, 127
        %v967 = vpop.permute.xlu0 %966
        %968 = vrot.lane.b32.xlu0 %v955, 127
        %v969 = vpop.permute.xlu0 %968
        %970 = vrot.lane.b32.xlu0 %v957, 127
        %v971 = vpop.permute.xlu0 %970
        %972 = vrot.lane.b32.xlu0 %v959, 127
        %v973 = vpop.permute.xlu0 %972
        %974 = vrot.lane.b32.xlu0 %v961, 127
        %v975 = vpop.permute.xlu0 %974
        %976 = vrot.lane.b32.xlu0 %v963, 127
        %v977 = vpop.permute.xlu0 %976
        %v985 = vadd.f32 %v755, %v965
        %v986 = vadd.f32 %v756, %v967
        %v987 = vadd.f32 %v757, %v969
        %v988 = vadd.f32 %v758, %v971
        %v989 = vadd.f32 %v759, %v973
        %v990 = vadd.f32 %v760, %v975
        %v991 = vadd.f32 %v761, %v977
        %s992 = sld [smem:[#allocation2 + $0x55]]
        %v993 = vstv %s992
        %v994 = vmul.f32 %v196, %v993
        %v995 = vmul.f32 %v197, %v993
        %v996 = vmul.f32 %v198, %v993
        %v997 = vmul.f32 %v199, %v993
        %v998 = vmul.f32 %v200, %v993
        %v999 = vmul.f32 %v201, %v993
        %v1000 = vmul.f32 %v202, %v993
        %v1001 = vmul.f32 %v203, %v993
        %v1010 = vrot.slane %v994, 1
        %v1011 = vrot.slane %v995, 1
        %v1012 = vsel %vm638, %v1010, %v1011
        %v1013 = vrot.slane %v996, 1
        %v1014 = vsel %vm638, %v1011, %v1013
        %v1015 = vrot.slane %v997, 1
        %v1016 = vsel %vm638, %v1013, %v1015
        %v1017 = vrot.slane %v998, 1
        %v1018 = vsel %vm638, %v1015, %v1017
        %v1019 = vrot.slane %v999, 1
        %v1020 = vsel %vm638, %v1017, %v1019
        %v1021 = vrot.slane %v1000, 1
        %v1022 = vsel %vm638, %v1019, %v1021
        %v1023 = vrot.slane %v1001, 1
        %v1024 = vsel %vm638, %v1021, %v1023
        %1025 = vrot.lane.b32.xlu0 %v1012, 127
        %v1026 = vpop.permute.xlu0 %1025
        %1027 = vrot.lane.b32.xlu0 %v1014, 127
        %v1028 = vpop.permute.xlu0 %1027
        %1029 = vrot.lane.b32.xlu0 %v1016, 127
        %v1030 = vpop.permute.xlu0 %1029
        %1031 = vrot.lane.b32.xlu0 %v1018, 127
        %v1032 = vpop.permute.xlu0 %1031
        %1033 = vrot.lane.b32.xlu0 %v1020, 127
        %v1034 = vpop.permute.xlu0 %1033
        %1035 = vrot.lane.b32.xlu0 %v1022, 127
        %v1036 = vpop.permute.xlu0 %1035
        %1037 = vrot.lane.b32.xlu0 %v1024, 127
        %v1038 = vpop.permute.xlu0 %1037
        %v1046 = vadd.f32 %v802, %v1026
        %v1047 = vadd.f32 %v803, %v1028
        %v1048 = vadd.f32 %v804, %v1030
        %v1049 = vadd.f32 %v805, %v1032
        %v1050 = vadd.f32 %v806, %v1034
        %v1051 = vadd.f32 %v807, %v1036
        %v1052 = vadd.f32 %v808, %v1038
        %s1053 = sld [smem:[#allocation2 + $0x5]]
        %v1054 = vstv %s1053
        %v1055 = vmul.f32 %v196, %v1054
        %v1056 = vmul.f32 %v197, %v1054
        %v1057 = vmul.f32 %v198, %v1054
        %v1058 = vmul.f32 %v199, %v1054
        %v1059 = vmul.f32 %v200, %v1054
        %v1060 = vmul.f32 %v201, %v1054
        %v1061 = vmul.f32 %v202, %v1054
        %v1062 = vmul.f32 %v203, %v1054
        %v1071 = vrot.slane %v1055, 1
        %v1072 = vrot.slane %v1056, 1
        %v1073 = vsel %vm638, %v1071, %v1072
        %v1074 = vrot.slane %v1057, 1
        %v1075 = vsel %vm638, %v1072, %v1074
        %v1076 = vrot.slane %v1058, 1
        %v1077 = vsel %vm638, %v1074, %v1076
        %v1078 = vrot.slane %v1059, 1
        %v1079 = vsel %vm638, %v1076, %v1078
        %v1080 = vrot.slane %v1060, 1
        %v1081 = vsel %vm638, %v1078, %v1080
        %v1082 = vrot.slane %v1061, 1
        %v1083 = vsel %vm638, %v1080, %v1082
        %v1084 = vrot.slane %v1062, 1
        %v1085 = vsel %vm638, %v1082, %v1084
        %1086 = vrot.lane.b32.xlu0 %v1073, 126
        %v1087 = vpop.permute.xlu0 %1086
        %1088 = vrot.lane.b32.xlu0 %v1075, 126
        %v1089 = vpop.permute.xlu0 %1088
        %1090 = vrot.lane.b32.xlu0 %v1077, 126
        %v1091 = vpop.permute.xlu0 %1090
        %1092 = vrot.lane.b32.xlu0 %v1079, 126
        %v1093 = vpop.permute.xlu0 %1092
        %1094 = vrot.lane.b32.xlu0 %v1081, 126
        %v1095 = vpop.permute.xlu0 %1094
        %1096 = vrot.lane.b32.xlu0 %v1083, 126
        %v1097 = vpop.permute.xlu0 %1096
        %1098 = vrot.lane.b32.xlu0 %v1085, 126
        %v1099 = vpop.permute.xlu0 %1098
        %v1107 = vadd.f32 %v863, %v1087
        %v1108 = vadd.f32 %v864, %v1089
        %v1109 = vadd.f32 %v865, %v1091
        %v1110 = vadd.f32 %v866, %v1093
        %v1111 = vadd.f32 %v867, %v1095
        %v1112 = vadd.f32 %v868, %v1097
        %v1113 = vadd.f32 %v869, %v1099
        %s1114 = sld [smem:[#allocation2 + $0x20]]
        %v1115 = vstv %s1114
        %v1116 = vmul.f32 %v196, %v1115
        %v1117 = vmul.f32 %v197, %v1115
        %v1118 = vmul.f32 %v198, %v1115
        %v1119 = vmul.f32 %v199, %v1115
        %v1120 = vmul.f32 %v200, %v1115
        %v1121 = vmul.f32 %v201, %v1115
        %v1122 = vmul.f32 %v202, %v1115
        %v1123 = vmul.f32 %v203, %v1115
        %v1132 = vrot.slane %v1116, 1
        %v1133 = vrot.slane %v1117, 1
        %v1134 = vsel %vm638, %v1132, %v1133
        %v1135 = vrot.slane %v1118, 1
        %v1136 = vsel %vm638, %v1133, %v1135
        %v1137 = vrot.slane %v1119, 1
        %v1138 = vsel %vm638, %v1135, %v1137
        %v1139 = vrot.slane %v1120, 1
        %v1140 = vsel %vm638, %v1137, %v1139
        %v1141 = vrot.slane %v1121, 1
        %v1142 = vsel %vm638, %v1139, %v1141
        %v1143 = vrot.slane %v1122, 1
        %v1144 = vsel %vm638, %v1141, %v1143
        %v1145 = vrot.slane %v1123, 1
        %v1146 = vsel %vm638, %v1143, %v1145
        %1147 = vrot.lane.b32.xlu0 %v1134, 126
        %v1148 = vpop.permute.xlu0 %1147
        %1149 = vrot.lane.b32.xlu0 %v1136, 126
        %v1150 = vpop.permute.xlu0 %1149
        %1151 = vrot.lane.b32.xlu0 %v1138, 126
        %v1152 = vpop.permute.xlu0 %1151
        %1153 = vrot.lane.b32.xlu0 %v1140, 126
        %v1154 = vpop.permute.xlu0 %1153
        %1155 = vrot.lane.b32.xlu0 %v1142, 126
        %v1156 = vpop.permute.xlu0 %1155
        %1157 = vrot.lane.b32.xlu0 %v1144, 126
        %v1158 = vpop.permute.xlu0 %1157
        %1159 = vrot.lane.b32.xlu0 %v1146, 126
        %v1160 = vpop.permute.xlu0 %1159
        %v1168 = vadd.f32 %v924, %v1148
        %v1169 = vadd.f32 %v925, %v1150
        %v1170 = vadd.f32 %v926, %v1152
        %v1171 = vadd.f32 %v927, %v1154
        %v1172 = vadd.f32 %v928, %v1156
        %v1173 = vadd.f32 %v929, %v1158
        %v1174 = vadd.f32 %v930, %v1160
        %s1175 = sld [smem:[#allocation2 + $0x3b]]
        %v1176 = vstv %s1175
        %v1177 = vmul.f32 %v196, %v1176
        %v1178 = vmul.f32 %v197, %v1176
        %v1179 = vmul.f32 %v198, %v1176
        %v1180 = vmul.f32 %v199, %v1176
        %v1181 = vmul.f32 %v200, %v1176
        %v1182 = vmul.f32 %v201, %v1176
        %v1183 = vmul.f32 %v202, %v1176
        %v1184 = vmul.f32 %v203, %v1176
        %v1193 = vrot.slane %v1177, 1
        %v1194 = vrot.slane %v1178, 1
        %v1195 = vsel %vm638, %v1193, %v1194
        %v1196 = vrot.slane %v1179, 1
        %v1197 = vsel %vm638, %v1194, %v1196
        %v1198 = vrot.slane %v1180, 1
        %v1199 = vsel %vm638, %v1196, %v1198
        %v1200 = vrot.slane %v1181, 1
        %v1201 = vsel %vm638, %v1198, %v1200
        %v1202 = vrot.slane %v1182, 1
        %v1203 = vsel %vm638, %v1200, %v1202
        %v1204 = vrot.slane %v1183, 1
        %v1205 = vsel %vm638, %v1202, %v1204
        %v1206 = vrot.slane %v1184, 1
        %v1207 = vsel %vm638, %v1204, %v1206
        %1208 = vrot.lane.b32.xlu0 %v1195, 126
        %v1209 = vpop.permute.xlu0 %1208
        %1210 = vrot.lane.b32.xlu0 %v1197, 126
        %v1211 = vpop.permute.xlu0 %1210
        %1212 = vrot.lane.b32.xlu0 %v1199, 126
        %v1213 = vpop.permute.xlu0 %1212
        %1214 = vrot.lane.b32.xlu0 %v1201, 126
        %v1215 = vpop.permute.xlu0 %1214
        %1216 = vrot.lane.b32.xlu0 %v1203, 126
        %v1217 = vpop.permute.xlu0 %1216
        %1218 = vrot.lane.b32.xlu0 %v1205, 126
        %v1219 = vpop.permute.xlu0 %1218
        %1220 = vrot.lane.b32.xlu0 %v1207, 126
        %v1221 = vpop.permute.xlu0 %1220
        %v1229 = vadd.f32 %v985, %v1209
        %v1230 = vadd.f32 %v986, %v1211
        %v1231 = vadd.f32 %v987, %v1213
        %v1232 = vadd.f32 %v988, %v1215
        %v1233 = vadd.f32 %v989, %v1217
        %v1234 = vadd.f32 %v990, %v1219
        %v1235 = vadd.f32 %v991, %v1221
        %s1236 = sld [smem:[#allocation2 + $0x56]]
        %v1237 = vstv %s1236
        %v1238 = vmul.f32 %v196, %v1237
        %v1239 = vmul.f32 %v197, %v1237
        %v1240 = vmul.f32 %v198, %v1237
        %v1241 = vmul.f32 %v199, %v1237
        %v1242 = vmul.f32 %v200, %v1237
        %v1243 = vmul.f32 %v201, %v1237
        %v1244 = vmul.f32 %v202, %v1237
        %v1245 = vmul.f32 %v203, %v1237
        %v1254 = vrot.slane %v1238, 1
        %v1255 = vrot.slane %v1239, 1
        %v1256 = vsel %vm638, %v1254, %v1255
        %v1257 = vrot.slane %v1240, 1
        %v1258 = vsel %vm638, %v1255, %v1257
        %v1259 = vrot.slane %v1241, 1
        %v1260 = vsel %vm638, %v1257, %v1259
        %v1261 = vrot.slane %v1242, 1
        %v1262 = vsel %vm638, %v1259, %v1261
        %v1263 = vrot.slane %v1243, 1
        %v1264 = vsel %vm638, %v1261, %v1263
        %v1265 = vrot.slane %v1244, 1
        %v1266 = vsel %vm638, %v1263, %v1265
        %v1267 = vrot.slane %v1245, 1
        %v1268 = vsel %vm638, %v1265, %v1267
        %1269 = vrot.lane.b32.xlu0 %v1256, 126
        %v1270 = vpop.permute.xlu0 %1269
        %1271 = vrot.lane.b32.xlu0 %v1258, 126
        %v1272 = vpop.permute.xlu0 %1271
        %1273 = vrot.lane.b32.xlu0 %v1260, 126
        %v1274 = vpop.permute.xlu0 %1273
        %1275 = vrot.lane.b32.xlu0 %v1262, 126
        %v1276 = vpop.permute.xlu0 %1275
        %1277 = vrot.lane.b32.xlu0 %v1264, 126
        %v1278 = vpop.permute.xlu0 %1277
        %1279 = vrot.lane.b32.xlu0 %v1266, 126
        %v1280 = vpop.permute.xlu0 %1279
        %1281 = vrot.lane.b32.xlu0 %v1268, 126
        %v1282 = vpop.permute.xlu0 %1281
        %v1290 = vadd.f32 %v1046, %v1270
        %v1291 = vadd.f32 %v1047, %v1272
        %v1292 = vadd.f32 %v1048, %v1274
        %v1293 = vadd.f32 %v1049, %v1276
        %v1294 = vadd.f32 %v1050, %v1278
        %v1295 = vadd.f32 %v1051, %v1280
        %v1296 = vadd.f32 %v1052, %v1282
        %s1297 = sld [smem:[#allocation2 + $0x6]]
        %v1298 = vstv %s1297
        %v1299 = vmul.f32 %v196, %v1298
        %v1300 = vmul.f32 %v197, %v1298
        %v1301 = vmul.f32 %v198, %v1298
        %v1302 = vmul.f32 %v199, %v1298
        %v1303 = vmul.f32 %v200, %v1298
        %v1304 = vmul.f32 %v201, %v1298
        %v1305 = vmul.f32 %v202, %v1298
        %v1306 = vmul.f32 %v203, %v1298
        %vm1315 = vcmask 1045504
        %v1316 = vrot.slane %v1299, 2
        %v1317 = vrot.slane %v1300, 2
        %v1318 = vsel %vm1315, %v1316, %v1317
        %v1319 = vrot.slane %v1301, 2
        %v1320 = vsel %vm1315, %v1317, %v1319
        %v1321 = vrot.slane %v1302, 2
        %v1322 = vsel %vm1315, %v1319, %v1321
        %v1323 = vrot.slane %v1303, 2
        %v1324 = vsel %vm1315, %v1321, %v1323
        %v1325 = vrot.slane %v1304, 2
        %v1326 = vsel %vm1315, %v1323, %v1325
        %v1327 = vrot.slane %v1305, 2
        %v1328 = vsel %vm1315, %v1325, %v1327
        %v1329 = vrot.slane %v1306, 2
        %v1330 = vsel %vm1315, %v1327, %v1329
        %v1338 = vadd.f32 %v1107, %v1318
        %v1339 = vadd.f32 %v1108, %v1320
        %v1340 = vadd.f32 %v1109, %v1322
        %v1341 = vadd.f32 %v1110, %v1324
        %v1342 = vadd.f32 %v1111, %v1326
        %v1343 = vadd.f32 %v1112, %v1328
        %v1344 = vadd.f32 %v1113, %v1330
        %s1345 = sld [smem:[#allocation2 + $0x21]]
        %v1346 = vstv %s1345
        %v1347 = vmul.f32 %v196, %v1346
        %v1348 = vmul.f32 %v197, %v1346
        %v1349 = vmul.f32 %v198, %v1346
        %v1350 = vmul.f32 %v199, %v1346
        %v1351 = vmul.f32 %v200, %v1346
        %v1352 = vmul.f32 %v201, %v1346
        %v1353 = vmul.f32 %v202, %v1346
        %v1354 = vmul.f32 %v203, %v1346
        %v1363 = vrot.slane %v1347, 2
        %v1364 = vrot.slane %v1348, 2
        %v1365 = vsel %vm1315, %v1363, %v1364
        %v1366 = vrot.slane %v1349, 2
        %v1367 = vsel %vm1315, %v1364, %v1366
        %v1368 = vrot.slane %v1350, 2
        %v1369 = vsel %vm1315, %v1366, %v1368
        %v1370 = vrot.slane %v1351, 2
        %v1371 = vsel %vm1315, %v1368, %v1370
        %v1372 = vrot.slane %v1352, 2
        %v1373 = vsel %vm1315, %v1370, %v1372
        %v1374 = vrot.slane %v1353, 2
        %v1375 = vsel %vm1315, %v1372, %v1374
        %v1376 = vrot.slane %v1354, 2
        %v1377 = vsel %vm1315, %v1374, %v1376
        %v1385 = vadd.f32 %v1168, %v1365
        %v1386 = vadd.f32 %v1169, %v1367
        %v1387 = vadd.f32 %v1170, %v1369
        %v1388 = vadd.f32 %v1171, %v1371
        %v1389 = vadd.f32 %v1172, %v1373
        %v1390 = vadd.f32 %v1173, %v1375
        %v1391 = vadd.f32 %v1174, %v1377
        %s1392 = sld [smem:[#allocation2 + $0x3c]]
        %v1393 = vstv %s1392
        %v1394 = vmul.f32 %v196, %v1393
        %v1395 = vmul.f32 %v197, %v1393
        %v1396 = vmul.f32 %v198, %v1393
        %v1397 = vmul.f32 %v199, %v1393
        %v1398 = vmul.f32 %v200, %v1393
        %v1399 = vmul.f32 %v201, %v1393
        %v1400 = vmul.f32 %v202, %v1393
        %v1401 = vmul.f32 %v203, %v1393
        %v1410 = vrot.slane %v1394, 2
        %v1411 = vrot.slane %v1395, 2
        %v1412 = vsel %vm1315, %v1410, %v1411
        %v1413 = vrot.slane %v1396, 2
        %v1414 = vsel %vm1315, %v1411, %v1413
        %v1415 = vrot.slane %v1397, 2
        %v1416 = vsel %vm1315, %v1413, %v1415
        %v1417 = vrot.slane %v1398, 2
        %v1418 = vsel %vm1315, %v1415, %v1417
        %v1419 = vrot.slane %v1399, 2
        %v1420 = vsel %vm1315, %v1417, %v1419
        %v1421 = vrot.slane %v1400, 2
        %v1422 = vsel %vm1315, %v1419, %v1421
        %v1423 = vrot.slane %v1401, 2
        %v1424 = vsel %vm1315, %v1421, %v1423
        %v1432 = vadd.f32 %v1229, %v1412
        %v1433 = vadd.f32 %v1230, %v1414
        %v1434 = vadd.f32 %v1231, %v1416
        %v1435 = vadd.f32 %v1232, %v1418
        %v1436 = vadd.f32 %v1233, %v1420
        %v1437 = vadd.f32 %v1234, %v1422
        %v1438 = vadd.f32 %v1235, %v1424
        %s1439 = sld [smem:[#allocation2 + $0x57]]
        %v1440 = vstv %s1439
        %v1441 = vmul.f32 %v196, %v1440
        %v1442 = vmul.f32 %v197, %v1440
        %v1443 = vmul.f32 %v198, %v1440
        %v1444 = vmul.f32 %v199, %v1440
        %v1445 = vmul.f32 %v200, %v1440
        %v1446 = vmul.f32 %v201, %v1440
        %v1447 = vmul.f32 %v202, %v1440
        %v1448 = vmul.f32 %v203, %v1440
        %v1457 = vrot.slane %v1441, 2
        %v1458 = vrot.slane %v1442, 2
        %v1459 = vsel %vm1315, %v1457, %v1458
        %v1460 = vrot.slane %v1443, 2
        %v1461 = vsel %vm1315, %v1458, %v1460
        %v1462 = vrot.slane %v1444, 2
        %v1463 = vsel %vm1315, %v1460, %v1462
        %v1464 = vrot.slane %v1445, 2
        %v1465 = vsel %vm1315, %v1462, %v1464
        %v1466 = vrot.slane %v1446, 2
        %v1467 = vsel %vm1315, %v1464, %v1466
        %v1468 = vrot.slane %v1447, 2
        %v1469 = vsel %vm1315, %v1466, %v1468
        %v1470 = vrot.slane %v1448, 2
        %v1471 = vsel %vm1315, %v1468, %v1470
        %v1479 = vadd.f32 %v1290, %v1459
        %v1480 = vadd.f32 %v1291, %v1461
        %v1481 = vadd.f32 %v1292, %v1463
        %v1482 = vadd.f32 %v1293, %v1465
        %v1483 = vadd.f32 %v1294, %v1467
        %v1484 = vadd.f32 %v1295, %v1469
        %v1485 = vadd.f32 %v1296, %v1471
        %s1486 = sld [smem:[#allocation2 + $0x7]]
        %v1487 = vstv %s1486
        %v1488 = vmul.f32 %v196, %v1487
        %v1489 = vmul.f32 %v197, %v1487
        %v1490 = vmul.f32 %v198, %v1487
        %v1491 = vmul.f32 %v199, %v1487
        %v1492 = vmul.f32 %v200, %v1487
        %v1493 = vmul.f32 %v201, %v1487
        %v1494 = vmul.f32 %v202, %v1487
        %v1495 = vmul.f32 %v203, %v1487
        %v1504 = vrot.slane %v1488, 2
        %v1505 = vrot.slane %v1489, 2
        %v1506 = vsel %vm1315, %v1504, %v1505
        %v1507 = vrot.slane %v1490, 2
        %v1508 = vsel %vm1315, %v1505, %v1507
        %v1509 = vrot.slane %v1491, 2
        %v1510 = vsel %vm1315, %v1507, %v1509
        %v1511 = vrot.slane %v1492, 2
        %v1512 = vsel %vm1315, %v1509, %v1511
        %v1513 = vrot.slane %v1493, 2
        %v1514 = vsel %vm1315, %v1511, %v1513
        %v1515 = vrot.slane %v1494, 2
        %v1516 = vsel %vm1315, %v1513, %v1515
        %v1517 = vrot.slane %v1495, 2
        %v1518 = vsel %vm1315, %v1515, %v1517
        %1519 = vrot.lane.b32.xlu0 %v1506, 127
        %v1520 = vpop.permute.xlu0 %1519
        %1521 = vrot.lane.b32.xlu0 %v1508, 127
        %v1522 = vpop.permute.xlu0 %1521
        %1523 = vrot.lane.b32.xlu0 %v1510, 127
        %v1524 = vpop.permute.xlu0 %1523
        %1525 = vrot.lane.b32.xlu0 %v1512, 127
        %v1526 = vpop.permute.xlu0 %1525
        %1527 = vrot.lane.b32.xlu0 %v1514, 127
        %v1528 = vpop.permute.xlu0 %1527
        %1529 = vrot.lane.b32.xlu0 %v1516, 127
        %v1530 = vpop.permute.xlu0 %1529
        %1531 = vrot.lane.b32.xlu0 %v1518, 127
        %v1532 = vpop.permute.xlu0 %1531
        %v1540 = vadd.f32 %v1338, %v1520
        %v1541 = vadd.f32 %v1339, %v1522
        %v1542 = vadd.f32 %v1340, %v1524
        %v1543 = vadd.f32 %v1341, %v1526
        %v1544 = vadd.f32 %v1342, %v1528
        %v1545 = vadd.f32 %v1343, %v1530
        %v1546 = vadd.f32 %v1344, %v1532
        %s1547 = sld [smem:[#allocation2 + $0x22]]
        %v1548 = vstv %s1547
        %v1549 = vmul.f32 %v196, %v1548
        %v1550 = vmul.f32 %v197, %v1548
        %v1551 = vmul.f32 %v198, %v1548
        %v1552 = vmul.f32 %v199, %v1548
        %v1553 = vmul.f32 %v200, %v1548
        %v1554 = vmul.f32 %v201, %v1548
        %v1555 = vmul.f32 %v202, %v1548
        %v1556 = vmul.f32 %v203, %v1548
        %v1565 = vrot.slane %v1549, 2
        %v1566 = vrot.slane %v1550, 2
        %v1567 = vsel %vm1315, %v1565, %v1566
        %v1568 = vrot.slane %v1551, 2
        %v1569 = vsel %vm1315, %v1566, %v1568
        %v1570 = vrot.slane %v1552, 2
        %v1571 = vsel %vm1315, %v1568, %v1570
        %v1572 = vrot.slane %v1553, 2
        %v1573 = vsel %vm1315, %v1570, %v1572
        %v1574 = vrot.slane %v1554, 2
        %v1575 = vsel %vm1315, %v1572, %v1574
        %v1576 = vrot.slane %v1555, 2
        %v1577 = vsel %vm1315, %v1574, %v1576
        %v1578 = vrot.slane %v1556, 2
        %v1579 = vsel %vm1315, %v1576, %v1578
        %1580 = vrot.lane.b32.xlu0 %v1567, 127
        %v1581 = vpop.permute.xlu0 %1580
        %1582 = vrot.lane.b32.xlu0 %v1569, 127
        %v1583 = vpop.permute.xlu0 %1582
        %1584 = vrot.lane.b32.xlu0 %v1571, 127
        %v1585 = vpop.permute.xlu0 %1584
        %1586 = vrot.lane.b32.xlu0 %v1573, 127
        %v1587 = vpop.permute.xlu0 %1586
        %1588 = vrot.lane.b32.xlu0 %v1575, 127
        %v1589 = vpop.permute.xlu0 %1588
        %1590 = vrot.lane.b32.xlu0 %v1577, 127
        %v1591 = vpop.permute.xlu0 %1590
        %1592 = vrot.lane.b32.xlu0 %v1579, 127
        %v1593 = vpop.permute.xlu0 %1592
        %v1601 = vadd.f32 %v1385, %v1581
        %v1602 = vadd.f32 %v1386, %v1583
        %v1603 = vadd.f32 %v1387, %v1585
        %v1604 = vadd.f32 %v1388, %v1587
        %v1605 = vadd.f32 %v1389, %v1589
        %v1606 = vadd.f32 %v1390, %v1591
        %v1607 = vadd.f32 %v1391, %v1593
        %s1608 = sld [smem:[#allocation2 + $0x3d]]
        %v1609 = vstv %s1608
        %v1610 = vmul.f32 %v196, %v1609
        %v1611 = vmul.f32 %v197, %v1609
        %v1612 = vmul.f32 %v198, %v1609
        %v1613 = vmul.f32 %v199, %v1609
        %v1614 = vmul.f32 %v200, %v1609
        %v1615 = vmul.f32 %v201, %v1609
        %v1616 = vmul.f32 %v202, %v1609
        %v1617 = vmul.f32 %v203, %v1609
        %v1626 = vrot.slane %v1610, 2
        %v1627 = vrot.slane %v1611, 2
        %v1628 = vsel %vm1315, %v1626, %v1627
        %v1629 = vrot.slane %v1612, 2
        %v1630 = vsel %vm1315, %v1627, %v1629
        %v1631 = vrot.slane %v1613, 2
        %v1632 = vsel %vm1315, %v1629, %v1631
        %v1633 = vrot.slane %v1614, 2
        %v1634 = vsel %vm1315, %v1631, %v1633
        %v1635 = vrot.slane %v1615, 2
        %v1636 = vsel %vm1315, %v1633, %v1635
        %v1637 = vrot.slane %v1616, 2
        %v1638 = vsel %vm1315, %v1635, %v1637
        %v1639 = vrot.slane %v1617, 2
        %v1640 = vsel %vm1315, %v1637, %v1639
        %1641 = vrot.lane.b32.xlu0 %v1628, 127
        %v1642 = vpop.permute.xlu0 %1641
        %1643 = vrot.lane.b32.xlu0 %v1630, 127
        %v1644 = vpop.permute.xlu0 %1643
        %1645 = vrot.lane.b32.xlu0 %v1632, 127
        %v1646 = vpop.permute.xlu0 %1645
        %1647 = vrot.lane.b32.xlu0 %v1634, 127
        %v1648 = vpop.permute.xlu0 %1647
        %1649 = vrot.lane.b32.xlu0 %v1636, 127
        %v1650 = vpop.permute.xlu0 %1649
        %1651 = vrot.lane.b32.xlu0 %v1638, 127
        %v1652 = vpop.permute.xlu0 %1651
        %1653 = vrot.lane.b32.xlu0 %v1640, 127
        %v1654 = vpop.permute.xlu0 %1653
        %v1662 = vadd.f32 %v1432, %v1642
        %v1663 = vadd.f32 %v1433, %v1644
        %v1664 = vadd.f32 %v1434, %v1646
        %v1665 = vadd.f32 %v1435, %v1648
        %v1666 = vadd.f32 %v1436, %v1650
        %v1667 = vadd.f32 %v1437, %v1652
        %v1668 = vadd.f32 %v1438, %v1654
        %s1669 = sld [smem:[#allocation2 + $0x58]]
        %v1670 = vstv %s1669
        %v1671 = vmul.f32 %v196, %v1670
        %v1672 = vmul.f32 %v197, %v1670
        %v1673 = vmul.f32 %v198, %v1670
        %v1674 = vmul.f32 %v199, %v1670
        %v1675 = vmul.f32 %v200, %v1670
        %v1676 = vmul.f32 %v201, %v1670
        %v1677 = vmul.f32 %v202, %v1670
        %v1678 = vmul.f32 %v203, %v1670
        %v1687 = vrot.slane %v1671, 2
        %v1688 = vrot.slane %v1672, 2
        %v1689 = vsel %vm1315, %v1687, %v1688
        %v1690 = vrot.slane %v1673, 2
        %v1691 = vsel %vm1315, %v1688, %v1690
        %v1692 = vrot.slane %v1674, 2
        %v1693 = vsel %vm1315, %v1690, %v1692
        %v1694 = vrot.slane %v1675, 2
        %v1695 = vsel %vm1315, %v1692, %v1694
        %v1696 = vrot.slane %v1676, 2
        %v1697 = vsel %vm1315, %v1694, %v1696
        %v1698 = vrot.slane %v1677, 2
        %v1699 = vsel %vm1315, %v1696, %v1698
        %v1700 = vrot.slane %v1678, 2
        %v1701 = vsel %vm1315, %v1698, %v1700
        %1702 = vrot.lane.b32.xlu0 %v1689, 127
        %v1703 = vpop.permute.xlu0 %1702
        %1704 = vrot.lane.b32.xlu0 %v1691, 127
        %v1705 = vpop.permute.xlu0 %1704
        %1706 = vrot.lane.b32.xlu0 %v1693, 127
        %v1707 = vpop.permute.xlu0 %1706
        %1708 = vrot.lane.b32.xlu0 %v1695, 127
        %v1709 = vpop.permute.xlu0 %1708
        %1710 = vrot.lane.b32.xlu0 %v1697, 127
        %v1711 = vpop.permute.xlu0 %1710
        %1712 = vrot.lane.b32.xlu0 %v1699, 127
        %v1713 = vpop.permute.xlu0 %1712
        %1714 = vrot.lane.b32.xlu0 %v1701, 127
        %v1715 = vpop.permute.xlu0 %1714
        %v1723 = vadd.f32 %v1479, %v1703
        %v1724 = vadd.f32 %v1480, %v1705
        %v1725 = vadd.f32 %v1481, %v1707
        %v1726 = vadd.f32 %v1482, %v1709
        %v1727 = vadd.f32 %v1483, %v1711
        %v1728 = vadd.f32 %v1484, %v1713
        %v1729 = vadd.f32 %v1485, %v1715
        %s1730 = sld [smem:[#allocation2 + $0x8]]
        %v1731 = vstv %s1730
        %v1732 = vmul.f32 %v196, %v1731
        %v1733 = vmul.f32 %v197, %v1731
        %v1734 = vmul.f32 %v198, %v1731
        %v1735 = vmul.f32 %v199, %v1731
        %v1736 = vmul.f32 %v200, %v1731
        %v1737 = vmul.f32 %v201, %v1731
        %v1738 = vmul.f32 %v202, %v1731
        %v1739 = vmul.f32 %v203, %v1731
        %v1748 = vrot.slane %v1732, 2
        %v1749 = vrot.slane %v1733, 2
        %v1750 = vsel %vm1315, %v1748, %v1749
        %v1751 = vrot.slane %v1734, 2
        %v1752 = vsel %vm1315, %v1749, %v1751
        %v1753 = vrot.slane %v1735, 2
        %v1754 = vsel %vm1315, %v1751, %v1753
        %v1755 = vrot.slane %v1736, 2
        %v1756 = vsel %vm1315, %v1753, %v1755
        %v1757 = vrot.slane %v1737, 2
        %v1758 = vsel %vm1315, %v1755, %v1757
        %v1759 = vrot.slane %v1738, 2
        %v1760 = vsel %vm1315, %v1757, %v1759
        %v1761 = vrot.slane %v1739, 2
        %v1762 = vsel %vm1315, %v1759, %v1761
        %1763 = vrot.lane.b32.xlu0 %v1750, 126
        %v1764 = vpop.permute.xlu0 %1763
        %1765 = vrot.lane.b32.xlu0 %v1752, 126
        %v1766 = vpop.permute.xlu0 %1765
        %1767 = vrot.lane.b32.xlu0 %v1754, 126
        %v1768 = vpop.permute.xlu0 %1767
        %1769 = vrot.lane.b32.xlu0 %v1756, 126
        %v1770 = vpop.permute.xlu0 %1769
        %1771 = vrot.lane.b32.xlu0 %v1758, 126
        %v1772 = vpop.permute.xlu0 %1771
        %1773 = vrot.lane.b32.xlu0 %v1760, 126
        %v1774 = vpop.permute.xlu0 %1773
        %1775 = vrot.lane.b32.xlu0 %v1762, 126
        %v1776 = vpop.permute.xlu0 %1775
        %v1784 = vadd.f32 %v1540, %v1764
        %v1785 = vadd.f32 %v1541, %v1766
        %v1786 = vadd.f32 %v1542, %v1768
        %v1787 = vadd.f32 %v1543, %v1770
        %v1788 = vadd.f32 %v1544, %v1772
        %v1789 = vadd.f32 %v1545, %v1774
        %v1790 = vadd.f32 %v1546, %v1776
        %s1791 = sld [smem:[#allocation2 + $0x23]]
        %v1792 = vstv %s1791
        %v1793 = vmul.f32 %v196, %v1792
        %v1794 = vmul.f32 %v197, %v1792
        %v1795 = vmul.f32 %v198, %v1792
        %v1796 = vmul.f32 %v199, %v1792
        %v1797 = vmul.f32 %v200, %v1792
        %v1798 = vmul.f32 %v201, %v1792
        %v1799 = vmul.f32 %v202, %v1792
        %v1800 = vmul.f32 %v203, %v1792
        %v1809 = vrot.slane %v1793, 2
        %v1810 = vrot.slane %v1794, 2
        %v1811 = vsel %vm1315, %v1809, %v1810
        %v1812 = vrot.slane %v1795, 2
        %v1813 = vsel %vm1315, %v1810, %v1812
        %v1814 = vrot.slane %v1796, 2
        %v1815 = vsel %vm1315, %v1812, %v1814
        %v1816 = vrot.slane %v1797, 2
        %v1817 = vsel %vm1315, %v1814, %v1816
        %v1818 = vrot.slane %v1798, 2
        %v1819 = vsel %vm1315, %v1816, %v1818
        %v1820 = vrot.slane %v1799, 2
        %v1821 = vsel %vm1315, %v1818, %v1820
        %v1822 = vrot.slane %v1800, 2
        %v1823 = vsel %vm1315, %v1820, %v1822
        %1824 = vrot.lane.b32.xlu0 %v1811, 126
        %v1825 = vpop.permute.xlu0 %1824
        %1826 = vrot.lane.b32.xlu0 %v1813, 126
        %v1827 = vpop.permute.xlu0 %1826
        %1828 = vrot.lane.b32.xlu0 %v1815, 126
        %v1829 = vpop.permute.xlu0 %1828
        %1830 = vrot.lane.b32.xlu0 %v1817, 126
        %v1831 = vpop.permute.xlu0 %1830
        %1832 = vrot.lane.b32.xlu0 %v1819, 126
        %v1833 = vpop.permute.xlu0 %1832
        %1834 = vrot.lane.b32.xlu0 %v1821, 126
        %v1835 = vpop.permute.xlu0 %1834
        %1836 = vrot.lane.b32.xlu0 %v1823, 126
        %v1837 = vpop.permute.xlu0 %1836
        %v1845 = vadd.f32 %v1601, %v1825
        %v1846 = vadd.f32 %v1602, %v1827
        %v1847 = vadd.f32 %v1603, %v1829
        %v1848 = vadd.f32 %v1604, %v1831
        %v1849 = vadd.f32 %v1605, %v1833
        %v1850 = vadd.f32 %v1606, %v1835
        %v1851 = vadd.f32 %v1607, %v1837
        %s1852 = sld [smem:[#allocation2 + $0x3e]]
        %v1853 = vstv %s1852
        %v1854 = vmul.f32 %v196, %v1853
        %v1855 = vmul.f32 %v197, %v1853
        %v1856 = vmul.f32 %v198, %v1853
        %v1857 = vmul.f32 %v199, %v1853
        %v1858 = vmul.f32 %v200, %v1853
        %v1859 = vmul.f32 %v201, %v1853
        %v1860 = vmul.f32 %v202, %v1853
        %v1861 = vmul.f32 %v203, %v1853
        %v1870 = vrot.slane %v1854, 2
        %v1871 = vrot.slane %v1855, 2
        %v1872 = vsel %vm1315, %v1870, %v1871
        %v1873 = vrot.slane %v1856, 2
        %v1874 = vsel %vm1315, %v1871, %v1873
        %v1875 = vrot.slane %v1857, 2
        %v1876 = vsel %vm1315, %v1873, %v1875
        %v1877 = vrot.slane %v1858, 2
        %v1878 = vsel %vm1315, %v1875, %v1877
        %v1879 = vrot.slane %v1859, 2
        %v1880 = vsel %vm1315, %v1877, %v1879
        %v1881 = vrot.slane %v1860, 2
        %v1882 = vsel %vm1315, %v1879, %v1881
        %v1883 = vrot.slane %v1861, 2
        %v1884 = vsel %vm1315, %v1881, %v1883
        %1885 = vrot.lane.b32.xlu0 %v1872, 126
        %v1886 = vpop.permute.xlu0 %1885
        %1887 = vrot.lane.b32.xlu0 %v1874, 126
        %v1888 = vpop.permute.xlu0 %1887
        %1889 = vrot.lane.b32.xlu0 %v1876, 126
        %v1890 = vpop.permute.xlu0 %1889
        %1891 = vrot.lane.b32.xlu0 %v1878, 126
        %v1892 = vpop.permute.xlu0 %1891
        %1893 = vrot.lane.b32.xlu0 %v1880, 126
        %v1894 = vpop.permute.xlu0 %1893
        %1895 = vrot.lane.b32.xlu0 %v1882, 126
        %v1896 = vpop.permute.xlu0 %1895
        %1897 = vrot.lane.b32.xlu0 %v1884, 126
        %v1898 = vpop.permute.xlu0 %1897
        %v1906 = vadd.f32 %v1662, %v1886
        %v1907 = vadd.f32 %v1663, %v1888
        %v1908 = vadd.f32 %v1664, %v1890
        %v1909 = vadd.f32 %v1665, %v1892
        %v1910 = vadd.f32 %v1666, %v1894
        %v1911 = vadd.f32 %v1667, %v1896
        %v1912 = vadd.f32 %v1668, %v1898
        %s1913 = sld [smem:[#allocation2 + $0x59]]
        %v1914 = vstv %s1913
        %v1915 = vmul.f32 %v196, %v1914
        %v1916 = vmul.f32 %v197, %v1914
        %v1917 = vmul.f32 %v198, %v1914
        %v1918 = vmul.f32 %v199, %v1914
        %v1919 = vmul.f32 %v200, %v1914
        %v1920 = vmul.f32 %v201, %v1914
        %v1921 = vmul.f32 %v202, %v1914
        %v1922 = vmul.f32 %v203, %v1914
        %v1931 = vrot.slane %v1915, 2
        %v1932 = vrot.slane %v1916, 2
        %v1933 = vsel %vm1315, %v1931, %v1932
        %v1934 = vrot.slane %v1917, 2
        %v1935 = vsel %vm1315, %v1932, %v1934
        %v1936 = vrot.slane %v1918, 2
        %v1937 = vsel %vm1315, %v1934, %v1936
        %v1938 = vrot.slane %v1919, 2
        %v1939 = vsel %vm1315, %v1936, %v1938
        %v1940 = vrot.slane %v1920, 2
        %v1941 = vsel %vm1315, %v1938, %v1940
        %v1942 = vrot.slane %v1921, 2
        %v1943 = vsel %vm1315, %v1940, %v1942
        %v1944 = vrot.slane %v1922, 2
        %v1945 = vsel %vm1315, %v1942, %v1944
        %1946 = vrot.lane.b32.xlu0 %v1933, 126
        %v1947 = vpop.permute.xlu0 %1946
        %1948 = vrot.lane.b32.xlu0 %v1935, 126
        %v1949 = vpop.permute.xlu0 %1948
        %1950 = vrot.lane.b32.xlu0 %v1937, 126
        %v1951 = vpop.permute.xlu0 %1950
        %1952 = vrot.lane.b32.xlu0 %v1939, 126
        %v1953 = vpop.permute.xlu0 %1952
        %1954 = vrot.lane.b32.xlu0 %v1941, 126
        %v1955 = vpop.permute.xlu0 %1954
        %1956 = vrot.lane.b32.xlu0 %v1943, 126
        %v1957 = vpop.permute.xlu0 %1956
        %1958 = vrot.lane.b32.xlu0 %v1945, 126
        %v1959 = vpop.permute.xlu0 %1958
        %v1967 = vadd.f32 %v1723, %v1947
        %v1968 = vadd.f32 %v1724, %v1949
        %v1969 = vadd.f32 %v1725, %v1951
        %v1970 = vadd.f32 %v1726, %v1953
        %v1971 = vadd.f32 %v1727, %v1955
        %v1972 = vadd.f32 %v1728, %v1957
        %v1973 = vadd.f32 %v1729, %v1959
        %s1974 = scalar_lea.vmem %s190, 64
        %v1975 = vld [vmem:[%s1974] sm:$0xff]
        %v1976 = vld [vmem:[%s1974 + $0x8] sm:$0xff]
        %v1977 = vld [vmem:[%s1974 + $0x10] sm:$0xff]
        %v1978 = vld [vmem:[%s1974 + $0x18] sm:$0xff]
        %v1979 = vld [vmem:[%s1974 + $0x20] sm:$0xff]
        %v1980 = vld [vmem:[%s1974 + $0x28] sm:$0xff]
        %v1981 = vld [vmem:[%s1974 + $0x30] sm:$0xff]
        %v1982 = vld [vmem:[%s1974 + $0x38] sm:$0x3]
        %s1983 = sld [smem:[#allocation2 + $0x9]]
        %v1984 = vstv %s1983
        %v1985 = vmul.f32 %v1975, %v1984
        %v1986 = vmul.f32 %v1976, %v1984
        %v1987 = vmul.f32 %v1977, %v1984
        %v1988 = vmul.f32 %v1978, %v1984
        %v1989 = vmul.f32 %v1979, %v1984
        %v1990 = vmul.f32 %v1980, %v1984
        %v1991 = vmul.f32 %v1981, %v1984
        %v1992 = vadd.f32 %v1784, %v1985
        %v1993 = vadd.f32 %v1785, %v1986
        %v1994 = vadd.f32 %v1786, %v1987
        %v1995 = vadd.f32 %v1787, %v1988
        %v1996 = vadd.f32 %v1788, %v1989
        %v1997 = vadd.f32 %v1789, %v1990
        %v1998 = vadd.f32 %v1790, %v1991
        %s1999 = sld [smem:[#allocation2 + $0x24]]
        %v2000 = vstv %s1999
        %v2001 = vmul.f32 %v1975, %v2000
        %v2002 = vmul.f32 %v1976, %v2000
        %v2003 = vmul.f32 %v1977, %v2000
        %v2004 = vmul.f32 %v1978, %v2000
        %v2005 = vmul.f32 %v1979, %v2000
        %v2006 = vmul.f32 %v1980, %v2000
        %v2007 = vmul.f32 %v1981, %v2000
        %v2008 = vadd.f32 %v1845, %v2001
        %v2009 = vadd.f32 %v1846, %v2002
        %v2010 = vadd.f32 %v1847, %v2003
        %v2011 = vadd.f32 %v1848, %v2004
        %v2012 = vadd.f32 %v1849, %v2005
        %v2013 = vadd.f32 %v1850, %v2006
        %v2014 = vadd.f32 %v1851, %v2007
        %s2015 = sld [smem:[#allocation2 + $0x3f]]
        %v2016 = vstv %s2015
        %v2017 = vmul.f32 %v1975, %v2016
        %v2018 = vmul.f32 %v1976, %v2016
        %v2019 = vmul.f32 %v1977, %v2016
        %v2020 = vmul.f32 %v1978, %v2016
        %v2021 = vmul.f32 %v1979, %v2016
        %v2022 = vmul.f32 %v1980, %v2016
        %v2023 = vmul.f32 %v1981, %v2016
        %v2024 = vadd.f32 %v1906, %v2017
        %v2025 = vadd.f32 %v1907, %v2018
        %v2026 = vadd.f32 %v1908, %v2019
        %v2027 = vadd.f32 %v1909, %v2020
        %v2028 = vadd.f32 %v1910, %v2021
        %v2029 = vadd.f32 %v1911, %v2022
        %v2030 = vadd.f32 %v1912, %v2023
        %s2031 = sld [smem:[#allocation2 + $0x5a]]
        %v2032 = vstv %s2031
        %v2033 = vmul.f32 %v1975, %v2032
        %v2034 = vmul.f32 %v1976, %v2032
        %v2035 = vmul.f32 %v1977, %v2032
        %v2036 = vmul.f32 %v1978, %v2032
        %v2037 = vmul.f32 %v1979, %v2032
        %v2038 = vmul.f32 %v1980, %v2032
        %v2039 = vmul.f32 %v1981, %v2032
        %v2040 = vadd.f32 %v1967, %v2033
        %v2041 = vadd.f32 %v1968, %v2034
        %v2042 = vadd.f32 %v1969, %v2035
        %v2043 = vadd.f32 %v1970, %v2036
        %v2044 = vadd.f32 %v1971, %v2037
        %v2045 = vadd.f32 %v1972, %v2038
        %v2046 = vadd.f32 %v1973, %v2039
        %s2047 = sld [smem:[#allocation2 + $0xa]]
        %v2048 = vstv %s2047
        %v2049 = vmul.f32 %v1975, %v2048
        %v2050 = vmul.f32 %v1976, %v2048
        %v2051 = vmul.f32 %v1977, %v2048
        %v2052 = vmul.f32 %v1978, %v2048
        %v2053 = vmul.f32 %v1979, %v2048
        %v2054 = vmul.f32 %v1980, %v2048
        %v2055 = vmul.f32 %v1981, %v2048
        %2063 = vrot.lane.b32.xlu0 %v2049, 127
        %v2064 = vpop.permute.xlu0 %2063
        %2065 = vrot.lane.b32.xlu0 %v2050, 127
        %v2066 = vpop.permute.xlu0 %2065
        %2067 = vrot.lane.b32.xlu0 %v2051, 127
        %v2068 = vpop.permute.xlu0 %2067
        %2069 = vrot.lane.b32.xlu0 %v2052, 127
        %v2070 = vpop.permute.xlu0 %2069
        %2071 = vrot.lane.b32.xlu0 %v2053, 127
        %v2072 = vpop.permute.xlu0 %2071
        %2073 = vrot.lane.b32.xlu0 %v2054, 127
        %v2074 = vpop.permute.xlu0 %2073
        %2075 = vrot.lane.b32.xlu0 %v2055, 127
        %v2076 = vpop.permute.xlu0 %2075
        %v2084 = vadd.f32 %v1992, %v2064
        %v2085 = vadd.f32 %v1993, %v2066
        %v2086 = vadd.f32 %v1994, %v2068
        %v2087 = vadd.f32 %v1995, %v2070
        %v2088 = vadd.f32 %v1996, %v2072
        %v2089 = vadd.f32 %v1997, %v2074
        %v2090 = vadd.f32 %v1998, %v2076
        %s2091 = sld [smem:[#allocation2 + $0x25]]
        %v2092 = vstv %s2091
        %v2093 = vmul.f32 %v1975, %v2092
        %v2094 = vmul.f32 %v1976, %v2092
        %v2095 = vmul.f32 %v1977, %v2092
        %v2096 = vmul.f32 %v1978, %v2092
        %v2097 = vmul.f32 %v1979, %v2092
        %v2098 = vmul.f32 %v1980, %v2092
        %v2099 = vmul.f32 %v1981, %v2092
        %2107 = vrot.lane.b32.xlu0 %v2093, 127
        %v2108 = vpop.permute.xlu0 %2107
        %2109 = vrot.lane.b32.xlu0 %v2094, 127
        %v2110 = vpop.permute.xlu0 %2109
        %2111 = vrot.lane.b32.xlu0 %v2095, 127
        %v2112 = vpop.permute.xlu0 %2111
        %2113 = vrot.lane.b32.xlu0 %v2096, 127
        %v2114 = vpop.permute.xlu0 %2113
        %2115 = vrot.lane.b32.xlu0 %v2097, 127
        %v2116 = vpop.permute.xlu0 %2115
        %2117 = vrot.lane.b32.xlu0 %v2098, 127
        %v2118 = vpop.permute.xlu0 %2117
        %2119 = vrot.lane.b32.xlu0 %v2099, 127
        %v2120 = vpop.permute.xlu0 %2119
        %v2128 = vadd.f32 %v2008, %v2108
        %v2129 = vadd.f32 %v2009, %v2110
        %v2130 = vadd.f32 %v2010, %v2112
        %v2131 = vadd.f32 %v2011, %v2114
        %v2132 = vadd.f32 %v2012, %v2116
        %v2133 = vadd.f32 %v2013, %v2118
        %v2134 = vadd.f32 %v2014, %v2120
        %s2135 = sld [smem:[#allocation2 + $0x40]]
        %v2136 = vstv %s2135
        %v2137 = vmul.f32 %v1975, %v2136
        %v2138 = vmul.f32 %v1976, %v2136
        %v2139 = vmul.f32 %v1977, %v2136
        %v2140 = vmul.f32 %v1978, %v2136
        %v2141 = vmul.f32 %v1979, %v2136
        %v2142 = vmul.f32 %v1980, %v2136
        %v2143 = vmul.f32 %v1981, %v2136
        %2151 = vrot.lane.b32.xlu0 %v2137, 127
        %v2152 = vpop.permute.xlu0 %2151
        %2153 = vrot.lane.b32.xlu0 %v2138, 127
        %v2154 = vpop.permute.xlu0 %2153
        %2155 = vrot.lane.b32.xlu0 %v2139, 127
        %v2156 = vpop.permute.xlu0 %2155
        %2157 = vrot.lane.b32.xlu0 %v2140, 127
        %v2158 = vpop.permute.xlu0 %2157
        %2159 = vrot.lane.b32.xlu0 %v2141, 127
        %v2160 = vpop.permute.xlu0 %2159
        %2161 = vrot.lane.b32.xlu0 %v2142, 127
        %v2162 = vpop.permute.xlu0 %2161
        %2163 = vrot.lane.b32.xlu0 %v2143, 127
        %v2164 = vpop.permute.xlu0 %2163
        %v2172 = vadd.f32 %v2024, %v2152
        %v2173 = vadd.f32 %v2025, %v2154
        %v2174 = vadd.f32 %v2026, %v2156
        %v2175 = vadd.f32 %v2027, %v2158
        %v2176 = vadd.f32 %v2028, %v2160
        %v2177 = vadd.f32 %v2029, %v2162
        %v2178 = vadd.f32 %v2030, %v2164
        %s2179 = sld [smem:[#allocation2 + $0x5b]]
        %v2180 = vstv %s2179
        %v2181 = vmul.f32 %v1975, %v2180
        %v2182 = vmul.f32 %v1976, %v2180
        %v2183 = vmul.f32 %v1977, %v2180
        %v2184 = vmul.f32 %v1978, %v2180
        %v2185 = vmul.f32 %v1979, %v2180
        %v2186 = vmul.f32 %v1980, %v2180
        %v2187 = vmul.f32 %v1981, %v2180
        %2195 = vrot.lane.b32.xlu0 %v2181, 127
        %v2196 = vpop.permute.xlu0 %2195
        %2197 = vrot.lane.b32.xlu0 %v2182, 127
        %v2198 = vpop.permute.xlu0 %2197
        %2199 = vrot.lane.b32.xlu0 %v2183, 127
        %v2200 = vpop.permute.xlu0 %2199
        %2201 = vrot.lane.b32.xlu0 %v2184, 127
        %v2202 = vpop.permute.xlu0 %2201
        %2203 = vrot.lane.b32.xlu0 %v2185, 127
        %v2204 = vpop.permute.xlu0 %2203
        %2205 = vrot.lane.b32.xlu0 %v2186, 127
        %v2206 = vpop.permute.xlu0 %2205
        %2207 = vrot.lane.b32.xlu0 %v2187, 127
        %v2208 = vpop.permute.xlu0 %2207
        %v2216 = vadd.f32 %v2040, %v2196
        %v2217 = vadd.f32 %v2041, %v2198
        %v2218 = vadd.f32 %v2042, %v2200
        %v2219 = vadd.f32 %v2043, %v2202
        %v2220 = vadd.f32 %v2044, %v2204
        %v2221 = vadd.f32 %v2045, %v2206
        %v2222 = vadd.f32 %v2046, %v2208
        %s2223 = sld [smem:[#allocation2 + $0xb]]
        %v2224 = vstv %s2223
        %v2225 = vmul.f32 %v1975, %v2224
        %v2226 = vmul.f32 %v1976, %v2224
        %v2227 = vmul.f32 %v1977, %v2224
        %v2228 = vmul.f32 %v1978, %v2224
        %v2229 = vmul.f32 %v1979, %v2224
        %v2230 = vmul.f32 %v1980, %v2224
        %v2231 = vmul.f32 %v1981, %v2224
        %2239 = vrot.lane.b32.xlu0 %v2225, 126
        %v2240 = vpop.permute.xlu0 %2239
        %2241 = vrot.lane.b32.xlu0 %v2226, 126
        %v2242 = vpop.permute.xlu0 %2241
        %2243 = vrot.lane.b32.xlu0 %v2227, 126
        %v2244 = vpop.permute.xlu0 %2243
        %2245 = vrot.lane.b32.xlu0 %v2228, 126
        %v2246 = vpop.permute.xlu0 %2245
        %2247 = vrot.lane.b32.xlu0 %v2229, 126
        %v2248 = vpop.permute.xlu0 %2247
        %2249 = vrot.lane.b32.xlu0 %v2230, 126
        %v2250 = vpop.permute.xlu0 %2249
        %2251 = vrot.lane.b32.xlu0 %v2231, 126
        %v2252 = vpop.permute.xlu0 %2251
        %v2260 = vadd.f32 %v2084, %v2240
        %v2261 = vadd.f32 %v2085, %v2242
        %v2262 = vadd.f32 %v2086, %v2244
        %v2263 = vadd.f32 %v2087, %v2246
        %v2264 = vadd.f32 %v2088, %v2248
        %v2265 = vadd.f32 %v2089, %v2250
        %v2266 = vadd.f32 %v2090, %v2252
        %s2267 = sld [smem:[#allocation2 + $0x26]]
        %v2268 = vstv %s2267
        %v2269 = vmul.f32 %v1975, %v2268
        %v2270 = vmul.f32 %v1976, %v2268
        %v2271 = vmul.f32 %v1977, %v2268
        %v2272 = vmul.f32 %v1978, %v2268
        %v2273 = vmul.f32 %v1979, %v2268
        %v2274 = vmul.f32 %v1980, %v2268
        %v2275 = vmul.f32 %v1981, %v2268
        %2283 = vrot.lane.b32.xlu0 %v2269, 126
        %v2284 = vpop.permute.xlu0 %2283
        %2285 = vrot.lane.b32.xlu0 %v2270, 126
        %v2286 = vpop.permute.xlu0 %2285
        %2287 = vrot.lane.b32.xlu0 %v2271, 126
        %v2288 = vpop.permute.xlu0 %2287
        %2289 = vrot.lane.b32.xlu0 %v2272, 126
        %v2290 = vpop.permute.xlu0 %2289
        %2291 = vrot.lane.b32.xlu0 %v2273, 126
        %v2292 = vpop.permute.xlu0 %2291
        %2293 = vrot.lane.b32.xlu0 %v2274, 126
        %v2294 = vpop.permute.xlu0 %2293
        %2295 = vrot.lane.b32.xlu0 %v2275, 126
        %v2296 = vpop.permute.xlu0 %2295
        %v2304 = vadd.f32 %v2128, %v2284
        %v2305 = vadd.f32 %v2129, %v2286
        %v2306 = vadd.f32 %v2130, %v2288
        %v2307 = vadd.f32 %v2131, %v2290
        %v2308 = vadd.f32 %v2132, %v2292
        %v2309 = vadd.f32 %v2133, %v2294
        %v2310 = vadd.f32 %v2134, %v2296
        %s2311 = sld [smem:[#allocation2 + $0x41]]
        %v2312 = vstv %s2311
        %v2313 = vmul.f32 %v1975, %v2312
        %v2314 = vmul.f32 %v1976, %v2312
        %v2315 = vmul.f32 %v1977, %v2312
        %v2316 = vmul.f32 %v1978, %v2312
        %v2317 = vmul.f32 %v1979, %v2312
        %v2318 = vmul.f32 %v1980, %v2312
        %v2319 = vmul.f32 %v1981, %v2312
        %2327 = vrot.lane.b32.xlu0 %v2313, 126
        %v2328 = vpop.permute.xlu0 %2327
        %2329 = vrot.lane.b32.xlu0 %v2314, 126
        %v2330 = vpop.permute.xlu0 %2329
        %2331 = vrot.lane.b32.xlu0 %v2315, 126
        %v2332 = vpop.permute.xlu0 %2331
        %2333 = vrot.lane.b32.xlu0 %v2316, 126
        %v2334 = vpop.permute.xlu0 %2333
        %2335 = vrot.lane.b32.xlu0 %v2317, 126
        %v2336 = vpop.permute.xlu0 %2335
        %2337 = vrot.lane.b32.xlu0 %v2318, 126
        %v2338 = vpop.permute.xlu0 %2337
        %2339 = vrot.lane.b32.xlu0 %v2319, 126
        %v2340 = vpop.permute.xlu0 %2339
        %v2348 = vadd.f32 %v2172, %v2328
        %v2349 = vadd.f32 %v2173, %v2330
        %v2350 = vadd.f32 %v2174, %v2332
        %v2351 = vadd.f32 %v2175, %v2334
        %v2352 = vadd.f32 %v2176, %v2336
        %v2353 = vadd.f32 %v2177, %v2338
        %v2354 = vadd.f32 %v2178, %v2340
        %s2355 = sld [smem:[#allocation2 + $0x5c]]
        %v2356 = vstv %s2355
        %v2357 = vmul.f32 %v1975, %v2356
        %v2358 = vmul.f32 %v1976, %v2356
        %v2359 = vmul.f32 %v1977, %v2356
        %v2360 = vmul.f32 %v1978, %v2356
        %v2361 = vmul.f32 %v1979, %v2356
        %v2362 = vmul.f32 %v1980, %v2356
        %v2363 = vmul.f32 %v1981, %v2356
        %2371 = vrot.lane.b32.xlu0 %v2357, 126
        %v2372 = vpop.permute.xlu0 %2371
        %2373 = vrot.lane.b32.xlu0 %v2358, 126
        %v2374 = vpop.permute.xlu0 %2373
        %2375 = vrot.lane.b32.xlu0 %v2359, 126
        %v2376 = vpop.permute.xlu0 %2375
        %2377 = vrot.lane.b32.xlu0 %v2360, 126
        %v2378 = vpop.permute.xlu0 %2377
        %2379 = vrot.lane.b32.xlu0 %v2361, 126
        %v2380 = vpop.permute.xlu0 %2379
        %2381 = vrot.lane.b32.xlu0 %v2362, 126
        %v2382 = vpop.permute.xlu0 %2381
        %2383 = vrot.lane.b32.xlu0 %v2363, 126
        %v2384 = vpop.permute.xlu0 %2383
        %v2392 = vadd.f32 %v2216, %v2372
        %v2393 = vadd.f32 %v2217, %v2374
        %v2394 = vadd.f32 %v2218, %v2376
        %v2395 = vadd.f32 %v2219, %v2378
        %v2396 = vadd.f32 %v2220, %v2380
        %v2397 = vadd.f32 %v2221, %v2382
        %v2398 = vadd.f32 %v2222, %v2384
        %s2399 = sld [smem:[#allocation2 + $0xc]]
        %v2400 = vstv %s2399
        %v2401 = vmul.f32 %v1975, %v2400
        %v2402 = vmul.f32 %v1976, %v2400
        %v2403 = vmul.f32 %v1977, %v2400
        %v2404 = vmul.f32 %v1978, %v2400
        %v2405 = vmul.f32 %v1979, %v2400
        %v2406 = vmul.f32 %v1980, %v2400
        %v2407 = vmul.f32 %v1981, %v2400
        %v2408 = vmul.f32 %v1982, %v2400
        %v2417 = vrot.slane %v2401, 1
        %v2418 = vrot.slane %v2402, 1
        %v2419 = vsel %vm638, %v2417, %v2418
        %v2420 = vrot.slane %v2403, 1
        %v2421 = vsel %vm638, %v2418, %v2420
        %v2422 = vrot.slane %v2404, 1
        %v2423 = vsel %vm638, %v2420, %v2422
        %v2424 = vrot.slane %v2405, 1
        %v2425 = vsel %vm638, %v2422, %v2424
        %v2426 = vrot.slane %v2406, 1
        %v2427 = vsel %vm638, %v2424, %v2426
        %v2428 = vrot.slane %v2407, 1
        %v2429 = vsel %vm638, %v2426, %v2428
        %v2430 = vrot.slane %v2408, 1
        %v2431 = vsel %vm638, %v2428, %v2430
        %v2439 = vadd.f32 %v2260, %v2419
        %v2440 = vadd.f32 %v2261, %v2421
        %v2441 = vadd.f32 %v2262, %v2423
        %v2442 = vadd.f32 %v2263, %v2425
        %v2443 = vadd.f32 %v2264, %v2427
        %v2444 = vadd.f32 %v2265, %v2429
        %v2445 = vadd.f32 %v2266, %v2431
        %s2446 = sld [smem:[#allocation2 + $0x27]]
        %v2447 = vstv %s2446
        %v2448 = vmul.f32 %v1975, %v2447
        %v2449 = vmul.f32 %v1976, %v2447
        %v2450 = vmul.f32 %v1977, %v2447
        %v2451 = vmul.f32 %v1978, %v2447
        %v2452 = vmul.f32 %v1979, %v2447
        %v2453 = vmul.f32 %v1980, %v2447
        %v2454 = vmul.f32 %v1981, %v2447
        %v2455 = vmul.f32 %v1982, %v2447
        %v2464 = vrot.slane %v2448, 1
        %v2465 = vrot.slane %v2449, 1
        %v2466 = vsel %vm638, %v2464, %v2465
        %v2467 = vrot.slane %v2450, 1
        %v2468 = vsel %vm638, %v2465, %v2467
        %v2469 = vrot.slane %v2451, 1
        %v2470 = vsel %vm638, %v2467, %v2469
        %v2471 = vrot.slane %v2452, 1
        %v2472 = vsel %vm638, %v2469, %v2471
        %v2473 = vrot.slane %v2453, 1
        %v2474 = vsel %vm638, %v2471, %v2473
        %v2475 = vrot.slane %v2454, 1
        %v2476 = vsel %vm638, %v2473, %v2475
        %v2477 = vrot.slane %v2455, 1
        %v2478 = vsel %vm638, %v2475, %v2477
        %v2486 = vadd.f32 %v2304, %v2466
        %v2487 = vadd.f32 %v2305, %v2468
        %v2488 = vadd.f32 %v2306, %v2470
        %v2489 = vadd.f32 %v2307, %v2472
        %v2490 = vadd.f32 %v2308, %v2474
        %v2491 = vadd.f32 %v2309, %v2476
        %v2492 = vadd.f32 %v2310, %v2478
        %s2493 = sld [smem:[#allocation2 + $0x42]]
        %v2494 = vstv %s2493
        %v2495 = vmul.f32 %v1975, %v2494
        %v2496 = vmul.f32 %v1976, %v2494
        %v2497 = vmul.f32 %v1977, %v2494
        %v2498 = vmul.f32 %v1978, %v2494
        %v2499 = vmul.f32 %v1979, %v2494
        %v2500 = vmul.f32 %v1980, %v2494
        %v2501 = vmul.f32 %v1981, %v2494
        %v2502 = vmul.f32 %v1982, %v2494
        %v2511 = vrot.slane %v2495, 1
        %v2512 = vrot.slane %v2496, 1
        %v2513 = vsel %vm638, %v2511, %v2512
        %v2514 = vrot.slane %v2497, 1
        %v2515 = vsel %vm638, %v2512, %v2514
        %v2516 = vrot.slane %v2498, 1
        %v2517 = vsel %vm638, %v2514, %v2516
        %v2518 = vrot.slane %v2499, 1
        %v2519 = vsel %vm638, %v2516, %v2518
        %v2520 = vrot.slane %v2500, 1
        %v2521 = vsel %vm638, %v2518, %v2520
        %v2522 = vrot.slane %v2501, 1
        %v2523 = vsel %vm638, %v2520, %v2522
        %v2524 = vrot.slane %v2502, 1
        %v2525 = vsel %vm638, %v2522, %v2524
        %v2533 = vadd.f32 %v2348, %v2513
        %v2534 = vadd.f32 %v2349, %v2515
        %v2535 = vadd.f32 %v2350, %v2517
        %v2536 = vadd.f32 %v2351, %v2519
        %v2537 = vadd.f32 %v2352, %v2521
        %v2538 = vadd.f32 %v2353, %v2523
        %v2539 = vadd.f32 %v2354, %v2525
        %s2540 = sld [smem:[#allocation2 + $0x5d]]
        %v2541 = vstv %s2540
        %v2542 = vmul.f32 %v1975, %v2541
        %v2543 = vmul.f32 %v1976, %v2541
        %v2544 = vmul.f32 %v1977, %v2541
        %v2545 = vmul.f32 %v1978, %v2541
        %v2546 = vmul.f32 %v1979, %v2541
        %v2547 = vmul.f32 %v1980, %v2541
        %v2548 = vmul.f32 %v1981, %v2541
        %v2549 = vmul.f32 %v1982, %v2541
        %v2558 = vrot.slane %v2542, 1
        %v2559 = vrot.slane %v2543, 1
        %v2560 = vsel %vm638, %v2558, %v2559
        %v2561 = vrot.slane %v2544, 1
        %v2562 = vsel %vm638, %v2559, %v2561
        %v2563 = vrot.slane %v2545, 1
        %v2564 = vsel %vm638, %v2561, %v2563
        %v2565 = vrot.slane %v2546, 1
        %v2566 = vsel %vm638, %v2563, %v2565
        %v2567 = vrot.slane %v2547, 1
        %v2568 = vsel %vm638, %v2565, %v2567
        %v2569 = vrot.slane %v2548, 1
        %v2570 = vsel %vm638, %v2567, %v2569
        %v2571 = vrot.slane %v2549, 1
        %v2572 = vsel %vm638, %v2569, %v2571
        %v2580 = vadd.f32 %v2392, %v2560
        %v2581 = vadd.f32 %v2393, %v2562
        %v2582 = vadd.f32 %v2394, %v2564
        %v2583 = vadd.f32 %v2395, %v2566
        %v2584 = vadd.f32 %v2396, %v2568
        %v2585 = vadd.f32 %v2397, %v2570
        %v2586 = vadd.f32 %v2398, %v2572
        %s2587 = sld [smem:[#allocation2 + $0xd]]
        %v2588 = vstv %s2587
        %v2589 = vmul.f32 %v1975, %v2588
        %v2590 = vmul.f32 %v1976, %v2588
        %v2591 = vmul.f32 %v1977, %v2588
        %v2592 = vmul.f32 %v1978, %v2588
        %v2593 = vmul.f32 %v1979, %v2588
        %v2594 = vmul.f32 %v1980, %v2588
        %v2595 = vmul.f32 %v1981, %v2588
        %v2596 = vmul.f32 %v1982, %v2588
        %v2605 = vrot.slane %v2589, 1
        %v2606 = vrot.slane %v2590, 1
        %v2607 = vsel %vm638, %v2605, %v2606
        %v2608 = vrot.slane %v2591, 1
        %v2609 = vsel %vm638, %v2606, %v2608
        %v2610 = vrot.slane %v2592, 1
        %v2611 = vsel %vm638, %v2608, %v2610
        %v2612 = vrot.slane %v2593, 1
        %v2613 = vsel %vm638, %v2610, %v2612
        %v2614 = vrot.slane %v2594, 1
        %v2615 = vsel %vm638, %v2612, %v2614
        %v2616 = vrot.slane %v2595, 1
        %v2617 = vsel %vm638, %v2614, %v2616
        %v2618 = vrot.slane %v2596, 1
        %v2619 = vsel %vm638, %v2616, %v2618
        %2620 = vrot.lane.b32.xlu0 %v2607, 127
        %v2621 = vpop.permute.xlu0 %2620
        %2622 = vrot.lane.b32.xlu0 %v2609, 127
        %v2623 = vpop.permute.xlu0 %2622
        %2624 = vrot.lane.b32.xlu0 %v2611, 127
        %v2625 = vpop.permute.xlu0 %2624
        %2626 = vrot.lane.b32.xlu0 %v2613, 127
        %v2627 = vpop.permute.xlu0 %2626
        %2628 = vrot.lane.b32.xlu0 %v2615, 127
        %v2629 = vpop.permute.xlu0 %2628
        %2630 = vrot.lane.b32.xlu0 %v2617, 127
        %v2631 = vpop.permute.xlu0 %2630
        %2632 = vrot.lane.b32.xlu0 %v2619, 127
        %v2633 = vpop.permute.xlu0 %2632
        %v2641 = vadd.f32 %v2439, %v2621
        %v2642 = vadd.f32 %v2440, %v2623
        %v2643 = vadd.f32 %v2441, %v2625
        %v2644 = vadd.f32 %v2442, %v2627
        %v2645 = vadd.f32 %v2443, %v2629
        %v2646 = vadd.f32 %v2444, %v2631
        %v2647 = vadd.f32 %v2445, %v2633
        %s2648 = sld [smem:[#allocation2 + $0x28]]
        %v2649 = vstv %s2648
        %v2650 = vmul.f32 %v1975, %v2649
        %v2651 = vmul.f32 %v1976, %v2649
        %v2652 = vmul.f32 %v1977, %v2649
        %v2653 = vmul.f32 %v1978, %v2649
        %v2654 = vmul.f32 %v1979, %v2649
        %v2655 = vmul.f32 %v1980, %v2649
        %v2656 = vmul.f32 %v1981, %v2649
        %v2657 = vmul.f32 %v1982, %v2649
        %v2666 = vrot.slane %v2650, 1
        %v2667 = vrot.slane %v2651, 1
        %v2668 = vsel %vm638, %v2666, %v2667
        %v2669 = vrot.slane %v2652, 1
        %v2670 = vsel %vm638, %v2667, %v2669
        %v2671 = vrot.slane %v2653, 1
        %v2672 = vsel %vm638, %v2669, %v2671
        %v2673 = vrot.slane %v2654, 1
        %v2674 = vsel %vm638, %v2671, %v2673
        %v2675 = vrot.slane %v2655, 1
        %v2676 = vsel %vm638, %v2673, %v2675
        %v2677 = vrot.slane %v2656, 1
        %v2678 = vsel %vm638, %v2675, %v2677
        %v2679 = vrot.slane %v2657, 1
        %v2680 = vsel %vm638, %v2677, %v2679
        %2681 = vrot.lane.b32.xlu0 %v2668, 127
        %v2682 = vpop.permute.xlu0 %2681
        %2683 = vrot.lane.b32.xlu0 %v2670, 127
        %v2684 = vpop.permute.xlu0 %2683
        %2685 = vrot.lane.b32.xlu0 %v2672, 127
        %v2686 = vpop.permute.xlu0 %2685
        %2687 = vrot.lane.b32.xlu0 %v2674, 127
        %v2688 = vpop.permute.xlu0 %2687
        %2689 = vrot.lane.b32.xlu0 %v2676, 127
        %v2690 = vpop.permute.xlu0 %2689
        %2691 = vrot.lane.b32.xlu0 %v2678, 127
        %v2692 = vpop.permute.xlu0 %2691
        %2693 = vrot.lane.b32.xlu0 %v2680, 127
        %v2694 = vpop.permute.xlu0 %2693
        %v2702 = vadd.f32 %v2486, %v2682
        %v2703 = vadd.f32 %v2487, %v2684
        %v2704 = vadd.f32 %v2488, %v2686
        %v2705 = vadd.f32 %v2489, %v2688
        %v2706 = vadd.f32 %v2490, %v2690
        %v2707 = vadd.f32 %v2491, %v2692
        %v2708 = vadd.f32 %v2492, %v2694
        %s2709 = sld [smem:[#allocation2 + $0x43]]
        %v2710 = vstv %s2709
        %v2711 = vmul.f32 %v1975, %v2710
        %v2712 = vmul.f32 %v1976, %v2710
        %v2713 = vmul.f32 %v1977, %v2710
        %v2714 = vmul.f32 %v1978, %v2710
        %v2715 = vmul.f32 %v1979, %v2710
        %v2716 = vmul.f32 %v1980, %v2710
        %v2717 = vmul.f32 %v1981, %v2710
        %v2718 = vmul.f32 %v1982, %v2710
        %v2727 = vrot.slane %v2711, 1
        %v2728 = vrot.slane %v2712, 1
        %v2729 = vsel %vm638, %v2727, %v2728
        %v2730 = vrot.slane %v2713, 1
        %v2731 = vsel %vm638, %v2728, %v2730
        %v2732 = vrot.slane %v2714, 1
        %v2733 = vsel %vm638, %v2730, %v2732
        %v2734 = vrot.slane %v2715, 1
        %v2735 = vsel %vm638, %v2732, %v2734
        %v2736 = vrot.slane %v2716, 1
        %v2737 = vsel %vm638, %v2734, %v2736
        %v2738 = vrot.slane %v2717, 1
        %v2739 = vsel %vm638, %v2736, %v2738
        %v2740 = vrot.slane %v2718, 1
        %v2741 = vsel %vm638, %v2738, %v2740
        %2742 = vrot.lane.b32.xlu0 %v2729, 127
        %v2743 = vpop.permute.xlu0 %2742
        %2744 = vrot.lane.b32.xlu0 %v2731, 127
        %v2745 = vpop.permute.xlu0 %2744
        %2746 = vrot.lane.b32.xlu0 %v2733, 127
        %v2747 = vpop.permute.xlu0 %2746
        %2748 = vrot.lane.b32.xlu0 %v2735, 127
        %v2749 = vpop.permute.xlu0 %2748
        %2750 = vrot.lane.b32.xlu0 %v2737, 127
        %v2751 = vpop.permute.xlu0 %2750
        %2752 = vrot.lane.b32.xlu0 %v2739, 127
        %v2753 = vpop.permute.xlu0 %2752
        %2754 = vrot.lane.b32.xlu0 %v2741, 127
        %v2755 = vpop.permute.xlu0 %2754
        %v2763 = vadd.f32 %v2533, %v2743
        %v2764 = vadd.f32 %v2534, %v2745
        %v2765 = vadd.f32 %v2535, %v2747
        %v2766 = vadd.f32 %v2536, %v2749
        %v2767 = vadd.f32 %v2537, %v2751
        %v2768 = vadd.f32 %v2538, %v2753
        %v2769 = vadd.f32 %v2539, %v2755
        %s2770 = sld [smem:[#allocation2 + $0x5e]]
        %v2771 = vstv %s2770
        %v2772 = vmul.f32 %v1975, %v2771
        %v2773 = vmul.f32 %v1976, %v2771
        %v2774 = vmul.f32 %v1977, %v2771
        %v2775 = vmul.f32 %v1978, %v2771
        %v2776 = vmul.f32 %v1979, %v2771
        %v2777 = vmul.f32 %v1980, %v2771
        %v2778 = vmul.f32 %v1981, %v2771
        %v2779 = vmul.f32 %v1982, %v2771
        %v2788 = vrot.slane %v2772, 1
        %v2789 = vrot.slane %v2773, 1
        %v2790 = vsel %vm638, %v2788, %v2789
        %v2791 = vrot.slane %v2774, 1
        %v2792 = vsel %vm638, %v2789, %v2791
        %v2793 = vrot.slane %v2775, 1
        %v2794 = vsel %vm638, %v2791, %v2793
        %v2795 = vrot.slane %v2776, 1
        %v2796 = vsel %vm638, %v2793, %v2795
        %v2797 = vrot.slane %v2777, 1
        %v2798 = vsel %vm638, %v2795, %v2797
        %v2799 = vrot.slane %v2778, 1
        %v2800 = vsel %vm638, %v2797, %v2799
        %v2801 = vrot.slane %v2779, 1
        %v2802 = vsel %vm638, %v2799, %v2801
        %2803 = vrot.lane.b32.xlu0 %v2790, 127
        %v2804 = vpop.permute.xlu0 %2803
        %2805 = vrot.lane.b32.xlu0 %v2792, 127
        %v2806 = vpop.permute.xlu0 %2805
        %2807 = vrot.lane.b32.xlu0 %v2794, 127
        %v2808 = vpop.permute.xlu0 %2807
        %2809 = vrot.lane.b32.xlu0 %v2796, 127
        %v2810 = vpop.permute.xlu0 %2809
        %2811 = vrot.lane.b32.xlu0 %v2798, 127
        %v2812 = vpop.permute.xlu0 %2811
        %2813 = vrot.lane.b32.xlu0 %v2800, 127
        %v2814 = vpop.permute.xlu0 %2813
        %2815 = vrot.lane.b32.xlu0 %v2802, 127
        %v2816 = vpop.permute.xlu0 %2815
        %v2824 = vadd.f32 %v2580, %v2804
        %v2825 = vadd.f32 %v2581, %v2806
        %v2826 = vadd.f32 %v2582, %v2808
        %v2827 = vadd.f32 %v2583, %v2810
        %v2828 = vadd.f32 %v2584, %v2812
        %v2829 = vadd.f32 %v2585, %v2814
        %v2830 = vadd.f32 %v2586, %v2816
        %s2831 = sld [smem:[#allocation2 + $0xe]]
        %v2832 = vstv %s2831
        %v2833 = vmul.f32 %v1975, %v2832
        %v2834 = vmul.f32 %v1976, %v2832
        %v2835 = vmul.f32 %v1977, %v2832
        %v2836 = vmul.f32 %v1978, %v2832
        %v2837 = vmul.f32 %v1979, %v2832
        %v2838 = vmul.f32 %v1980, %v2832
        %v2839 = vmul.f32 %v1981, %v2832
        %v2840 = vmul.f32 %v1982, %v2832
        %v2849 = vrot.slane %v2833, 1
        %v2850 = vrot.slane %v2834, 1
        %v2851 = vsel %vm638, %v2849, %v2850
        %v2852 = vrot.slane %v2835, 1
        %v2853 = vsel %vm638, %v2850, %v2852
        %v2854 = vrot.slane %v2836, 1
        %v2855 = vsel %vm638, %v2852, %v2854
        %v2856 = vrot.slane %v2837, 1
        %v2857 = vsel %vm638, %v2854, %v2856
        %v2858 = vrot.slane %v2838, 1
        %v2859 = vsel %vm638, %v2856, %v2858
        %v2860 = vrot.slane %v2839, 1
        %v2861 = vsel %vm638, %v2858, %v2860
        %v2862 = vrot.slane %v2840, 1
        %v2863 = vsel %vm638, %v2860, %v2862
        %2864 = vrot.lane.b32.xlu0 %v2851, 126
        %v2865 = vpop.permute.xlu0 %2864
        %2866 = vrot.lane.b32.xlu0 %v2853, 126
        %v2867 = vpop.permute.xlu0 %2866
        %2868 = vrot.lane.b32.xlu0 %v2855, 126
        %v2869 = vpop.permute.xlu0 %2868
        %2870 = vrot.lane.b32.xlu0 %v2857, 126
        %v2871 = vpop.permute.xlu0 %2870
        %2872 = vrot.lane.b32.xlu0 %v2859, 126
        %v2873 = vpop.permute.xlu0 %2872
        %2874 = vrot.lane.b32.xlu0 %v2861, 126
        %v2875 = vpop.permute.xlu0 %2874
        %2876 = vrot.lane.b32.xlu0 %v2863, 126
        %v2877 = vpop.permute.xlu0 %2876
        %v2885 = vadd.f32 %v2641, %v2865
        %v2886 = vadd.f32 %v2642, %v2867
        %v2887 = vadd.f32 %v2643, %v2869
        %v2888 = vadd.f32 %v2644, %v2871
        %v2889 = vadd.f32 %v2645, %v2873
        %v2890 = vadd.f32 %v2646, %v2875
        %v2891 = vadd.f32 %v2647, %v2877
        %s2892 = sld [smem:[#allocation2 + $0x29]]
        %v2893 = vstv %s2892
        %v2894 = vmul.f32 %v1975, %v2893
        %v2895 = vmul.f32 %v1976, %v2893
        %v2896 = vmul.f32 %v1977, %v2893
        %v2897 = vmul.f32 %v1978, %v2893
        %v2898 = vmul.f32 %v1979, %v2893
        %v2899 = vmul.f32 %v1980, %v2893
        %v2900 = vmul.f32 %v1981, %v2893
        %v2901 = vmul.f32 %v1982, %v2893
        %v2910 = vrot.slane %v2894, 1
        %v2911 = vrot.slane %v2895, 1
        %v2912 = vsel %vm638, %v2910, %v2911
        %v2913 = vrot.slane %v2896, 1
        %v2914 = vsel %vm638, %v2911, %v2913
        %v2915 = vrot.slane %v2897, 1
        %v2916 = vsel %vm638, %v2913, %v2915
        %v2917 = vrot.slane %v2898, 1
        %v2918 = vsel %vm638, %v2915, %v2917
        %v2919 = vrot.slane %v2899, 1
        %v2920 = vsel %vm638, %v2917, %v2919
        %v2921 = vrot.slane %v2900, 1
        %v2922 = vsel %vm638, %v2919, %v2921
        %v2923 = vrot.slane %v2901, 1
        %v2924 = vsel %vm638, %v2921, %v2923
        %2925 = vrot.lane.b32.xlu0 %v2912, 126
        %v2926 = vpop.permute.xlu0 %2925
        %2927 = vrot.lane.b32.xlu0 %v2914, 126
        %v2928 = vpop.permute.xlu0 %2927
        %2929 = vrot.lane.b32.xlu0 %v2916, 126
        %v2930 = vpop.permute.xlu0 %2929
        %2931 = vrot.lane.b32.xlu0 %v2918, 126
        %v2932 = vpop.permute.xlu0 %2931
        %2933 = vrot.lane.b32.xlu0 %v2920, 126
        %v2934 = vpop.permute.xlu0 %2933
        %2935 = vrot.lane.b32.xlu0 %v2922, 126
        %v2936 = vpop.permute.xlu0 %2935
        %2937 = vrot.lane.b32.xlu0 %v2924, 126
        %v2938 = vpop.permute.xlu0 %2937
        %v2946 = vadd.f32 %v2702, %v2926
        %v2947 = vadd.f32 %v2703, %v2928
        %v2948 = vadd.f32 %v2704, %v2930
        %v2949 = vadd.f32 %v2705, %v2932
        %v2950 = vadd.f32 %v2706, %v2934
        %v2951 = vadd.f32 %v2707, %v2936
        %v2952 = vadd.f32 %v2708, %v2938
        %s2953 = sld [smem:[#allocation2 + $0x44]]
        %v2954 = vstv %s2953
        %v2955 = vmul.f32 %v1975, %v2954
        %v2956 = vmul.f32 %v1976, %v2954
        %v2957 = vmul.f32 %v1977, %v2954
        %v2958 = vmul.f32 %v1978, %v2954
        %v2959 = vmul.f32 %v1979, %v2954
        %v2960 = vmul.f32 %v1980, %v2954
        %v2961 = vmul.f32 %v1981, %v2954
        %v2962 = vmul.f32 %v1982, %v2954
        %v2971 = vrot.slane %v2955, 1
        %v2972 = vrot.slane %v2956, 1
        %v2973 = vsel %vm638, %v2971, %v2972
        %v2974 = vrot.slane %v2957, 1
        %v2975 = vsel %vm638, %v2972, %v2974
        %v2976 = vrot.slane %v2958, 1
        %v2977 = vsel %vm638, %v2974, %v2976
        %v2978 = vrot.slane %v2959, 1
        %v2979 = vsel %vm638, %v2976, %v2978
        %v2980 = vrot.slane %v2960, 1
        %v2981 = vsel %vm638, %v2978, %v2980
        %v2982 = vrot.slane %v2961, 1
        %v2983 = vsel %vm638, %v2980, %v2982
        %v2984 = vrot.slane %v2962, 1
        %v2985 = vsel %vm638, %v2982, %v2984
        %2986 = vrot.lane.b32.xlu0 %v2973, 126
        %v2987 = vpop.permute.xlu0 %2986
        %2988 = vrot.lane.b32.xlu0 %v2975, 126
        %v2989 = vpop.permute.xlu0 %2988
        %2990 = vrot.lane.b32.xlu0 %v2977, 126
        %v2991 = vpop.permute.xlu0 %2990
        %2992 = vrot.lane.b32.xlu0 %v2979, 126
        %v2993 = vpop.permute.xlu0 %2992
        %2994 = vrot.lane.b32.xlu0 %v2981, 126
        %v2995 = vpop.permute.xlu0 %2994
        %2996 = vrot.lane.b32.xlu0 %v2983, 126
        %v2997 = vpop.permute.xlu0 %2996
        %2998 = vrot.lane.b32.xlu0 %v2985, 126
        %v2999 = vpop.permute.xlu0 %2998
        %v3007 = vadd.f32 %v2763, %v2987
        %v3008 = vadd.f32 %v2764, %v2989
        %v3009 = vadd.f32 %v2765, %v2991
        %v3010 = vadd.f32 %v2766, %v2993
        %v3011 = vadd.f32 %v2767, %v2995
        %v3012 = vadd.f32 %v2768, %v2997
        %v3013 = vadd.f32 %v2769, %v2999
        %s3014 = sld [smem:[#allocation2 + $0x5f]]
        %v3015 = vstv %s3014
        %v3016 = vmul.f32 %v1975, %v3015
        %v3017 = vmul.f32 %v1976, %v3015
        %v3018 = vmul.f32 %v1977, %v3015
        %v3019 = vmul.f32 %v1978, %v3015
        %v3020 = vmul.f32 %v1979, %v3015
        %v3021 = vmul.f32 %v1980, %v3015
        %v3022 = vmul.f32 %v1981, %v3015
        %v3023 = vmul.f32 %v1982, %v3015
        %v3032 = vrot.slane %v3016, 1
        %v3033 = vrot.slane %v3017, 1
        %v3034 = vsel %vm638, %v3032, %v3033
        %v3035 = vrot.slane %v3018, 1
        %v3036 = vsel %vm638, %v3033, %v3035
        %v3037 = vrot.slane %v3019, 1
        %v3038 = vsel %vm638, %v3035, %v3037
        %v3039 = vrot.slane %v3020, 1
        %v3040 = vsel %vm638, %v3037, %v3039
        %v3041 = vrot.slane %v3021, 1
        %v3042 = vsel %vm638, %v3039, %v3041
        %v3043 = vrot.slane %v3022, 1
        %v3044 = vsel %vm638, %v3041, %v3043
        %v3045 = vrot.slane %v3023, 1
        %v3046 = vsel %vm638, %v3043, %v3045
        %3047 = vrot.lane.b32.xlu0 %v3034, 126
        %v3048 = vpop.permute.xlu0 %3047
        %3049 = vrot.lane.b32.xlu0 %v3036, 126
        %v3050 = vpop.permute.xlu0 %3049
        %3051 = vrot.lane.b32.xlu0 %v3038, 126
        %v3052 = vpop.permute.xlu0 %3051
        %3053 = vrot.lane.b32.xlu0 %v3040, 126
        %v3054 = vpop.permute.xlu0 %3053
        %3055 = vrot.lane.b32.xlu0 %v3042, 126
        %v3056 = vpop.permute.xlu0 %3055
        %3057 = vrot.lane.b32.xlu0 %v3044, 126
        %v3058 = vpop.permute.xlu0 %3057
        %3059 = vrot.lane.b32.xlu0 %v3046, 126
        %v3060 = vpop.permute.xlu0 %3059
        %v3068 = vadd.f32 %v2824, %v3048
        %v3069 = vadd.f32 %v2825, %v3050
        %v3070 = vadd.f32 %v2826, %v3052
        %v3071 = vadd.f32 %v2827, %v3054
        %v3072 = vadd.f32 %v2828, %v3056
        %v3073 = vadd.f32 %v2829, %v3058
        %v3074 = vadd.f32 %v2830, %v3060
        %s3075 = sld [smem:[#allocation2 + $0xf]]
        %v3076 = vstv %s3075
        %v3077 = vmul.f32 %v1975, %v3076
        %v3078 = vmul.f32 %v1976, %v3076
        %v3079 = vmul.f32 %v1977, %v3076
        %v3080 = vmul.f32 %v1978, %v3076
        %v3081 = vmul.f32 %v1979, %v3076
        %v3082 = vmul.f32 %v1980, %v3076
        %v3083 = vmul.f32 %v1981, %v3076
        %v3084 = vmul.f32 %v1982, %v3076
        %v3093 = vrot.slane %v3077, 2
        %v3094 = vrot.slane %v3078, 2
        %v3095 = vsel %vm1315, %v3093, %v3094
        %v3096 = vrot.slane %v3079, 2
        %v3097 = vsel %vm1315, %v3094, %v3096
        %v3098 = vrot.slane %v3080, 2
        %v3099 = vsel %vm1315, %v3096, %v3098
        %v3100 = vrot.slane %v3081, 2
        %v3101 = vsel %vm1315, %v3098, %v3100
        %v3102 = vrot.slane %v3082, 2
        %v3103 = vsel %vm1315, %v3100, %v3102
        %v3104 = vrot.slane %v3083, 2
        %v3105 = vsel %vm1315, %v3102, %v3104
        %v3106 = vrot.slane %v3084, 2
        %v3107 = vsel %vm1315, %v3104, %v3106
        %v3115 = vadd.f32 %v2885, %v3095
        %v3116 = vadd.f32 %v2886, %v3097
        %v3117 = vadd.f32 %v2887, %v3099
        %v3118 = vadd.f32 %v2888, %v3101
        %v3119 = vadd.f32 %v2889, %v3103
        %v3120 = vadd.f32 %v2890, %v3105
        %v3121 = vadd.f32 %v2891, %v3107
        %s3122 = sld [smem:[#allocation2 + $0x2a]]
        %v3123 = vstv %s3122
        %v3124 = vmul.f32 %v1975, %v3123
        %v3125 = vmul.f32 %v1976, %v3123
        %v3126 = vmul.f32 %v1977, %v3123
        %v3127 = vmul.f32 %v1978, %v3123
        %v3128 = vmul.f32 %v1979, %v3123
        %v3129 = vmul.f32 %v1980, %v3123
        %v3130 = vmul.f32 %v1981, %v3123
        %v3131 = vmul.f32 %v1982, %v3123
        %v3140 = vrot.slane %v3124, 2
        %v3141 = vrot.slane %v3125, 2
        %v3142 = vsel %vm1315, %v3140, %v3141
        %v3143 = vrot.slane %v3126, 2
        %v3144 = vsel %vm1315, %v3141, %v3143
        %v3145 = vrot.slane %v3127, 2
        %v3146 = vsel %vm1315, %v3143, %v3145
        %v3147 = vrot.slane %v3128, 2
        %v3148 = vsel %vm1315, %v3145, %v3147
        %v3149 = vrot.slane %v3129, 2
        %v3150 = vsel %vm1315, %v3147, %v3149
        %v3151 = vrot.slane %v3130, 2
        %v3152 = vsel %vm1315, %v3149, %v3151
        %v3153 = vrot.slane %v3131, 2
        %v3154 = vsel %vm1315, %v3151, %v3153
        %v3162 = vadd.f32 %v2946, %v3142
        %v3163 = vadd.f32 %v2947, %v3144
        %v3164 = vadd.f32 %v2948, %v3146
        %v3165 = vadd.f32 %v2949, %v3148
        %v3166 = vadd.f32 %v2950, %v3150
        %v3167 = vadd.f32 %v2951, %v3152
        %v3168 = vadd.f32 %v2952, %v3154
        %s3169 = sld [smem:[#allocation2 + $0x45]]
        %v3170 = vstv %s3169
        %v3171 = vmul.f32 %v1975, %v3170
        %v3172 = vmul.f32 %v1976, %v3170
        %v3173 = vmul.f32 %v1977, %v3170
        %v3174 = vmul.f32 %v1978, %v3170
        %v3175 = vmul.f32 %v1979, %v3170
        %v3176 = vmul.f32 %v1980, %v3170
        %v3177 = vmul.f32 %v1981, %v3170
        %v3178 = vmul.f32 %v1982, %v3170
        %v3187 = vrot.slane %v3171, 2
        %v3188 = vrot.slane %v3172, 2
        %v3189 = vsel %vm1315, %v3187, %v3188
        %v3190 = vrot.slane %v3173, 2
        %v3191 = vsel %vm1315, %v3188, %v3190
        %v3192 = vrot.slane %v3174, 2
        %v3193 = vsel %vm1315, %v3190, %v3192
        %v3194 = vrot.slane %v3175, 2
        %v3195 = vsel %vm1315, %v3192, %v3194
        %v3196 = vrot.slane %v3176, 2
        %v3197 = vsel %vm1315, %v3194, %v3196
        %v3198 = vrot.slane %v3177, 2
        %v3199 = vsel %vm1315, %v3196, %v3198
        %v3200 = vrot.slane %v3178, 2
        %v3201 = vsel %vm1315, %v3198, %v3200
        %v3209 = vadd.f32 %v3007, %v3189
        %v3210 = vadd.f32 %v3008, %v3191
        %v3211 = vadd.f32 %v3009, %v3193
        %v3212 = vadd.f32 %v3010, %v3195
        %v3213 = vadd.f32 %v3011, %v3197
        %v3214 = vadd.f32 %v3012, %v3199
        %v3215 = vadd.f32 %v3013, %v3201
        %s3216 = sld [smem:[#allocation2 + $0x60]]
        %v3217 = vstv %s3216
        %v3218 = vmul.f32 %v1975, %v3217
        %v3219 = vmul.f32 %v1976, %v3217
        %v3220 = vmul.f32 %v1977, %v3217
        %v3221 = vmul.f32 %v1978, %v3217
        %v3222 = vmul.f32 %v1979, %v3217
        %v3223 = vmul.f32 %v1980, %v3217
        %v3224 = vmul.f32 %v1981, %v3217
        %v3225 = vmul.f32 %v1982, %v3217
        %v3234 = vrot.slane %v3218, 2
        %v3235 = vrot.slane %v3219, 2
        %v3236 = vsel %vm1315, %v3234, %v3235
        %v3237 = vrot.slane %v3220, 2
        %v3238 = vsel %vm1315, %v3235, %v3237
        %v3239 = vrot.slane %v3221, 2
        %v3240 = vsel %vm1315, %v3237, %v3239
        %v3241 = vrot.slane %v3222, 2
        %v3242 = vsel %vm1315, %v3239, %v3241
        %v3243 = vrot.slane %v3223, 2
        %v3244 = vsel %vm1315, %v3241, %v3243
        %v3245 = vrot.slane %v3224, 2
        %v3246 = vsel %vm1315, %v3243, %v3245
        %v3247 = vrot.slane %v3225, 2
        %v3248 = vsel %vm1315, %v3245, %v3247
        %v3256 = vadd.f32 %v3068, %v3236
        %v3257 = vadd.f32 %v3069, %v3238
        %v3258 = vadd.f32 %v3070, %v3240
        %v3259 = vadd.f32 %v3071, %v3242
        %v3260 = vadd.f32 %v3072, %v3244
        %v3261 = vadd.f32 %v3073, %v3246
        %v3262 = vadd.f32 %v3074, %v3248
        %s3263 = sld [smem:[#allocation2 + $0x10]]
        %v3264 = vstv %s3263
        %v3265 = vmul.f32 %v1975, %v3264
        %v3266 = vmul.f32 %v1976, %v3264
        %v3267 = vmul.f32 %v1977, %v3264
        %v3268 = vmul.f32 %v1978, %v3264
        %v3269 = vmul.f32 %v1979, %v3264
        %v3270 = vmul.f32 %v1980, %v3264
        %v3271 = vmul.f32 %v1981, %v3264
        %v3272 = vmul.f32 %v1982, %v3264
        %v3281 = vrot.slane %v3265, 2
        %v3282 = vrot.slane %v3266, 2
        %v3283 = vsel %vm1315, %v3281, %v3282
        %v3284 = vrot.slane %v3267, 2
        %v3285 = vsel %vm1315, %v3282, %v3284
        %v3286 = vrot.slane %v3268, 2
        %v3287 = vsel %vm1315, %v3284, %v3286
        %v3288 = vrot.slane %v3269, 2
        %v3289 = vsel %vm1315, %v3286, %v3288
        %v3290 = vrot.slane %v3270, 2
        %v3291 = vsel %vm1315, %v3288, %v3290
        %v3292 = vrot.slane %v3271, 2
        %v3293 = vsel %vm1315, %v3290, %v3292
        %v3294 = vrot.slane %v3272, 2
        %v3295 = vsel %vm1315, %v3292, %v3294
        %3296 = vrot.lane.b32.xlu0 %v3283, 127
        %v3297 = vpop.permute.xlu0 %3296
        %3298 = vrot.lane.b32.xlu0 %v3285, 127
        %v3299 = vpop.permute.xlu0 %3298
        %3300 = vrot.lane.b32.xlu0 %v3287, 127
        %v3301 = vpop.permute.xlu0 %3300
        %3302 = vrot.lane.b32.xlu0 %v3289, 127
        %v3303 = vpop.permute.xlu0 %3302
        %3304 = vrot.lane.b32.xlu0 %v3291, 127
        %v3305 = vpop.permute.xlu0 %3304
        %3306 = vrot.lane.b32.xlu0 %v3293, 127
        %v3307 = vpop.permute.xlu0 %3306
        %3308 = vrot.lane.b32.xlu0 %v3295, 127
        %v3309 = vpop.permute.xlu0 %3308
        %v3317 = vadd.f32 %v3115, %v3297
        %v3318 = vadd.f32 %v3116, %v3299
        %v3319 = vadd.f32 %v3117, %v3301
        %v3320 = vadd.f32 %v3118, %v3303
        %v3321 = vadd.f32 %v3119, %v3305
        %v3322 = vadd.f32 %v3120, %v3307
        %v3323 = vadd.f32 %v3121, %v3309
        %s3324 = sld [smem:[#allocation2 + $0x2b]]
        %v3325 = vstv %s3324
        %v3326 = vmul.f32 %v1975, %v3325
        %v3327 = vmul.f32 %v1976, %v3325
        %v3328 = vmul.f32 %v1977, %v3325
        %v3329 = vmul.f32 %v1978, %v3325
        %v3330 = vmul.f32 %v1979, %v3325
        %v3331 = vmul.f32 %v1980, %v3325
        %v3332 = vmul.f32 %v1981, %v3325
        %v3333 = vmul.f32 %v1982, %v3325
        %v3342 = vrot.slane %v3326, 2
        %v3343 = vrot.slane %v3327, 2
        %v3344 = vsel %vm1315, %v3342, %v3343
        %v3345 = vrot.slane %v3328, 2
        %v3346 = vsel %vm1315, %v3343, %v3345
        %v3347 = vrot.slane %v3329, 2
        %v3348 = vsel %vm1315, %v3345, %v3347
        %v3349 = vrot.slane %v3330, 2
        %v3350 = vsel %vm1315, %v3347, %v3349
        %v3351 = vrot.slane %v3331, 2
        %v3352 = vsel %vm1315, %v3349, %v3351
        %v3353 = vrot.slane %v3332, 2
        %v3354 = vsel %vm1315, %v3351, %v3353
        %v3355 = vrot.slane %v3333, 2
        %v3356 = vsel %vm1315, %v3353, %v3355
        %3357 = vrot.lane.b32.xlu0 %v3344, 127
        %v3358 = vpop.permute.xlu0 %3357
        %3359 = vrot.lane.b32.xlu0 %v3346, 127
        %v3360 = vpop.permute.xlu0 %3359
        %3361 = vrot.lane.b32.xlu0 %v3348, 127
        %v3362 = vpop.permute.xlu0 %3361
        %3363 = vrot.lane.b32.xlu0 %v3350, 127
        %v3364 = vpop.permute.xlu0 %3363
        %3365 = vrot.lane.b32.xlu0 %v3352, 127
        %v3366 = vpop.permute.xlu0 %3365
        %3367 = vrot.lane.b32.xlu0 %v3354, 127
        %v3368 = vpop.permute.xlu0 %3367
        %3369 = vrot.lane.b32.xlu0 %v3356, 127
        %v3370 = vpop.permute.xlu0 %3369
        %v3378 = vadd.f32 %v3162, %v3358
        %v3379 = vadd.f32 %v3163, %v3360
        %v3380 = vadd.f32 %v3164, %v3362
        %v3381 = vadd.f32 %v3165, %v3364
        %v3382 = vadd.f32 %v3166, %v3366
        %v3383 = vadd.f32 %v3167, %v3368
        %v3384 = vadd.f32 %v3168, %v3370
        %s3385 = sld [smem:[#allocation2 + $0x46]]
        %v3386 = vstv %s3385
        %v3387 = vmul.f32 %v1975, %v3386
        %v3388 = vmul.f32 %v1976, %v3386
        %v3389 = vmul.f32 %v1977, %v3386
        %v3390 = vmul.f32 %v1978, %v3386
        %v3391 = vmul.f32 %v1979, %v3386
        %v3392 = vmul.f32 %v1980, %v3386
        %v3393 = vmul.f32 %v1981, %v3386
        %v3394 = vmul.f32 %v1982, %v3386
        %v3403 = vrot.slane %v3387, 2
        %v3404 = vrot.slane %v3388, 2
        %v3405 = vsel %vm1315, %v3403, %v3404
        %v3406 = vrot.slane %v3389, 2
        %v3407 = vsel %vm1315, %v3404, %v3406
        %v3408 = vrot.slane %v3390, 2
        %v3409 = vsel %vm1315, %v3406, %v3408
        %v3410 = vrot.slane %v3391, 2
        %v3411 = vsel %vm1315, %v3408, %v3410
        %v3412 = vrot.slane %v3392, 2
        %v3413 = vsel %vm1315, %v3410, %v3412
        %v3414 = vrot.slane %v3393, 2
        %v3415 = vsel %vm1315, %v3412, %v3414
        %v3416 = vrot.slane %v3394, 2
        %v3417 = vsel %vm1315, %v3414, %v3416
        %3418 = vrot.lane.b32.xlu0 %v3405, 127
        %v3419 = vpop.permute.xlu0 %3418
        %3420 = vrot.lane.b32.xlu0 %v3407, 127
        %v3421 = vpop.permute.xlu0 %3420
        %3422 = vrot.lane.b32.xlu0 %v3409, 127
        %v3423 = vpop.permute.xlu0 %3422
        %3424 = vrot.lane.b32.xlu0 %v3411, 127
        %v3425 = vpop.permute.xlu0 %3424
        %3426 = vrot.lane.b32.xlu0 %v3413, 127
        %v3427 = vpop.permute.xlu0 %3426
        %3428 = vrot.lane.b32.xlu0 %v3415, 127
        %v3429 = vpop.permute.xlu0 %3428
        %3430 = vrot.lane.b32.xlu0 %v3417, 127
        %v3431 = vpop.permute.xlu0 %3430
        %v3439 = vadd.f32 %v3209, %v3419
        %v3440 = vadd.f32 %v3210, %v3421
        %v3441 = vadd.f32 %v3211, %v3423
        %v3442 = vadd.f32 %v3212, %v3425
        %v3443 = vadd.f32 %v3213, %v3427
        %v3444 = vadd.f32 %v3214, %v3429
        %v3445 = vadd.f32 %v3215, %v3431
        %s3446 = sld [smem:[#allocation2 + $0x61]]
        %v3447 = vstv %s3446
        %v3448 = vmul.f32 %v1975, %v3447
        %v3449 = vmul.f32 %v1976, %v3447
        %v3450 = vmul.f32 %v1977, %v3447
        %v3451 = vmul.f32 %v1978, %v3447
        %v3452 = vmul.f32 %v1979, %v3447
        %v3453 = vmul.f32 %v1980, %v3447
        %v3454 = vmul.f32 %v1981, %v3447
        %v3455 = vmul.f32 %v1982, %v3447
        %v3464 = vrot.slane %v3448, 2
        %v3465 = vrot.slane %v3449, 2
        %v3466 = vsel %vm1315, %v3464, %v3465
        %v3467 = vrot.slane %v3450, 2
        %v3468 = vsel %vm1315, %v3465, %v3467
        %v3469 = vrot.slane %v3451, 2
        %v3470 = vsel %vm1315, %v3467, %v3469
        %v3471 = vrot.slane %v3452, 2
        %v3472 = vsel %vm1315, %v3469, %v3471
        %v3473 = vrot.slane %v3453, 2
        %v3474 = vsel %vm1315, %v3471, %v3473
        %v3475 = vrot.slane %v3454, 2
        %v3476 = vsel %vm1315, %v3473, %v3475
        %v3477 = vrot.slane %v3455, 2
        %v3478 = vsel %vm1315, %v3475, %v3477
        %3479 = vrot.lane.b32.xlu0 %v3466, 127
        %v3480 = vpop.permute.xlu0 %3479
        %3481 = vrot.lane.b32.xlu0 %v3468, 127
        %v3482 = vpop.permute.xlu0 %3481
        %3483 = vrot.lane.b32.xlu0 %v3470, 127
        %v3484 = vpop.permute.xlu0 %3483
        %3485 = vrot.lane.b32.xlu0 %v3472, 127
        %v3486 = vpop.permute.xlu0 %3485
        %3487 = vrot.lane.b32.xlu0 %v3474, 127
        %v3488 = vpop.permute.xlu0 %3487
        %3489 = vrot.lane.b32.xlu0 %v3476, 127
        %v3490 = vpop.permute.xlu0 %3489
        %3491 = vrot.lane.b32.xlu0 %v3478, 127
        %v3492 = vpop.permute.xlu0 %3491
        %v3500 = vadd.f32 %v3256, %v3480
        %v3501 = vadd.f32 %v3257, %v3482
        %v3502 = vadd.f32 %v3258, %v3484
        %v3503 = vadd.f32 %v3259, %v3486
        %v3504 = vadd.f32 %v3260, %v3488
        %v3505 = vadd.f32 %v3261, %v3490
        %v3506 = vadd.f32 %v3262, %v3492
        %s3507 = sld [smem:[#allocation2 + $0x11]]
        %v3508 = vstv %s3507
        %v3509 = vmul.f32 %v1975, %v3508
        %v3510 = vmul.f32 %v1976, %v3508
        %v3511 = vmul.f32 %v1977, %v3508
        %v3512 = vmul.f32 %v1978, %v3508
        %v3513 = vmul.f32 %v1979, %v3508
        %v3514 = vmul.f32 %v1980, %v3508
        %v3515 = vmul.f32 %v1981, %v3508
        %v3516 = vmul.f32 %v1982, %v3508
        %v3525 = vrot.slane %v3509, 2
        %v3526 = vrot.slane %v3510, 2
        %v3527 = vsel %vm1315, %v3525, %v3526
        %v3528 = vrot.slane %v3511, 2
        %v3529 = vsel %vm1315, %v3526, %v3528
        %v3530 = vrot.slane %v3512, 2
        %v3531 = vsel %vm1315, %v3528, %v3530
        %v3532 = vrot.slane %v3513, 2
        %v3533 = vsel %vm1315, %v3530, %v3532
        %v3534 = vrot.slane %v3514, 2
        %v3535 = vsel %vm1315, %v3532, %v3534
        %v3536 = vrot.slane %v3515, 2
        %v3537 = vsel %vm1315, %v3534, %v3536
        %v3538 = vrot.slane %v3516, 2
        %v3539 = vsel %vm1315, %v3536, %v3538
        %3540 = vrot.lane.b32.xlu0 %v3527, 126
        %v3541 = vpop.permute.xlu0 %3540
        %3542 = vrot.lane.b32.xlu0 %v3529, 126
        %v3543 = vpop.permute.xlu0 %3542
        %3544 = vrot.lane.b32.xlu0 %v3531, 126
        %v3545 = vpop.permute.xlu0 %3544
        %3546 = vrot.lane.b32.xlu0 %v3533, 126
        %v3547 = vpop.permute.xlu0 %3546
        %3548 = vrot.lane.b32.xlu0 %v3535, 126
        %v3549 = vpop.permute.xlu0 %3548
        %3550 = vrot.lane.b32.xlu0 %v3537, 126
        %v3551 = vpop.permute.xlu0 %3550
        %3552 = vrot.lane.b32.xlu0 %v3539, 126
        %v3553 = vpop.permute.xlu0 %3552
        %v3561 = vadd.f32 %v3317, %v3541
        %v3562 = vadd.f32 %v3318, %v3543
        %v3563 = vadd.f32 %v3319, %v3545
        %v3564 = vadd.f32 %v3320, %v3547
        %v3565 = vadd.f32 %v3321, %v3549
        %v3566 = vadd.f32 %v3322, %v3551
        %v3567 = vadd.f32 %v3323, %v3553
        %s3568 = sld [smem:[#allocation2 + $0x2c]]
        %v3569 = vstv %s3568
        %v3570 = vmul.f32 %v1975, %v3569
        %v3571 = vmul.f32 %v1976, %v3569
        %v3572 = vmul.f32 %v1977, %v3569
        %v3573 = vmul.f32 %v1978, %v3569
        %v3574 = vmul.f32 %v1979, %v3569
        %v3575 = vmul.f32 %v1980, %v3569
        %v3576 = vmul.f32 %v1981, %v3569
        %v3577 = vmul.f32 %v1982, %v3569
        %v3586 = vrot.slane %v3570, 2
        %v3587 = vrot.slane %v3571, 2
        %v3588 = vsel %vm1315, %v3586, %v3587
        %v3589 = vrot.slane %v3572, 2
        %v3590 = vsel %vm1315, %v3587, %v3589
        %v3591 = vrot.slane %v3573, 2
        %v3592 = vsel %vm1315, %v3589, %v3591
        %v3593 = vrot.slane %v3574, 2
        %v3594 = vsel %vm1315, %v3591, %v3593
        %v3595 = vrot.slane %v3575, 2
        %v3596 = vsel %vm1315, %v3593, %v3595
        %v3597 = vrot.slane %v3576, 2
        %v3598 = vsel %vm1315, %v3595, %v3597
        %v3599 = vrot.slane %v3577, 2
        %v3600 = vsel %vm1315, %v3597, %v3599
        %3601 = vrot.lane.b32.xlu0 %v3588, 126
        %v3602 = vpop.permute.xlu0 %3601
        %3603 = vrot.lane.b32.xlu0 %v3590, 126
        %v3604 = vpop.permute.xlu0 %3603
        %3605 = vrot.lane.b32.xlu0 %v3592, 126
        %v3606 = vpop.permute.xlu0 %3605
        %3607 = vrot.lane.b32.xlu0 %v3594, 126
        %v3608 = vpop.permute.xlu0 %3607
        %3609 = vrot.lane.b32.xlu0 %v3596, 126
        %v3610 = vpop.permute.xlu0 %3609
        %3611 = vrot.lane.b32.xlu0 %v3598, 126
        %v3612 = vpop.permute.xlu0 %3611
        %3613 = vrot.lane.b32.xlu0 %v3600, 126
        %v3614 = vpop.permute.xlu0 %3613
        %v3622 = vadd.f32 %v3378, %v3602
        %v3623 = vadd.f32 %v3379, %v3604
        %v3624 = vadd.f32 %v3380, %v3606
        %v3625 = vadd.f32 %v3381, %v3608
        %v3626 = vadd.f32 %v3382, %v3610
        %v3627 = vadd.f32 %v3383, %v3612
        %v3628 = vadd.f32 %v3384, %v3614
        %s3629 = sld [smem:[#allocation2 + $0x47]]
        %v3630 = vstv %s3629
        %v3631 = vmul.f32 %v1975, %v3630
        %v3632 = vmul.f32 %v1976, %v3630
        %v3633 = vmul.f32 %v1977, %v3630
        %v3634 = vmul.f32 %v1978, %v3630
        %v3635 = vmul.f32 %v1979, %v3630
        %v3636 = vmul.f32 %v1980, %v3630
        %v3637 = vmul.f32 %v1981, %v3630
        %v3638 = vmul.f32 %v1982, %v3630
        %v3647 = vrot.slane %v3631, 2
        %v3648 = vrot.slane %v3632, 2
        %v3649 = vsel %vm1315, %v3647, %v3648
        %v3650 = vrot.slane %v3633, 2
        %v3651 = vsel %vm1315, %v3648, %v3650
        %v3652 = vrot.slane %v3634, 2
        %v3653 = vsel %vm1315, %v3650, %v3652
        %v3654 = vrot.slane %v3635, 2
        %v3655 = vsel %vm1315, %v3652, %v3654
        %v3656 = vrot.slane %v3636, 2
        %v3657 = vsel %vm1315, %v3654, %v3656
        %v3658 = vrot.slane %v3637, 2
        %v3659 = vsel %vm1315, %v3656, %v3658
        %v3660 = vrot.slane %v3638, 2
        %v3661 = vsel %vm1315, %v3658, %v3660
        %3662 = vrot.lane.b32.xlu0 %v3649, 126
        %v3663 = vpop.permute.xlu0 %3662
        %3664 = vrot.lane.b32.xlu0 %v3651, 126
        %v3665 = vpop.permute.xlu0 %3664
        %3666 = vrot.lane.b32.xlu0 %v3653, 126
        %v3667 = vpop.permute.xlu0 %3666
        %3668 = vrot.lane.b32.xlu0 %v3655, 126
        %v3669 = vpop.permute.xlu0 %3668
        %3670 = vrot.lane.b32.xlu0 %v3657, 126
        %v3671 = vpop.permute.xlu0 %3670
        %3672 = vrot.lane.b32.xlu0 %v3659, 126
        %v3673 = vpop.permute.xlu0 %3672
        %3674 = vrot.lane.b32.xlu0 %v3661, 126
        %v3675 = vpop.permute.xlu0 %3674
        %v3683 = vadd.f32 %v3439, %v3663
        %v3684 = vadd.f32 %v3440, %v3665
        %v3685 = vadd.f32 %v3441, %v3667
        %v3686 = vadd.f32 %v3442, %v3669
        %v3687 = vadd.f32 %v3443, %v3671
        %v3688 = vadd.f32 %v3444, %v3673
        %v3689 = vadd.f32 %v3445, %v3675
        %s3690 = sld [smem:[#allocation2 + $0x62]]
        %v3691 = vstv %s3690
        %v3692 = vmul.f32 %v1975, %v3691
        %v3693 = vmul.f32 %v1976, %v3691
        %v3694 = vmul.f32 %v1977, %v3691
        %v3695 = vmul.f32 %v1978, %v3691
        %v3696 = vmul.f32 %v1979, %v3691
        %v3697 = vmul.f32 %v1980, %v3691
        %v3698 = vmul.f32 %v1981, %v3691
        %v3699 = vmul.f32 %v1982, %v3691
        %v3708 = vrot.slane %v3692, 2
        %v3709 = vrot.slane %v3693, 2
        %v3710 = vsel %vm1315, %v3708, %v3709
        %v3711 = vrot.slane %v3694, 2
        %v3712 = vsel %vm1315, %v3709, %v3711
        %v3713 = vrot.slane %v3695, 2
        %v3714 = vsel %vm1315, %v3711, %v3713
        %v3715 = vrot.slane %v3696, 2
        %v3716 = vsel %vm1315, %v3713, %v3715
        %v3717 = vrot.slane %v3697, 2
        %v3718 = vsel %vm1315, %v3715, %v3717
        %v3719 = vrot.slane %v3698, 2
        %v3720 = vsel %vm1315, %v3717, %v3719
        %v3721 = vrot.slane %v3699, 2
        %v3722 = vsel %vm1315, %v3719, %v3721
        %3723 = vrot.lane.b32.xlu0 %v3710, 126
        %v3724 = vpop.permute.xlu0 %3723
        %3725 = vrot.lane.b32.xlu0 %v3712, 126
        %v3726 = vpop.permute.xlu0 %3725
        %3727 = vrot.lane.b32.xlu0 %v3714, 126
        %v3728 = vpop.permute.xlu0 %3727
        %3729 = vrot.lane.b32.xlu0 %v3716, 126
        %v3730 = vpop.permute.xlu0 %3729
        %3731 = vrot.lane.b32.xlu0 %v3718, 126
        %v3732 = vpop.permute.xlu0 %3731
        %3733 = vrot.lane.b32.xlu0 %v3720, 126
        %v3734 = vpop.permute.xlu0 %3733
        %3735 = vrot.lane.b32.xlu0 %v3722, 126
        %v3736 = vpop.permute.xlu0 %3735
        %v3744 = vadd.f32 %v3500, %v3724
        %v3745 = vadd.f32 %v3501, %v3726
        %v3746 = vadd.f32 %v3502, %v3728
        %v3747 = vadd.f32 %v3503, %v3730
        %v3748 = vadd.f32 %v3504, %v3732
        %v3749 = vadd.f32 %v3505, %v3734
        %v3750 = vadd.f32 %v3506, %v3736
        %s3751 = scalar_lea.vmem %s190, 128
        %v3752 = vld [vmem:[%s3751] sm:$0xff]
        %v3753 = vld [vmem:[%s3751 + $0x8] sm:$0xff]
        %v3754 = vld [vmem:[%s3751 + $0x10] sm:$0xff]
        %v3755 = vld [vmem:[%s3751 + $0x18] sm:$0xff]
        %v3756 = vld [vmem:[%s3751 + $0x20] sm:$0xff]
        %v3757 = vld [vmem:[%s3751 + $0x28] sm:$0xff]
        %v3758 = vld [vmem:[%s3751 + $0x30] sm:$0xff]
        %v3759 = vld [vmem:[%s3751 + $0x38] sm:$0x3]
        %s3760 = sld [smem:[#allocation2 + $0x12]]
        %v3761 = vstv %s3760
        %v3762 = vmul.f32 %v3752, %v3761
        %v3763 = vmul.f32 %v3753, %v3761
        %v3764 = vmul.f32 %v3754, %v3761
        %v3765 = vmul.f32 %v3755, %v3761
        %v3766 = vmul.f32 %v3756, %v3761
        %v3767 = vmul.f32 %v3757, %v3761
        %v3768 = vmul.f32 %v3758, %v3761
        %v3769 = vadd.f32 %v3561, %v3762
        %v3770 = vadd.f32 %v3562, %v3763
        %v3771 = vadd.f32 %v3563, %v3764
        %v3772 = vadd.f32 %v3564, %v3765
        %v3773 = vadd.f32 %v3565, %v3766
        %v3774 = vadd.f32 %v3566, %v3767
        %v3775 = vadd.f32 %v3567, %v3768
        %s3776 = sld [smem:[#allocation2 + $0x2d]]
        %v3777 = vstv %s3776
        %v3778 = vmul.f32 %v3752, %v3777
        %v3779 = vmul.f32 %v3753, %v3777
        %v3780 = vmul.f32 %v3754, %v3777
        %v3781 = vmul.f32 %v3755, %v3777
        %v3782 = vmul.f32 %v3756, %v3777
        %v3783 = vmul.f32 %v3757, %v3777
        %v3784 = vmul.f32 %v3758, %v3777
        %v3785 = vadd.f32 %v3622, %v3778
        %v3786 = vadd.f32 %v3623, %v3779
        %v3787 = vadd.f32 %v3624, %v3780
        %v3788 = vadd.f32 %v3625, %v3781
        %v3789 = vadd.f32 %v3626, %v3782
        %v3790 = vadd.f32 %v3627, %v3783
        %v3791 = vadd.f32 %v3628, %v3784
        %s3792 = sld [smem:[#allocation2 + $0x48]]
        %v3793 = vstv %s3792
        %v3794 = vmul.f32 %v3752, %v3793
        %v3795 = vmul.f32 %v3753, %v3793
        %v3796 = vmul.f32 %v3754, %v3793
        %v3797 = vmul.f32 %v3755, %v3793
        %v3798 = vmul.f32 %v3756, %v3793
        %v3799 = vmul.f32 %v3757, %v3793
        %v3800 = vmul.f32 %v3758, %v3793
        %v3801 = vadd.f32 %v3683, %v3794
        %v3802 = vadd.f32 %v3684, %v3795
        %v3803 = vadd.f32 %v3685, %v3796
        %v3804 = vadd.f32 %v3686, %v3797
        %v3805 = vadd.f32 %v3687, %v3798
        %v3806 = vadd.f32 %v3688, %v3799
        %v3807 = vadd.f32 %v3689, %v3800
        %s3808 = sld [smem:[#allocation2 + $0x63]]
        %v3809 = vstv %s3808
        %v3810 = vmul.f32 %v3752, %v3809
        %v3811 = vmul.f32 %v3753, %v3809
        %v3812 = vmul.f32 %v3754, %v3809
        %v3813 = vmul.f32 %v3755, %v3809
        %v3814 = vmul.f32 %v3756, %v3809
        %v3815 = vmul.f32 %v3757, %v3809
        %v3816 = vmul.f32 %v3758, %v3809
        %v3817 = vadd.f32 %v3744, %v3810
        %v3818 = vadd.f32 %v3745, %v3811
        %v3819 = vadd.f32 %v3746, %v3812
        %v3820 = vadd.f32 %v3747, %v3813
        %v3821 = vadd.f32 %v3748, %v3814
        %v3822 = vadd.f32 %v3749, %v3815
        %v3823 = vadd.f32 %v3750, %v3816
        %s3824 = sld [smem:[#allocation2 + $0x13]]
        %v3825 = vstv %s3824
        %v3826 = vmul.f32 %v3752, %v3825
        %v3827 = vmul.f32 %v3753, %v3825
        %v3828 = vmul.f32 %v3754, %v3825
        %v3829 = vmul.f32 %v3755, %v3825
        %v3830 = vmul.f32 %v3756, %v3825
        %v3831 = vmul.f32 %v3757, %v3825
        %v3832 = vmul.f32 %v3758, %v3825
        %3840 = vrot.lane.b32.xlu0 %v3826, 127
        %v3841 = vpop.permute.xlu0 %3840
        %3842 = vrot.lane.b32.xlu0 %v3827, 127
        %v3843 = vpop.permute.xlu0 %3842
        %3844 = vrot.lane.b32.xlu0 %v3828, 127
        %v3845 = vpop.permute.xlu0 %3844
        %3846 = vrot.lane.b32.xlu0 %v3829, 127
        %v3847 = vpop.permute.xlu0 %3846
        %3848 = vrot.lane.b32.xlu0 %v3830, 127
        %v3849 = vpop.permute.xlu0 %3848
        %3850 = vrot.lane.b32.xlu0 %v3831, 127
        %v3851 = vpop.permute.xlu0 %3850
        %3852 = vrot.lane.b32.xlu0 %v3832, 127
        %v3853 = vpop.permute.xlu0 %3852
        %v3861 = vadd.f32 %v3769, %v3841
        %v3862 = vadd.f32 %v3770, %v3843
        %v3863 = vadd.f32 %v3771, %v3845
        %v3864 = vadd.f32 %v3772, %v3847
        %v3865 = vadd.f32 %v3773, %v3849
        %v3866 = vadd.f32 %v3774, %v3851
        %v3867 = vadd.f32 %v3775, %v3853
        %s3868 = sld [smem:[#allocation2 + $0x2e]]
        %v3869 = vstv %s3868
        %v3870 = vmul.f32 %v3752, %v3869
        %v3871 = vmul.f32 %v3753, %v3869
        %v3872 = vmul.f32 %v3754, %v3869
        %v3873 = vmul.f32 %v3755, %v3869
        %v3874 = vmul.f32 %v3756, %v3869
        %v3875 = vmul.f32 %v3757, %v3869
        %v3876 = vmul.f32 %v3758, %v3869
        %3884 = vrot.lane.b32.xlu0 %v3870, 127
        %v3885 = vpop.permute.xlu0 %3884
        %3886 = vrot.lane.b32.xlu0 %v3871, 127
        %v3887 = vpop.permute.xlu0 %3886
        %3888 = vrot.lane.b32.xlu0 %v3872, 127
        %v3889 = vpop.permute.xlu0 %3888
        %3890 = vrot.lane.b32.xlu0 %v3873, 127
        %v3891 = vpop.permute.xlu0 %3890
        %3892 = vrot.lane.b32.xlu0 %v3874, 127
        %v3893 = vpop.permute.xlu0 %3892
        %3894 = vrot.lane.b32.xlu0 %v3875, 127
        %v3895 = vpop.permute.xlu0 %3894
        %3896 = vrot.lane.b32.xlu0 %v3876, 127
        %v3897 = vpop.permute.xlu0 %3896
        %v3905 = vadd.f32 %v3785, %v3885
        %v3906 = vadd.f32 %v3786, %v3887
        %v3907 = vadd.f32 %v3787, %v3889
        %v3908 = vadd.f32 %v3788, %v3891
        %v3909 = vadd.f32 %v3789, %v3893
        %v3910 = vadd.f32 %v3790, %v3895
        %v3911 = vadd.f32 %v3791, %v3897
        %s3912 = sld [smem:[#allocation2 + $0x49]]
        %v3913 = vstv %s3912
        %v3914 = vmul.f32 %v3752, %v3913
        %v3915 = vmul.f32 %v3753, %v3913
        %v3916 = vmul.f32 %v3754, %v3913
        %v3917 = vmul.f32 %v3755, %v3913
        %v3918 = vmul.f32 %v3756, %v3913
        %v3919 = vmul.f32 %v3757, %v3913
        %v3920 = vmul.f32 %v3758, %v3913
        %3928 = vrot.lane.b32.xlu0 %v3914, 127
        %v3929 = vpop.permute.xlu0 %3928
        %3930 = vrot.lane.b32.xlu0 %v3915, 127
        %v3931 = vpop.permute.xlu0 %3930
        %3932 = vrot.lane.b32.xlu0 %v3916, 127
        %v3933 = vpop.permute.xlu0 %3932
        %3934 = vrot.lane.b32.xlu0 %v3917, 127
        %v3935 = vpop.permute.xlu0 %3934
        %3936 = vrot.lane.b32.xlu0 %v3918, 127
        %v3937 = vpop.permute.xlu0 %3936
        %3938 = vrot.lane.b32.xlu0 %v3919, 127
        %v3939 = vpop.permute.xlu0 %3938
        %3940 = vrot.lane.b32.xlu0 %v3920, 127
        %v3941 = vpop.permute.xlu0 %3940
        %v3949 = vadd.f32 %v3801, %v3929
        %v3950 = vadd.f32 %v3802, %v3931
        %v3951 = vadd.f32 %v3803, %v3933
        %v3952 = vadd.f32 %v3804, %v3935
        %v3953 = vadd.f32 %v3805, %v3937
        %v3954 = vadd.f32 %v3806, %v3939
        %v3955 = vadd.f32 %v3807, %v3941
        %s3956 = sld [smem:[#allocation2 + $0x64]]
        %v3957 = vstv %s3956
        %v3958 = vmul.f32 %v3752, %v3957
        %v3959 = vmul.f32 %v3753, %v3957
        %v3960 = vmul.f32 %v3754, %v3957
        %v3961 = vmul.f32 %v3755, %v3957
        %v3962 = vmul.f32 %v3756, %v3957
        %v3963 = vmul.f32 %v3757, %v3957
        %v3964 = vmul.f32 %v3758, %v3957
        %3972 = vrot.lane.b32.xlu0 %v3958, 127
        %v3973 = vpop.permute.xlu0 %3972
        %3974 = vrot.lane.b32.xlu0 %v3959, 127
        %v3975 = vpop.permute.xlu0 %3974
        %3976 = vrot.lane.b32.xlu0 %v3960, 127
        %v3977 = vpop.permute.xlu0 %3976
        %3978 = vrot.lane.b32.xlu0 %v3961, 127
        %v3979 = vpop.permute.xlu0 %3978
        %3980 = vrot.lane.b32.xlu0 %v3962, 127
        %v3981 = vpop.permute.xlu0 %3980
        %3982 = vrot.lane.b32.xlu0 %v3963, 127
        %v3983 = vpop.permute.xlu0 %3982
        %3984 = vrot.lane.b32.xlu0 %v3964, 127
        %v3985 = vpop.permute.xlu0 %3984
        %v3993 = vadd.f32 %v3817, %v3973
        %v3994 = vadd.f32 %v3818, %v3975
        %v3995 = vadd.f32 %v3819, %v3977
        %v3996 = vadd.f32 %v3820, %v3979
        %v3997 = vadd.f32 %v3821, %v3981
        %v3998 = vadd.f32 %v3822, %v3983
        %v3999 = vadd.f32 %v3823, %v3985
        %s4000 = sld [smem:[#allocation2 + $0x14]]
        %v4001 = vstv %s4000
        %v4002 = vmul.f32 %v3752, %v4001
        %v4003 = vmul.f32 %v3753, %v4001
        %v4004 = vmul.f32 %v3754, %v4001
        %v4005 = vmul.f32 %v3755, %v4001
        %v4006 = vmul.f32 %v3756, %v4001
        %v4007 = vmul.f32 %v3757, %v4001
        %v4008 = vmul.f32 %v3758, %v4001
        %4016 = vrot.lane.b32.xlu0 %v4002, 126
        %v4017 = vpop.permute.xlu0 %4016
        %4018 = vrot.lane.b32.xlu0 %v4003, 126
        %v4019 = vpop.permute.xlu0 %4018
        %4020 = vrot.lane.b32.xlu0 %v4004, 126
        %v4021 = vpop.permute.xlu0 %4020
        %4022 = vrot.lane.b32.xlu0 %v4005, 126
        %v4023 = vpop.permute.xlu0 %4022
        %4024 = vrot.lane.b32.xlu0 %v4006, 126
        %v4025 = vpop.permute.xlu0 %4024
        %4026 = vrot.lane.b32.xlu0 %v4007, 126
        %v4027 = vpop.permute.xlu0 %4026
        %4028 = vrot.lane.b32.xlu0 %v4008, 126
        %v4029 = vpop.permute.xlu0 %4028
        %v4037 = vadd.f32 %v3861, %v4017
        %v4038 = vadd.f32 %v3862, %v4019
        %v4039 = vadd.f32 %v3863, %v4021
        %v4040 = vadd.f32 %v3864, %v4023
        %v4041 = vadd.f32 %v3865, %v4025
        %v4042 = vadd.f32 %v3866, %v4027
        %v4043 = vadd.f32 %v3867, %v4029
        %s4044 = sld [smem:[#allocation2 + $0x2f]]
        %v4045 = vstv %s4044
        %v4046 = vmul.f32 %v3752, %v4045
        %v4047 = vmul.f32 %v3753, %v4045
        %v4048 = vmul.f32 %v3754, %v4045
        %v4049 = vmul.f32 %v3755, %v4045
        %v4050 = vmul.f32 %v3756, %v4045
        %v4051 = vmul.f32 %v3757, %v4045
        %v4052 = vmul.f32 %v3758, %v4045
        %4060 = vrot.lane.b32.xlu0 %v4046, 126
        %v4061 = vpop.permute.xlu0 %4060
        %4062 = vrot.lane.b32.xlu0 %v4047, 126
        %v4063 = vpop.permute.xlu0 %4062
        %4064 = vrot.lane.b32.xlu0 %v4048, 126
        %v4065 = vpop.permute.xlu0 %4064
        %4066 = vrot.lane.b32.xlu0 %v4049, 126
        %v4067 = vpop.permute.xlu0 %4066
        %4068 = vrot.lane.b32.xlu0 %v4050, 126
        %v4069 = vpop.permute.xlu0 %4068
        %4070 = vrot.lane.b32.xlu0 %v4051, 126
        %v4071 = vpop.permute.xlu0 %4070
        %4072 = vrot.lane.b32.xlu0 %v4052, 126
        %v4073 = vpop.permute.xlu0 %4072
        %v4081 = vadd.f32 %v3905, %v4061
        %v4082 = vadd.f32 %v3906, %v4063
        %v4083 = vadd.f32 %v3907, %v4065
        %v4084 = vadd.f32 %v3908, %v4067
        %v4085 = vadd.f32 %v3909, %v4069
        %v4086 = vadd.f32 %v3910, %v4071
        %v4087 = vadd.f32 %v3911, %v4073
        %s4088 = sld [smem:[#allocation2 + $0x4a]]
        %v4089 = vstv %s4088
        %v4090 = vmul.f32 %v3752, %v4089
        %v4091 = vmul.f32 %v3753, %v4089
        %v4092 = vmul.f32 %v3754, %v4089
        %v4093 = vmul.f32 %v3755, %v4089
        %v4094 = vmul.f32 %v3756, %v4089
        %v4095 = vmul.f32 %v3757, %v4089
        %v4096 = vmul.f32 %v3758, %v4089
        %4104 = vrot.lane.b32.xlu0 %v4090, 126
        %v4105 = vpop.permute.xlu0 %4104
        %4106 = vrot.lane.b32.xlu0 %v4091, 126
        %v4107 = vpop.permute.xlu0 %4106
        %4108 = vrot.lane.b32.xlu0 %v4092, 126
        %v4109 = vpop.permute.xlu0 %4108
        %4110 = vrot.lane.b32.xlu0 %v4093, 126
        %v4111 = vpop.permute.xlu0 %4110
        %4112 = vrot.lane.b32.xlu0 %v4094, 126
        %v4113 = vpop.permute.xlu0 %4112
        %4114 = vrot.lane.b32.xlu0 %v4095, 126
        %v4115 = vpop.permute.xlu0 %4114
        %4116 = vrot.lane.b32.xlu0 %v4096, 126
        %v4117 = vpop.permute.xlu0 %4116
        %v4125 = vadd.f32 %v3949, %v4105
        %v4126 = vadd.f32 %v3950, %v4107
        %v4127 = vadd.f32 %v3951, %v4109
        %v4128 = vadd.f32 %v3952, %v4111
        %v4129 = vadd.f32 %v3953, %v4113
        %v4130 = vadd.f32 %v3954, %v4115
        %v4131 = vadd.f32 %v3955, %v4117
        %s4132 = sld [smem:[#allocation2 + $0x65]]
        %v4133 = vstv %s4132
        %v4134 = vmul.f32 %v3752, %v4133
        %v4135 = vmul.f32 %v3753, %v4133
        %v4136 = vmul.f32 %v3754, %v4133
        %v4137 = vmul.f32 %v3755, %v4133
        %v4138 = vmul.f32 %v3756, %v4133
        %v4139 = vmul.f32 %v3757, %v4133
        %v4140 = vmul.f32 %v3758, %v4133
        %4148 = vrot.lane.b32.xlu0 %v4134, 126
        %v4149 = vpop.permute.xlu0 %4148
        %4150 = vrot.lane.b32.xlu0 %v4135, 126
        %v4151 = vpop.permute.xlu0 %4150
        %4152 = vrot.lane.b32.xlu0 %v4136, 126
        %v4153 = vpop.permute.xlu0 %4152
        %4154 = vrot.lane.b32.xlu0 %v4137, 126
        %v4155 = vpop.permute.xlu0 %4154
        %4156 = vrot.lane.b32.xlu0 %v4138, 126
        %v4157 = vpop.permute.xlu0 %4156
        %4158 = vrot.lane.b32.xlu0 %v4139, 126
        %v4159 = vpop.permute.xlu0 %4158
        %4160 = vrot.lane.b32.xlu0 %v4140, 126
        %v4161 = vpop.permute.xlu0 %4160
        %v4169 = vadd.f32 %v3993, %v4149
        %v4170 = vadd.f32 %v3994, %v4151
        %v4171 = vadd.f32 %v3995, %v4153
        %v4172 = vadd.f32 %v3996, %v4155
        %v4173 = vadd.f32 %v3997, %v4157
        %v4174 = vadd.f32 %v3998, %v4159
        %v4175 = vadd.f32 %v3999, %v4161
        %s4176 = sld [smem:[#allocation2 + $0x15]]
        %v4177 = vstv %s4176
        %v4178 = vmul.f32 %v3752, %v4177
        %v4179 = vmul.f32 %v3753, %v4177
        %v4180 = vmul.f32 %v3754, %v4177
        %v4181 = vmul.f32 %v3755, %v4177
        %v4182 = vmul.f32 %v3756, %v4177
        %v4183 = vmul.f32 %v3757, %v4177
        %v4184 = vmul.f32 %v3758, %v4177
        %v4185 = vmul.f32 %v3759, %v4177
        %v4194 = vrot.slane %v4178, 1
        %v4195 = vrot.slane %v4179, 1
        %v4196 = vsel %vm638, %v4194, %v4195
        %v4197 = vrot.slane %v4180, 1
        %v4198 = vsel %vm638, %v4195, %v4197
        %v4199 = vrot.slane %v4181, 1
        %v4200 = vsel %vm638, %v4197, %v4199
        %v4201 = vrot.slane %v4182, 1
        %v4202 = vsel %vm638, %v4199, %v4201
        %v4203 = vrot.slane %v4183, 1
        %v4204 = vsel %vm638, %v4201, %v4203
        %v4205 = vrot.slane %v4184, 1
        %v4206 = vsel %vm638, %v4203, %v4205
        %v4207 = vrot.slane %v4185, 1
        %v4208 = vsel %vm638, %v4205, %v4207
        %v4216 = vadd.f32 %v4037, %v4196
        %v4217 = vadd.f32 %v4038, %v4198
        %v4218 = vadd.f32 %v4039, %v4200
        %v4219 = vadd.f32 %v4040, %v4202
        %v4220 = vadd.f32 %v4041, %v4204
        %v4221 = vadd.f32 %v4042, %v4206
        %v4222 = vadd.f32 %v4043, %v4208
        %s4223 = sld [smem:[#allocation2 + $0x30]]
        %v4224 = vstv %s4223
        %v4225 = vmul.f32 %v3752, %v4224
        %v4226 = vmul.f32 %v3753, %v4224
        %v4227 = vmul.f32 %v3754, %v4224
        %v4228 = vmul.f32 %v3755, %v4224
        %v4229 = vmul.f32 %v3756, %v4224
        %v4230 = vmul.f32 %v3757, %v4224
        %v4231 = vmul.f32 %v3758, %v4224
        %v4232 = vmul.f32 %v3759, %v4224
        %v4241 = vrot.slane %v4225, 1
        %v4242 = vrot.slane %v4226, 1
        %v4243 = vsel %vm638, %v4241, %v4242
        %v4244 = vrot.slane %v4227, 1
        %v4245 = vsel %vm638, %v4242, %v4244
        %v4246 = vrot.slane %v4228, 1
        %v4247 = vsel %vm638, %v4244, %v4246
        %v4248 = vrot.slane %v4229, 1
        %v4249 = vsel %vm638, %v4246, %v4248
        %v4250 = vrot.slane %v4230, 1
        %v4251 = vsel %vm638, %v4248, %v4250
        %v4252 = vrot.slane %v4231, 1
        %v4253 = vsel %vm638, %v4250, %v4252
        %v4254 = vrot.slane %v4232, 1
        %v4255 = vsel %vm638, %v4252, %v4254
        %v4263 = vadd.f32 %v4081, %v4243
        %v4264 = vadd.f32 %v4082, %v4245
        %v4265 = vadd.f32 %v4083, %v4247
        %v4266 = vadd.f32 %v4084, %v4249
        %v4267 = vadd.f32 %v4085, %v4251
        %v4268 = vadd.f32 %v4086, %v4253
        %v4269 = vadd.f32 %v4087, %v4255
        %s4270 = sld [smem:[#allocation2 + $0x4b]]
        %v4271 = vstv %s4270
        %v4272 = vmul.f32 %v3752, %v4271
        %v4273 = vmul.f32 %v3753, %v4271
        %v4274 = vmul.f32 %v3754, %v4271
        %v4275 = vmul.f32 %v3755, %v4271
        %v4276 = vmul.f32 %v3756, %v4271
        %v4277 = vmul.f32 %v3757, %v4271
        %v4278 = vmul.f32 %v3758, %v4271
        %v4279 = vmul.f32 %v3759, %v4271
        %v4288 = vrot.slane %v4272, 1
        %v4289 = vrot.slane %v4273, 1
        %v4290 = vsel %vm638, %v4288, %v4289
        %v4291 = vrot.slane %v4274, 1
        %v4292 = vsel %vm638, %v4289, %v4291
        %v4293 = vrot.slane %v4275, 1
        %v4294 = vsel %vm638, %v4291, %v4293
        %v4295 = vrot.slane %v4276, 1
        %v4296 = vsel %vm638, %v4293, %v4295
        %v4297 = vrot.slane %v4277, 1
        %v4298 = vsel %vm638, %v4295, %v4297
        %v4299 = vrot.slane %v4278, 1
        %v4300 = vsel %vm638, %v4297, %v4299
        %v4301 = vrot.slane %v4279, 1
        %v4302 = vsel %vm638, %v4299, %v4301
        %v4310 = vadd.f32 %v4125, %v4290
        %v4311 = vadd.f32 %v4126, %v4292
        %v4312 = vadd.f32 %v4127, %v4294
        %v4313 = vadd.f32 %v4128, %v4296
        %v4314 = vadd.f32 %v4129, %v4298
        %v4315 = vadd.f32 %v4130, %v4300
        %v4316 = vadd.f32 %v4131, %v4302
        %s4317 = sld [smem:[#allocation2 + $0x66]]
        %v4318 = vstv %s4317
        %v4319 = vmul.f32 %v3752, %v4318
        %v4320 = vmul.f32 %v3753, %v4318
        %v4321 = vmul.f32 %v3754, %v4318
        %v4322 = vmul.f32 %v3755, %v4318
        %v4323 = vmul.f32 %v3756, %v4318
        %v4324 = vmul.f32 %v3757, %v4318
        %v4325 = vmul.f32 %v3758, %v4318
        %v4326 = vmul.f32 %v3759, %v4318
        %v4335 = vrot.slane %v4319, 1
        %v4336 = vrot.slane %v4320, 1
        %v4337 = vsel %vm638, %v4335, %v4336
        %v4338 = vrot.slane %v4321, 1
        %v4339 = vsel %vm638, %v4336, %v4338
        %v4340 = vrot.slane %v4322, 1
        %v4341 = vsel %vm638, %v4338, %v4340
        %v4342 = vrot.slane %v4323, 1
        %v4343 = vsel %vm638, %v4340, %v4342
        %v4344 = vrot.slane %v4324, 1
        %v4345 = vsel %vm638, %v4342, %v4344
        %v4346 = vrot.slane %v4325, 1
        %v4347 = vsel %vm638, %v4344, %v4346
        %v4348 = vrot.slane %v4326, 1
        %v4349 = vsel %vm638, %v4346, %v4348
        %v4357 = vadd.f32 %v4169, %v4337
        %v4358 = vadd.f32 %v4170, %v4339
        %v4359 = vadd.f32 %v4171, %v4341
        %v4360 = vadd.f32 %v4172, %v4343
        %v4361 = vadd.f32 %v4173, %v4345
        %v4362 = vadd.f32 %v4174, %v4347
        %v4363 = vadd.f32 %v4175, %v4349
        %s4364 = sld [smem:[#allocation2 + $0x16]]
        %v4365 = vstv %s4364
        %v4366 = vmul.f32 %v3752, %v4365
        %v4367 = vmul.f32 %v3753, %v4365
        %v4368 = vmul.f32 %v3754, %v4365
        %v4369 = vmul.f32 %v3755, %v4365
        %v4370 = vmul.f32 %v3756, %v4365
        %v4371 = vmul.f32 %v3757, %v4365
        %v4372 = vmul.f32 %v3758, %v4365
        %v4373 = vmul.f32 %v3759, %v4365
        %v4382 = vrot.slane %v4366, 1
        %v4383 = vrot.slane %v4367, 1
        %v4384 = vsel %vm638, %v4382, %v4383
        %v4385 = vrot.slane %v4368, 1
        %v4386 = vsel %vm638, %v4383, %v4385
        %v4387 = vrot.slane %v4369, 1
        %v4388 = vsel %vm638, %v4385, %v4387
        %v4389 = vrot.slane %v4370, 1
        %v4390 = vsel %vm638, %v4387, %v4389
        %v4391 = vrot.slane %v4371, 1
        %v4392 = vsel %vm638, %v4389, %v4391
        %v4393 = vrot.slane %v4372, 1
        %v4394 = vsel %vm638, %v4391, %v4393
        %v4395 = vrot.slane %v4373, 1
        %v4396 = vsel %vm638, %v4393, %v4395
        %4397 = vrot.lane.b32.xlu0 %v4384, 127
        %v4398 = vpop.permute.xlu0 %4397
        %4399 = vrot.lane.b32.xlu0 %v4386, 127
        %v4400 = vpop.permute.xlu0 %4399
        %4401 = vrot.lane.b32.xlu0 %v4388, 127
        %v4402 = vpop.permute.xlu0 %4401
        %4403 = vrot.lane.b32.xlu0 %v4390, 127
        %v4404 = vpop.permute.xlu0 %4403
        %4405 = vrot.lane.b32.xlu0 %v4392, 127
        %v4406 = vpop.permute.xlu0 %4405
        %4407 = vrot.lane.b32.xlu0 %v4394, 127
        %v4408 = vpop.permute.xlu0 %4407
        %4409 = vrot.lane.b32.xlu0 %v4396, 127
        %v4410 = vpop.permute.xlu0 %4409
        %v4418 = vadd.f32 %v4216, %v4398
        %v4419 = vadd.f32 %v4217, %v4400
        %v4420 = vadd.f32 %v4218, %v4402
        %v4421 = vadd.f32 %v4219, %v4404
        %v4422 = vadd.f32 %v4220, %v4406
        %v4423 = vadd.f32 %v4221, %v4408
        %v4424 = vadd.f32 %v4222, %v4410
        %s4425 = sld [smem:[#allocation2 + $0x31]]
        %v4426 = vstv %s4425
        %v4427 = vmul.f32 %v3752, %v4426
        %v4428 = vmul.f32 %v3753, %v4426
        %v4429 = vmul.f32 %v3754, %v4426
        %v4430 = vmul.f32 %v3755, %v4426
        %v4431 = vmul.f32 %v3756, %v4426
        %v4432 = vmul.f32 %v3757, %v4426
        %v4433 = vmul.f32 %v3758, %v4426
        %v4434 = vmul.f32 %v3759, %v4426
        %v4443 = vrot.slane %v4427, 1
        %v4444 = vrot.slane %v4428, 1
        %v4445 = vsel %vm638, %v4443, %v4444
        %v4446 = vrot.slane %v4429, 1
        %v4447 = vsel %vm638, %v4444, %v4446
        %v4448 = vrot.slane %v4430, 1
        %v4449 = vsel %vm638, %v4446, %v4448
        %v4450 = vrot.slane %v4431, 1
        %v4451 = vsel %vm638, %v4448, %v4450
        %v4452 = vrot.slane %v4432, 1
        %v4453 = vsel %vm638, %v4450, %v4452
        %v4454 = vrot.slane %v4433, 1
        %v4455 = vsel %vm638, %v4452, %v4454
        %v4456 = vrot.slane %v4434, 1
        %v4457 = vsel %vm638, %v4454, %v4456
        %4458 = vrot.lane.b32.xlu0 %v4445, 127
        %v4459 = vpop.permute.xlu0 %4458
        %4460 = vrot.lane.b32.xlu0 %v4447, 127
        %v4461 = vpop.permute.xlu0 %4460
        %4462 = vrot.lane.b32.xlu0 %v4449, 127
        %v4463 = vpop.permute.xlu0 %4462
        %4464 = vrot.lane.b32.xlu0 %v4451, 127
        %v4465 = vpop.permute.xlu0 %4464
        %4466 = vrot.lane.b32.xlu0 %v4453, 127
        %v4467 = vpop.permute.xlu0 %4466
        %4468 = vrot.lane.b32.xlu0 %v4455, 127
        %v4469 = vpop.permute.xlu0 %4468
        %4470 = vrot.lane.b32.xlu0 %v4457, 127
        %v4471 = vpop.permute.xlu0 %4470
        %v4479 = vadd.f32 %v4263, %v4459
        %v4480 = vadd.f32 %v4264, %v4461
        %v4481 = vadd.f32 %v4265, %v4463
        %v4482 = vadd.f32 %v4266, %v4465
        %v4483 = vadd.f32 %v4267, %v4467
        %v4484 = vadd.f32 %v4268, %v4469
        %v4485 = vadd.f32 %v4269, %v4471
        %s4486 = sld [smem:[#allocation2 + $0x4c]]
        %v4487 = vstv %s4486
        %v4488 = vmul.f32 %v3752, %v4487
        %v4489 = vmul.f32 %v3753, %v4487
        %v4490 = vmul.f32 %v3754, %v4487
        %v4491 = vmul.f32 %v3755, %v4487
        %v4492 = vmul.f32 %v3756, %v4487
        %v4493 = vmul.f32 %v3757, %v4487
        %v4494 = vmul.f32 %v3758, %v4487
        %v4495 = vmul.f32 %v3759, %v4487
        %v4504 = vrot.slane %v4488, 1
        %v4505 = vrot.slane %v4489, 1
        %v4506 = vsel %vm638, %v4504, %v4505
        %v4507 = vrot.slane %v4490, 1
        %v4508 = vsel %vm638, %v4505, %v4507
        %v4509 = vrot.slane %v4491, 1
        %v4510 = vsel %vm638, %v4507, %v4509
        %v4511 = vrot.slane %v4492, 1
        %v4512 = vsel %vm638, %v4509, %v4511
        %v4513 = vrot.slane %v4493, 1
        %v4514 = vsel %vm638, %v4511, %v4513
        %v4515 = vrot.slane %v4494, 1
        %v4516 = vsel %vm638, %v4513, %v4515
        %v4517 = vrot.slane %v4495, 1
        %v4518 = vsel %vm638, %v4515, %v4517
        %4519 = vrot.lane.b32.xlu0 %v4506, 127
        %v4520 = vpop.permute.xlu0 %4519
        %4521 = vrot.lane.b32.xlu0 %v4508, 127
        %v4522 = vpop.permute.xlu0 %4521
        %4523 = vrot.lane.b32.xlu0 %v4510, 127
        %v4524 = vpop.permute.xlu0 %4523
        %4525 = vrot.lane.b32.xlu0 %v4512, 127
        %v4526 = vpop.permute.xlu0 %4525
        %4527 = vrot.lane.b32.xlu0 %v4514, 127
        %v4528 = vpop.permute.xlu0 %4527
        %4529 = vrot.lane.b32.xlu0 %v4516, 127
        %v4530 = vpop.permute.xlu0 %4529
        %4531 = vrot.lane.b32.xlu0 %v4518, 127
        %v4532 = vpop.permute.xlu0 %4531
        %v4540 = vadd.f32 %v4310, %v4520
        %v4541 = vadd.f32 %v4311, %v4522
        %v4542 = vadd.f32 %v4312, %v4524
        %v4543 = vadd.f32 %v4313, %v4526
        %v4544 = vadd.f32 %v4314, %v4528
        %v4545 = vadd.f32 %v4315, %v4530
        %v4546 = vadd.f32 %v4316, %v4532
        %s4547 = sld [smem:[#allocation2 + $0x67]]
        %v4548 = vstv %s4547
        %v4549 = vmul.f32 %v3752, %v4548
        %v4550 = vmul.f32 %v3753, %v4548
        %v4551 = vmul.f32 %v3754, %v4548
        %v4552 = vmul.f32 %v3755, %v4548
        %v4553 = vmul.f32 %v3756, %v4548
        %v4554 = vmul.f32 %v3757, %v4548
        %v4555 = vmul.f32 %v3758, %v4548
        %v4556 = vmul.f32 %v3759, %v4548
        %v4565 = vrot.slane %v4549, 1
        %v4566 = vrot.slane %v4550, 1
        %v4567 = vsel %vm638, %v4565, %v4566
        %v4568 = vrot.slane %v4551, 1
        %v4569 = vsel %vm638, %v4566, %v4568
        %v4570 = vrot.slane %v4552, 1
        %v4571 = vsel %vm638, %v4568, %v4570
        %v4572 = vrot.slane %v4553, 1
        %v4573 = vsel %vm638, %v4570, %v4572
        %v4574 = vrot.slane %v4554, 1
        %v4575 = vsel %vm638, %v4572, %v4574
        %v4576 = vrot.slane %v4555, 1
        %v4577 = vsel %vm638, %v4574, %v4576
        %v4578 = vrot.slane %v4556, 1
        %v4579 = vsel %vm638, %v4576, %v4578
        %4580 = vrot.lane.b32.xlu0 %v4567, 127
        %v4581 = vpop.permute.xlu0 %4580
        %4582 = vrot.lane.b32.xlu0 %v4569, 127
        %v4583 = vpop.permute.xlu0 %4582
        %4584 = vrot.lane.b32.xlu0 %v4571, 127
        %v4585 = vpop.permute.xlu0 %4584
        %4586 = vrot.lane.b32.xlu0 %v4573, 127
        %v4587 = vpop.permute.xlu0 %4586
        %4588 = vrot.lane.b32.xlu0 %v4575, 127
        %v4589 = vpop.permute.xlu0 %4588
        %4590 = vrot.lane.b32.xlu0 %v4577, 127
        %v4591 = vpop.permute.xlu0 %4590
        %4592 = vrot.lane.b32.xlu0 %v4579, 127
        %v4593 = vpop.permute.xlu0 %4592
        %v4601 = vadd.f32 %v4357, %v4581
        %v4602 = vadd.f32 %v4358, %v4583
        %v4603 = vadd.f32 %v4359, %v4585
        %v4604 = vadd.f32 %v4360, %v4587
        %v4605 = vadd.f32 %v4361, %v4589
        %v4606 = vadd.f32 %v4362, %v4591
        %v4607 = vadd.f32 %v4363, %v4593
        %s4608 = sld [smem:[#allocation2 + $0x17]]
        %v4609 = vstv %s4608
        %v4610 = vmul.f32 %v3752, %v4609
        %v4611 = vmul.f32 %v3753, %v4609
        %v4612 = vmul.f32 %v3754, %v4609
        %v4613 = vmul.f32 %v3755, %v4609
        %v4614 = vmul.f32 %v3756, %v4609
        %v4615 = vmul.f32 %v3757, %v4609
        %v4616 = vmul.f32 %v3758, %v4609
        %v4617 = vmul.f32 %v3759, %v4609
        %v4626 = vrot.slane %v4610, 1
        %v4627 = vrot.slane %v4611, 1
        %v4628 = vsel %vm638, %v4626, %v4627
        %v4629 = vrot.slane %v4612, 1
        %v4630 = vsel %vm638, %v4627, %v4629
        %v4631 = vrot.slane %v4613, 1
        %v4632 = vsel %vm638, %v4629, %v4631
        %v4633 = vrot.slane %v4614, 1
        %v4634 = vsel %vm638, %v4631, %v4633
        %v4635 = vrot.slane %v4615, 1
        %v4636 = vsel %vm638, %v4633, %v4635
        %v4637 = vrot.slane %v4616, 1
        %v4638 = vsel %vm638, %v4635, %v4637
        %v4639 = vrot.slane %v4617, 1
        %v4640 = vsel %vm638, %v4637, %v4639
        %4641 = vrot.lane.b32.xlu0 %v4628, 126
        %v4642 = vpop.permute.xlu0 %4641
        %4643 = vrot.lane.b32.xlu0 %v4630, 126
        %v4644 = vpop.permute.xlu0 %4643
        %4645 = vrot.lane.b32.xlu0 %v4632, 126
        %v4646 = vpop.permute.xlu0 %4645
        %4647 = vrot.lane.b32.xlu0 %v4634, 126
        %v4648 = vpop.permute.xlu0 %4647
        %4649 = vrot.lane.b32.xlu0 %v4636, 126
        %v4650 = vpop.permute.xlu0 %4649
        %4651 = vrot.lane.b32.xlu0 %v4638, 126
        %v4652 = vpop.permute.xlu0 %4651
        %4653 = vrot.lane.b32.xlu0 %v4640, 126
        %v4654 = vpop.permute.xlu0 %4653
        %v4662 = vadd.f32 %v4418, %v4642
        %v4663 = vadd.f32 %v4419, %v4644
        %v4664 = vadd.f32 %v4420, %v4646
        %v4665 = vadd.f32 %v4421, %v4648
        %v4666 = vadd.f32 %v4422, %v4650
        %v4667 = vadd.f32 %v4423, %v4652
        %v4668 = vadd.f32 %v4424, %v4654
        %s4669 = sld [smem:[#allocation2 + $0x32]]
        %v4670 = vstv %s4669
        %v4671 = vmul.f32 %v3752, %v4670
        %v4672 = vmul.f32 %v3753, %v4670
        %v4673 = vmul.f32 %v3754, %v4670
        %v4674 = vmul.f32 %v3755, %v4670
        %v4675 = vmul.f32 %v3756, %v4670
        %v4676 = vmul.f32 %v3757, %v4670
        %v4677 = vmul.f32 %v3758, %v4670
        %v4678 = vmul.f32 %v3759, %v4670
        %v4687 = vrot.slane %v4671, 1
        %v4688 = vrot.slane %v4672, 1
        %v4689 = vsel %vm638, %v4687, %v4688
        %v4690 = vrot.slane %v4673, 1
        %v4691 = vsel %vm638, %v4688, %v4690
        %v4692 = vrot.slane %v4674, 1
        %v4693 = vsel %vm638, %v4690, %v4692
        %v4694 = vrot.slane %v4675, 1
        %v4695 = vsel %vm638, %v4692, %v4694
        %v4696 = vrot.slane %v4676, 1
        %v4697 = vsel %vm638, %v4694, %v4696
        %v4698 = vrot.slane %v4677, 1
        %v4699 = vsel %vm638, %v4696, %v4698
        %v4700 = vrot.slane %v4678, 1
        %v4701 = vsel %vm638, %v4698, %v4700
        %4702 = vrot.lane.b32.xlu0 %v4689, 126
        %v4703 = vpop.permute.xlu0 %4702
        %4704 = vrot.lane.b32.xlu0 %v4691, 126
        %v4705 = vpop.permute.xlu0 %4704
        %4706 = vrot.lane.b32.xlu0 %v4693, 126
        %v4707 = vpop.permute.xlu0 %4706
        %4708 = vrot.lane.b32.xlu0 %v4695, 126
        %v4709 = vpop.permute.xlu0 %4708
        %4710 = vrot.lane.b32.xlu0 %v4697, 126
        %v4711 = vpop.permute.xlu0 %4710
        %4712 = vrot.lane.b32.xlu0 %v4699, 126
        %v4713 = vpop.permute.xlu0 %4712
        %4714 = vrot.lane.b32.xlu0 %v4701, 126
        %v4715 = vpop.permute.xlu0 %4714
        %v4723 = vadd.f32 %v4479, %v4703
        %v4724 = vadd.f32 %v4480, %v4705
        %v4725 = vadd.f32 %v4481, %v4707
        %v4726 = vadd.f32 %v4482, %v4709
        %v4727 = vadd.f32 %v4483, %v4711
        %v4728 = vadd.f32 %v4484, %v4713
        %v4729 = vadd.f32 %v4485, %v4715
        %s4730 = sld [smem:[#allocation2 + $0x4d]]
        %v4731 = vstv %s4730
        %v4732 = vmul.f32 %v3752, %v4731
        %v4733 = vmul.f32 %v3753, %v4731
        %v4734 = vmul.f32 %v3754, %v4731
        %v4735 = vmul.f32 %v3755, %v4731
        %v4736 = vmul.f32 %v3756, %v4731
        %v4737 = vmul.f32 %v3757, %v4731
        %v4738 = vmul.f32 %v3758, %v4731
        %v4739 = vmul.f32 %v3759, %v4731
        %v4748 = vrot.slane %v4732, 1
        %v4749 = vrot.slane %v4733, 1
        %v4750 = vsel %vm638, %v4748, %v4749
        %v4751 = vrot.slane %v4734, 1
        %v4752 = vsel %vm638, %v4749, %v4751
        %v4753 = vrot.slane %v4735, 1
        %v4754 = vsel %vm638, %v4751, %v4753
        %v4755 = vrot.slane %v4736, 1
        %v4756 = vsel %vm638, %v4753, %v4755
        %v4757 = vrot.slane %v4737, 1
        %v4758 = vsel %vm638, %v4755, %v4757
        %v4759 = vrot.slane %v4738, 1
        %v4760 = vsel %vm638, %v4757, %v4759
        %v4761 = vrot.slane %v4739, 1
        %v4762 = vsel %vm638, %v4759, %v4761
        %4763 = vrot.lane.b32.xlu0 %v4750, 126
        %v4764 = vpop.permute.xlu0 %4763
        %4765 = vrot.lane.b32.xlu0 %v4752, 126
        %v4766 = vpop.permute.xlu0 %4765
        %4767 = vrot.lane.b32.xlu0 %v4754, 126
        %v4768 = vpop.permute.xlu0 %4767
        %4769 = vrot.lane.b32.xlu0 %v4756, 126
        %v4770 = vpop.permute.xlu0 %4769
        %4771 = vrot.lane.b32.xlu0 %v4758, 126
        %v4772 = vpop.permute.xlu0 %4771
        %4773 = vrot.lane.b32.xlu0 %v4760, 126
        %v4774 = vpop.permute.xlu0 %4773
        %4775 = vrot.lane.b32.xlu0 %v4762, 126
        %v4776 = vpop.permute.xlu0 %4775
        %v4784 = vadd.f32 %v4540, %v4764
        %v4785 = vadd.f32 %v4541, %v4766
        %v4786 = vadd.f32 %v4542, %v4768
        %v4787 = vadd.f32 %v4543, %v4770
        %v4788 = vadd.f32 %v4544, %v4772
        %v4789 = vadd.f32 %v4545, %v4774
        %v4790 = vadd.f32 %v4546, %v4776
        %s4791 = sld [smem:[#allocation2 + $0x68]]
        %v4792 = vstv %s4791
        %v4793 = vmul.f32 %v3752, %v4792
        %v4794 = vmul.f32 %v3753, %v4792
        %v4795 = vmul.f32 %v3754, %v4792
        %v4796 = vmul.f32 %v3755, %v4792
        %v4797 = vmul.f32 %v3756, %v4792
        %v4798 = vmul.f32 %v3757, %v4792
        %v4799 = vmul.f32 %v3758, %v4792
        %v4800 = vmul.f32 %v3759, %v4792
        %v4809 = vrot.slane %v4793, 1
        %v4810 = vrot.slane %v4794, 1
        %v4811 = vsel %vm638, %v4809, %v4810
        %v4812 = vrot.slane %v4795, 1
        %v4813 = vsel %vm638, %v4810, %v4812
        %v4814 = vrot.slane %v4796, 1
        %v4815 = vsel %vm638, %v4812, %v4814
        %v4816 = vrot.slane %v4797, 1
        %v4817 = vsel %vm638, %v4814, %v4816
        %v4818 = vrot.slane %v4798, 1
        %v4819 = vsel %vm638, %v4816, %v4818
        %v4820 = vrot.slane %v4799, 1
        %v4821 = vsel %vm638, %v4818, %v4820
        %v4822 = vrot.slane %v4800, 1
        %v4823 = vsel %vm638, %v4820, %v4822
        %4824 = vrot.lane.b32.xlu0 %v4811, 126
        %v4825 = vpop.permute.xlu0 %4824
        %4826 = vrot.lane.b32.xlu0 %v4813, 126
        %v4827 = vpop.permute.xlu0 %4826
        %4828 = vrot.lane.b32.xlu0 %v4815, 126
        %v4829 = vpop.permute.xlu0 %4828
        %4830 = vrot.lane.b32.xlu0 %v4817, 126
        %v4831 = vpop.permute.xlu0 %4830
        %4832 = vrot.lane.b32.xlu0 %v4819, 126
        %v4833 = vpop.permute.xlu0 %4832
        %4834 = vrot.lane.b32.xlu0 %v4821, 126
        %v4835 = vpop.permute.xlu0 %4834
        %4836 = vrot.lane.b32.xlu0 %v4823, 126
        %v4837 = vpop.permute.xlu0 %4836
        %v4845 = vadd.f32 %v4601, %v4825
        %v4846 = vadd.f32 %v4602, %v4827
        %v4847 = vadd.f32 %v4603, %v4829
        %v4848 = vadd.f32 %v4604, %v4831
        %v4849 = vadd.f32 %v4605, %v4833
        %v4850 = vadd.f32 %v4606, %v4835
        %v4851 = vadd.f32 %v4607, %v4837
        %s4852 = sld [smem:[#allocation2 + $0x18]]
        %v4853 = vstv %s4852
        %v4854 = vmul.f32 %v3752, %v4853
        %v4855 = vmul.f32 %v3753, %v4853
        %v4856 = vmul.f32 %v3754, %v4853
        %v4857 = vmul.f32 %v3755, %v4853
        %v4858 = vmul.f32 %v3756, %v4853
        %v4859 = vmul.f32 %v3757, %v4853
        %v4860 = vmul.f32 %v3758, %v4853
        %v4861 = vmul.f32 %v3759, %v4853
        %v4870 = vrot.slane %v4854, 2
        %v4871 = vrot.slane %v4855, 2
        %v4872 = vsel %vm1315, %v4870, %v4871
        %v4873 = vrot.slane %v4856, 2
        %v4874 = vsel %vm1315, %v4871, %v4873
        %v4875 = vrot.slane %v4857, 2
        %v4876 = vsel %vm1315, %v4873, %v4875
        %v4877 = vrot.slane %v4858, 2
        %v4878 = vsel %vm1315, %v4875, %v4877
        %v4879 = vrot.slane %v4859, 2
        %v4880 = vsel %vm1315, %v4877, %v4879
        %v4881 = vrot.slane %v4860, 2
        %v4882 = vsel %vm1315, %v4879, %v4881
        %v4883 = vrot.slane %v4861, 2
        %v4884 = vsel %vm1315, %v4881, %v4883
        %v4892 = vadd.f32 %v4662, %v4872
        %v4893 = vadd.f32 %v4663, %v4874
        %v4894 = vadd.f32 %v4664, %v4876
        %v4895 = vadd.f32 %v4665, %v4878
        %v4896 = vadd.f32 %v4666, %v4880
        %v4897 = vadd.f32 %v4667, %v4882
        %v4898 = vadd.f32 %v4668, %v4884
        %s4899 = sld [smem:[#allocation2 + $0x33]]
        %v4900 = vstv %s4899
        %v4901 = vmul.f32 %v3752, %v4900
        %v4902 = vmul.f32 %v3753, %v4900
        %v4903 = vmul.f32 %v3754, %v4900
        %v4904 = vmul.f32 %v3755, %v4900
        %v4905 = vmul.f32 %v3756, %v4900
        %v4906 = vmul.f32 %v3757, %v4900
        %v4907 = vmul.f32 %v3758, %v4900
        %v4908 = vmul.f32 %v3759, %v4900
        %v4917 = vrot.slane %v4901, 2
        %v4918 = vrot.slane %v4902, 2
        %v4919 = vsel %vm1315, %v4917, %v4918
        %v4920 = vrot.slane %v4903, 2
        %v4921 = vsel %vm1315, %v4918, %v4920
        %v4922 = vrot.slane %v4904, 2
        %v4923 = vsel %vm1315, %v4920, %v4922
        %v4924 = vrot.slane %v4905, 2
        %v4925 = vsel %vm1315, %v4922, %v4924
        %v4926 = vrot.slane %v4906, 2
        %v4927 = vsel %vm1315, %v4924, %v4926
        %v4928 = vrot.slane %v4907, 2
        %v4929 = vsel %vm1315, %v4926, %v4928
        %v4930 = vrot.slane %v4908, 2
        %v4931 = vsel %vm1315, %v4928, %v4930
        %v4939 = vadd.f32 %v4723, %v4919
        %v4940 = vadd.f32 %v4724, %v4921
        %v4941 = vadd.f32 %v4725, %v4923
        %v4942 = vadd.f32 %v4726, %v4925
        %v4943 = vadd.f32 %v4727, %v4927
        %v4944 = vadd.f32 %v4728, %v4929
        %v4945 = vadd.f32 %v4729, %v4931
        %s4946 = sld [smem:[#allocation2 + $0x4e]]
        %v4947 = vstv %s4946
        %v4948 = vmul.f32 %v3752, %v4947
        %v4949 = vmul.f32 %v3753, %v4947
        %v4950 = vmul.f32 %v3754, %v4947
        %v4951 = vmul.f32 %v3755, %v4947
        %v4952 = vmul.f32 %v3756, %v4947
        %v4953 = vmul.f32 %v3757, %v4947
        %v4954 = vmul.f32 %v3758, %v4947
        %v4955 = vmul.f32 %v3759, %v4947
        %v4964 = vrot.slane %v4948, 2
        %v4965 = vrot.slane %v4949, 2
        %v4966 = vsel %vm1315, %v4964, %v4965
        %v4967 = vrot.slane %v4950, 2
        %v4968 = vsel %vm1315, %v4965, %v4967
        %v4969 = vrot.slane %v4951, 2
        %v4970 = vsel %vm1315, %v4967, %v4969
        %v4971 = vrot.slane %v4952, 2
        %v4972 = vsel %vm1315, %v4969, %v4971
        %v4973 = vrot.slane %v4953, 2
        %v4974 = vsel %vm1315, %v4971, %v4973
        %v4975 = vrot.slane %v4954, 2
        %v4976 = vsel %vm1315, %v4973, %v4975
        %v4977 = vrot.slane %v4955, 2
        %v4978 = vsel %vm1315, %v4975, %v4977
        %v4986 = vadd.f32 %v4784, %v4966
        %v4987 = vadd.f32 %v4785, %v4968
        %v4988 = vadd.f32 %v4786, %v4970
        %v4989 = vadd.f32 %v4787, %v4972
        %v4990 = vadd.f32 %v4788, %v4974
        %v4991 = vadd.f32 %v4789, %v4976
        %v4992 = vadd.f32 %v4790, %v4978
        %s4993 = sld [smem:[#allocation2 + $0x69]]
        %v4994 = vstv %s4993
        %v4995 = vmul.f32 %v3752, %v4994
        %v4996 = vmul.f32 %v3753, %v4994
        %v4997 = vmul.f32 %v3754, %v4994
        %v4998 = vmul.f32 %v3755, %v4994
        %v4999 = vmul.f32 %v3756, %v4994
        %v5000 = vmul.f32 %v3757, %v4994
        %v5001 = vmul.f32 %v3758, %v4994
        %v5002 = vmul.f32 %v3759, %v4994
        %v5011 = vrot.slane %v4995, 2
        %v5012 = vrot.slane %v4996, 2
        %v5013 = vsel %vm1315, %v5011, %v5012
        %v5014 = vrot.slane %v4997, 2
        %v5015 = vsel %vm1315, %v5012, %v5014
        %v5016 = vrot.slane %v4998, 2
        %v5017 = vsel %vm1315, %v5014, %v5016
        %v5018 = vrot.slane %v4999, 2
        %v5019 = vsel %vm1315, %v5016, %v5018
        %v5020 = vrot.slane %v5000, 2
        %v5021 = vsel %vm1315, %v5018, %v5020
        %v5022 = vrot.slane %v5001, 2
        %v5023 = vsel %vm1315, %v5020, %v5022
        %v5024 = vrot.slane %v5002, 2
        %v5025 = vsel %vm1315, %v5022, %v5024
        %v5033 = vadd.f32 %v4845, %v5013
        %v5034 = vadd.f32 %v4846, %v5015
        %v5035 = vadd.f32 %v4847, %v5017
        %v5036 = vadd.f32 %v4848, %v5019
        %v5037 = vadd.f32 %v4849, %v5021
        %v5038 = vadd.f32 %v4850, %v5023
        %v5039 = vadd.f32 %v4851, %v5025
        %s5040 = sld [smem:[#allocation2 + $0x19]]
        %v5041 = vstv %s5040
        %v5042 = vmul.f32 %v3752, %v5041
        %v5043 = vmul.f32 %v3753, %v5041
        %v5044 = vmul.f32 %v3754, %v5041
        %v5045 = vmul.f32 %v3755, %v5041
        %v5046 = vmul.f32 %v3756, %v5041
        %v5047 = vmul.f32 %v3757, %v5041
        %v5048 = vmul.f32 %v3758, %v5041
        %v5049 = vmul.f32 %v3759, %v5041
        %v5058 = vrot.slane %v5042, 2
        %v5059 = vrot.slane %v5043, 2
        %v5060 = vsel %vm1315, %v5058, %v5059
        %v5061 = vrot.slane %v5044, 2
        %v5062 = vsel %vm1315, %v5059, %v5061
        %v5063 = vrot.slane %v5045, 2
        %v5064 = vsel %vm1315, %v5061, %v5063
        %v5065 = vrot.slane %v5046, 2
        %v5066 = vsel %vm1315, %v5063, %v5065
        %v5067 = vrot.slane %v5047, 2
        %v5068 = vsel %vm1315, %v5065, %v5067
        %v5069 = vrot.slane %v5048, 2
        %v5070 = vsel %vm1315, %v5067, %v5069
        %v5071 = vrot.slane %v5049, 2
        %v5072 = vsel %vm1315, %v5069, %v5071
        %5073 = vrot.lane.b32.xlu0 %v5060, 127
        %v5074 = vpop.permute.xlu0 %5073
        %5075 = vrot.lane.b32.xlu0 %v5062, 127
        %v5076 = vpop.permute.xlu0 %5075
        %5077 = vrot.lane.b32.xlu0 %v5064, 127
        %v5078 = vpop.permute.xlu0 %5077
        %5079 = vrot.lane.b32.xlu0 %v5066, 127
        %v5080 = vpop.permute.xlu0 %5079
        %5081 = vrot.lane.b32.xlu0 %v5068, 127
        %v5082 = vpop.permute.xlu0 %5081
        %5083 = vrot.lane.b32.xlu0 %v5070, 127
        %v5084 = vpop.permute.xlu0 %5083
        %5085 = vrot.lane.b32.xlu0 %v5072, 127
        %v5086 = vpop.permute.xlu0 %5085
        %v5094 = vadd.f32 %v4892, %v5074
        %v5095 = vadd.f32 %v4893, %v5076
        %v5096 = vadd.f32 %v4894, %v5078
        %v5097 = vadd.f32 %v4895, %v5080
        %v5098 = vadd.f32 %v4896, %v5082
        %v5099 = vadd.f32 %v4897, %v5084
        %v5100 = vadd.f32 %v4898, %v5086
        %s5101 = sld [smem:[#allocation2 + $0x34]]
        %v5102 = vstv %s5101
        %v5103 = vmul.f32 %v3752, %v5102
        %v5104 = vmul.f32 %v3753, %v5102
        %v5105 = vmul.f32 %v3754, %v5102
        %v5106 = vmul.f32 %v3755, %v5102
        %v5107 = vmul.f32 %v3756, %v5102
        %v5108 = vmul.f32 %v3757, %v5102
        %v5109 = vmul.f32 %v3758, %v5102
        %v5110 = vmul.f32 %v3759, %v5102
        %v5119 = vrot.slane %v5103, 2
        %v5120 = vrot.slane %v5104, 2
        %v5121 = vsel %vm1315, %v5119, %v5120
        %v5122 = vrot.slane %v5105, 2
        %v5123 = vsel %vm1315, %v5120, %v5122
        %v5124 = vrot.slane %v5106, 2
        %v5125 = vsel %vm1315, %v5122, %v5124
        %v5126 = vrot.slane %v5107, 2
        %v5127 = vsel %vm1315, %v5124, %v5126
        %v5128 = vrot.slane %v5108, 2
        %v5129 = vsel %vm1315, %v5126, %v5128
        %v5130 = vrot.slane %v5109, 2
        %v5131 = vsel %vm1315, %v5128, %v5130
        %v5132 = vrot.slane %v5110, 2
        %v5133 = vsel %vm1315, %v5130, %v5132
        %5134 = vrot.lane.b32.xlu0 %v5121, 127
        %v5135 = vpop.permute.xlu0 %5134
        %5136 = vrot.lane.b32.xlu0 %v5123, 127
        %v5137 = vpop.permute.xlu0 %5136
        %5138 = vrot.lane.b32.xlu0 %v5125, 127
        %v5139 = vpop.permute.xlu0 %5138
        %5140 = vrot.lane.b32.xlu0 %v5127, 127
        %v5141 = vpop.permute.xlu0 %5140
        %5142 = vrot.lane.b32.xlu0 %v5129, 127
        %v5143 = vpop.permute.xlu0 %5142
        %5144 = vrot.lane.b32.xlu0 %v5131, 127
        %v5145 = vpop.permute.xlu0 %5144
        %5146 = vrot.lane.b32.xlu0 %v5133, 127
        %v5147 = vpop.permute.xlu0 %5146
        %v5155 = vadd.f32 %v4939, %v5135
        %v5156 = vadd.f32 %v4940, %v5137
        %v5157 = vadd.f32 %v4941, %v5139
        %v5158 = vadd.f32 %v4942, %v5141
        %v5159 = vadd.f32 %v4943, %v5143
        %v5160 = vadd.f32 %v4944, %v5145
        %v5161 = vadd.f32 %v4945, %v5147
        %s5162 = sld [smem:[#allocation2 + $0x4f]]
        %v5163 = vstv %s5162
        %v5164 = vmul.f32 %v3752, %v5163
        %v5165 = vmul.f32 %v3753, %v5163
        %v5166 = vmul.f32 %v3754, %v5163
        %v5167 = vmul.f32 %v3755, %v5163
        %v5168 = vmul.f32 %v3756, %v5163
        %v5169 = vmul.f32 %v3757, %v5163
        %v5170 = vmul.f32 %v3758, %v5163
        %v5171 = vmul.f32 %v3759, %v5163
        %v5180 = vrot.slane %v5164, 2
        %v5181 = vrot.slane %v5165, 2
        %v5182 = vsel %vm1315, %v5180, %v5181
        %v5183 = vrot.slane %v5166, 2
        %v5184 = vsel %vm1315, %v5181, %v5183
        %v5185 = vrot.slane %v5167, 2
        %v5186 = vsel %vm1315, %v5183, %v5185
        %v5187 = vrot.slane %v5168, 2
        %v5188 = vsel %vm1315, %v5185, %v5187
        %v5189 = vrot.slane %v5169, 2
        %v5190 = vsel %vm1315, %v5187, %v5189
        %v5191 = vrot.slane %v5170, 2
        %v5192 = vsel %vm1315, %v5189, %v5191
        %v5193 = vrot.slane %v5171, 2
        %v5194 = vsel %vm1315, %v5191, %v5193
        %5195 = vrot.lane.b32.xlu0 %v5182, 127
        %v5196 = vpop.permute.xlu0 %5195
        %5197 = vrot.lane.b32.xlu0 %v5184, 127
        %v5198 = vpop.permute.xlu0 %5197
        %5199 = vrot.lane.b32.xlu0 %v5186, 127
        %v5200 = vpop.permute.xlu0 %5199
        %5201 = vrot.lane.b32.xlu0 %v5188, 127
        %v5202 = vpop.permute.xlu0 %5201
        %5203 = vrot.lane.b32.xlu0 %v5190, 127
        %v5204 = vpop.permute.xlu0 %5203
        %5205 = vrot.lane.b32.xlu0 %v5192, 127
        %v5206 = vpop.permute.xlu0 %5205
        %5207 = vrot.lane.b32.xlu0 %v5194, 127
        %v5208 = vpop.permute.xlu0 %5207
        %v5216 = vadd.f32 %v4986, %v5196
        %v5217 = vadd.f32 %v4987, %v5198
        %v5218 = vadd.f32 %v4988, %v5200
        %v5219 = vadd.f32 %v4989, %v5202
        %v5220 = vadd.f32 %v4990, %v5204
        %v5221 = vadd.f32 %v4991, %v5206
        %v5222 = vadd.f32 %v4992, %v5208
        %s5223 = sld [smem:[#allocation2 + $0x6a]]
        %v5224 = vstv %s5223
        %v5225 = vmul.f32 %v3752, %v5224
        %v5226 = vmul.f32 %v3753, %v5224
        %v5227 = vmul.f32 %v3754, %v5224
        %v5228 = vmul.f32 %v3755, %v5224
        %v5229 = vmul.f32 %v3756, %v5224
        %v5230 = vmul.f32 %v3757, %v5224
        %v5231 = vmul.f32 %v3758, %v5224
        %v5232 = vmul.f32 %v3759, %v5224
        %v5241 = vrot.slane %v5225, 2
        %v5242 = vrot.slane %v5226, 2
        %v5243 = vsel %vm1315, %v5241, %v5242
        %v5244 = vrot.slane %v5227, 2
        %v5245 = vsel %vm1315, %v5242, %v5244
        %v5246 = vrot.slane %v5228, 2
        %v5247 = vsel %vm1315, %v5244, %v5246
        %v5248 = vrot.slane %v5229, 2
        %v5249 = vsel %vm1315, %v5246, %v5248
        %v5250 = vrot.slane %v5230, 2
        %v5251 = vsel %vm1315, %v5248, %v5250
        %v5252 = vrot.slane %v5231, 2
        %v5253 = vsel %vm1315, %v5250, %v5252
        %v5254 = vrot.slane %v5232, 2
        %v5255 = vsel %vm1315, %v5252, %v5254
        %5256 = vrot.lane.b32.xlu0 %v5243, 127
        %v5257 = vpop.permute.xlu0 %5256
        %5258 = vrot.lane.b32.xlu0 %v5245, 127
        %v5259 = vpop.permute.xlu0 %5258
        %5260 = vrot.lane.b32.xlu0 %v5247, 127
        %v5261 = vpop.permute.xlu0 %5260
        %5262 = vrot.lane.b32.xlu0 %v5249, 127
        %v5263 = vpop.permute.xlu0 %5262
        %5264 = vrot.lane.b32.xlu0 %v5251, 127
        %v5265 = vpop.permute.xlu0 %5264
        %5266 = vrot.lane.b32.xlu0 %v5253, 127
        %v5267 = vpop.permute.xlu0 %5266
        %5268 = vrot.lane.b32.xlu0 %v5255, 127
        %v5269 = vpop.permute.xlu0 %5268
        %v5277 = vadd.f32 %v5033, %v5257
        %v5278 = vadd.f32 %v5034, %v5259
        %v5279 = vadd.f32 %v5035, %v5261
        %v5280 = vadd.f32 %v5036, %v5263
        %v5281 = vadd.f32 %v5037, %v5265
        %v5282 = vadd.f32 %v5038, %v5267
        %v5283 = vadd.f32 %v5039, %v5269
        %s5284 = sld [smem:[#allocation2 + $0x1a]]
        %v5285 = vstv %s5284
        %v5286 = vmul.f32 %v3752, %v5285
        %v5287 = vmul.f32 %v3753, %v5285
        %v5288 = vmul.f32 %v3754, %v5285
        %v5289 = vmul.f32 %v3755, %v5285
        %v5290 = vmul.f32 %v3756, %v5285
        %v5291 = vmul.f32 %v3757, %v5285
        %v5292 = vmul.f32 %v3758, %v5285
        %v5293 = vmul.f32 %v3759, %v5285
        %v5302 = vrot.slane %v5286, 2
        %v5303 = vrot.slane %v5287, 2
        %v5304 = vsel %vm1315, %v5302, %v5303
        %v5305 = vrot.slane %v5288, 2
        %v5306 = vsel %vm1315, %v5303, %v5305
        %v5307 = vrot.slane %v5289, 2
        %v5308 = vsel %vm1315, %v5305, %v5307
        %v5309 = vrot.slane %v5290, 2
        %v5310 = vsel %vm1315, %v5307, %v5309
        %v5311 = vrot.slane %v5291, 2
        %v5312 = vsel %vm1315, %v5309, %v5311
        %v5313 = vrot.slane %v5292, 2
        %v5314 = vsel %vm1315, %v5311, %v5313
        %v5315 = vrot.slane %v5293, 2
        %v5316 = vsel %vm1315, %v5313, %v5315
        %5317 = vrot.lane.b32.xlu0 %v5304, 126
        %v5318 = vpop.permute.xlu0 %5317
        %5319 = vrot.lane.b32.xlu0 %v5306, 126
        %v5320 = vpop.permute.xlu0 %5319
        %5321 = vrot.lane.b32.xlu0 %v5308, 126
        %v5322 = vpop.permute.xlu0 %5321
        %5323 = vrot.lane.b32.xlu0 %v5310, 126
        %v5324 = vpop.permute.xlu0 %5323
        %5325 = vrot.lane.b32.xlu0 %v5312, 126
        %v5326 = vpop.permute.xlu0 %5325
        %5327 = vrot.lane.b32.xlu0 %v5314, 126
        %v5328 = vpop.permute.xlu0 %5327
        %5329 = vrot.lane.b32.xlu0 %v5316, 126
        %v5330 = vpop.permute.xlu0 %5329
        %v5338 = vadd.f32 %v5094, %v5318
        %v5339 = vadd.f32 %v5095, %v5320
        %v5340 = vadd.f32 %v5096, %v5322
        %v5341 = vadd.f32 %v5097, %v5324
        %v5342 = vadd.f32 %v5098, %v5326
        %v5343 = vadd.f32 %v5099, %v5328
        %v5344 = vadd.f32 %v5100, %v5330
        %s5345 = sld [smem:[#allocation2 + $0x35]]
        %v5346 = vstv %s5345
        %v5347 = vmul.f32 %v3752, %v5346
        %v5348 = vmul.f32 %v3753, %v5346
        %v5349 = vmul.f32 %v3754, %v5346
        %v5350 = vmul.f32 %v3755, %v5346
        %v5351 = vmul.f32 %v3756, %v5346
        %v5352 = vmul.f32 %v3757, %v5346
        %v5353 = vmul.f32 %v3758, %v5346
        %v5354 = vmul.f32 %v3759, %v5346
        %v5363 = vrot.slane %v5347, 2
        %v5364 = vrot.slane %v5348, 2
        %v5365 = vsel %vm1315, %v5363, %v5364
        %v5366 = vrot.slane %v5349, 2
        %v5367 = vsel %vm1315, %v5364, %v5366
        %v5368 = vrot.slane %v5350, 2
        %v5369 = vsel %vm1315, %v5366, %v5368
        %v5370 = vrot.slane %v5351, 2
        %v5371 = vsel %vm1315, %v5368, %v5370
        %v5372 = vrot.slane %v5352, 2
        %v5373 = vsel %vm1315, %v5370, %v5372
        %v5374 = vrot.slane %v5353, 2
        %v5375 = vsel %vm1315, %v5372, %v5374
        %v5376 = vrot.slane %v5354, 2
        %v5377 = vsel %vm1315, %v5374, %v5376
        %5378 = vrot.lane.b32.xlu0 %v5365, 126
        %v5379 = vpop.permute.xlu0 %5378
        %5380 = vrot.lane.b32.xlu0 %v5367, 126
        %v5381 = vpop.permute.xlu0 %5380
        %5382 = vrot.lane.b32.xlu0 %v5369, 126
        %v5383 = vpop.permute.xlu0 %5382
        %5384 = vrot.lane.b32.xlu0 %v5371, 126
        %v5385 = vpop.permute.xlu0 %5384
        %5386 = vrot.lane.b32.xlu0 %v5373, 126
        %v5387 = vpop.permute.xlu0 %5386
        %5388 = vrot.lane.b32.xlu0 %v5375, 126
        %v5389 = vpop.permute.xlu0 %5388
        %5390 = vrot.lane.b32.xlu0 %v5377, 126
        %v5391 = vpop.permute.xlu0 %5390
        %v5399 = vadd.f32 %v5155, %v5379
        %v5400 = vadd.f32 %v5156, %v5381
        %v5401 = vadd.f32 %v5157, %v5383
        %v5402 = vadd.f32 %v5158, %v5385
        %v5403 = vadd.f32 %v5159, %v5387
        %v5404 = vadd.f32 %v5160, %v5389
        %v5405 = vadd.f32 %v5161, %v5391
        %s5406 = sld [smem:[#allocation2 + $0x50]]
        %v5407 = vstv %s5406
        %v5408 = vmul.f32 %v3752, %v5407
        %v5409 = vmul.f32 %v3753, %v5407
        %v5410 = vmul.f32 %v3754, %v5407
        %v5411 = vmul.f32 %v3755, %v5407
        %v5412 = vmul.f32 %v3756, %v5407
        %v5413 = vmul.f32 %v3757, %v5407
        %v5414 = vmul.f32 %v3758, %v5407
        %v5415 = vmul.f32 %v3759, %v5407
        %v5424 = vrot.slane %v5408, 2
        %v5425 = vrot.slane %v5409, 2
        %v5426 = vsel %vm1315, %v5424, %v5425
        %v5427 = vrot.slane %v5410, 2
        %v5428 = vsel %vm1315, %v5425, %v5427
        %v5429 = vrot.slane %v5411, 2
        %v5430 = vsel %vm1315, %v5427, %v5429
        %v5431 = vrot.slane %v5412, 2
        %v5432 = vsel %vm1315, %v5429, %v5431
        %v5433 = vrot.slane %v5413, 2
        %v5434 = vsel %vm1315, %v5431, %v5433
        %v5435 = vrot.slane %v5414, 2
        %v5436 = vsel %vm1315, %v5433, %v5435
        %v5437 = vrot.slane %v5415, 2
        %v5438 = vsel %vm1315, %v5435, %v5437
        %5439 = vrot.lane.b32.xlu0 %v5426, 126
        %v5440 = vpop.permute.xlu0 %5439
        %5441 = vrot.lane.b32.xlu0 %v5428, 126
        %v5442 = vpop.permute.xlu0 %5441
        %5443 = vrot.lane.b32.xlu0 %v5430, 126
        %v5444 = vpop.permute.xlu0 %5443
        %5445 = vrot.lane.b32.xlu0 %v5432, 126
        %v5446 = vpop.permute.xlu0 %5445
        %5447 = vrot.lane.b32.xlu0 %v5434, 126
        %v5448 = vpop.permute.xlu0 %5447
        %5449 = vrot.lane.b32.xlu0 %v5436, 126
        %v5450 = vpop.permute.xlu0 %5449
        %5451 = vrot.lane.b32.xlu0 %v5438, 126
        %v5452 = vpop.permute.xlu0 %5451
        %v5460 = vadd.f32 %v5216, %v5440
        %v5461 = vadd.f32 %v5217, %v5442
        %v5462 = vadd.f32 %v5218, %v5444
        %v5463 = vadd.f32 %v5219, %v5446
        %v5464 = vadd.f32 %v5220, %v5448
        %v5465 = vadd.f32 %v5221, %v5450
        %v5466 = vadd.f32 %v5222, %v5452
        %s5467 = sld [smem:[#allocation2 + $0x6b]]
        %v5468 = vstv %s5467
        %v5469 = vmul.f32 %v3752, %v5468
        %v5470 = vmul.f32 %v3753, %v5468
        %v5471 = vmul.f32 %v3754, %v5468
        %v5472 = vmul.f32 %v3755, %v5468
        %v5473 = vmul.f32 %v3756, %v5468
        %v5474 = vmul.f32 %v3757, %v5468
        %v5475 = vmul.f32 %v3758, %v5468
        %v5476 = vmul.f32 %v3759, %v5468
        %v5485 = vrot.slane %v5469, 2
        %v5486 = vrot.slane %v5470, 2
        %v5487 = vsel %vm1315, %v5485, %v5486
        %v5488 = vrot.slane %v5471, 2
        %v5489 = vsel %vm1315, %v5486, %v5488
        %v5490 = vrot.slane %v5472, 2
        %v5491 = vsel %vm1315, %v5488, %v5490
        %v5492 = vrot.slane %v5473, 2
        %v5493 = vsel %vm1315, %v5490, %v5492
        %v5494 = vrot.slane %v5474, 2
        %v5495 = vsel %vm1315, %v5492, %v5494
        %v5496 = vrot.slane %v5475, 2
        %v5497 = vsel %vm1315, %v5494, %v5496
        %v5498 = vrot.slane %v5476, 2
        %v5499 = vsel %vm1315, %v5496, %v5498
        %5500 = vrot.lane.b32.xlu0 %v5487, 126
        %v5501 = vpop.permute.xlu0 %5500
        %5502 = vrot.lane.b32.xlu0 %v5489, 126
        %v5503 = vpop.permute.xlu0 %5502
        %5504 = vrot.lane.b32.xlu0 %v5491, 126
        %v5505 = vpop.permute.xlu0 %5504
        %5506 = vrot.lane.b32.xlu0 %v5493, 126
        %v5507 = vpop.permute.xlu0 %5506
        %5508 = vrot.lane.b32.xlu0 %v5495, 126
        %v5509 = vpop.permute.xlu0 %5508
        %5510 = vrot.lane.b32.xlu0 %v5497, 126
        %v5511 = vpop.permute.xlu0 %5510
        %5512 = vrot.lane.b32.xlu0 %v5499, 126
        %v5513 = vpop.permute.xlu0 %5512
        %v5521 = vadd.f32 %v5277, %v5501
        %v5522 = vadd.f32 %v5278, %v5503
        %v5523 = vadd.f32 %v5279, %v5505
        %v5524 = vadd.f32 %v5280, %v5507
        %v5525 = vadd.f32 %v5281, %v5509
        %v5526 = vadd.f32 %v5282, %v5511
        %v5527 = vadd.f32 %v5283, %v5513
        %s5528 = sld [smem:[#allocation5]]
        %v5529 = vstv %s5528
        %v5530 = vadd.f32 %v5338, %v5529
        %v5531 = vadd.f32 %v5339, %v5529
        %v5532 = vadd.f32 %v5340, %v5529
        %v5533 = vadd.f32 %v5341, %v5529
        %v5534 = vadd.f32 %v5342, %v5529
        %v5535 = vadd.f32 %v5343, %v5529
        %v5536 = vadd.f32 %v5344, %v5529
        %v5537 = vmax.f32 %v5530, 0.0
        %v5538 = vmax.f32 %v5531, 0.0
        %v5539 = vmax.f32 %v5532, 0.0
        %v5540 = vmax.f32 %v5533, 0.0
        %v5541 = vmax.f32 %v5534, 0.0
        %v5542 = vmax.f32 %v5535, 0.0
        %v5543 = vmax.f32 %v5536, 0.0
        %vm5544 = vcmask 457728
        %5545 = vst.msk [vmem:[%s195] sm:$0xff] %vm5544, %v5537
        %5546 = vst.msk [vmem:[%s195 + $0x8] sm:$0xff] %vm5544, %v5538
        %5547 = vst.msk [vmem:[%s195 + $0x10] sm:$0xff] %vm5544, %v5539
        %5548 = vst.msk [vmem:[%s195 + $0x18] sm:$0xff] %vm5544, %v5540
        %5549 = vst.msk [vmem:[%s195 + $0x20] sm:$0xff] %vm5544, %v5541
        %5550 = vst.msk [vmem:[%s195 + $0x28] sm:$0xff] %vm5544, %v5542
        %5551 = vst.msk [vmem:[%s195 + $0x30] sm:$0xff] %vm5544, %v5543
        %s5552 = sld [smem:[#allocation5 + $0x1]]
        %v5553 = vstv %s5552
        %v5554 = vadd.f32 %v5399, %v5553
        %v5555 = vadd.f32 %v5400, %v5553
        %v5556 = vadd.f32 %v5401, %v5553
        %v5557 = vadd.f32 %v5402, %v5553
        %v5558 = vadd.f32 %v5403, %v5553
        %v5559 = vadd.f32 %v5404, %v5553
        %v5560 = vadd.f32 %v5405, %v5553
        %v5561 = vmax.f32 %v5554, 0.0
        %v5562 = vmax.f32 %v5555, 0.0
        %v5563 = vmax.f32 %v5556, 0.0
        %v5564 = vmax.f32 %v5557, 0.0
        %v5565 = vmax.f32 %v5558, 0.0
        %v5566 = vmax.f32 %v5559, 0.0
        %v5567 = vmax.f32 %v5560, 0.0
        %s5568 = scalar_lea.vmem %s195, 56
        %5569 = vst.msk [vmem:[%s5568] sm:$0xff] %vm5544, %v5561
        %5570 = vst.msk [vmem:[%s5568 + $0x8] sm:$0xff] %vm5544, %v5562
        %5571 = vst.msk [vmem:[%s5568 + $0x10] sm:$0xff] %vm5544, %v5563
        %5572 = vst.msk [vmem:[%s5568 + $0x18] sm:$0xff] %vm5544, %v5564
        %5573 = vst.msk [vmem:[%s5568 + $0x20] sm:$0xff] %vm5544, %v5565
        %5574 = vst.msk [vmem:[%s5568 + $0x28] sm:$0xff] %vm5544, %v5566
        %5575 = vst.msk [vmem:[%s5568 + $0x30] sm:$0xff] %vm5544, %v5567
        %s5576 = sld [smem:[#allocation5 + $0x2]]
        %v5577 = vstv %s5576
        %v5578 = vadd.f32 %v5460, %v5577
        %v5579 = vadd.f32 %v5461, %v5577
        %v5580 = vadd.f32 %v5462, %v5577
        %v5581 = vadd.f32 %v5463, %v5577
        %v5582 = vadd.f32 %v5464, %v5577
        %v5583 = vadd.f32 %v5465, %v5577
        %v5584 = vadd.f32 %v5466, %v5577
        %v5585 = vmax.f32 %v5578, 0.0
        %v5586 = vmax.f32 %v5579, 0.0
        %v5587 = vmax.f32 %v5580, 0.0
        %v5588 = vmax.f32 %v5581, 0.0
        %v5589 = vmax.f32 %v5582, 0.0
        %v5590 = vmax.f32 %v5583, 0.0
        %v5591 = vmax.f32 %v5584, 0.0
        %s5592 = scalar_lea.vmem %s195, 112
        %5593 = vst.msk [vmem:[%s5592] sm:$0xff] %vm5544, %v5585
        %5594 = vst.msk [vmem:[%s5592 + $0x8] sm:$0xff] %vm5544, %v5586
        %5595 = vst.msk [vmem:[%s5592 + $0x10] sm:$0xff] %vm5544, %v5587
        %5596 = vst.msk [vmem:[%s5592 + $0x18] sm:$0xff] %vm5544, %v5588
        %5597 = vst.msk [vmem:[%s5592 + $0x20] sm:$0xff] %vm5544, %v5589
        %5598 = vst.msk [vmem:[%s5592 + $0x28] sm:$0xff] %vm5544, %v5590
        %5599 = vst.msk [vmem:[%s5592 + $0x30] sm:$0xff] %vm5544, %v5591
        %s5600 = sld [smem:[#allocation5 + $0x3]]
        %v5601 = vstv %s5600
        %v5602 = vadd.f32 %v5521, %v5601
        %v5603 = vadd.f32 %v5522, %v5601
        %v5604 = vadd.f32 %v5523, %v5601
        %v5605 = vadd.f32 %v5524, %v5601
        %v5606 = vadd.f32 %v5525, %v5601
        %v5607 = vadd.f32 %v5526, %v5601
        %v5608 = vadd.f32 %v5527, %v5601
        %v5609 = vmax.f32 %v5602, 0.0
        %v5610 = vmax.f32 %v5603, 0.0
        %v5611 = vmax.f32 %v5604, 0.0
        %v5612 = vmax.f32 %v5605, 0.0
        %v5613 = vmax.f32 %v5606, 0.0
        %v5614 = vmax.f32 %v5607, 0.0
        %v5615 = vmax.f32 %v5608, 0.0
        %s5616 = scalar_lea.vmem %s195, 168
        %5617 = vst.msk [vmem:[%s5616] sm:$0xff] %vm5544, %v5609
        %5618 = vst.msk [vmem:[%s5616 + $0x8] sm:$0xff] %vm5544, %v5610
        %5619 = vst.msk [vmem:[%s5616 + $0x10] sm:$0xff] %vm5544, %v5611
        %5620 = vst.msk [vmem:[%s5616 + $0x18] sm:$0xff] %vm5544, %v5612
        %5621 = vst.msk [vmem:[%s5616 + $0x20] sm:$0xff] %vm5544, %v5613
        %5622 = vst.msk [vmem:[%s5616 + $0x28] sm:$0xff] %vm5544, %v5614
        %5623 = vst.msk [vmem:[%s5616 + $0x30] sm:$0xff] %vm5544, %v5615
        %p5624 = scmp.lt.s32.totalorder %s16, 1
        %s5625 = scalar_select %p5624, %s16, 1
        %s5626 = smul.addr %s5625, 28
        %s5627 = smul.addr %s5626, 8
        %s5628 = scalar_lea.vmem %s3, %s5627
        // Predicated region
        $region41: #{ca_encoder_classifier_forward.2} parent=31 // pred_check
          %p5629 = pneg %p102
        $region42: #{ca_encoder_classifier_forward.2} parent=31 // pred_check_branch
          %5631 = sbr.rel (%p5629) target = $region44
        $region43: #{ca_encoder_classifier_forward.2} parent=31 // pred_region
          _
        $region44: #{ca_encoder_classifier_forward.2} parent=31 // pred_fallthru
          _
      $region32: #{ca_encoder_classifier_forward.2} parent=5 // pred_fallthru
        _
      %p5632 = scmp.le.s32.totalorder 2, %s11
      // Predicated region
      $region45: #{ca_encoder_classifier_forward.2} parent=5 // pred_check
        %p5633 = pneg %p5632
      $region46: #{ca_encoder_classifier_forward.2} parent=5 // pred_check_branch
        %5635 = sbr.rel (%p5633) target = $region48
      $region47: #{ca_encoder_classifier_forward.2} parent=5 // pred_region
        %s5636 = ssub.s32 %s11, 2
        // Predicated region
        $region49: #{ca_encoder_classifier_forward.2} parent=47 // pred_check
          %p5637 = pneg %p108
        $region50: #{ca_encoder_classifier_forward.2} parent=47 // pred_check_branch
          %5639 = sbr.rel (%p5637) target = $region52
        $region51: #{ca_encoder_classifier_forward.2} parent=47 // pred_region
          %p5640 = scmp.lt.s32.totalorder %s17, 1
          %s5641 = scalar_select %p5640, %s17, 1
          %s5642 = smul.addr %s5641, 28
          %s5643 = smul.addr %s5642, 8
          %s5644 = scalar_lea.vmem %s3, %s5643
        $region52: #{ca_encoder_classifier_forward.2} parent=47 // pred_fallthru
          _
      $region48: #{ca_encoder_classifier_forward.2} parent=5 // pred_fallthru
        _
    $region6: #{ca_encoder_classifier_forward.2} parent=1 // loop_footer
      %s15 = sadd.s32 1, %s11
    $region7: #{ca_encoder_classifier_forward.2} parent=1 // loop_footer_branch
      %10 = sbr.rel target = $region3
    $region8: #{ca_encoder_classifier_forward.2} parent=1 // loop_exit
      _
    %5645 = vsyncpa [#allocation3], 1
    %s5646 = scalar_lea.sflag [#allocation3], 1
    %5647 = vsyncpa %s5646, 1
    %5648 = vsyncpa [#allocation4], 1
    %s5649 = scalar_lea.sflag [#allocation4], 1
    %5650 = vsyncpa %s5649, 1

</llo_original>
